<compile_context>
chip_gen: v7x
topology: tpu7x:2x2x1
jax: 0.10.0
libtpu: 0.0.40
codegen_flags: <defaults>
</compile_context>

<pallas_src>
import functools

import jax
import jax.numpy as jnp
from jax.experimental import pallas as pl
from jax.experimental.pallas import tpu as pltpu


def _round_up(x, m):
    return ((x + m - 1) // m) * m


# ---------------------------------------------------------------------------
# Pallas kernel 1: tiled-over-M matmul + bias + optional ReLU  (conv layers)
# ---------------------------------------------------------------------------
def _matmul_bias_kernel(a_ref, b_ref, bias_ref, o_ref, *, apply_relu):
    acc = jnp.dot(a_ref[...], b_ref[...], preferred_element_type=jnp.float32)
    acc = acc + bias_ref[...]
    if apply_relu:
        acc = jnp.maximum(acc, 0.0)
    o_ref[...] = acc.astype(o_ref.dtype)


def matmul_bias(a, b_packed, bias_row, apply_relu=True, out_dtype=jnp.bfloat16):
    """a: [M, K] float, b_packed: [K, Np] bf16 (Np % 128 == 0), bias_row: [1, Np] f32."""
    M, K = a.shape
    K2, Np = b_packed.shape
    assert K == K2 and Np % 128 == 0
    # Adaptive M tile: tiny layers are not padded to 256 anymore; large M uses 512.
    tm = min(_round_up(M, 8), 512)
    Mp = _round_up(M, tm)
    a = a.astype(jnp.bfloat16)
    if Mp != M:
        a = jnp.pad(a, ((0, Mp - M), (0, 0)))

    out = pl.pallas_call(
        functools.partial(_matmul_bias_kernel, apply_relu=apply_relu),
        out_shape=jax.ShapeDtypeStruct((Mp, Np), out_dtype),
        grid_spec=pltpu.PrefetchScalarGridSpec(
            num_scalar_prefetch=0,
            grid=(Mp // tm,),
            in_specs=[
                pl.BlockSpec((tm, K), lambda i: (i, 0)),   # A tile (bf16)
                pl.BlockSpec((K, Np), lambda i: (0, 0)),   # full B, resident in VMEM
                pl.BlockSpec((1, Np), lambda i: (0, 0)),   # bias row
            ],
            out_specs=pl.BlockSpec((tm, Np), lambda i: (i, 0)),
        ),
        compiler_params=pltpu.CompilerParams(
            dimension_semantics=("parallel",)),
    )(a, b_packed, bias_row)
    return out[:M]                                        # drop padded rows


# ---------------------------------------------------------------------------
# Pallas kernel 2: fused FC stack (FC1..output), all weights live in VMEM
# ---------------------------------------------------------------------------
def _fc_stack_kernel(x_ref, w1_ref, b1_ref, w2_ref, b2_ref, w3_ref, b3_ref,
                     w4_ref, b4_ref, w5_ref, b5_ref, o_ref):
    def layer(h, w_ref, b_ref, relu):
        y = jnp.dot(h, w_ref[...], preferred_element_type=jnp.float32) + b_ref[...]
        if relu:
            y = jnp.maximum(y, 0.0).astype(jnp.bfloat16)
        return y

    h = x_ref[...]
    h = layer(h, w1_ref, b1_ref, True)
    h = layer(h, w2_ref, b2_ref, True)
    h = layer(h, w3_ref, b3_ref, True)
    h = layer(h, w4_ref, b4_ref, True)
    o_ref[...] = layer(h, w5_ref, b5_ref, False)


def fc_stack(x, p):
    M, _ = x.shape
    Mp = _round_up(M, 8)
    x = x.astype(jnp.bfloat16)
    if Mp != M:
        x = jnp.pad(x, ((0, Mp - M), (0, 0)))
    vmem = pl.BlockSpec(memory_space=pltpu.MemorySpace.VMEM)
    out = pl.pallas_call(
        _fc_stack_kernel,
        out_shape=jax.ShapeDtypeStruct((Mp, p["out_b"].shape[1]), jnp.float32),
        in_specs=[vmem] * 11,
        out_specs=vmem,
    )(x, p["fc1_w"], p["fc1_b"], p["fc2_w"], p["fc2_b"], p["fc3_w"], p["fc3_b"],
      p["fc4_w"], p["fc4_b"], p["out_w"], p["out_b"])
    return out[:M]


# ---------------------------------------------------------------------------
# Glue: im2col conv (matmul+bias+ReLU runs in the Pallas kernel)
# ---------------------------------------------------------------------------
# TODO(synk): the im2col patch extraction below is plain-JAX glue; it could be
# fused into the conv kernel (in-VMEM shifted-slice accumulation) to remove the
# patch materialization in HBM for conv1/conv2.
def conv2d_relu(x_nhwc, wmat, bias_row, k, stride, oc):
    n, h, wd, c = x_nhwc.shape
    oh = (h - k) // stride + 1
    ow = (wd - k) // stride + 1
    cols = []
    for i in range(k):
        for j in range(k):
            sl = x_nhwc[:, i:i + (oh - 1) * stride + 1:stride,
                           j:j + (ow - 1) * stride + 1:stride, :]
            cols.append(sl)
    patches = jnp.stack(cols, axis=3)                    # [n, oh, ow, k*k, c]
    a = patches.reshape(n * oh * ow, k * k * c)
    y = matmul_bias(a, wmat, bias_row, apply_relu=True)  # [M, Np]
    return y[:, :oc].reshape(n, oh, ow, oc)


def fold_bn_into_conv1(x_nchw, wmat_f32, b1_row, gamma, beta, k, eps=1e-5):
    # nn.BatchNorm2d (training mode, biased variance) folded into conv1:
    #   BN(x)[c] = x*scale[c] + shift[c]  =>  scale weight rows, adjust bias.
    mean = jnp.mean(x_nchw, axis=(0, 2, 3))
    var = jnp.var(x_nchw, axis=(0, 2, 3))
    scale = gamma / jnp.sqrt(var + eps)                  # [ic]
    shift = beta - mean * scale                          # [ic]
    scale_rows = jnp.tile(scale, k * k)[:, None]         # [k*k*ic, 1]
    shift_rows = jnp.tile(shift, k * k)[:, None]
    w_eff = (wmat_f32 * scale_rows).astype(jnp.bfloat16)
    b_eff = b1_row + jnp.sum(wmat_f32 * shift_rows, axis=0, keepdims=True)
    return w_eff, b_eff


# ---------------------------------------------------------------------------
# Deterministic parameter init; weights pre-packed to [K, N(pad 128)] bf16
# ---------------------------------------------------------------------------
def _uniform(key, shape, fan_in):
    bound = 1.0 / jnp.sqrt(jnp.float32(fan_in))
    return jax.random.uniform(key, shape, jnp.float32, -bound, bound)


def init_params(key):
    ks = jax.random.split(key, 32)
    p = {}
    p["bn_gamma"] = jnp.ones((3,), jnp.float32)
    p["bn_beta"] = jnp.zeros((3,), jnp.float32)

    conv_cfg = [  # (name, oc, ic, k)
        ("1", 24, 3, 5), ("2", 36, 24, 5), ("3", 48, 36, 5),
        ("4", 64, 48, 3), ("5", 64, 64, 3),
    ]
    ki = 0
    for name, oc, ic, k in conv_cfg:
        fan = ic * k * k
        w = _uniform(ks[ki], (oc, ic, k, k), fan); ki += 1
        b = _uniform(ks[ki], (oc,), fan); ki += 1
        ocp = _round_up(oc, 128)
        wmat = jnp.transpose(w, (2, 3, 1, 0)).reshape(k * k * ic, oc)
        wmat = jnp.pad(wmat, ((0, 0), (0, ocp - oc)))
        if name == "1":
            p["w1_mat"] = wmat                            # kept f32 for BN folding
        else:
            p[f"w{name}_mat"] = wmat.astype(jnp.bfloat16)
        p[f"b{name}_row"] = jnp.pad(b, (0, ocp - oc)).reshape(1, ocp)

    fc_cfg = [("fc1", 1164, 1152), ("fc2", 100, 1164),
              ("fc3", 50, 100), ("fc4", 10, 50), ("out", 5, 10)]
    kp_prev = 1152                                        # chained padded widths
    for name, out_f, in_f in fc_cfg:
        w = _uniform(ks[ki], (out_f, in_f), in_f); ki += 1
        b = _uniform(ks[ki], (out_f,), in_f); ki += 1
        np_ = _round_up(out_f, 128)
        wT = jnp.pad(w.T, ((0, kp_prev - in_f), (0, np_ - out_f)))
        p[f"{name}_w"] = wT.astype(jnp.bfloat16)          # [Kp, Np]
        p[f"{name}_b"] = jnp.pad(b, (0, np_ - out_f)).reshape(1, np_)
        kp_prev = np_
    return p


# ---------------------------------------------------------------------------
# Forward pass (mirrors nvidia.forward)
# ---------------------------------------------------------------------------
def nvidia_forward(params, x_nchw):
    n = x_nchw.shape[0]
    w1, b1 = fold_bn_into_conv1(x_nchw, params["w1_mat"], params["b1_row"],
                                params["bn_gamma"], params["bn_beta"], k=5)
    x = jnp.transpose(x_nchw, (0, 2, 3, 1)).astype(jnp.bfloat16)   # NCHW -> NHWC
    x = conv2d_relu(x, w1, b1, k=5, stride=2, oc=24)
    x = conv2d_relu(x, params["w2_mat"], params["b2_row"], k=5, stride=2, oc=36)
    x = conv2d_relu(x, params["w3_mat"], params["b3_row"], k=5, stride=2, oc=48)
    x = conv2d_relu(x, params["w4_mat"], params["b4_row"], k=3, stride=1, oc=64)
    x = conv2d_relu(x, params["w5_mat"], params["b5_row"], k=3, stride=1, oc=64)
    # match PyTorch x.view(N, -1) on an NCHW tensor (channel-major flatten)
    x = jnp.transpose(x, (0, 3, 1, 2)).reshape(n, -1)              # [N, 1152]
    out = fc_stack(x, params)                                      # [N, 128]
    return out[:, :5]


if __name__ == "__main__":
    key = jax.random.PRNGKey(0)
    kp, kx = jax.random.split(key)
    params = init_params(kp)
    # NVIDIA DAVE-2 input size (forced by FC1 expecting 64*18 features)
    x = jax.random.normal(kx, (2, 3, 66, 200), jnp.float32)
    fwd = jax.jit(nvidia_forward)
    y = fwd(params, x)
    jax.block_until_ready(y)
    assert y.shape == (2, 5)
    print("KERNEL_OK")
</pallas_src>

<mosaic_0001>
module attributes {stable_mosaic.version = 11 : i64} {
  func.func @_matmul_bias_kernel(%arg0: i32, %arg1: memref<512x75xbf16, #tpu.memory_space<vmem>>, %arg2: memref<75x128xbf16, #tpu.memory_space<vmem>>, %arg3: memref<1x128xf32, #tpu.memory_space<vmem>>, %arg4: memref<512x128xbf16, #tpu.memory_space<vmem>>) attributes {dimension_semantics = [#tpu.dimension_semantics<parallel>], iteration_bounds = array<i64: 12>, scalar_prefetch = 0 : i64, scratch_operands = 0 : i64, tpu.core_type = #tpu.core_type<tc>, window_params = [{transform_indices = @transform_0, window_bounds = array<i64: 512, 75>}, {pipeline_mode = #tpu.pipeline_mode<synchronous>, transform_indices = @transform_1, window_bounds = array<i64: 75, 128>}, {pipeline_mode = #tpu.pipeline_mode<synchronous>, transform_indices = @transform_2, window_bounds = array<i64: 1, 128>}, {transform_indices = @transform_3, window_bounds = array<i64: 512, 128>}]} {
    %c0 = arith.constant 0 : index
    %c0_0 = arith.constant 0 : index
    %0 = vector.load %arg1[%c0, %c0_0] : memref<512x75xbf16, #tpu.memory_space<vmem>>, vector<512x75xbf16>
    %c0_1 = arith.constant 0 : index
    %c0_2 = arith.constant 0 : index
    %1 = vector.load %arg2[%c0_1, %c0_2] : memref<75x128xbf16, #tpu.memory_space<vmem>>, vector<75x128xbf16>
    %cst = arith.constant dense<0.000000e+00> : vector<512x128xf32>
    %2 = tpu.matmul %0, %1, %cst {dimension_numbers = #tpu.dot_dimension_numbers<[1], [0], [0], [1], [0, 0, 1, 1], [], []>} : vector<512x75xbf16>, vector<75x128xbf16>, vector<512x128xf32> -> vector<512x128xf32>
    %c0_3 = arith.constant 0 : index
    %c0_4 = arith.constant 0 : index
    %3 = vector.load %arg3[%c0_3, %c0_4] : memref<1x128xf32, #tpu.memory_space<vmem>>, vector<1x128xf32>
    %4 = vector.broadcast %3 : vector<1x128xf32> to vector<512x128xf32>
    %5 = arith.addf %2, %4 : vector<512x128xf32>
    %cst_5 = arith.constant 0.000000e+00 : f32
    %6 = vector.broadcast %cst_5 : f32 to vector<512x128xf32>
    %7 = arith.maximumf %5, %6 : vector<512x128xf32>
    %8 = arith.truncf %7 : vector<512x128xf32> to vector<512x128xbf16>
    %c0_6 = arith.constant 0 : index
    %c0_7 = arith.constant 0 : index
    %9 = vector.load %arg4[%c0_6, %c0_7] : memref<512x128xbf16, #tpu.memory_space<vmem>>, vector<512x128xbf16>
    tpu.vector_store %arg4[%c0_6, %c0_7], %8 {strides = array<i32>} : memref<512x128xbf16, #tpu.memory_space<vmem>>, vector<512x128xbf16>,
    return
  }
  func.func @transform_0(%arg0: i32) -> (i32, i32) {
    %c0_i32 = arith.constant 0 : i32
    %c0_i32_0 = arith.constant 0 : i32
    return %arg0, %c0_i32 : i32, i32
  }
  func.func @transform_1(%arg0: i32) -> (i32, i32) {
    %c0_i32 = arith.constant 0 : i32
    %c0_i32_0 = arith.constant 0 : i32
    %c0_i32_1 = arith.constant 0 : i32
    return %c0_i32, %c0_i32_0 : i32, i32
  }
  func.func @transform_2(%arg0: i32) -> (i32, i32) {
    %c0_i32 = arith.constant 0 : i32
    %c0_i32_0 = arith.constant 0 : i32
    %c0_i32_1 = arith.constant 0 : i32
    return %c0_i32, %c0_i32_0 : i32, i32
  }
  func.func @transform_3(%arg0: i32) -> (i32, i32) {
    %c0_i32 = arith.constant 0 : i32
    %c0_i32_0 = arith.constant 0 : i32
    return %arg0, %c0_i32 : i32, i32
  }
}

module attributes {stable_mosaic.version = 11 : i64} {
  func.func @_matmul_bias_kernel(%arg0: i32, %arg1: memref<512x600xbf16, #tpu.memory_space<vmem>>, %arg2: memref<600x128xbf16, #tpu.memory_space<vmem>>, %arg3: memref<1x128xf32, #tpu.memory_space<vmem>>, %arg4: memref<512x128xbf16, #tpu.memory_space<vmem>>) attributes {dimension_semantics = [#tpu.dimension_semantics<parallel>], iteration_bounds = array<i64: 3>, scalar_prefetch = 0 : i64, scratch_operands = 0 : i64, tpu.core_type = #tpu.core_type<tc>, window_params = [{transform_indices = @transform_0, window_bounds = array<i64: 512, 600>}, {pipeline_mode = #tpu.pipeline_mode<synchronous>, transform_indices = @transform_1, window_bounds = array<i64: 600, 128>}, {pipeline_mode = #tpu.pipeline_mode<synchronous>, transform_indices = @transform_2, window_bounds = array<i64: 1, 128>}, {transform_indices = @transform_3, window_bounds = array<i64: 512, 128>}]} {
    %c0 = arith.constant 0 : index
    %c0_0 = arith.constant 0 : index
    %0 = vector.load %arg1[%c0, %c0_0] : memref<512x600xbf16, #tpu.memory_space<vmem>>, vector<512x600xbf16>
    %c0_1 = arith.constant 0 : index
    %c0_2 = arith.constant 0 : index
    %1 = vector.load %arg2[%c0_1, %c0_2] : memref<600x128xbf16, #tpu.memory_space<vmem>>, vector<600x128xbf16>
    %cst = arith.constant dense<0.000000e+00> : vector<512x128xf32>
    %2 = tpu.matmul %0, %1, %cst {dimension_numbers = #tpu.dot_dimension_numbers<[1], [0], [0], [1], [0, 0, 1, 1], [], []>} : vector<512x600xbf16>, vector<600x128xbf16>, vector<512x128xf32> -> vector<512x128xf32>
    %c0_3 = arith.constant 0 : index
    %c0_4 = arith.constant 0 : index
    %3 = vector.load %arg3[%c0_3, %c0_4] : memref<1x128xf32, #tpu.memory_space<vmem>>, vector<1x128xf32>
    %4 = vector.broadcast %3 : vector<1x128xf32> to vector<512x128xf32>
    %5 = arith.addf %2, %4 : vector<512x128xf32>
    %cst_5 = arith.constant 0.000000e+00 : f32
    %6 = vector.broadcast %cst_5 : f32 to vector<512x128xf32>
    %7 = arith.maximumf %5, %6 : vector<512x128xf32>
    %8 = arith.truncf %7 : vector<512x128xf32> to vector<512x128xbf16>
    %c0_6 = arith.constant 0 : index
    %c0_7 = arith.constant 0 : index
    %9 = vector.load %arg4[%c0_6, %c0_7] : memref<512x128xbf16, #tpu.memory_space<vmem>>, vector<512x128xbf16>
    tpu.vector_store %arg4[%c0_6, %c0_7], %8 {strides = array<i32>} : memref<512x128xbf16, #tpu.memory_space<vmem>>, vector<512x128xbf16>,
    return
  }
  func.func @transform_0(%arg0: i32) -> (i32, i32) {
    %c0_i32 = arith.constant 0 : i32
    %c0_i32_0 = arith.constant 0 : i32
    return %arg0, %c0_i32 : i32, i32
  }
  func.func @transform_1(%arg0: i32) -> (i32, i32) {
    %c0_i32 = arith.constant 0 : i32
    %c0_i32_0 = arith.constant 0 : i32
    %c0_i32_1 = arith.constant 0 : i32
    return %c0_i32, %c0_i32_0 : i32, i32
  }
  func.func @transform_2(%arg0: i32) -> (i32, i32) {
    %c0_i32 = arith.constant 0 : i32
    %c0_i32_0 = arith.constant 0 : i32
    %c0_i32_1 = arith.constant 0 : i32
    return %c0_i32, %c0_i32_0 : i32, i32
  }
  func.func @transform_3(%arg0: i32) -> (i32, i32) {
    %c0_i32 = arith.constant 0 : i32
    %c0_i32_0 = arith.constant 0 : i32
    return %arg0, %c0_i32 : i32, i32
  }
}

module attributes {stable_mosaic.version = 11 : i64} {
  func.func @_matmul_bias_kernel(%arg0: i32, %arg1: memref<224x900xbf16, #tpu.memory_space<vmem>>, %arg2: memref<900x128xbf16, #tpu.memory_space<vmem>>, %arg3: memref<1x128xf32, #tpu.memory_space<vmem>>, %arg4: memref<224x128xbf16, #tpu.memory_space<vmem>>) attributes {dimension_semantics = [#tpu.dimension_semantics<parallel>], iteration_bounds = array<i64: 1>, scalar_prefetch = 0 : i64, scratch_operands = 0 : i64, tpu.core_type = #tpu.core_type<tc>, window_params = [{transform_indices = @transform_0, window_bounds = array<i64: 224, 900>}, {pipeline_mode = #tpu.pipeline_mode<synchronous>, transform_indices = @transform_1, window_bounds = array<i64: 900, 128>}, {pipeline_mode = #tpu.pipeline_mode<synchronous>, transform_indices = @transform_2, window_bounds = array<i64: 1, 128>}, {transform_indices = @transform_3, window_bounds = array<i64: 224, 128>}]} {
    %c0 = arith.constant 0 : index
    %c0_0 = arith.constant 0 : index
    %0 = vector.load %arg1[%c0, %c0_0] : memref<224x900xbf16, #tpu.memory_space<vmem>>, vector<224x900xbf16>
    %c0_1 = arith.constant 0 : index
    %c0_2 = arith.constant 0 : index
    %1 = vector.load %arg2[%c0_1, %c0_2] : memref<900x128xbf16, #tpu.memory_space<vmem>>, vector<900x128xbf16>
    %cst = arith.constant dense<0.000000e+00> : vector<224x128xf32>
    %2 = tpu.matmul %0, %1, %cst {dimension_numbers = #tpu.dot_dimension_numbers<[1], [0], [0], [1], [0, 0, 1, 1], [], []>} : vector<224x900xbf16>, vector<900x128xbf16>, vector<224x128xf32> -> vector<224x128xf32>
    %c0_3 = arith.constant 0 : index
    %c0_4 = arith.constant 0 : index
    %3 = vector.load %arg3[%c0_3, %c0_4] : memref<1x128xf32, #tpu.memory_space<vmem>>, vector<1x128xf32>
    %4 = vector.broadcast %3 : vector<1x128xf32> to vector<224x128xf32>
    %5 = arith.addf %2, %4 : vector<224x128xf32>
    %cst_5 = arith.constant 0.000000e+00 : f32
    %6 = vector.broadcast %cst_5 : f32 to vector<224x128xf32>
    %7 = arith.maximumf %5, %6 : vector<224x128xf32>
    %8 = arith.truncf %7 : vector<224x128xf32> to vector<224x128xbf16>
    %c0_6 = arith.constant 0 : index
    %c0_7 = arith.constant 0 : index
    %9 = vector.load %arg4[%c0_6, %c0_7] : memref<224x128xbf16, #tpu.memory_space<vmem>>, vector<224x128xbf16>
    tpu.vector_store %arg4[%c0_6, %c0_7], %8 {strides = array<i32>} : memref<224x128xbf16, #tpu.memory_space<vmem>>, vector<224x128xbf16>,
    return
  }
  func.func @transform_0(%arg0: i32) -> (i32, i32) {
    %c0_i32 = arith.constant 0 : i32
    %c0_i32_0 = arith.constant 0 : i32
    return %arg0, %c0_i32 : i32, i32
  }
  func.func @transform_1(%arg0: i32) -> (i32, i32) {
    %c0_i32 = arith.constant 0 : i32
    %c0_i32_0 = arith.constant 0 : i32
    %c0_i32_1 = arith.constant 0 : i32
    return %c0_i32, %c0_i32_0 : i32, i32
  }
  func.func @transform_2(%arg0: i32) -> (i32, i32) {
    %c0_i32 = arith.constant 0 : i32
    %c0_i32_0 = arith.constant 0 : i32
    %c0_i32_1 = arith.constant 0 : i32
    return %c0_i32, %c0_i32_0 : i32, i32
  }
  func.func @transform_3(%arg0: i32) -> (i32, i32) {
    %c0_i32 = arith.constant 0 : i32
    %c0_i32_0 = arith.constant 0 : i32
    return %arg0, %c0_i32 : i32, i32
  }
}

module attributes {stable_mosaic.version = 11 : i64} {
  func.func @_matmul_bias_kernel(%arg0: i32, %arg1: memref<120x432xbf16, #tpu.memory_space<vmem>>, %arg2: memref<432x128xbf16, #tpu.memory_space<vmem>>, %arg3: memref<1x128xf32, #tpu.memory_space<vmem>>, %arg4: memref<120x128xbf16, #tpu.memory_space<vmem>>) attributes {dimension_semantics = [#tpu.dimension_semantics<parallel>], iteration_bounds = array<i64: 1>, scalar_prefetch = 0 : i64, scratch_operands = 0 : i64, tpu.core_type = #tpu.core_type<tc>, window_params = [{transform_indices = @transform_0, window_bounds = array<i64: 120, 432>}, {pipeline_mode = #tpu.pipeline_mode<synchronous>, transform_indices = @transform_1, window_bounds = array<i64: 432, 128>}, {pipeline_mode = #tpu.pipeline_mode<synchronous>, transform_indices = @transform_2, window_bounds = array<i64: 1, 128>}, {transform_indices = @transform_3, window_bounds = array<i64: 120, 128>}]} {
    %c0 = arith.constant 0 : index
    %c0_0 = arith.constant 0 : index
    %0 = vector.load %arg1[%c0, %c0_0] : memref<120x432xbf16, #tpu.memory_space<vmem>>, vector<120x432xbf16>
    %c0_1 = arith.constant 0 : index
    %c0_2 = arith.constant 0 : index
    %1 = vector.load %arg2[%c0_1, %c0_2] : memref<432x128xbf16, #tpu.memory_space<vmem>>, vector<432x128xbf16>
    %cst = arith.constant dense<0.000000e+00> : vector<120x128xf32>
    %2 = tpu.matmul %0, %1, %cst {dimension_numbers = #tpu.dot_dimension_numbers<[1], [0], [0], [1], [0, 0, 1, 1], [], []>} : vector<120x432xbf16>, vector<432x128xbf16>, vector<120x128xf32> -> vector<120x128xf32>
    %c0_3 = arith.constant 0 : index
    %c0_4 = arith.constant 0 : index
    %3 = vector.load %arg3[%c0_3, %c0_4] : memref<1x128xf32, #tpu.memory_space<vmem>>, vector<1x128xf32>
    %4 = vector.broadcast %3 : vector<1x128xf32> to vector<120x128xf32>
    %5 = arith.addf %2, %4 : vector<120x128xf32>
    %cst_5 = arith.constant 0.000000e+00 : f32
    %6 = vector.broadcast %cst_5 : f32 to vector<120x128xf32>
    %7 = arith.maximumf %5, %6 : vector<120x128xf32>
    %8 = arith.truncf %7 : vector<120x128xf32> to vector<120x128xbf16>
    %c0_6 = arith.constant 0 : index
    %c0_7 = arith.constant 0 : index
    %9 = vector.load %arg4[%c0_6, %c0_7] : memref<120x128xbf16, #tpu.memory_space<vmem>>, vector<120x128xbf16>
    tpu.vector_store %arg4[%c0_6, %c0_7], %8 {strides = array<i32>} : memref<120x128xbf16, #tpu.memory_space<vmem>>, vector<120x128xbf16>,
    return
  }
  func.func @transform_0(%arg0: i32) -> (i32, i32) {
    %c0_i32 = arith.constant 0 : i32
    %c0_i32_0 = arith.constant 0 : i32
    return %arg0, %c0_i32 : i32, i32
  }
  func.func @transform_1(%arg0: i32) -> (i32, i32) {
    %c0_i32 = arith.constant 0 : i32
    %c0_i32_0 = arith.constant 0 : i32
    %c0_i32_1 = arith.constant 0 : i32
    return %c0_i32, %c0_i32_0 : i32, i32
  }
  func.func @transform_2(%arg0: i32) -> (i32, i32) {
    %c0_i32 = arith.constant 0 : i32
    %c0_i32_0 = arith.constant 0 : i32
    %c0_i32_1 = arith.constant 0 : i32
    return %c0_i32, %c0_i32_0 : i32, i32
  }
  func.func @transform_3(%arg0: i32) -> (i32, i32) {
    %c0_i32 = arith.constant 0 : i32
    %c0_i32_0 = arith.constant 0 : i32
    return %arg0, %c0_i32 : i32, i32
  }
}

module attributes {stable_mosaic.version = 11 : i64} {
  func.func @_matmul_bias_kernel(%arg0: i32, %arg1: memref<40x576xbf16, #tpu.memory_space<vmem>>, %arg2: memref<576x128xbf16, #tpu.memory_space<vmem>>, %arg3: memref<1x128xf32, #tpu.memory_space<vmem>>, %arg4: memref<40x128xbf16, #tpu.memory_space<vmem>>) attributes {dimension_semantics = [#tpu.dimension_semantics<parallel>], iteration_bounds = array<i64: 1>, scalar_prefetch = 0 : i64, scratch_operands = 0 : i64, tpu.core_type = #tpu.core_type<tc>, window_params = [{transform_indices = @transform_0, window_bounds = array<i64: 40, 576>}, {pipeline_mode = #tpu.pipeline_mode<synchronous>, transform_indices = @transform_1, window_bounds = array<i64: 576, 128>}, {pipeline_mode = #tpu.pipeline_mode<synchronous>, transform_indices = @transform_2, window_bounds = array<i64: 1, 128>}, {transform_indices = @transform_3, window_bounds = array<i64: 40, 128>}]} {
    %c0 = arith.constant 0 : index
    %c0_0 = arith.constant 0 : index
    %0 = vector.load %arg1[%c0, %c0_0] : memref<40x576xbf16, #tpu.memory_space<vmem>>, vector<40x576xbf16>
    %c0_1 = arith.constant 0 : index
    %c0_2 = arith.constant 0 : index
    %1 = vector.load %arg2[%c0_1, %c0_2] : memref<576x128xbf16, #tpu.memory_space<vmem>>, vector<576x128xbf16>
    %cst = arith.constant dense<0.000000e+00> : vector<40x128xf32>
    %2 = tpu.matmul %0, %1, %cst {dimension_numbers = #tpu.dot_dimension_numbers<[1], [0], [0], [1], [0, 0, 1, 1], [], []>} : vector<40x576xbf16>, vector<576x128xbf16>, vector<40x128xf32> -> vector<40x128xf32>
    %c0_3 = arith.constant 0 : index
    %c0_4 = arith.constant 0 : index
    %3 = vector.load %arg3[%c0_3, %c0_4] : memref<1x128xf32, #tpu.memory_space<vmem>>, vector<1x128xf32>
    %4 = vector.broadcast %3 : vector<1x128xf32> to vector<40x128xf32>
    %5 = arith.addf %2, %4 : vector<40x128xf32>
    %cst_5 = arith.constant 0.000000e+00 : f32
    %6 = vector.broadcast %cst_5 : f32 to vector<40x128xf32>
    %7 = arith.maximumf %5, %6 : vector<40x128xf32>
    %8 = arith.truncf %7 : vector<40x128xf32> to vector<40x128xbf16>
    %c0_6 = arith.constant 0 : index
    %c0_7 = arith.constant 0 : index
    %9 = vector.load %arg4[%c0_6, %c0_7] : memref<40x128xbf16, #tpu.memory_space<vmem>>, vector<40x128xbf16>
    tpu.vector_store %arg4[%c0_6, %c0_7], %8 {strides = array<i32>} : memref<40x128xbf16, #tpu.memory_space<vmem>>, vector<40x128xbf16>,
    return
  }
  func.func @transform_0(%arg0: i32) -> (i32, i32) {
    %c0_i32 = arith.constant 0 : i32
    %c0_i32_0 = arith.constant 0 : i32
    return %arg0, %c0_i32 : i32, i32
  }
  func.func @transform_1(%arg0: i32) -> (i32, i32) {
    %c0_i32 = arith.constant 0 : i32
    %c0_i32_0 = arith.constant 0 : i32
    %c0_i32_1 = arith.constant 0 : i32
    return %c0_i32, %c0_i32_0 : i32, i32
  }
  func.func @transform_2(%arg0: i32) -> (i32, i32) {
    %c0_i32 = arith.constant 0 : i32
    %c0_i32_0 = arith.constant 0 : i32
    %c0_i32_1 = arith.constant 0 : i32
    return %c0_i32, %c0_i32_0 : i32, i32
  }
  func.func @transform_3(%arg0: i32) -> (i32, i32) {
    %c0_i32 = arith.constant 0 : i32
    %c0_i32_0 = arith.constant 0 : i32
    return %arg0, %c0_i32 : i32, i32
  }
}

module attributes {stable_mosaic.version = 11 : i64} {
  func.func @_fc_stack_kernel(%arg0: memref<8x1152xbf16, #tpu.memory_space<vmem>>, %arg1: memref<1152x1280xbf16, #tpu.memory_space<vmem>>, %arg2: memref<1x1280xf32, #tpu.memory_space<vmem>>, %arg3: memref<1280x128xbf16, #tpu.memory_space<vmem>>, %arg4: memref<1x128xf32, #tpu.memory_space<vmem>>, %arg5: memref<128x128xbf16, #tpu.memory_space<vmem>>, %arg6: memref<1x128xf32, #tpu.memory_space<vmem>>, %arg7: memref<128x128xbf16, #tpu.memory_space<vmem>>, %arg8: memref<1x128xf32, #tpu.memory_space<vmem>>, %arg9: memref<128x128xbf16, #tpu.memory_space<vmem>>, %arg10: memref<1x128xf32, #tpu.memory_space<vmem>>, %arg11: memref<8x128xf32, #tpu.memory_space<vmem>>) attributes {dimension_semantics = [], scalar_prefetch = 0 : i64, scratch_operands = 0 : i64, tpu.core_type = #tpu.core_type<tc>} {
    %c0 = arith.constant 0 : index
    %c0_0 = arith.constant 0 : index
    %0 = vector.load %arg0[%c0, %c0_0] : memref<8x1152xbf16, #tpu.memory_space<vmem>>, vector<8x1152xbf16>
    %c0_1 = arith.constant 0 : index
    %c0_2 = arith.constant 0 : index
    %1 = vector.load %arg1[%c0_1, %c0_2] : memref<1152x1280xbf16, #tpu.memory_space<vmem>>, vector<1152x1280xbf16>
    %cst = arith.constant dense<0.000000e+00> : vector<8x1280xf32>
    %2 = tpu.matmul %0, %1, %cst {dimension_numbers = #tpu.dot_dimension_numbers<[1], [0], [0], [1], [0, 0, 1, 1], [], []>} : vector<8x1152xbf16>, vector<1152x1280xbf16>, vector<8x1280xf32> -> vector<8x1280xf32>
    %c0_3 = arith.constant 0 : index
    %c0_4 = arith.constant 0 : index
    %3 = vector.load %arg2[%c0_3, %c0_4] : memref<1x1280xf32, #tpu.memory_space<vmem>>, vector<1x1280xf32>
    %4 = vector.broadcast %3 : vector<1x1280xf32> to vector<8x1280xf32>
    %5 = arith.addf %2, %4 : vector<8x1280xf32>
    %cst_5 = arith.constant 0.000000e+00 : f32
    %6 = vector.broadcast %cst_5 : f32 to vector<8x1280xf32>
    %7 = arith.maximumf %5, %6 : vector<8x1280xf32>
    %8 = arith.truncf %7 : vector<8x1280xf32> to vector<8x1280xbf16>
    %c0_6 = arith.constant 0 : index
    %c0_7 = arith.constant 0 : index
    %9 = vector.load %arg3[%c0_6, %c0_7] : memref<1280x128xbf16, #tpu.memory_space<vmem>>, vector<1280x128xbf16>
    %cst_8 = arith.constant dense<0.000000e+00> : vector<8x128xf32>
    %10 = tpu.matmul %8, %9, %cst_8 {dimension_numbers = #tpu.dot_dimension_numbers<[1], [0], [0], [1], [0, 0, 1, 1], [], []>} : vector<8x1280xbf16>, vector<1280x128xbf16>, vector<8x128xf32> -> vector<8x128xf32>
    %c0_9 = arith.constant 0 : index
    %c0_10 = arith.constant 0 : index
    %11 = vector.load %arg4[%c0_9, %c0_10] : memref<1x128xf32, #tpu.memory_space<vmem>>, vector<1x128xf32>
    %12 = vector.broadcast %11 : vector<1x128xf32> to vector<8x128xf32>
    %13 = arith.addf %10, %12 : vector<8x128xf32>
    %cst_11 = arith.constant 0.000000e+00 : f32
    %14 = vector.broadcast %cst_11 : f32 to vector<8x128xf32>
    %15 = arith.maximumf %13, %14 : vector<8x128xf32>
    %16 = arith.truncf %15 : vector<8x128xf32> to vector<8x128xbf16>
    %c0_12 = arith.constant 0 : index
    %c0_13 = arith.constant 0 : index
    %17 = vector.load %arg5[%c0_12, %c0_13] : memref<128x128xbf16, #tpu.memory_space<vmem>>, vector<128x128xbf16>
    %cst_14 = arith.constant dense<0.000000e+00> : vector<8x128xf32>
    %18 = tpu.matmul %16, %17, %cst_14 {dimension_numbers = #tpu.dot_dimension_numbers<[1], [0], [0], [1], [0, 0, 1, 1], [], []>} : vector<8x128xbf16>, vector<128x128xbf16>, vector<8x128xf32> -> vector<8x128xf32>
    %c0_15 = arith.constant 0 : index
    %c0_16 = arith.constant 0 : index
    %19 = vector.load %arg6[%c0_15, %c0_16] : memref<1x128xf32, #tpu.memory_space<vmem>>, vector<1x128xf32>
    %20 = vector.broadcast %19 : vector<1x128xf32> to vector<8x128xf32>
    %21 = arith.addf %18, %20 : vector<8x128xf32>
    %cst_17 = arith.constant 0.000000e+00 : f32
    %22 = vector.broadcast %cst_17 : f32 to vector<8x128xf32>
    %23 = arith.maximumf %21, %22 : vector<8x128xf32>
    %24 = arith.truncf %23 : vector<8x128xf32> to vector<8x128xbf16>
    %c0_18 = arith.constant 0 : index
    %c0_19 = arith.constant 0 : index
    %25 = vector.load %arg7[%c0_18, %c0_19] : memref<128x128xbf16, #tpu.memory_space<vmem>>, vector<128x128xbf16>
    %cst_20 = arith.constant dense<0.000000e+00> : vector<8x128xf32>
    %26 = tpu.matmul %24, %25, %cst_20 {dimension_numbers = #tpu.dot_dimension_numbers<[1], [0], [0], [1], [0, 0, 1, 1], [], []>} : vector<8x128xbf16>, vector<128x128xbf16>, vector<8x128xf32> -> vector<8x128xf32>
    %c0_21 = arith.constant 0 : index
    %c0_22 = arith.constant 0 : index
    %27 = vector.load %arg8[%c0_21, %c0_22] : memref<1x128xf32, #tpu.memory_space<vmem>>, vector<1x128xf32>
    %28 = vector.broadcast %27 : vector<1x128xf32> to vector<8x128xf32>
    %29 = arith.addf %26, %28 : vector<8x128xf32>
    %cst_23 = arith.constant 0.000000e+00 : f32
    %30 = vector.broadcast %cst_23 : f32 to vector<8x128xf32>
    %31 = arith.maximumf %29, %30 : vector<8x128xf32>
    %32 = arith.truncf %31 : vector<8x128xf32> to vector<8x128xbf16>
    %c0_24 = arith.constant 0 : index
    %c0_25 = arith.constant 0 : index
    %33 = vector.load %arg9[%c0_24, %c0_25] : memref<128x128xbf16, #tpu.memory_space<vmem>>, vector<128x128xbf16>
    %cst_26 = arith.constant dense<0.000000e+00> : vector<8x128xf32>
    %34 = tpu.matmul %32, %33, %cst_26 {dimension_numbers = #tpu.dot_dimension_numbers<[1], [0], [0], [1], [0, 0, 1, 1], [], []>} : vector<8x128xbf16>, vector<128x128xbf16>, vector<8x128xf32> -> vector<8x128xf32>
    %c0_27 = arith.constant 0 : index
    %c0_28 = arith.constant 0 : index
    %35 = vector.load %arg10[%c0_27, %c0_28] : memref<1x128xf32, #tpu.memory_space<vmem>>, vector<1x128xf32>
    %36 = vector.broadcast %35 : vector<1x128xf32> to vector<8x128xf32>
    %37 = arith.addf %34, %36 : vector<8x128xf32>
    %c0_29 = arith.constant 0 : index
    %c0_30 = arith.constant 0 : index
    %38 = vector.load %arg11[%c0_29, %c0_30] : memref<8x128xf32, #tpu.memory_space<vmem>>, vector<8x128xf32>
    tpu.vector_store %arg11[%c0_29, %c0_30], %37 {strides = array<i32>} : memref<8x128xf32, #tpu.memory_space<vmem>>, vector<8x128xf32>,
    return
  }
}

</mosaic_0001>

<llo_original>
// kernel: tile.13
$region0: #{tile.13}
  #allocation0 [shape = 's32[1]{0}', space=sflag, size = 0x4, scoped, tag = 'scoped memory for tile.13']
  %s0 = inlined_call_operand.vmem [shape: f32[3], index: 0, kind: input, shape index: {}]
  %s1 = inlined_call_operand.vmem [shape: f32[25,3], index: 1, kind: output, shape index: {}]
  // Predicated region
  $region2: #{tile.13} parent=0 // pred_check
    _
  $region3: #{tile.13} parent=0 // pred_check_branch
    %3 = sbr.rel (0) target = $region5
  $region4: #{tile.13} parent=0 // pred_region
    _
  $region5: #{tile.13} parent=0 // pred_fallthru
    _
  %v4 = vld [vmem:[%s0] ss:$0 sm:$0xff]
  %5 = vst [vmem:[%s1] sm:$0xff] %v4
  %s6 = scalar_lea.vmem %s1, 8
  %7 = vst [vmem:[%s6] sm:$0xff] %v4
  %s8 = scalar_lea.vmem %s1, 16
  %9 = vst [vmem:[%s8] sm:$0xff] %v4
  %s10 = scalar_lea.vmem %s1, 24
  %11 = vst [vmem:[%s10] sm:$0xff] %v4

// kernel: mul.11
$region0: #{mul.11}
  %s0 = inlined_call_operand.vmem [shape: f32[25,3], index: 0, kind: input, shape index: {}]
  %s1 = inlined_call_operand.vmem [shape: f32[75], index: 1, kind: output, shape index: {}]
  $region1: #{mul.11} parent=0
    #allocation0 [shape = 'u8[4096]{0}', space=vmem, size = 0x1000, scoped, tag = 'scoped mem for output reshape']
    %v2 = vld [vmem:[%s0] sm:$0x1]
    %vm3 = vcmask 23552
    %4 = vst.msk [vmem:[#allocation0] sm:$0x1] %vm3, %v2
    %s5 = scalar_lea.vmem %s0, 24
    %v6 = vld [vmem:[%s5] sm:$0x1]
    %7 = vrot.lane.b32.xlu0 %v6, 72
    %v8 = vpop.permute.xlu0 %7
    %vm9 = vcmask 613952
    %10 = vst.msk [vmem:[#allocation0] sm:$0x1] %vm9, %v8
    %s11 = scalar_lea.vmem %s0, 23
    %v12 = vld [vmem:[%s11] sm:$0x1]
    %13 = vrot.lane.b32.xlu0 %v12, 69
    %v14 = vpop.permute.xlu0 %13
    %vm15 = vcmask 589352
    %16 = vst.msk [vmem:[#allocation0] sm:$0x1] %vm15, %v14
    %s17 = scalar_lea.vmem %s0, 22
    %v18 = vld [vmem:[%s17] sm:$0x1]
    %19 = vrot.lane.b32.xlu0 %v18, 66
    %v20 = vpop.permute.xlu0 %19
    %vm21 = vcmask 564752
    %22 = vst.msk [vmem:[#allocation0] sm:$0x1] %vm21, %v20
    %s23 = scalar_lea.vmem %s0, 21
    %v24 = vld [vmem:[%s23] sm:$0x1]
    %25 = vrot.lane.b32.xlu0 %v24, 63
    %v26 = vpop.permute.xlu0 %25
    %vm27 = vcmask 540152
    %28 = vst.msk [vmem:[#allocation0] sm:$0x1] %vm27, %v26
    %s29 = scalar_lea.vmem %s0, 20
    %v30 = vld [vmem:[%s29] sm:$0x1]
    %31 = vrot.lane.b32.xlu0 %v30, 60
    %v32 = vpop.permute.xlu0 %31
    %vm33 = vcmask 515552
    %34 = vst.msk [vmem:[#allocation0] sm:$0x1] %vm33, %v32
    %s35 = scalar_lea.vmem %s0, 19
    %v36 = vld [vmem:[%s35] sm:$0x1]
    %37 = vrot.lane.b32.xlu0 %v36, 57
    %v38 = vpop.permute.xlu0 %37
    %vm39 = vcmask 490952
    %40 = vst.msk [vmem:[#allocation0] sm:$0x1] %vm39, %v38
    %s41 = scalar_lea.vmem %s0, 18
    %v42 = vld [vmem:[%s41] sm:$0x1]
    %43 = vrot.lane.b32.xlu0 %v42, 54
    %v44 = vpop.permute.xlu0 %43
    %vm45 = vcmask 466352
    %46 = vst.msk [vmem:[#allocation0] sm:$0x1] %vm45, %v44
    %s47 = scalar_lea.vmem %s0, 17
    %v48 = vld [vmem:[%s47] sm:$0x1]
    %49 = vrot.lane.b32.xlu0 %v48, 51
    %v50 = vpop.permute.xlu0 %49
    %vm51 = vcmask 441752
    %52 = vst.msk [vmem:[#allocation0] sm:$0x1] %vm51, %v50
    %s53 = scalar_lea.vmem %s0, 16
    %v54 = vld [vmem:[%s53] sm:$0x1]
    %55 = vrot.lane.b32.xlu0 %v54, 48
    %v56 = vpop.permute.xlu0 %55
    %vm57 = vcmask 417152
    %58 = vst.msk [vmem:[#allocation0] sm:$0x1] %vm57, %v56
    %s59 = scalar_lea.vmem %s0, 15
    %v60 = vld [vmem:[%s59] sm:$0x1]
    %61 = vrot.lane.b32.xlu0 %v60, 45
    %v62 = vpop.permute.xlu0 %61
    %vm63 = vcmask 392552
    %64 = vst.msk [vmem:[#allocation0] sm:$0x1] %vm63, %v62
    %s65 = scalar_lea.vmem %s0, 14
    %v66 = vld [vmem:[%s65] sm:$0x1]
    %67 = vrot.lane.b32.xlu0 %v66, 42
    %v68 = vpop.permute.xlu0 %67
    %vm69 = vcmask 367952
    %70 = vst.msk [vmem:[#allocation0] sm:$0x1] %vm69, %v68
    %s71 = scalar_lea.vmem %s0, 13
    %v72 = vld [vmem:[%s71] sm:$0x1]
    %73 = vrot.lane.b32.xlu0 %v72, 39
    %v74 = vpop.permute.xlu0 %73
    %vm75 = vcmask 343352
    %76 = vst.msk [vmem:[#allocation0] sm:$0x1] %vm75, %v74
    %s77 = scalar_lea.vmem %s0, 12
    %v78 = vld [vmem:[%s77] sm:$0x1]
    %79 = vrot.lane.b32.xlu0 %v78, 36
    %v80 = vpop.permute.xlu0 %79
    %vm81 = vcmask 318752
    %82 = vst.msk [vmem:[#allocation0] sm:$0x1] %vm81, %v80
    %s83 = scalar_lea.vmem %s0, 11
    %v84 = vld [vmem:[%s83] sm:$0x1]
    %85 = vrot.lane.b32.xlu0 %v84, 33
    %v86 = vpop.permute.xlu0 %85
    %vm87 = vcmask 294152
    %88 = vst.msk [vmem:[#allocation0] sm:$0x1] %vm87, %v86
    %s89 = scalar_lea.vmem %s0, 10
    %v90 = vld [vmem:[%s89] sm:$0x1]
    %91 = vrot.lane.b32.xlu0 %v90, 30
    %v92 = vpop.permute.xlu0 %91
    %vm93 = vcmask 269552
    %94 = vst.msk [vmem:[#allocation0] sm:$0x1] %vm93, %v92
    %s95 = scalar_lea.vmem %s0, 9
    %v96 = vld [vmem:[%s95] sm:$0x1]
    %97 = vrot.lane.b32.xlu0 %v96, 27
    %v98 = vpop.permute.xlu0 %97
    %vm99 = vcmask 244952
    %100 = vst.msk [vmem:[#allocation0] sm:$0x1] %vm99, %v98
    %s101 = scalar_lea.vmem %s0, 8
    %v102 = vld [vmem:[%s101] sm:$0x1]
    %103 = vrot.lane.b32.xlu0 %v102, 24
    %v104 = vpop.permute.xlu0 %103
    %vm105 = vcmask 220352
    %106 = vst.msk [vmem:[#allocation0] sm:$0x1] %vm105, %v104
    %s107 = scalar_lea.vmem %s0, 7
    %v108 = vld [vmem:[%s107] sm:$0x1]
    %109 = vrot.lane.b32.xlu0 %v108, 21
    %v110 = vpop.permute.xlu0 %109
    %vm111 = vcmask 195752
    %112 = vst.msk [vmem:[#allocation0] sm:$0x1] %vm111, %v110
    %s113 = scalar_lea.vmem %s0, 6
    %v114 = vld [vmem:[%s113] sm:$0x1]
    %115 = vrot.lane.b32.xlu0 %v114, 18
    %v116 = vpop.permute.xlu0 %115
    %vm117 = vcmask 171152
    %118 = vst.msk [vmem:[#allocation0] sm:$0x1] %vm117, %v116
    %s119 = scalar_lea.vmem %s0, 5
    %v120 = vld [vmem:[%s119] sm:$0x1]
    %121 = vrot.lane.b32.xlu0 %v120, 15
    %v122 = vpop.permute.xlu0 %121
    %vm123 = vcmask 146552
    %124 = vst.msk [vmem:[#allocation0] sm:$0x1] %vm123, %v122
    %s125 = scalar_lea.vmem %s0, 4
    %v126 = vld [vmem:[%s125] sm:$0x1]
    %127 = vrot.lane.b32.xlu0 %v126, 12
    %v128 = vpop.permute.xlu0 %127
    %vm129 = vcmask 121952
    %130 = vst.msk [vmem:[#allocation0] sm:$0x1] %vm129, %v128
    %s131 = scalar_lea.vmem %s0, 3
    %v132 = vld [vmem:[%s131] sm:$0x1]
    %133 = vrot.lane.b32.xlu0 %v132, 9
    %v134 = vpop.permute.xlu0 %133
    %vm135 = vcmask 97352
    %136 = vst.msk [vmem:[#allocation0] sm:$0x1] %vm135, %v134
    %s137 = scalar_lea.vmem %s0, 2
    %v138 = vld [vmem:[%s137] sm:$0x1]
    %139 = vrot.lane.b32.xlu0 %v138, 6
    %v140 = vpop.permute.xlu0 %139
    %vm141 = vcmask 72752
    %142 = vst.msk [vmem:[#allocation0] sm:$0x1] %vm141, %v140
    %s143 = scalar_lea.vmem %s0, 1
    %v144 = vld [vmem:[%s143] sm:$0x1]
    %145 = vrot.lane.b32.xlu0 %v144, 3
    %v146 = vpop.permute.xlu0 %145
    %vm147 = vcmask 48152
    %148 = vst.msk [vmem:[#allocation0] sm:$0x1] %vm147, %v146
    %s150 = sshllo.u32 0, 1
    %v152 = vld [vmem:[#allocation0] sm:%s150]
    %s153 = sshllo.u32 0, 1
    %154 = vst [vmem:[%s1] sm:%s153] %v152

// kernel: nvidia_forward.6
$region0: #{nvidia_forward.6}
  #allocation0 [shape = 'u32[]', space=smem, size = 0x4, offset = 0x4, fixed_abs, tag = 'smem constant byte address 0x4 - core index']
  #allocation1 [shape = 'u32[144,128]{1,0:T(1,128)}', space=vmem, size = 0x12000, scoped, tag = 'internal scratch']
  %s0 = inlined_call_operand.vmem [shape: bf16[6144,75], index: 0, kind: input, shape index: {}]
  %s1 = inlined_call_operand.vmem [shape: bf16[75,128], index: 1, kind: input, shape index: {}]
  %s2 = inlined_call_operand.vmem [shape: f32[1,128], index: 2, kind: input, shape index: {}]
  %s3 = inlined_call_operand.vmem [shape: bf16[6144,128], index: 3, kind: output, shape index: {}]
  %s4 = sld [smem:[#allocation0]]
  $region45: #{nvidia_forward.6} parent=0
    _
  %s6 = ssub.s32 1, %s4
  %s7 = scalar_select 0, %s6, %s4
  loop: start=0, step=1, limit=14
  $region2: #{nvidia_forward.6} parent=0 // loop_pre_header
    _
  $region3: #{nvidia_forward.6} parent=0 // loop_header
    %s9 = sphi 0, %s13
    %p10 = scmp.ge.s32.totalorder %s9, 14
    %s19 = sphi 0, %s21
    %s22 = sphi 0, %s19
    %s23 = sphi 0, %s22
    %s39 = sphi 0, %s23
    %s43 = sphi 0, %s43
    %s45 = sphi 0, %s43
    %s46 = sphi 0, %s45
    %s60 = sphi 0, %s46
    %s64 = sphi 0, %s64
    %s66 = sphi 0, %s64
    %s67 = sphi 0, %s66
    %s81 = sphi 0, %s67
    %s87 = sphi 0, %s89
    %s90 = sphi 0, %s87
    %s91 = sphi 0, %s90
    %s107 = sphi 0, %s91
  $region4: #{nvidia_forward.6} parent=0 // loop_header_branch
    %12 = sbr.rel (%p10) target = $region8
  $region5: #{nvidia_forward.6} parent=0 // loop_body
    %s14 = ssub.s32 %s9, 1
    %s15 = ssub.s32 %s9, 2
    %s16 = sadd.s32 %s9, 1
    %s17 = ssub.s32 %s9, %s16
    %p18 = scmp.eq.s32.totalorder %s17, 0
    %s20 = sadd.s32 %s19, 1
    %s21 = scalar_select %p18, %s19, %s20
    %p24 = pneg %p18
    %p25 = scmp.eq.s32.totalorder %s9, 11
    %p26 = por %p24, %p25
    %p27 = scmp.ne.s32.totalorder %s19, %s22
    %p28 = scmp.eq.s32.totalorder %s9, 0
    %p29 = por %p27, %p28
    %p30 = scmp.ne.s32.totalorder %s19, %s22
    %p31 = scmp.eq.s32.totalorder %s14, 11
    %p32 = por %p30, %p31
    %p33 = scmp.ne.s32.totalorder %s22, %s23
    %p34 = scmp.eq.s32.totalorder %s14, 0
    %p35 = por %p33, %p34
    %p36 = scmp.ne.s32.totalorder %s22, %s23
    %p37 = scmp.eq.s32.totalorder %s15, 11
    %p38 = por %p36, %p37
    %p40 = scmp.ne.s32.totalorder %s23, %s39
    %p41 = scmp.eq.s32.totalorder %s15, 0
    %p42 = por %p40, %p41
    %s44 = sadd.s32 %s43, 1
    %p47 = scmp.eq.s32.totalorder %s9, 11
    %p48 = scmp.ne.s32.totalorder %s43, %s45
    %p49 = scmp.eq.s32.totalorder %s9, 0
    %p50 = por %p48, %p49
    %p51 = scmp.ne.s32.totalorder %s43, %s45
    %p52 = scmp.eq.s32.totalorder %s14, 11
    %p53 = por %p51, %p52
    %p54 = scmp.ne.s32.totalorder %s45, %s46
    %p55 = scmp.eq.s32.totalorder %s14, 0
    %p56 = por %p54, %p55
    %p57 = scmp.ne.s32.totalorder %s45, %s46
    %p58 = scmp.eq.s32.totalorder %s15, 11
    %p59 = por %p57, %p58
    %p61 = scmp.ne.s32.totalorder %s46, %s60
    %p62 = scmp.eq.s32.totalorder %s15, 0
    %p63 = por %p61, %p62
    %s65 = sadd.s32 %s64, 1
    %p68 = scmp.eq.s32.totalorder %s9, 11
    %p69 = scmp.ne.s32.totalorder %s64, %s66
    %p70 = scmp.eq.s32.totalorder %s9, 0
    %p71 = por %p69, %p70
    %p72 = scmp.ne.s32.totalorder %s64, %s66
    %p73 = scmp.eq.s32.totalorder %s14, 11
    %p74 = por %p72, %p73
    %p75 = scmp.ne.s32.totalorder %s66, %s67
    %p76 = scmp.eq.s32.totalorder %s14, 0
    %p77 = por %p75, %p76
    %p78 = scmp.ne.s32.totalorder %s66, %s67
    %p79 = scmp.eq.s32.totalorder %s15, 11
    %p80 = por %p78, %p79
    %p82 = scmp.ne.s32.totalorder %s67, %s81
    %p83 = scmp.eq.s32.totalorder %s15, 0
    %p84 = por %p82, %p83
    %s85 = ssub.s32 %s9, %s16
    %p86 = scmp.eq.s32.totalorder %s85, 0
    %s88 = sadd.s32 %s87, 1
    %s89 = scalar_select %p86, %s87, %s88
    %p92 = pneg %p86
    %p93 = scmp.eq.s32.totalorder %s9, 11
    %p94 = por %p92, %p93
    %p95 = scmp.ne.s32.totalorder %s87, %s90
    %p96 = scmp.eq.s32.totalorder %s9, 0
    %p97 = por %p95, %p96
    %p98 = scmp.ne.s32.totalorder %s87, %s90
    %p99 = scmp.eq.s32.totalorder %s14, 11
    %p100 = por %p98, %p99
    %p101 = scmp.ne.s32.totalorder %s90, %s91
    %p102 = scmp.eq.s32.totalorder %s14, 0
    %p103 = por %p101, %p102
    %p104 = scmp.ne.s32.totalorder %s90, %s91
    %p105 = scmp.eq.s32.totalorder %s15, 11
    %p106 = por %p104, %p105
    %p108 = scmp.ne.s32.totalorder %s91, %s107
    %p109 = scmp.eq.s32.totalorder %s15, 0
    %p110 = por %p108, %p109
    %p111 = scmp.le.s32.totalorder 1, %s9
    %p112 = scmp.lt.s32.totalorder %s9, 13
    %p113 = pnand %p111, %p112
    %p114 = pneg %p113
    // Predicated region
    $region9: #{nvidia_forward.6} parent=5 // pred_check
      _
    $region10: #{nvidia_forward.6} parent=5 // pred_check_branch
      %116 = sbr.rel (%p113) target = $region12
    $region11: #{nvidia_forward.6} parent=5 // pred_region
      %s117 = ssub.s32 %s9, 1
      // Predicated region
      $region13: #{nvidia_forward.6} parent=11 // pred_check
        %p118 = pneg %p56
      $region14: #{nvidia_forward.6} parent=11 // pred_check_branch
        %120 = sbr.rel (%p118) target = $region16
      $region15: #{nvidia_forward.6} parent=11 // pred_region
        _
      $region16: #{nvidia_forward.6} parent=11 // pred_fallthru
        _
      // Predicated region
      $region17: #{nvidia_forward.6} parent=11 // pred_check
        %p121 = pneg %p77
      $region18: #{nvidia_forward.6} parent=11 // pred_check_branch
        %123 = sbr.rel (%p121) target = $region20
      $region19: #{nvidia_forward.6} parent=11 // pred_region
        _
      $region20: #{nvidia_forward.6} parent=11 // pred_fallthru
        _
    $region12: #{nvidia_forward.6} parent=5 // pred_fallthru
      _
    %p124 = scmp.lt.s32.totalorder %s9, 12
    // Predicated region
    $region21: #{nvidia_forward.6} parent=5 // pred_check
      %p125 = pneg %p124
    $region22: #{nvidia_forward.6} parent=5 // pred_check_branch
      %127 = sbr.rel (%p125) target = $region24
    $region23: #{nvidia_forward.6} parent=5 // pred_region
      // Predicated region
      $region25: #{nvidia_forward.6} parent=23 // pred_check
        %p128 = pneg %p29
      $region26: #{nvidia_forward.6} parent=23 // pred_check_branch
        %130 = sbr.rel (%p128) target = $region28
      $region27: #{nvidia_forward.6} parent=23 // pred_region
        %s131 = smul.u32 64, %s9
        %p132 = scmp.lt.s32.totalorder %s131, 767
        %s133 = scalar_select %p132, %s131, 767
        %s134 = smul.addr %s133, 4
        %s135 = scalar_lea.vmem %s0, %s134
        %s136 = smul.u32 64, %s9
      $region28: #{nvidia_forward.6} parent=23 // pred_fallthru
        _
    $region24: #{nvidia_forward.6} parent=5 // pred_fallthru
      _
    %p137 = scmp.le.s32.totalorder 1, %s9
    %p138 = scmp.lt.s32.totalorder %s9, 13
    %p139 = pnand %p137, %p138
    %p140 = pneg %p139
    // Predicated region
    $region29: #{nvidia_forward.6} parent=5 // pred_check
      _
    $region30: #{nvidia_forward.6} parent=5 // pred_check_branch
      %142 = sbr.rel (%p139) target = $region32
    $region31: #{nvidia_forward.6} parent=5 // pred_region
      %s143 = ssub.s32 %s9, 1
      %s144 = smul.u32 64, %s14
      %p145 = scmp.lt.s32.totalorder %s144, 767
      %s146 = scalar_select %p145, %s144, 767
      %s147 = smul.addr %s146, 4
      %s148 = scalar_lea.vmem %s0, %s147
      %p149 = pneg %p35
      %p150 = pneg %p32
      %p151 = pneg %p56
      %p152 = pneg %p53
      %p153 = pneg %p77
      %p154 = pneg %p74
      %p155 = pneg %p103
      %p156 = pneg %p100
      %s157 = smul.u32 64, %s14
      %p158 = scmp.lt.s32.totalorder %s157, 767
      %s159 = scalar_select %p158, %s157, 767
      %s160 = smul.addr %s159, 4
      %s161 = scalar_lea.vmem %s3, %s160
      %s162 = smul.u32 64, %s14
      %p163 = scmp.lt.s32.totalorder %s162, 767
      %s164 = scalar_select %p163, %s162, 767
      %s165 = smul.addr %s164, 4
      %s166 = scalar_lea.vmem %s0, %s165
      %s167 = smul.u32 64, %s14
      %s168 = smul.u32 64, %s14
      %p169 = scmp.lt.s32.totalorder %s168, 767
      %s170 = scalar_select %p169, %s168, 767
      %s171 = smul.addr %s170, 4
      %s172 = scalar_lea.vmem %s3, %s171
      %s173 = smul.u32 64, %s14
      %v175 = vld [vmem:[%s166] sm:$0xf]
      %v176 = vld [vmem:[%s166 + $0x4] sm:$0xf]
      %v177 = vld [vmem:[%s166 + $0x8] sm:$0xf]
      %v178 = vld [vmem:[%s166 + $0xc] sm:$0xf]
      %v179 = vld [vmem:[%s166 + $0x10] sm:$0xf]
      %v180 = vld [vmem:[%s166 + $0x14] sm:$0xf]
      %v181 = vld [vmem:[%s166 + $0x18] sm:$0xf]
      %v182 = vld [vmem:[%s166 + $0x1c] sm:$0xf]
      %v183 = vld [vmem:[%s166 + $0x20] sm:$0xf]
      %v184 = vld [vmem:[%s166 + $0x24] sm:$0xf]
      %v185 = vld [vmem:[%s166 + $0x28] sm:$0xf]
      %v186 = vld [vmem:[%s166 + $0x2c] sm:$0xf]
      %v187 = vld [vmem:[%s166 + $0x30] sm:$0xf]
      %v188 = vld [vmem:[%s166 + $0x34] sm:$0xf]
      %v189 = vld [vmem:[%s166 + $0x38] sm:$0xf]
      %v190 = vld [vmem:[%s166 + $0x3c] sm:$0xf]
      %v191 = vld [vmem:[%s166 + $0x40] sm:$0xf]
      %v192 = vld [vmem:[%s166 + $0x44] sm:$0xf]
      %v193 = vld [vmem:[%s166 + $0x48] sm:$0xf]
      %v194 = vld [vmem:[%s166 + $0x4c] sm:$0xf]
      %v195 = vld [vmem:[%s166 + $0x50] sm:$0xf]
      %v196 = vld [vmem:[%s166 + $0x54] sm:$0xf]
      %v197 = vld [vmem:[%s166 + $0x58] sm:$0xf]
      %v198 = vld [vmem:[%s166 + $0x5c] sm:$0xf]
      %v199 = vld [vmem:[%s166 + $0x60] sm:$0xf]
      %v200 = vld [vmem:[%s166 + $0x64] sm:$0xf]
      %v201 = vld [vmem:[%s166 + $0x68] sm:$0xf]
      %v202 = vld [vmem:[%s166 + $0x6c] sm:$0xf]
      %v203 = vld [vmem:[%s166 + $0x70] sm:$0xf]
      %v204 = vld [vmem:[%s166 + $0x74] sm:$0xf]
      %v205 = vld [vmem:[%s166 + $0x78] sm:$0xf]
      %v206 = vld [vmem:[%s166 + $0x7c] sm:$0xf]
      %v207 = vld [vmem:[%s166 + $0x80] sm:$0xf]
      %v208 = vld [vmem:[%s166 + $0x84] sm:$0xf]
      %v209 = vld [vmem:[%s166 + $0x88] sm:$0xf]
      %v210 = vld [vmem:[%s166 + $0x8c] sm:$0xf]
      %v211 = vld [vmem:[%s166 + $0x90] sm:$0xf]
      %v212 = vld [vmem:[%s166 + $0x94] sm:$0xf]
      %v213 = vld [vmem:[%s166 + $0x98] sm:$0xf]
      %v214 = vld [vmem:[%s166 + $0x9c] sm:$0xf]
      %v215 = vld [vmem:[%s166 + $0xa0] sm:$0xf]
      %v216 = vld [vmem:[%s166 + $0xa4] sm:$0xf]
      %v217 = vld [vmem:[%s166 + $0xa8] sm:$0xf]
      %v218 = vld [vmem:[%s166 + $0xac] sm:$0xf]
      %v219 = vld [vmem:[%s166 + $0xb0] sm:$0xf]
      %v220 = vld [vmem:[%s166 + $0xb4] sm:$0xf]
      %v221 = vld [vmem:[%s166 + $0xb8] sm:$0xf]
      %v222 = vld [vmem:[%s166 + $0xbc] sm:$0xf]
      %v223 = vld [vmem:[%s166 + $0xc0] sm:$0xf]
      %v224 = vld [vmem:[%s166 + $0xc4] sm:$0xf]
      %v225 = vld [vmem:[%s166 + $0xc8] sm:$0xf]
      %v226 = vld [vmem:[%s166 + $0xcc] sm:$0xf]
      %v227 = vld [vmem:[%s166 + $0xd0] sm:$0xf]
      %v228 = vld [vmem:[%s166 + $0xd4] sm:$0xf]
      %v229 = vld [vmem:[%s166 + $0xd8] sm:$0xf]
      %v230 = vld [vmem:[%s166 + $0xdc] sm:$0xf]
      %v231 = vld [vmem:[%s166 + $0xe0] sm:$0xf]
      %v232 = vld [vmem:[%s166 + $0xe4] sm:$0xf]
      %v233 = vld [vmem:[%s166 + $0xe8] sm:$0xf]
      %v234 = vld [vmem:[%s166 + $0xec] sm:$0xf]
      %v235 = vld [vmem:[%s166 + $0xf0] sm:$0xf]
      %v236 = vld [vmem:[%s166 + $0xf4] sm:$0xf]
      %v237 = vld [vmem:[%s166 + $0xf8] sm:$0xf]
      %v238 = vld [vmem:[%s166 + $0xfc] sm:$0xf]
      %v239 = vld [vmem:[%s1] sm:$0xf]
      %v240 = vld [vmem:[%s1 + $0x4] sm:$0xf]
      %v241 = vld [vmem:[%s1 + $0x8] sm:$0xf]
      %v242 = vld [vmem:[%s1 + $0xc] sm:$0xf]
      %v243 = vld [vmem:[%s1 + $0x10] sm:$0xf]
      %v244 = vld [vmem:[%s1 + $0x14] sm:$0xf]
      %v245 = vld [vmem:[%s1 + $0x18] sm:$0xf]
      %v246 = vld [vmem:[%s1 + $0x1c] sm:$0xf]
      %v247 = vld [vmem:[%s1 + $0x20] sm:$0xf]
      %v248 = vld [vmem:[%s1 + $0x24] sm:$0x3]
      %v249 = vld [vmem:[%s2] sm:$0x1]
      %v251 = vlaneseq
      %v252 = vshrl.u32 %v251, 7
      %v253 = vsub.s32 0, %v252
      %v254 = vrot.slane %v249, %v253
      %v320 = vunpack.c.l.b16 %v175
      %v321 = vunpack.c.l.b16 %v176
      %v322 = vunpack.c.l.b16 %v177
      %v323 = vunpack.c.l.b16 %v178
      %v324 = vunpack.c.l.b16 %v179
      %v325 = vunpack.c.l.b16 %v180
      %v326 = vunpack.c.l.b16 %v181
      %v327 = vunpack.c.l.b16 %v182
      %v328 = vunpack.c.l.b16 %v183
      %v329 = vunpack.c.l.b16 %v184
      %v330 = vunpack.c.l.b16 %v185
      %v331 = vunpack.c.l.b16 %v186
      %v332 = vunpack.c.l.b16 %v187
      %v333 = vunpack.c.l.b16 %v188
      %v334 = vunpack.c.l.b16 %v189
      %v335 = vunpack.c.l.b16 %v190
      %v336 = vunpack.c.l.b16 %v191
      %v337 = vunpack.c.l.b16 %v192
      %v338 = vunpack.c.l.b16 %v193
      %v339 = vunpack.c.l.b16 %v194
      %v340 = vunpack.c.l.b16 %v195
      %v341 = vunpack.c.l.b16 %v196
      %v342 = vunpack.c.l.b16 %v197
      %v343 = vunpack.c.l.b16 %v198
      %v344 = vunpack.c.l.b16 %v199
      %v345 = vunpack.c.l.b16 %v200
      %v346 = vunpack.c.l.b16 %v201
      %v347 = vunpack.c.l.b16 %v202
      %v348 = vunpack.c.l.b16 %v203
      %v349 = vunpack.c.l.b16 %v204
      %v350 = vunpack.c.l.b16 %v205
      %v351 = vunpack.c.l.b16 %v206
      %v352 = vunpack.c.l.b16 %v207
      %v353 = vunpack.c.l.b16 %v208
      %v354 = vunpack.c.l.b16 %v209
      %v355 = vunpack.c.l.b16 %v210
      %v356 = vunpack.c.l.b16 %v211
      %v357 = vunpack.c.l.b16 %v212
      %v358 = vunpack.c.l.b16 %v213
      %v359 = vunpack.c.l.b16 %v214
      %v360 = vunpack.c.l.b16 %v215
      %v361 = vunpack.c.l.b16 %v216
      %v362 = vunpack.c.l.b16 %v217
      %v363 = vunpack.c.l.b16 %v218
      %v364 = vunpack.c.l.b16 %v219
      %v365 = vunpack.c.l.b16 %v220
      %v366 = vunpack.c.l.b16 %v221
      %v367 = vunpack.c.l.b16 %v222
      %v368 = vunpack.c.l.b16 %v223
      %v369 = vunpack.c.l.b16 %v224
      %v370 = vunpack.c.l.b16 %v225
      %v371 = vunpack.c.l.b16 %v226
      %v372 = vunpack.c.l.b16 %v227
      %v373 = vunpack.c.l.b16 %v228
      %v374 = vunpack.c.l.b16 %v229
      %v375 = vunpack.c.l.b16 %v230
      %v376 = vunpack.c.l.b16 %v231
      %v377 = vunpack.c.l.b16 %v232
      %v378 = vunpack.c.l.b16 %v233
      %v379 = vunpack.c.l.b16 %v234
      %v380 = vunpack.c.l.b16 %v235
      %v381 = vunpack.c.l.b16 %v236
      %v382 = vunpack.c.l.b16 %v237
      %v383 = vunpack.c.l.b16 %v238
      %v384 = vpack.c.b16 %v321, %v320
      %v385 = vpack.c.b16 %v323, %v322
      %v386 = vpack.c.b16 %v325, %v324
      %v387 = vpack.c.b16 %v327, %v326
      %v388 = vpack.c.b16 %v329, %v328
      %v389 = vpack.c.b16 %v331, %v330
      %v390 = vpack.c.b16 %v333, %v332
      %v391 = vpack.c.b16 %v335, %v334
      %v392 = vpack.c.b16 %v337, %v336
      %v393 = vpack.c.b16 %v339, %v338
      %v394 = vpack.c.b16 %v341, %v340
      %v395 = vpack.c.b16 %v343, %v342
      %v396 = vpack.c.b16 %v345, %v344
      %v397 = vpack.c.b16 %v347, %v346
      %v398 = vpack.c.b16 %v349, %v348
      %v399 = vpack.c.b16 %v351, %v350
      %v400 = vpack.c.b16 %v353, %v352
      %v401 = vpack.c.b16 %v355, %v354
      %v402 = vpack.c.b16 %v357, %v356
      %v403 = vpack.c.b16 %v359, %v358
      %v404 = vpack.c.b16 %v361, %v360
      %v405 = vpack.c.b16 %v363, %v362
      %v406 = vpack.c.b16 %v365, %v364
      %v407 = vpack.c.b16 %v367, %v366
      %v408 = vpack.c.b16 %v369, %v368
      %v409 = vpack.c.b16 %v371, %v370
      %v410 = vpack.c.b16 %v373, %v372
      %v411 = vpack.c.b16 %v375, %v374
      %v412 = vpack.c.b16 %v377, %v376
      %v413 = vpack.c.b16 %v379, %v378
      %v414 = vpack.c.b16 %v381, %v380
      %v415 = vpack.c.b16 %v383, %v382
      %v426 = vunpack.c.l.b16 %v239
      %v427 = vunpack.c.l.b16 %v240
      %v428 = vunpack.c.l.b16 %v241
      %v429 = vunpack.c.l.b16 %v242
      %v430 = vunpack.c.l.b16 %v243
      %v431 = vunpack.c.l.b16 %v244
      %v432 = vunpack.c.l.b16 %v245
      %v433 = vunpack.c.l.b16 %v246
      %v434 = vunpack.c.l.b16 %v247
      %v435 = vunpack.c.l.b16 %v248
      %v436 = vpack.c.b16 %v427, %v426
      %v437 = vpack.c.b16 %v429, %v428
      %v438 = vpack.c.b16 %v431, %v430
      %v439 = vpack.c.b16 %v433, %v432
      %v440 = vpack.c.b16 %v435, %v434
      %vm445 = vcmask 613376
      %v447 = vsel %vm445, %v384, 0
      %v450 = vsel %vm445, %v385, 0
      %v453 = vsel %vm445, %v386, 0
      %v456 = vsel %vm445, %v387, 0
      %v459 = vsel %vm445, %v388, 0
      %v462 = vsel %vm445, %v389, 0
      %v465 = vsel %vm445, %v390, 0
      %v468 = vsel %vm445, %v391, 0
      %v471 = vsel %vm445, %v392, 0
      %v474 = vsel %vm445, %v393, 0
      %v477 = vsel %vm445, %v394, 0
      %v480 = vsel %vm445, %v395, 0
      %v483 = vsel %vm445, %v396, 0
      %v486 = vsel %vm445, %v397, 0
      %v489 = vsel %vm445, %v398, 0
      %v492 = vsel %vm445, %v399, 0
      %v495 = vsel %vm445, %v400, 0
      %v498 = vsel %vm445, %v401, 0
      %v501 = vsel %vm445, %v402, 0
      %v504 = vsel %vm445, %v403, 0
      %v507 = vsel %vm445, %v404, 0
      %v510 = vsel %vm445, %v405, 0
      %v513 = vsel %vm445, %v406, 0
      %v516 = vsel %vm445, %v407, 0
      %v519 = vsel %vm445, %v408, 0
      %v522 = vsel %vm445, %v409, 0
      %v525 = vsel %vm445, %v410, 0
      %v528 = vsel %vm445, %v411, 0
      %v531 = vsel %vm445, %v412, 0
      %v534 = vsel %vm445, %v413, 0
      %v537 = vsel %vm445, %v414, 0
      %v540 = vsel %vm445, %v415, 0
      %vm542 = vcmask 1044480
      %vm543 = vcmask 1045504
      %v544 = vsel %vm542, 4294967295, 65535
      %v545 = vsel %vm543, %v544, 0
      %v547 = vand.u32 %v440, %v545
      %549 = vmatprep.subr.bf16.mxu0 0
      %550 = vmatpush1.bf16.msra.mxu0 %v436
      %551 = vmatprep.subr.bf16.mxu0 0
      %552 = vmatpush1.bf16.msra.mxu0 %v437
      %553 = vmatprep.subr.bf16.mxu0 0
      %554 = vmatpush1.bf16.msra.mxu0 %v438
      %555 = vmatprep.subr.bf16.mxu0 0
      %556 = vmatpush1.bf16.msra.mxu0 %v439
      %557 = vmatprep.subr.bf16.mxu0 0
      %558 = vmatpush1.bf16.msra.mxu0 %v547
      %559 = vmatprep.subr.bf16.mxu0 0
      %560 = vmatpush1.bf16.msra.mxu0 0
      %561 = vmatprep.subr.bf16.mxu0 0
      %562 = vmatpush1.bf16.msra.mxu0 0
      %563 = vmatprep.subr.bf16.mxu0 0
      %564 = vmatpush1.bf16.msra.mxu0 0
      %565 = vmatprep.subr.bf16.mxu0 0
      %566 = vmatpush1.bf16.msra.mxu0 0
      %567 = vmatprep.subr.bf16.mxu0 0
      %568 = vmatpush1.bf16.msra.mxu0 0
      %569 = vmatprep.subr.bf16.mxu0 0
      %570 = vmatpush1.bf16.msra.mxu0 0
      %571 = vmatprep.subr.bf16.mxu0 0
      %572 = vmatpush1.bf16.msra.mxu0 0
      %573 = vmatprep.subr.bf16.mxu0 0
      %574 = vmatpush1.bf16.msra.mxu0 0
      %575 = vmatprep.subr.bf16.mxu0 0
      %576 = vmatpush1.bf16.msra.mxu0 0
      %577 = vmatprep.subr.bf16.mxu0 0
      %578 = vmatpush1.bf16.msra.mxu0 0
      %579 = vmatprep.subr.bf16.mxu0 0
      %580 = vmatpush1.bf16.msra.mxu0 0
      %581 = vmatprep.mubr.bf16.mxu0 0
      %582 = vmatmul.mubr.bf16.gmra.mrb[0].mxu0 %v447
      %v583 = vpop.f32.mrb[0].mxu0
      %v584 = vadd.f32 %v254, %v583
      %v585 = vpop.f32.mrb[0].mxu0
      %v586 = vpop.f32.mrb[0].mxu0
      %v587 = vadd.f32 %v254, %v586
      %v588 = vpop.f32.mrb[0].mxu0
      %589 = vmatprep.mubr.bf16.mxu0 0
      %590 = vmatmul.mubr.bf16.gmra.mrb[0].mxu0 %v450
      %v591 = vpop.f32.mrb[0].mxu0
      %v592 = vadd.f32 %v254, %v591
      %v593 = vpop.f32.mrb[0].mxu0
      %v594 = vpop.f32.mrb[0].mxu0
      %v595 = vadd.f32 %v254, %v594
      %v596 = vpop.f32.mrb[0].mxu0
      %597 = vmatprep.mubr.bf16.mxu0 0
      %598 = vmatmul.mubr.bf16.gmra.mrb[0].mxu0 %v453
      %v599 = vpop.f32.mrb[0].mxu0
      %v600 = vadd.f32 %v254, %v599
      %v601 = vpop.f32.mrb[0].mxu0
      %v602 = vpop.f32.mrb[0].mxu0
      %v603 = vadd.f32 %v254, %v602
      %v604 = vpop.f32.mrb[0].mxu0
      %605 = vmatprep.mubr.bf16.mxu0 0
      %606 = vmatmul.mubr.bf16.gmra.mrb[0].mxu0 %v456
      %v607 = vpop.f32.mrb[0].mxu0
      %v608 = vadd.f32 %v254, %v607
      %v609 = vpop.f32.mrb[0].mxu0
      %v610 = vpop.f32.mrb[0].mxu0
      %v611 = vadd.f32 %v254, %v610
      %v612 = vpop.f32.mrb[0].mxu0
      %613 = vmatprep.mubr.bf16.mxu0 0
      %614 = vmatmul.mubr.bf16.gmra.mrb[0].mxu0 %v459
      %v615 = vpop.f32.mrb[0].mxu0
      %v616 = vadd.f32 %v254, %v615
      %v617 = vpop.f32.mrb[0].mxu0
      %v618 = vpop.f32.mrb[0].mxu0
      %v619 = vadd.f32 %v254, %v618
      %v620 = vpop.f32.mrb[0].mxu0
      %621 = vmatprep.mubr.bf16.mxu0 0
      %622 = vmatmul.mubr.bf16.gmra.mrb[0].mxu0 %v462
      %v623 = vpop.f32.mrb[0].mxu0
      %v624 = vadd.f32 %v254, %v623
      %v625 = vpop.f32.mrb[0].mxu0
      %v626 = vpop.f32.mrb[0].mxu0
      %v627 = vadd.f32 %v254, %v626
      %v628 = vpop.f32.mrb[0].mxu0
      %629 = vmatprep.mubr.bf16.mxu0 0
      %630 = vmatmul.mubr.bf16.gmra.mrb[0].mxu0 %v465
      %v631 = vpop.f32.mrb[0].mxu0
      %v632 = vadd.f32 %v254, %v631
      %v633 = vpop.f32.mrb[0].mxu0
      %v634 = vpop.f32.mrb[0].mxu0
      %v635 = vadd.f32 %v254, %v634
      %v636 = vpop.f32.mrb[0].mxu0
      %637 = vmatprep.mubr.bf16.mxu0 0
      %638 = vmatmul.mubr.bf16.gmra.mrb[0].mxu0 %v468
      %v639 = vpop.f32.mrb[0].mxu0
      %v640 = vadd.f32 %v254, %v639
      %v641 = vpop.f32.mrb[0].mxu0
      %v642 = vpop.f32.mrb[0].mxu0
      %v643 = vadd.f32 %v254, %v642
      %v644 = vpop.f32.mrb[0].mxu0
      %645 = vmatprep.mubr.bf16.mxu0 0
      %646 = vmatmul.mubr.bf16.gmra.mrb[0].mxu0 %v471
      %v647 = vpop.f32.mrb[0].mxu0
      %v648 = vadd.f32 %v254, %v647
      %v649 = vpop.f32.mrb[0].mxu0
      %v650 = vpop.f32.mrb[0].mxu0
      %v651 = vadd.f32 %v254, %v650
      %v652 = vpop.f32.mrb[0].mxu0
      %653 = vmatprep.mubr.bf16.mxu0 0
      %654 = vmatmul.mubr.bf16.gmra.mrb[0].mxu0 %v474
      %v655 = vpop.f32.mrb[0].mxu0
      %v656 = vadd.f32 %v254, %v655
      %v657 = vpop.f32.mrb[0].mxu0
      %v658 = vpop.f32.mrb[0].mxu0
      %v659 = vadd.f32 %v254, %v658
      %v660 = vpop.f32.mrb[0].mxu0
      %661 = vmatprep.mubr.bf16.mxu0 0
      %662 = vmatmul.mubr.bf16.gmra.mrb[0].mxu0 %v477
      %v663 = vpop.f32.mrb[0].mxu0
      %v664 = vadd.f32 %v254, %v663
      %v665 = vpop.f32.mrb[0].mxu0
      %v666 = vpop.f32.mrb[0].mxu0
      %v667 = vadd.f32 %v254, %v666
      %v668 = vpop.f32.mrb[0].mxu0
      %669 = vmatprep.mubr.bf16.mxu0 0
      %670 = vmatmul.mubr.bf16.gmra.mrb[0].mxu0 %v480
      %v671 = vpop.f32.mrb[0].mxu0
      %v672 = vadd.f32 %v254, %v671
      %v673 = vpop.f32.mrb[0].mxu0
      %v674 = vpop.f32.mrb[0].mxu0
      %v675 = vadd.f32 %v254, %v674
      %v676 = vpop.f32.mrb[0].mxu0
      %677 = vmatprep.mubr.bf16.mxu0 0
      %678 = vmatmul.mubr.bf16.gmra.mrb[0].mxu0 %v483
      %v679 = vpop.f32.mrb[0].mxu0
      %v680 = vadd.f32 %v254, %v679
      %v681 = vpop.f32.mrb[0].mxu0
      %v682 = vpop.f32.mrb[0].mxu0
      %v683 = vadd.f32 %v254, %v682
      %v684 = vpop.f32.mrb[0].mxu0
      %685 = vmatprep.mubr.bf16.mxu0 0
      %686 = vmatmul.mubr.bf16.gmra.mrb[0].mxu0 %v486
      %v687 = vpop.f32.mrb[0].mxu0
      %v688 = vadd.f32 %v254, %v687
      %v689 = vpop.f32.mrb[0].mxu0
      %v690 = vpop.f32.mrb[0].mxu0
      %v691 = vadd.f32 %v254, %v690
      %v692 = vpop.f32.mrb[0].mxu0
      %693 = vmatprep.mubr.bf16.mxu0 0
      %694 = vmatmul.mubr.bf16.gmra.mrb[0].mxu0 %v489
      %v695 = vpop.f32.mrb[0].mxu0
      %v696 = vadd.f32 %v254, %v695
      %v697 = vpop.f32.mrb[0].mxu0
      %v698 = vpop.f32.mrb[0].mxu0
      %v699 = vadd.f32 %v254, %v698
      %v700 = vpop.f32.mrb[0].mxu0
      %701 = vmatprep.mubr.bf16.mxu0 0
      %702 = vmatmul.mubr.bf16.gmra.mrb[0].mxu0 %v492
      %v703 = vpop.f32.mrb[0].mxu0
      %v704 = vadd.f32 %v254, %v703
      %v705 = vpop.f32.mrb[0].mxu0
      %v706 = vpop.f32.mrb[0].mxu0
      %v707 = vadd.f32 %v254, %v706
      %v708 = vpop.f32.mrb[0].mxu0
      %709 = vmatprep.mubr.bf16.mxu0 0
      %710 = vmatmul.mubr.bf16.gmra.mrb[0].mxu0 %v495
      %v711 = vpop.f32.mrb[0].mxu0
      %v712 = vadd.f32 %v254, %v711
      %v713 = vpop.f32.mrb[0].mxu0
      %v714 = vpop.f32.mrb[0].mxu0
      %v715 = vadd.f32 %v254, %v714
      %v716 = vpop.f32.mrb[0].mxu0
      %717 = vmatprep.mubr.bf16.mxu0 0
      %718 = vmatmul.mubr.bf16.gmra.mrb[0].mxu0 %v498
      %v719 = vpop.f32.mrb[0].mxu0
      %v720 = vadd.f32 %v254, %v719
      %v721 = vpop.f32.mrb[0].mxu0
      %v722 = vpop.f32.mrb[0].mxu0
      %v723 = vadd.f32 %v254, %v722
      %v724 = vpop.f32.mrb[0].mxu0
      %725 = vmatprep.mubr.bf16.mxu0 0
      %726 = vmatmul.mubr.bf16.gmra.mrb[0].mxu0 %v501
      %v727 = vpop.f32.mrb[0].mxu0
      %v728 = vadd.f32 %v254, %v727
      %v729 = vpop.f32.mrb[0].mxu0
      %v730 = vpop.f32.mrb[0].mxu0
      %v731 = vadd.f32 %v254, %v730
      %v732 = vpop.f32.mrb[0].mxu0
      %733 = vmatprep.mubr.bf16.mxu0 0
      %734 = vmatmul.mubr.bf16.gmra.mrb[0].mxu0 %v504
      %v735 = vpop.f32.mrb[0].mxu0
      %v736 = vadd.f32 %v254, %v735
      %v737 = vpop.f32.mrb[0].mxu0
      %v738 = vpop.f32.mrb[0].mxu0
      %v739 = vadd.f32 %v254, %v738
      %v740 = vpop.f32.mrb[0].mxu0
      %741 = vmatprep.mubr.bf16.mxu0 0
      %742 = vmatmul.mubr.bf16.gmra.mrb[0].mxu0 %v507
      %v743 = vpop.f32.mrb[0].mxu0
      %v744 = vadd.f32 %v254, %v743
      %v745 = vpop.f32.mrb[0].mxu0
      %v746 = vpop.f32.mrb[0].mxu0
      %v747 = vadd.f32 %v254, %v746
      %v748 = vpop.f32.mrb[0].mxu0
      %749 = vmatprep.mubr.bf16.mxu0 0
      %750 = vmatmul.mubr.bf16.gmra.mrb[0].mxu0 %v510
      %v751 = vpop.f32.mrb[0].mxu0
      %v752 = vadd.f32 %v254, %v751
      %v753 = vpop.f32.mrb[0].mxu0
      %v754 = vpop.f32.mrb[0].mxu0
      %v755 = vadd.f32 %v254, %v754
      %v756 = vpop.f32.mrb[0].mxu0
      %757 = vmatprep.mubr.bf16.mxu0 0
      %758 = vmatmul.mubr.bf16.gmra.mrb[0].mxu0 %v513
      %v759 = vpop.f32.mrb[0].mxu0
      %v760 = vadd.f32 %v254, %v759
      %v761 = vpop.f32.mrb[0].mxu0
      %v762 = vpop.f32.mrb[0].mxu0
      %v763 = vadd.f32 %v254, %v762
      %v764 = vpop.f32.mrb[0].mxu0
      %765 = vmatprep.mubr.bf16.mxu0 0
      %766 = vmatmul.mubr.bf16.gmra.mrb[0].mxu0 %v516
      %v767 = vpop.f32.mrb[0].mxu0
      %v768 = vadd.f32 %v254, %v767
      %v769 = vpop.f32.mrb[0].mxu0
      %v770 = vpop.f32.mrb[0].mxu0
      %v771 = vadd.f32 %v254, %v770
      %v772 = vpop.f32.mrb[0].mxu0
      %773 = vmatprep.mubr.bf16.mxu0 0
      %774 = vmatmul.mubr.bf16.gmra.mrb[0].mxu0 %v519
      %v775 = vpop.f32.mrb[0].mxu0
      %v776 = vadd.f32 %v254, %v775
      %v777 = vpop.f32.mrb[0].mxu0
      %v778 = vpop.f32.mrb[0].mxu0
      %v779 = vadd.f32 %v254, %v778
      %v780 = vpop.f32.mrb[0].mxu0
      %781 = vmatprep.mubr.bf16.mxu0 0
      %782 = vmatmul.mubr.bf16.gmra.mrb[0].mxu0 %v522
      %v783 = vpop.f32.mrb[0].mxu0
      %v784 = vadd.f32 %v254, %v783
      %v785 = vpop.f32.mrb[0].mxu0
      %v786 = vpop.f32.mrb[0].mxu0
      %v787 = vadd.f32 %v254, %v786
      %v788 = vpop.f32.mrb[0].mxu0
      %789 = vmatprep.mubr.bf16.mxu0 0
      %790 = vmatmul.mubr.bf16.gmra.mrb[0].mxu0 %v525
      %v791 = vpop.f32.mrb[0].mxu0
      %v792 = vadd.f32 %v254, %v791
      %v793 = vpop.f32.mrb[0].mxu0
      %v794 = vpop.f32.mrb[0].mxu0
      %v795 = vadd.f32 %v254, %v794
      %v796 = vpop.f32.mrb[0].mxu0
      %797 = vmatprep.mubr.bf16.mxu0 0
      %798 = vmatmul.mubr.bf16.gmra.mrb[0].mxu0 %v528
      %v799 = vpop.f32.mrb[0].mxu0
      %v800 = vadd.f32 %v254, %v799
      %v801 = vpop.f32.mrb[0].mxu0
      %v802 = vpop.f32.mrb[0].mxu0
      %v803 = vadd.f32 %v254, %v802
      %v804 = vpop.f32.mrb[0].mxu0
      %805 = vmatprep.mubr.bf16.mxu0 0
      %806 = vmatmul.mubr.bf16.gmra.mrb[0].mxu0 %v531
      %v807 = vpop.f32.mrb[0].mxu0
      %v808 = vadd.f32 %v254, %v807
      %v809 = vpop.f32.mrb[0].mxu0
      %v810 = vpop.f32.mrb[0].mxu0
      %v811 = vadd.f32 %v254, %v810
      %v812 = vpop.f32.mrb[0].mxu0
      %813 = vmatprep.mubr.bf16.mxu0 0
      %814 = vmatmul.mubr.bf16.gmra.mrb[0].mxu0 %v534
      %v815 = vpop.f32.mrb[0].mxu0
      %v816 = vadd.f32 %v254, %v815
      %v817 = vpop.f32.mrb[0].mxu0
      %v818 = vpop.f32.mrb[0].mxu0
      %v819 = vadd.f32 %v254, %v818
      %v820 = vpop.f32.mrb[0].mxu0
      %821 = vmatprep.mubr.bf16.mxu0 0
      %822 = vmatmul.mubr.bf16.gmra.mrb[0].mxu0 %v537
      %v823 = vpop.f32.mrb[0].mxu0
      %v824 = vadd.f32 %v254, %v823
      %v825 = vpop.f32.mrb[0].mxu0
      %v826 = vpop.f32.mrb[0].mxu0
      %v827 = vadd.f32 %v254, %v826
      %v828 = vpop.f32.mrb[0].mxu0
      %829 = vmatprep.mubr.bf16.mxu0 0
      %830 = vmatmul.mubr.bf16.gmra.mrb[0].mxu0 %v540
      %v831 = vpop.f32.mrb[0].mxu0
      %v832 = vadd.f32 %v254, %v831
      %v833 = vpop.f32.mrb[0].mxu0
      %v834 = vpop.f32.mrb[0].mxu0
      %v835 = vadd.f32 %v254, %v834
      %v836 = vpop.f32.mrb[0].mxu0
      %837 = vdwg.mxu0
      %v838 = vmax.f32 %v584, 0.0
      %v839 = vmax.f32 %v587, 0.0
      %v840 = vmax.f32 %v592, 0.0
      %v841 = vmax.f32 %v595, 0.0
      %v842 = vmax.f32 %v600, 0.0
      %v843 = vmax.f32 %v603, 0.0
      %v844 = vmax.f32 %v608, 0.0
      %v845 = vmax.f32 %v611, 0.0
      %v846 = vmax.f32 %v616, 0.0
      %v847 = vmax.f32 %v619, 0.0
      %v848 = vmax.f32 %v624, 0.0
      %v849 = vmax.f32 %v627, 0.0
      %v850 = vmax.f32 %v632, 0.0
      %v851 = vmax.f32 %v635, 0.0
      %v852 = vmax.f32 %v640, 0.0
      %v853 = vmax.f32 %v643, 0.0
      %v854 = vmax.f32 %v648, 0.0
      %v855 = vmax.f32 %v651, 0.0
      %v856 = vmax.f32 %v656, 0.0
      %v857 = vmax.f32 %v659, 0.0
      %v858 = vmax.f32 %v664, 0.0
      %v859 = vmax.f32 %v667, 0.0
      %v860 = vmax.f32 %v672, 0.0
      %v861 = vmax.f32 %v675, 0.0
      %v862 = vmax.f32 %v680, 0.0
      %v863 = vmax.f32 %v683, 0.0
      %v864 = vmax.f32 %v688, 0.0
      %v865 = vmax.f32 %v691, 0.0
      %v866 = vmax.f32 %v696, 0.0
      %v867 = vmax.f32 %v699, 0.0
      %v868 = vmax.f32 %v704, 0.0
      %v869 = vmax.f32 %v707, 0.0
      %v870 = vmax.f32 %v712, 0.0
      %v871 = vmax.f32 %v715, 0.0
      %v872 = vmax.f32 %v720, 0.0
      %v873 = vmax.f32 %v723, 0.0
      %v874 = vmax.f32 %v728, 0.0
      %v875 = vmax.f32 %v731, 0.0
      %v876 = vmax.f32 %v736, 0.0
      %v877 = vmax.f32 %v739, 0.0
      %v878 = vmax.f32 %v744, 0.0
      %v879 = vmax.f32 %v747, 0.0
      %v880 = vmax.f32 %v752, 0.0
      %v881 = vmax.f32 %v755, 0.0
      %v882 = vmax.f32 %v760, 0.0
      %v883 = vmax.f32 %v763, 0.0
      %v884 = vmax.f32 %v768, 0.0
      %v885 = vmax.f32 %v771, 0.0
      %v886 = vmax.f32 %v776, 0.0
      %v887 = vmax.f32 %v779, 0.0
      %v888 = vmax.f32 %v784, 0.0
      %v889 = vmax.f32 %v787, 0.0
      %v890 = vmax.f32 %v792, 0.0
      %v891 = vmax.f32 %v795, 0.0
      %v892 = vmax.f32 %v800, 0.0
      %v893 = vmax.f32 %v803, 0.0
      %v894 = vmax.f32 %v808, 0.0
      %v895 = vmax.f32 %v811, 0.0
      %v896 = vmax.f32 %v816, 0.0
      %v897 = vmax.f32 %v819, 0.0
      %v898 = vmax.f32 %v824, 0.0
      %v899 = vmax.f32 %v827, 0.0
      %v900 = vmax.f32 %v832, 0.0
      %v901 = vmax.f32 %v835, 0.0
      %v902 = vpack.c.bf16 %v839, %v838
      %v903 = vpack.c.bf16 %v841, %v840
      %v904 = vpack.c.bf16 %v843, %v842
      %v905 = vpack.c.bf16 %v845, %v844
      %v906 = vpack.c.bf16 %v847, %v846
      %v907 = vpack.c.bf16 %v849, %v848
      %v908 = vpack.c.bf16 %v851, %v850
      %v909 = vpack.c.bf16 %v853, %v852
      %v910 = vpack.c.bf16 %v855, %v854
      %v911 = vpack.c.bf16 %v857, %v856
      %v912 = vpack.c.bf16 %v859, %v858
      %v913 = vpack.c.bf16 %v861, %v860
      %v914 = vpack.c.bf16 %v863, %v862
      %v915 = vpack.c.bf16 %v865, %v864
      %v916 = vpack.c.bf16 %v867, %v866
      %v917 = vpack.c.bf16 %v869, %v868
      %v918 = vpack.c.bf16 %v871, %v870
      %v919 = vpack.c.bf16 %v873, %v872
      %v920 = vpack.c.bf16 %v875, %v874
      %v921 = vpack.c.bf16 %v877, %v876
      %v922 = vpack.c.bf16 %v879, %v878
      %v923 = vpack.c.bf16 %v881, %v880
      %v924 = vpack.c.bf16 %v883, %v882
      %v925 = vpack.c.bf16 %v885, %v884
      %v926 = vpack.c.bf16 %v887, %v886
      %v927 = vpack.c.bf16 %v889, %v888
      %v928 = vpack.c.bf16 %v891, %v890
      %v929 = vpack.c.bf16 %v893, %v892
      %v930 = vpack.c.bf16 %v895, %v894
      %v931 = vpack.c.bf16 %v897, %v896
      %v932 = vpack.c.bf16 %v899, %v898
      %v933 = vpack.c.bf16 %v901, %v900
      %v966 = vunpack.c.l.b16 %v902
      %v967 = vunpack.c.h.b16 %v902
      %v968 = vunpack.c.l.b16 %v903
      %v969 = vunpack.c.h.b16 %v903
      %v970 = vunpack.c.l.b16 %v904
      %v971 = vunpack.c.h.b16 %v904
      %v972 = vunpack.c.l.b16 %v905
      %v973 = vunpack.c.h.b16 %v905
      %v974 = vunpack.c.l.b16 %v906
      %v975 = vunpack.c.h.b16 %v906
      %v976 = vunpack.c.l.b16 %v907
      %v977 = vunpack.c.h.b16 %v907
      %v978 = vunpack.c.l.b16 %v908
      %v979 = vunpack.c.h.b16 %v908
      %v980 = vunpack.c.l.b16 %v909
      %v981 = vunpack.c.h.b16 %v909
      %v982 = vunpack.c.l.b16 %v910
      %v983 = vunpack.c.h.b16 %v910
      %v984 = vunpack.c.l.b16 %v911
      %v985 = vunpack.c.h.b16 %v911
      %v986 = vunpack.c.l.b16 %v912
      %v987 = vunpack.c.h.b16 %v912
      %v988 = vunpack.c.l.b16 %v913
      %v989 = vunpack.c.h.b16 %v913
      %v990 = vunpack.c.l.b16 %v914
      %v991 = vunpack.c.h.b16 %v914
      %v992 = vunpack.c.l.b16 %v915
      %v993 = vunpack.c.h.b16 %v915
      %v994 = vunpack.c.l.b16 %v916
      %v995 = vunpack.c.h.b16 %v916
      %v996 = vunpack.c.l.b16 %v917
      %v997 = vunpack.c.h.b16 %v917
      %v998 = vunpack.c.l.b16 %v918
      %v999 = vunpack.c.h.b16 %v918
      %v1000 = vunpack.c.l.b16 %v919
      %v1001 = vunpack.c.h.b16 %v919
      %v1002 = vunpack.c.l.b16 %v920
      %v1003 = vunpack.c.h.b16 %v920
      %v1004 = vunpack.c.l.b16 %v921
      %v1005 = vunpack.c.h.b16 %v921
      %v1006 = vunpack.c.l.b16 %v922
      %v1007 = vunpack.c.h.b16 %v922
      %v1008 = vunpack.c.l.b16 %v923
      %v1009 = vunpack.c.h.b16 %v923
      %v1010 = vunpack.c.l.b16 %v924
      %v1011 = vunpack.c.h.b16 %v924
      %v1012 = vunpack.c.l.b16 %v925
      %v1013 = vunpack.c.h.b16 %v925
      %v1014 = vunpack.c.l.b16 %v926
      %v1015 = vunpack.c.h.b16 %v926
      %v1016 = vunpack.c.l.b16 %v927
      %v1017 = vunpack.c.h.b16 %v927
      %v1018 = vunpack.c.l.b16 %v928
      %v1019 = vunpack.c.h.b16 %v928
      %v1020 = vunpack.c.l.b16 %v929
      %v1021 = vunpack.c.h.b16 %v929
      %v1022 = vunpack.c.l.b16 %v930
      %v1023 = vunpack.c.h.b16 %v930
      %v1024 = vunpack.c.l.b16 %v931
      %v1025 = vunpack.c.h.b16 %v931
      %v1026 = vunpack.c.l.b16 %v932
      %v1027 = vunpack.c.h.b16 %v932
      %v1028 = vunpack.c.l.b16 %v933
      %v1029 = vunpack.c.h.b16 %v933
      %v1030 = vpack.c.b16 %v966, %v966
      %v1031 = vpack.c.b16 %v967, %v967
      %v1032 = vpack.c.b16 %v968, %v968
      %v1033 = vpack.c.b16 %v969, %v969
      %v1034 = vpack.c.b16 %v970, %v970
      %v1035 = vpack.c.b16 %v971, %v971
      %v1036 = vpack.c.b16 %v972, %v972
      %v1037 = vpack.c.b16 %v973, %v973
      %v1038 = vpack.c.b16 %v974, %v974
      %v1039 = vpack.c.b16 %v975, %v975
      %v1040 = vpack.c.b16 %v976, %v976
      %v1041 = vpack.c.b16 %v977, %v977
      %v1042 = vpack.c.b16 %v978, %v978
      %v1043 = vpack.c.b16 %v979, %v979
      %v1044 = vpack.c.b16 %v980, %v980
      %v1045 = vpack.c.b16 %v981, %v981
      %v1046 = vpack.c.b16 %v982, %v982
      %v1047 = vpack.c.b16 %v983, %v983
      %v1048 = vpack.c.b16 %v984, %v984
      %v1049 = vpack.c.b16 %v985, %v985
      %v1050 = vpack.c.b16 %v986, %v986
      %v1051 = vpack.c.b16 %v987, %v987
      %v1052 = vpack.c.b16 %v988, %v988
      %v1053 = vpack.c.b16 %v989, %v989
      %v1054 = vpack.c.b16 %v990, %v990
      %v1055 = vpack.c.b16 %v991, %v991
      %v1056 = vpack.c.b16 %v992, %v992
      %v1057 = vpack.c.b16 %v993, %v993
      %v1058 = vpack.c.b16 %v994, %v994
      %v1059 = vpack.c.b16 %v995, %v995
      %v1060 = vpack.c.b16 %v996, %v996
      %v1061 = vpack.c.b16 %v997, %v997
      %v1062 = vpack.c.b16 %v998, %v998
      %v1063 = vpack.c.b16 %v999, %v999
      %v1064 = vpack.c.b16 %v1000, %v1000
      %v1065 = vpack.c.b16 %v1001, %v1001
      %v1066 = vpack.c.b16 %v1002, %v1002
      %v1067 = vpack.c.b16 %v1003, %v1003
      %v1068 = vpack.c.b16 %v1004, %v1004
      %v1069 = vpack.c.b16 %v1005, %v1005
      %v1070 = vpack.c.b16 %v1006, %v1006
      %v1071 = vpack.c.b16 %v1007, %v1007
      %v1072 = vpack.c.b16 %v1008, %v1008
      %v1073 = vpack.c.b16 %v1009, %v1009
      %v1074 = vpack.c.b16 %v1010, %v1010
      %v1075 = vpack.c.b16 %v1011, %v1011
      %v1076 = vpack.c.b16 %v1012, %v1012
      %v1077 = vpack.c.b16 %v1013, %v1013
      %v1078 = vpack.c.b16 %v1014, %v1014
      %v1079 = vpack.c.b16 %v1015, %v1015
      %v1080 = vpack.c.b16 %v1016, %v1016
      %v1081 = vpack.c.b16 %v1017, %v1017
      %v1082 = vpack.c.b16 %v1018, %v1018
      %v1083 = vpack.c.b16 %v1019, %v1019
      %v1084 = vpack.c.b16 %v1020, %v1020
      %v1085 = vpack.c.b16 %v1021, %v1021
      %v1086 = vpack.c.b16 %v1022, %v1022
      %v1087 = vpack.c.b16 %v1023, %v1023
      %v1088 = vpack.c.b16 %v1024, %v1024
      %v1089 = vpack.c.b16 %v1025, %v1025
      %v1090 = vpack.c.b16 %v1026, %v1026
      %v1091 = vpack.c.b16 %v1027, %v1027
      %v1092 = vpack.c.b16 %v1028, %v1028
      %v1093 = vpack.c.b16 %v1029, %v1029
      %1158 = vst [vmem:[%s172] sm:$0xf] %v1030
      %1159 = vst [vmem:[%s172 + $0x4] sm:$0xf] %v1031
      %1160 = vst [vmem:[%s172 + $0x8] sm:$0xf] %v1032
      %1161 = vst [vmem:[%s172 + $0xc] sm:$0xf] %v1033
      %1162 = vst [vmem:[%s172 + $0x10] sm:$0xf] %v1034
      %1163 = vst [vmem:[%s172 + $0x14] sm:$0xf] %v1035
      %1164 = vst [vmem:[%s172 + $0x18] sm:$0xf] %v1036
      %1165 = vst [vmem:[%s172 + $0x1c] sm:$0xf] %v1037
      %1166 = vst [vmem:[%s172 + $0x20] sm:$0xf] %v1038
      %1167 = vst [vmem:[%s172 + $0x24] sm:$0xf] %v1039
      %1168 = vst [vmem:[%s172 + $0x28] sm:$0xf] %v1040
      %1169 = vst [vmem:[%s172 + $0x2c] sm:$0xf] %v1041
      %1170 = vst [vmem:[%s172 + $0x30] sm:$0xf] %v1042
      %1171 = vst [vmem:[%s172 + $0x34] sm:$0xf] %v1043
      %1172 = vst [vmem:[%s172 + $0x38] sm:$0xf] %v1044
      %1173 = vst [vmem:[%s172 + $0x3c] sm:$0xf] %v1045
      %1174 = vst [vmem:[%s172 + $0x40] sm:$0xf] %v1046
      %1175 = vst [vmem:[%s172 + $0x44] sm:$0xf] %v1047
      %1176 = vst [vmem:[%s172 + $0x48] sm:$0xf] %v1048
      %1177 = vst [vmem:[%s172 + $0x4c] sm:$0xf] %v1049
      %1178 = vst [vmem:[%s172 + $0x50] sm:$0xf] %v1050
      %1179 = vst [vmem:[%s172 + $0x54] sm:$0xf] %v1051
      %1180 = vst [vmem:[%s172 + $0x58] sm:$0xf] %v1052
      %1181 = vst [vmem:[%s172 + $0x5c] sm:$0xf] %v1053
      %1182 = vst [vmem:[%s172 + $0x60] sm:$0xf] %v1054
      %1183 = vst [vmem:[%s172 + $0x64] sm:$0xf] %v1055
      %1184 = vst [vmem:[%s172 + $0x68] sm:$0xf] %v1056
      %1185 = vst [vmem:[%s172 + $0x6c] sm:$0xf] %v1057
      %1186 = vst [vmem:[%s172 + $0x70] sm:$0xf] %v1058
      %1187 = vst [vmem:[%s172 + $0x74] sm:$0xf] %v1059
      %1188 = vst [vmem:[%s172 + $0x78] sm:$0xf] %v1060
      %1189 = vst [vmem:[%s172 + $0x7c] sm:$0xf] %v1061
      %1190 = vst [vmem:[%s172 + $0x80] sm:$0xf] %v1062
      %1191 = vst [vmem:[%s172 + $0x84] sm:$0xf] %v1063
      %1192 = vst [vmem:[%s172 + $0x88] sm:$0xf] %v1064
      %1193 = vst [vmem:[%s172 + $0x8c] sm:$0xf] %v1065
      %1194 = vst [vmem:[%s172 + $0x90] sm:$0xf] %v1066
      %1195 = vst [vmem:[%s172 + $0x94] sm:$0xf] %v1067
      %1196 = vst [vmem:[%s172 + $0x98] sm:$0xf] %v1068
      %1197 = vst [vmem:[%s172 + $0x9c] sm:$0xf] %v1069
      %1198 = vst [vmem:[%s172 + $0xa0] sm:$0xf] %v1070
      %1199 = vst [vmem:[%s172 + $0xa4] sm:$0xf] %v1071
      %1200 = vst [vmem:[%s172 + $0xa8] sm:$0xf] %v1072
      %1201 = vst [vmem:[%s172 + $0xac] sm:$0xf] %v1073
      %1202 = vst [vmem:[%s172 + $0xb0] sm:$0xf] %v1074
      %1203 = vst [vmem:[%s172 + $0xb4] sm:$0xf] %v1075
      %1204 = vst [vmem:[%s172 + $0xb8] sm:$0xf] %v1076
      %1205 = vst [vmem:[%s172 + $0xbc] sm:$0xf] %v1077
      %1206 = vst [vmem:[%s172 + $0xc0] sm:$0xf] %v1078
      %1207 = vst [vmem:[%s172 + $0xc4] sm:$0xf] %v1079
      %1208 = vst [vmem:[%s172 + $0xc8] sm:$0xf] %v1080
      %1209 = vst [vmem:[%s172 + $0xcc] sm:$0xf] %v1081
      %1210 = vst [vmem:[%s172 + $0xd0] sm:$0xf] %v1082
      %1211 = vst [vmem:[%s172 + $0xd4] sm:$0xf] %v1083
      %1212 = vst [vmem:[%s172 + $0xd8] sm:$0xf] %v1084
      %1213 = vst [vmem:[%s172 + $0xdc] sm:$0xf] %v1085
      %1214 = vst [vmem:[%s172 + $0xe0] sm:$0xf] %v1086
      %1215 = vst [vmem:[%s172 + $0xe4] sm:$0xf] %v1087
      %1216 = vst [vmem:[%s172 + $0xe8] sm:$0xf] %v1088
      %1217 = vst [vmem:[%s172 + $0xec] sm:$0xf] %v1089
      %1218 = vst [vmem:[%s172 + $0xf0] sm:$0xf] %v1090
      %1219 = vst [vmem:[%s172 + $0xf4] sm:$0xf] %v1091
      %1220 = vst [vmem:[%s172 + $0xf8] sm:$0xf] %v1092
      %1221 = vst [vmem:[%s172 + $0xfc] sm:$0xf] %v1093
      %s1222 = smul.u32 64, %s14
      %p1223 = scmp.lt.s32.totalorder %s1222, 767
      %s1224 = scalar_select %p1223, %s1222, 767
      %s1225 = smul.addr %s1224, 4
      %s1226 = scalar_lea.vmem %s3, %s1225
      // Predicated region
      $region33: #{nvidia_forward.6} parent=31 // pred_check
        %p1227 = pneg %p100
      $region34: #{nvidia_forward.6} parent=31 // pred_check_branch
        %1229 = sbr.rel (%p1227) target = $region36
      $region35: #{nvidia_forward.6} parent=31 // pred_region
        %s1230 = smul.u32 64, %s14
      $region36: #{nvidia_forward.6} parent=31 // pred_fallthru
        _
    $region32: #{nvidia_forward.6} parent=5 // pred_fallthru
      _
    %p1231 = scmp.le.s32.totalorder 2, %s9
    // Predicated region
    $region37: #{nvidia_forward.6} parent=5 // pred_check
      %p1232 = pneg %p1231
    $region38: #{nvidia_forward.6} parent=5 // pred_check_branch
      %1234 = sbr.rel (%p1232) target = $region40
    $region39: #{nvidia_forward.6} parent=5 // pred_region
      %s1235 = ssub.s32 %s9, 2
      // Predicated region
      $region41: #{nvidia_forward.6} parent=39 // pred_check
        %p1236 = pneg %p106
      $region42: #{nvidia_forward.6} parent=39 // pred_check_branch
        %1238 = sbr.rel (%p1236) target = $region44
      $region43: #{nvidia_forward.6} parent=39 // pred_region
        %s1239 = smul.u32 64, %s15
        %p1240 = scmp.lt.s32.totalorder %s1239, 767
        %s1241 = scalar_select %p1240, %s1239, 767
        %s1242 = smul.addr %s1241, 4
        %s1243 = scalar_lea.vmem %s3, %s1242
      $region44: #{nvidia_forward.6} parent=39 // pred_fallthru
        _
    $region40: #{nvidia_forward.6} parent=5 // pred_fallthru
      _
  $region6: #{nvidia_forward.6} parent=0 // loop_footer
    %s13 = sadd.s32 1, %s9
  $region7: #{nvidia_forward.6} parent=0 // loop_footer_branch
    %8 = sbr.rel target = $region3
  $region8: #{nvidia_forward.6} parent=0 // loop_exit
    _

// kernel: nvidia_forward.7
$region0: #{nvidia_forward.7}
  #allocation0 [shape = 'u32[]', space=smem, size = 0x4, offset = 0x4, fixed_abs, tag = 'smem constant byte address 0x4 - core index']
  #allocation1 [shape = 'u32[144,128]{1,0:T(1,128)}', space=vmem, size = 0x12000, scoped, tag = 'internal scratch']
  %s0 = inlined_call_operand.vmem [shape: bf16[1536,600], index: 0, kind: input, shape index: {}]
  %s1 = inlined_call_operand.vmem [shape: bf16[600,128], index: 1, kind: input, shape index: {}]
  %s2 = inlined_call_operand.vmem [shape: f32[1,128], index: 2, kind: input, shape index: {}]
  %s3 = inlined_call_operand.vmem [shape: bf16[1536,128], index: 3, kind: output, shape index: {}]
  %s4 = sld [smem:[#allocation0]]
  $region45: #{nvidia_forward.7} parent=0
    _
  %s6 = ssub.s32 1, %s4
  %s7 = scalar_select 0, %s6, %s4
  loop: start=0, step=1, limit=5
  $region2: #{nvidia_forward.7} parent=0 // loop_pre_header
    _
  $region3: #{nvidia_forward.7} parent=0 // loop_header
    %s9 = sphi 0, %s13
    %p10 = scmp.ge.s32.totalorder %s9, 5
    %s19 = sphi 0, %s21
    %s22 = sphi 0, %s19
    %s23 = sphi 0, %s22
    %s39 = sphi 0, %s23
    %s43 = sphi 0, %s43
    %s45 = sphi 0, %s43
    %s46 = sphi 0, %s45
    %s60 = sphi 0, %s46
    %s64 = sphi 0, %s64
    %s66 = sphi 0, %s64
    %s67 = sphi 0, %s66
    %s81 = sphi 0, %s67
    %s87 = sphi 0, %s89
    %s90 = sphi 0, %s87
    %s91 = sphi 0, %s90
    %s107 = sphi 0, %s91
  $region4: #{nvidia_forward.7} parent=0 // loop_header_branch
    %12 = sbr.rel (%p10) target = $region8
  $region5: #{nvidia_forward.7} parent=0 // loop_body
    %s14 = ssub.s32 %s9, 1
    %s15 = ssub.s32 %s9, 2
    %s16 = sadd.s32 %s9, 1
    %s17 = ssub.s32 %s9, %s16
    %p18 = scmp.eq.s32.totalorder %s17, 0
    %s20 = sadd.s32 %s19, 1
    %s21 = scalar_select %p18, %s19, %s20
    %p24 = pneg %p18
    %p25 = scmp.eq.s32.totalorder %s9, 2
    %p26 = por %p24, %p25
    %p27 = scmp.ne.s32.totalorder %s19, %s22
    %p28 = scmp.eq.s32.totalorder %s9, 0
    %p29 = por %p27, %p28
    %p30 = scmp.ne.s32.totalorder %s19, %s22
    %p31 = scmp.eq.s32.totalorder %s14, 2
    %p32 = por %p30, %p31
    %p33 = scmp.ne.s32.totalorder %s22, %s23
    %p34 = scmp.eq.s32.totalorder %s14, 0
    %p35 = por %p33, %p34
    %p36 = scmp.ne.s32.totalorder %s22, %s23
    %p37 = scmp.eq.s32.totalorder %s15, 2
    %p38 = por %p36, %p37
    %p40 = scmp.ne.s32.totalorder %s23, %s39
    %p41 = scmp.eq.s32.totalorder %s15, 0
    %p42 = por %p40, %p41
    %s44 = sadd.s32 %s43, 1
    %p47 = scmp.eq.s32.totalorder %s9, 2
    %p48 = scmp.ne.s32.totalorder %s43, %s45
    %p49 = scmp.eq.s32.totalorder %s9, 0
    %p50 = por %p48, %p49
    %p51 = scmp.ne.s32.totalorder %s43, %s45
    %p52 = scmp.eq.s32.totalorder %s14, 2
    %p53 = por %p51, %p52
    %p54 = scmp.ne.s32.totalorder %s45, %s46
    %p55 = scmp.eq.s32.totalorder %s14, 0
    %p56 = por %p54, %p55
    %p57 = scmp.ne.s32.totalorder %s45, %s46
    %p58 = scmp.eq.s32.totalorder %s15, 2
    %p59 = por %p57, %p58
    %p61 = scmp.ne.s32.totalorder %s46, %s60
    %p62 = scmp.eq.s32.totalorder %s15, 0
    %p63 = por %p61, %p62
    %s65 = sadd.s32 %s64, 1
    %p68 = scmp.eq.s32.totalorder %s9, 2
    %p69 = scmp.ne.s32.totalorder %s64, %s66
    %p70 = scmp.eq.s32.totalorder %s9, 0
    %p71 = por %p69, %p70
    %p72 = scmp.ne.s32.totalorder %s64, %s66
    %p73 = scmp.eq.s32.totalorder %s14, 2
    %p74 = por %p72, %p73
    %p75 = scmp.ne.s32.totalorder %s66, %s67
    %p76 = scmp.eq.s32.totalorder %s14, 0
    %p77 = por %p75, %p76
    %p78 = scmp.ne.s32.totalorder %s66, %s67
    %p79 = scmp.eq.s32.totalorder %s15, 2
    %p80 = por %p78, %p79
    %p82 = scmp.ne.s32.totalorder %s67, %s81
    %p83 = scmp.eq.s32.totalorder %s15, 0
    %p84 = por %p82, %p83
    %s85 = ssub.s32 %s9, %s16
    %p86 = scmp.eq.s32.totalorder %s85, 0
    %s88 = sadd.s32 %s87, 1
    %s89 = scalar_select %p86, %s87, %s88
    %p92 = pneg %p86
    %p93 = scmp.eq.s32.totalorder %s9, 2
    %p94 = por %p92, %p93
    %p95 = scmp.ne.s32.totalorder %s87, %s90
    %p96 = scmp.eq.s32.totalorder %s9, 0
    %p97 = por %p95, %p96
    %p98 = scmp.ne.s32.totalorder %s87, %s90
    %p99 = scmp.eq.s32.totalorder %s14, 2
    %p100 = por %p98, %p99
    %p101 = scmp.ne.s32.totalorder %s90, %s91
    %p102 = scmp.eq.s32.totalorder %s14, 0
    %p103 = por %p101, %p102
    %p104 = scmp.ne.s32.totalorder %s90, %s91
    %p105 = scmp.eq.s32.totalorder %s15, 2
    %p106 = por %p104, %p105
    %p108 = scmp.ne.s32.totalorder %s91, %s107
    %p109 = scmp.eq.s32.totalorder %s15, 0
    %p110 = por %p108, %p109
    %p111 = scmp.le.s32.totalorder 1, %s9
    %p112 = scmp.lt.s32.totalorder %s9, 4
    %p113 = pnand %p111, %p112
    %p114 = pneg %p113
    // Predicated region
    $region9: #{nvidia_forward.7} parent=5 // pred_check
      _
    $region10: #{nvidia_forward.7} parent=5 // pred_check_branch
      %116 = sbr.rel (%p113) target = $region12
    $region11: #{nvidia_forward.7} parent=5 // pred_region
      %s117 = ssub.s32 %s9, 1
      // Predicated region
      $region13: #{nvidia_forward.7} parent=11 // pred_check
        %p118 = pneg %p56
      $region14: #{nvidia_forward.7} parent=11 // pred_check_branch
        %120 = sbr.rel (%p118) target = $region16
      $region15: #{nvidia_forward.7} parent=11 // pred_region
        _
      $region16: #{nvidia_forward.7} parent=11 // pred_fallthru
        _
      // Predicated region
      $region17: #{nvidia_forward.7} parent=11 // pred_check
        %p121 = pneg %p77
      $region18: #{nvidia_forward.7} parent=11 // pred_check_branch
        %123 = sbr.rel (%p121) target = $region20
      $region19: #{nvidia_forward.7} parent=11 // pred_region
        _
      $region20: #{nvidia_forward.7} parent=11 // pred_fallthru
        _
    $region12: #{nvidia_forward.7} parent=5 // pred_fallthru
      _
    %p124 = scmp.lt.s32.totalorder %s9, 3
    // Predicated region
    $region21: #{nvidia_forward.7} parent=5 // pred_check
      %p125 = pneg %p124
    $region22: #{nvidia_forward.7} parent=5 // pred_check_branch
      %127 = sbr.rel (%p125) target = $region24
    $region23: #{nvidia_forward.7} parent=5 // pred_region
      // Predicated region
      $region25: #{nvidia_forward.7} parent=23 // pred_check
        %p128 = pneg %p29
      $region26: #{nvidia_forward.7} parent=23 // pred_check_branch
        %130 = sbr.rel (%p128) target = $region28
      $region27: #{nvidia_forward.7} parent=23 // pred_region
        %s131 = smul.u32 64, %s9
        %p132 = scmp.lt.s32.totalorder %s131, 191
        %s133 = scalar_select %p132, %s131, 191
        %s134 = smul.addr %s133, 5
        %s135 = smul.addr %s134, 4
        %s136 = scalar_lea.vmem %s0, %s135
        %s137 = smul.u32 64, %s9
      $region28: #{nvidia_forward.7} parent=23 // pred_fallthru
        _
    $region24: #{nvidia_forward.7} parent=5 // pred_fallthru
      _
    %p138 = scmp.le.s32.totalorder 1, %s9
    %p139 = scmp.lt.s32.totalorder %s9, 4
    %p140 = pnand %p138, %p139
    %p141 = pneg %p140
    // Predicated region
    $region29: #{nvidia_forward.7} parent=5 // pred_check
      _
    $region30: #{nvidia_forward.7} parent=5 // pred_check_branch
      %143 = sbr.rel (%p140) target = $region32
    $region31: #{nvidia_forward.7} parent=5 // pred_region
      %s144 = ssub.s32 %s9, 1
      %s145 = smul.u32 64, %s14
      %p146 = scmp.lt.s32.totalorder %s145, 191
      %s147 = scalar_select %p146, %s145, 191
      %s148 = smul.addr %s147, 5
      %s149 = smul.addr %s148, 4
      %s150 = scalar_lea.vmem %s0, %s149
      %p151 = pneg %p35
      %p152 = pneg %p32
      %p153 = pneg %p56
      %p154 = pneg %p53
      %p155 = pneg %p77
      %p156 = pneg %p74
      %p157 = pneg %p103
      %p158 = pneg %p100
      %s159 = smul.u32 64, %s14
      %p160 = scmp.lt.s32.totalorder %s159, 191
      %s161 = scalar_select %p160, %s159, 191
      %s162 = smul.addr %s161, 4
      %s163 = scalar_lea.vmem %s3, %s162
      %s164 = smul.u32 64, %s14
      %p165 = scmp.lt.s32.totalorder %s164, 191
      %s166 = scalar_select %p165, %s164, 191
      %s167 = smul.addr %s166, 5
      %s168 = smul.addr %s167, 4
      %s169 = scalar_lea.vmem %s0, %s168
      %s170 = smul.u32 64, %s14
      %s171 = smul.u32 64, %s14
      %p172 = scmp.lt.s32.totalorder %s171, 191
      %s173 = scalar_select %p172, %s171, 191
      %s174 = smul.addr %s173, 4
      %s175 = scalar_lea.vmem %s3, %s174
      %s176 = smul.u32 64, %s14
      %v178 = vld [vmem:[%s169] sm:$0xff]
      %v179 = vld [vmem:[%s169 + $0x8] sm:$0xff]
      %v180 = vld [vmem:[%s169 + $0x10] sm:$0xf]
      %v181 = vld [vmem:[%s169 + $0x14] sm:$0xff]
      %v182 = vld [vmem:[%s169 + $0x1c] sm:$0xff]
      %v183 = vld [vmem:[%s169 + $0x24] sm:$0xf]
      %v184 = vld [vmem:[%s169 + $0x28] sm:$0xff]
      %v185 = vld [vmem:[%s169 + $0x30] sm:$0xff]
      %v186 = vld [vmem:[%s169 + $0x38] sm:$0xf]
      %v187 = vld [vmem:[%s169 + $0x3c] sm:$0xff]
      %v188 = vld [vmem:[%s169 + $0x44] sm:$0xff]
      %v189 = vld [vmem:[%s169 + $0x4c] sm:$0xf]
      %v190 = vld [vmem:[%s169 + $0x50] sm:$0xff]
      %v191 = vld [vmem:[%s169 + $0x58] sm:$0xff]
      %v192 = vld [vmem:[%s169 + $0x60] sm:$0xf]
      %v193 = vld [vmem:[%s169 + $0x64] sm:$0xff]
      %v194 = vld [vmem:[%s169 + $0x6c] sm:$0xff]
      %v195 = vld [vmem:[%s169 + $0x74] sm:$0xf]
      %v196 = vld [vmem:[%s169 + $0x78] sm:$0xff]
      %v197 = vld [vmem:[%s169 + $0x80] sm:$0xff]
      %v198 = vld [vmem:[%s169 + $0x88] sm:$0xf]
      %v199 = vld [vmem:[%s169 + $0x8c] sm:$0xff]
      %v200 = vld [vmem:[%s169 + $0x94] sm:$0xff]
      %v201 = vld [vmem:[%s169 + $0x9c] sm:$0xf]
      %v202 = vld [vmem:[%s169 + $0xa0] sm:$0xff]
      %v203 = vld [vmem:[%s169 + $0xa8] sm:$0xff]
      %v204 = vld [vmem:[%s169 + $0xb0] sm:$0xf]
      %v205 = vld [vmem:[%s169 + $0xb4] sm:$0xff]
      %v206 = vld [vmem:[%s169 + $0xbc] sm:$0xff]
      %v207 = vld [vmem:[%s169 + $0xc4] sm:$0xf]
      %v208 = vld [vmem:[%s169 + $0xc8] sm:$0xff]
      %v209 = vld [vmem:[%s169 + $0xd0] sm:$0xff]
      %v210 = vld [vmem:[%s169 + $0xd8] sm:$0xf]
      %v211 = vld [vmem:[%s169 + $0xdc] sm:$0xff]
      %v212 = vld [vmem:[%s169 + $0xe4] sm:$0xff]
      %v213 = vld [vmem:[%s169 + $0xec] sm:$0xf]
      %v214 = vld [vmem:[%s169 + $0xf0] sm:$0xff]
      %v215 = vld [vmem:[%s169 + $0xf8] sm:$0xff]
      %v216 = vld [vmem:[%s169 + $0x100] sm:$0xf]
      %v217 = vld [vmem:[%s169 + $0x104] sm:$0xff]
      %v218 = vld [vmem:[%s169 + $0x10c] sm:$0xff]
      %v219 = vld [vmem:[%s169 + $0x114] sm:$0xf]
      %v220 = vld [vmem:[%s169 + $0x118] sm:$0xff]
      %v221 = vld [vmem:[%s169 + $0x120] sm:$0xff]
      %v222 = vld [vmem:[%s169 + $0x128] sm:$0xf]
      %v223 = vld [vmem:[%s169 + $0x12c] sm:$0xff]
      %v224 = vld [vmem:[%s169 + $0x134] sm:$0xff]
      %v225 = vld [vmem:[%s169 + $0x13c] sm:$0xf]
      %v226 = vld [vmem:[%s169 + $0x140] sm:$0xff]
      %v227 = vld [vmem:[%s169 + $0x148] sm:$0xff]
      %v228 = vld [vmem:[%s169 + $0x150] sm:$0xf]
      %v229 = vld [vmem:[%s169 + $0x154] sm:$0xff]
      %v230 = vld [vmem:[%s169 + $0x15c] sm:$0xff]
      %v231 = vld [vmem:[%s169 + $0x164] sm:$0xf]
      %v232 = vld [vmem:[%s169 + $0x168] sm:$0xff]
      %v233 = vld [vmem:[%s169 + $0x170] sm:$0xff]
      %v234 = vld [vmem:[%s169 + $0x178] sm:$0xf]
      %v235 = vld [vmem:[%s169 + $0x17c] sm:$0xff]
      %v236 = vld [vmem:[%s169 + $0x184] sm:$0xff]
      %v237 = vld [vmem:[%s169 + $0x18c] sm:$0xf]
      %v238 = vld [vmem:[%s169 + $0x190] sm:$0xff]
      %v239 = vld [vmem:[%s169 + $0x198] sm:$0xff]
      %v240 = vld [vmem:[%s169 + $0x1a0] sm:$0xf]
      %v241 = vld [vmem:[%s169 + $0x1a4] sm:$0xff]
      %v242 = vld [vmem:[%s169 + $0x1ac] sm:$0xff]
      %v243 = vld [vmem:[%s169 + $0x1b4] sm:$0xf]
      %v244 = vld [vmem:[%s169 + $0x1b8] sm:$0xff]
      %v245 = vld [vmem:[%s169 + $0x1c0] sm:$0xff]
      %v246 = vld [vmem:[%s169 + $0x1c8] sm:$0xf]
      %v247 = vld [vmem:[%s169 + $0x1cc] sm:$0xff]
      %v248 = vld [vmem:[%s169 + $0x1d4] sm:$0xff]
      %v249 = vld [vmem:[%s169 + $0x1dc] sm:$0xf]
      %v250 = vld [vmem:[%s169 + $0x1e0] sm:$0xff]
      %v251 = vld [vmem:[%s169 + $0x1e8] sm:$0xff]
      %v252 = vld [vmem:[%s169 + $0x1f0] sm:$0xf]
      %v253 = vld [vmem:[%s169 + $0x1f4] sm:$0xff]
      %v254 = vld [vmem:[%s169 + $0x1fc] sm:$0xff]
      %v255 = vld [vmem:[%s169 + $0x204] sm:$0xf]
      %v256 = vld [vmem:[%s169 + $0x208] sm:$0xff]
      %v257 = vld [vmem:[%s169 + $0x210] sm:$0xff]
      %v258 = vld [vmem:[%s169 + $0x218] sm:$0xf]
      %v259 = vld [vmem:[%s169 + $0x21c] sm:$0xff]
      %v260 = vld [vmem:[%s169 + $0x224] sm:$0xff]
      %v261 = vld [vmem:[%s169 + $0x22c] sm:$0xf]
      %v262 = vld [vmem:[%s169 + $0x230] sm:$0xff]
      %v263 = vld [vmem:[%s169 + $0x238] sm:$0xff]
      %v264 = vld [vmem:[%s169 + $0x240] sm:$0xf]
      %v265 = vld [vmem:[%s169 + $0x244] sm:$0xff]
      %v266 = vld [vmem:[%s169 + $0x24c] sm:$0xff]
      %v267 = vld [vmem:[%s169 + $0x254] sm:$0xf]
      %v268 = vld [vmem:[%s169 + $0x258] sm:$0xff]
      %v269 = vld [vmem:[%s169 + $0x260] sm:$0xff]
      %v270 = vld [vmem:[%s169 + $0x268] sm:$0xf]
      %v271 = vld [vmem:[%s169 + $0x26c] sm:$0xff]
      %v272 = vld [vmem:[%s169 + $0x274] sm:$0xff]
      %v273 = vld [vmem:[%s169 + $0x27c] sm:$0xf]
      %v274 = vld [vmem:[%s169 + $0x280] sm:$0xff]
      %v275 = vld [vmem:[%s169 + $0x288] sm:$0xff]
      %v276 = vld [vmem:[%s169 + $0x290] sm:$0xf]
      %v277 = vld [vmem:[%s169 + $0x294] sm:$0xff]
      %v278 = vld [vmem:[%s169 + $0x29c] sm:$0xff]
      %v279 = vld [vmem:[%s169 + $0x2a4] sm:$0xf]
      %v280 = vld [vmem:[%s169 + $0x2a8] sm:$0xff]
      %v281 = vld [vmem:[%s169 + $0x2b0] sm:$0xff]
      %v282 = vld [vmem:[%s169 + $0x2b8] sm:$0xf]
      %v283 = vld [vmem:[%s169 + $0x2bc] sm:$0xff]
      %v284 = vld [vmem:[%s169 + $0x2c4] sm:$0xff]
      %v285 = vld [vmem:[%s169 + $0x2cc] sm:$0xf]
      %v286 = vld [vmem:[%s169 + $0x2d0] sm:$0xff]
      %v287 = vld [vmem:[%s169 + $0x2d8] sm:$0xff]
      %v288 = vld [vmem:[%s169 + $0x2e0] sm:$0xf]
      %v289 = vld [vmem:[%s169 + $0x2e4] sm:$0xff]
      %v290 = vld [vmem:[%s169 + $0x2ec] sm:$0xff]
      %v291 = vld [vmem:[%s169 + $0x2f4] sm:$0xf]
      %v292 = vld [vmem:[%s169 + $0x2f8] sm:$0xff]
      %v293 = vld [vmem:[%s169 + $0x300] sm:$0xff]
      %v294 = vld [vmem:[%s169 + $0x308] sm:$0xf]
      %v295 = vld [vmem:[%s169 + $0x30c] sm:$0xff]
      %v296 = vld [vmem:[%s169 + $0x314] sm:$0xff]
      %v297 = vld [vmem:[%s169 + $0x31c] sm:$0xf]
      %v298 = vld [vmem:[%s169 + $0x320] sm:$0xff]
      %v299 = vld [vmem:[%s169 + $0x328] sm:$0xff]
      %v300 = vld [vmem:[%s169 + $0x330] sm:$0xf]
      %v301 = vld [vmem:[%s169 + $0x334] sm:$0xff]
      %v302 = vld [vmem:[%s169 + $0x33c] sm:$0xff]
      %v303 = vld [vmem:[%s169 + $0x344] sm:$0xf]
      %v304 = vld [vmem:[%s169 + $0x348] sm:$0xff]
      %v305 = vld [vmem:[%s169 + $0x350] sm:$0xff]
      %v306 = vld [vmem:[%s169 + $0x358] sm:$0xf]
      %v307 = vld [vmem:[%s169 + $0x35c] sm:$0xff]
      %v308 = vld [vmem:[%s169 + $0x364] sm:$0xff]
      %v309 = vld [vmem:[%s169 + $0x36c] sm:$0xf]
      %v310 = vld [vmem:[%s169 + $0x370] sm:$0xff]
      %v311 = vld [vmem:[%s169 + $0x378] sm:$0xff]
      %v312 = vld [vmem:[%s169 + $0x380] sm:$0xf]
      %v313 = vld [vmem:[%s169 + $0x384] sm:$0xff]
      %v314 = vld [vmem:[%s169 + $0x38c] sm:$0xff]
      %v315 = vld [vmem:[%s169 + $0x394] sm:$0xf]
      %v316 = vld [vmem:[%s169 + $0x398] sm:$0xff]
      %v317 = vld [vmem:[%s169 + $0x3a0] sm:$0xff]
      %v318 = vld [vmem:[%s169 + $0x3a8] sm:$0xf]
      %v319 = vld [vmem:[%s169 + $0x3ac] sm:$0xff]
      %v320 = vld [vmem:[%s169 + $0x3b4] sm:$0xff]
      %v321 = vld [vmem:[%s169 + $0x3bc] sm:$0xf]
      %v322 = vld [vmem:[%s169 + $0x3c0] sm:$0xff]
      %v323 = vld [vmem:[%s169 + $0x3c8] sm:$0xff]
      %v324 = vld [vmem:[%s169 + $0x3d0] sm:$0xf]
      %v325 = vld [vmem:[%s169 + $0x3d4] sm:$0xff]
      %v326 = vld [vmem:[%s169 + $0x3dc] sm:$0xff]
      %v327 = vld [vmem:[%s169 + $0x3e4] sm:$0xf]
      %v328 = vld [vmem:[%s169 + $0x3e8] sm:$0xff]
      %v329 = vld [vmem:[%s169 + $0x3f0] sm:$0xff]
      %v330 = vld [vmem:[%s169 + $0x3f8] sm:$0xf]
      %v331 = vld [vmem:[%s169 + $0x3fc] sm:$0xff]
      %v332 = vld [vmem:[%s169 + $0x404] sm:$0xff]
      %v333 = vld [vmem:[%s169 + $0x40c] sm:$0xf]
      %v334 = vld [vmem:[%s169 + $0x410] sm:$0xff]
      %v335 = vld [vmem:[%s169 + $0x418] sm:$0xff]
      %v336 = vld [vmem:[%s169 + $0x420] sm:$0xf]
      %v337 = vld [vmem:[%s169 + $0x424] sm:$0xff]
      %v338 = vld [vmem:[%s169 + $0x42c] sm:$0xff]
      %v339 = vld [vmem:[%s169 + $0x434] sm:$0xf]
      %v340 = vld [vmem:[%s169 + $0x438] sm:$0xff]
      %v341 = vld [vmem:[%s169 + $0x440] sm:$0xff]
      %v342 = vld [vmem:[%s169 + $0x448] sm:$0xf]
      %v343 = vld [vmem:[%s169 + $0x44c] sm:$0xff]
      %v344 = vld [vmem:[%s169 + $0x454] sm:$0xff]
      %v345 = vld [vmem:[%s169 + $0x45c] sm:$0xf]
      %v346 = vld [vmem:[%s169 + $0x460] sm:$0xff]
      %v347 = vld [vmem:[%s169 + $0x468] sm:$0xff]
      %v348 = vld [vmem:[%s169 + $0x470] sm:$0xf]
      %v349 = vld [vmem:[%s169 + $0x474] sm:$0xff]
      %v350 = vld [vmem:[%s169 + $0x47c] sm:$0xff]
      %v351 = vld [vmem:[%s169 + $0x484] sm:$0xf]
      %v352 = vld [vmem:[%s169 + $0x488] sm:$0xff]
      %v353 = vld [vmem:[%s169 + $0x490] sm:$0xff]
      %v354 = vld [vmem:[%s169 + $0x498] sm:$0xf]
      %v355 = vld [vmem:[%s169 + $0x49c] sm:$0xff]
      %v356 = vld [vmem:[%s169 + $0x4a4] sm:$0xff]
      %v357 = vld [vmem:[%s169 + $0x4ac] sm:$0xf]
      %v358 = vld [vmem:[%s169 + $0x4b0] sm:$0xff]
      %v359 = vld [vmem:[%s169 + $0x4b8] sm:$0xff]
      %v360 = vld [vmem:[%s169 + $0x4c0] sm:$0xf]
      %v361 = vld [vmem:[%s169 + $0x4c4] sm:$0xff]
      %v362 = vld [vmem:[%s169 + $0x4cc] sm:$0xff]
      %v363 = vld [vmem:[%s169 + $0x4d4] sm:$0xf]
      %v364 = vld [vmem:[%s169 + $0x4d8] sm:$0xff]
      %v365 = vld [vmem:[%s169 + $0x4e0] sm:$0xff]
      %v366 = vld [vmem:[%s169 + $0x4e8] sm:$0xf]
      %v367 = vld [vmem:[%s169 + $0x4ec] sm:$0xff]
      %v368 = vld [vmem:[%s169 + $0x4f4] sm:$0xff]
      %v369 = vld [vmem:[%s169 + $0x4fc] sm:$0xf]
      %v370 = vld [vmem:[%s1] sm:$0xf]
      %v371 = vld [vmem:[%s1 + $0x4] sm:$0xf]
      %v372 = vld [vmem:[%s1 + $0x8] sm:$0xf]
      %v373 = vld [vmem:[%s1 + $0xc] sm:$0xf]
      %v374 = vld [vmem:[%s1 + $0x10] sm:$0xf]
      %v375 = vld [vmem:[%s1 + $0x14] sm:$0xf]
      %v376 = vld [vmem:[%s1 + $0x18] sm:$0xf]
      %v377 = vld [vmem:[%s1 + $0x1c] sm:$0xf]
      %v378 = vld [vmem:[%s1 + $0x20] sm:$0xf]
      %v379 = vld [vmem:[%s1 + $0x24] sm:$0xf]
      %v380 = vld [vmem:[%s1 + $0x28] sm:$0xf]
      %v381 = vld [vmem:[%s1 + $0x2c] sm:$0xf]
      %v382 = vld [vmem:[%s1 + $0x30] sm:$0xf]
      %v383 = vld [vmem:[%s1 + $0x34] sm:$0xf]
      %v384 = vld [vmem:[%s1 + $0x38] sm:$0xf]
      %v385 = vld [vmem:[%s1 + $0x3c] sm:$0xf]
      %v386 = vld [vmem:[%s1 + $0x40] sm:$0xf]
      %v387 = vld [vmem:[%s1 + $0x44] sm:$0xf]
      %v388 = vld [vmem:[%s1 + $0x48] sm:$0xf]
      %v389 = vld [vmem:[%s1 + $0x4c] sm:$0xf]
      %v390 = vld [vmem:[%s1 + $0x50] sm:$0xf]
      %v391 = vld [vmem:[%s1 + $0x54] sm:$0xf]
      %v392 = vld [vmem:[%s1 + $0x58] sm:$0xf]
      %v393 = vld [vmem:[%s1 + $0x5c] sm:$0xf]
      %v394 = vld [vmem:[%s1 + $0x60] sm:$0xf]
      %v395 = vld [vmem:[%s1 + $0x64] sm:$0xf]
      %v396 = vld [vmem:[%s1 + $0x68] sm:$0xf]
      %v397 = vld [vmem:[%s1 + $0x6c] sm:$0xf]
      %v398 = vld [vmem:[%s1 + $0x70] sm:$0xf]
      %v399 = vld [vmem:[%s1 + $0x74] sm:$0xf]
      %v400 = vld [vmem:[%s1 + $0x78] sm:$0xf]
      %v401 = vld [vmem:[%s1 + $0x7c] sm:$0xf]
      %v402 = vld [vmem:[%s1 + $0x80] sm:$0xf]
      %v403 = vld [vmem:[%s1 + $0x84] sm:$0xf]
      %v404 = vld [vmem:[%s1 + $0x88] sm:$0xf]
      %v405 = vld [vmem:[%s1 + $0x8c] sm:$0xf]
      %v406 = vld [vmem:[%s1 + $0x90] sm:$0xf]
      %v407 = vld [vmem:[%s1 + $0x94] sm:$0xf]
      %v408 = vld [vmem:[%s1 + $0x98] sm:$0xf]
      %v409 = vld [vmem:[%s1 + $0x9c] sm:$0xf]
      %v410 = vld [vmem:[%s1 + $0xa0] sm:$0xf]
      %v411 = vld [vmem:[%s1 + $0xa4] sm:$0xf]
      %v412 = vld [vmem:[%s1 + $0xa8] sm:$0xf]
      %v413 = vld [vmem:[%s1 + $0xac] sm:$0xf]
      %v414 = vld [vmem:[%s1 + $0xb0] sm:$0xf]
      %v415 = vld [vmem:[%s1 + $0xb4] sm:$0xf]
      %v416 = vld [vmem:[%s1 + $0xb8] sm:$0xf]
      %v417 = vld [vmem:[%s1 + $0xbc] sm:$0xf]
      %v418 = vld [vmem:[%s1 + $0xc0] sm:$0xf]
      %v419 = vld [vmem:[%s1 + $0xc4] sm:$0xf]
      %v420 = vld [vmem:[%s1 + $0xc8] sm:$0xf]
      %v421 = vld [vmem:[%s1 + $0xcc] sm:$0xf]
      %v422 = vld [vmem:[%s1 + $0xd0] sm:$0xf]
      %v423 = vld [vmem:[%s1 + $0xd4] sm:$0xf]
      %v424 = vld [vmem:[%s1 + $0xd8] sm:$0xf]
      %v425 = vld [vmem:[%s1 + $0xdc] sm:$0xf]
      %v426 = vld [vmem:[%s1 + $0xe0] sm:$0xf]
      %v427 = vld [vmem:[%s1 + $0xe4] sm:$0xf]
      %v428 = vld [vmem:[%s1 + $0xe8] sm:$0xf]
      %v429 = vld [vmem:[%s1 + $0xec] sm:$0xf]
      %v430 = vld [vmem:[%s1 + $0xf0] sm:$0xf]
      %v431 = vld [vmem:[%s1 + $0xf4] sm:$0xf]
      %v432 = vld [vmem:[%s1 + $0xf8] sm:$0xf]
      %v433 = vld [vmem:[%s1 + $0xfc] sm:$0xf]
      %v434 = vld [vmem:[%s1 + $0x100] sm:$0xf]
      %v435 = vld [vmem:[%s1 + $0x104] sm:$0xf]
      %v436 = vld [vmem:[%s1 + $0x108] sm:$0xf]
      %v437 = vld [vmem:[%s1 + $0x10c] sm:$0xf]
      %v438 = vld [vmem:[%s1 + $0x110] sm:$0xf]
      %v439 = vld [vmem:[%s1 + $0x114] sm:$0xf]
      %v440 = vld [vmem:[%s1 + $0x118] sm:$0xf]
      %v441 = vld [vmem:[%s1 + $0x11c] sm:$0xf]
      %v442 = vld [vmem:[%s1 + $0x120] sm:$0xf]
      %v443 = vld [vmem:[%s1 + $0x124] sm:$0xf]
      %v444 = vld [vmem:[%s1 + $0x128] sm:$0xf]
      %v445 = vld [vmem:[%s2] sm:$0x1]
      %v447 = vlaneseq
      %v448 = vshrl.u32 %v447, 7
      %v449 = vsub.s32 0, %v448
      %v450 = vrot.slane %v445, %v449
      %v644 = vunpack.c.l.b16 %v178
      %v645 = vunpack.c.h.b16 %v178
      %v646 = vunpack.c.l.b16 %v179
      %v647 = vunpack.c.h.b16 %v179
      %v648 = vunpack.c.l.b16 %v180
      %v649 = vunpack.c.l.b16 %v181
      %v650 = vunpack.c.h.b16 %v181
      %v651 = vunpack.c.l.b16 %v182
      %v652 = vunpack.c.h.b16 %v182
      %v653 = vunpack.c.l.b16 %v183
      %v654 = vunpack.c.l.b16 %v184
      %v655 = vunpack.c.h.b16 %v184
      %v656 = vunpack.c.l.b16 %v185
      %v657 = vunpack.c.h.b16 %v185
      %v658 = vunpack.c.l.b16 %v186
      %v659 = vunpack.c.l.b16 %v187
      %v660 = vunpack.c.h.b16 %v187
      %v661 = vunpack.c.l.b16 %v188
      %v662 = vunpack.c.h.b16 %v188
      %v663 = vunpack.c.l.b16 %v189
      %v664 = vunpack.c.l.b16 %v190
      %v665 = vunpack.c.h.b16 %v190
      %v666 = vunpack.c.l.b16 %v191
      %v667 = vunpack.c.h.b16 %v191
      %v668 = vunpack.c.l.b16 %v192
      %v669 = vunpack.c.l.b16 %v193
      %v670 = vunpack.c.h.b16 %v193
      %v671 = vunpack.c.l.b16 %v194
      %v672 = vunpack.c.h.b16 %v194
      %v673 = vunpack.c.l.b16 %v195
      %v674 = vunpack.c.l.b16 %v196
      %v675 = vunpack.c.h.b16 %v196
      %v676 = vunpack.c.l.b16 %v197
      %v677 = vunpack.c.h.b16 %v197
      %v678 = vunpack.c.l.b16 %v198
      %v679 = vunpack.c.l.b16 %v199
      %v680 = vunpack.c.h.b16 %v199
      %v681 = vunpack.c.l.b16 %v200
      %v682 = vunpack.c.h.b16 %v200
      %v683 = vunpack.c.l.b16 %v201
      %v684 = vunpack.c.l.b16 %v202
      %v685 = vunpack.c.h.b16 %v202
      %v686 = vunpack.c.l.b16 %v203
      %v687 = vunpack.c.h.b16 %v203
      %v688 = vunpack.c.l.b16 %v204
      %v689 = vunpack.c.l.b16 %v205
      %v690 = vunpack.c.h.b16 %v205
      %v691 = vunpack.c.l.b16 %v206
      %v692 = vunpack.c.h.b16 %v206
      %v693 = vunpack.c.l.b16 %v207
      %v694 = vunpack.c.l.b16 %v208
      %v695 = vunpack.c.h.b16 %v208
      %v696 = vunpack.c.l.b16 %v209
      %v697 = vunpack.c.h.b16 %v209
      %v698 = vunpack.c.l.b16 %v210
      %v699 = vunpack.c.l.b16 %v211
      %v700 = vunpack.c.h.b16 %v211
      %v701 = vunpack.c.l.b16 %v212
      %v702 = vunpack.c.h.b16 %v212
      %v703 = vunpack.c.l.b16 %v213
      %v704 = vunpack.c.l.b16 %v214
      %v705 = vunpack.c.h.b16 %v214
      %v706 = vunpack.c.l.b16 %v215
      %v707 = vunpack.c.h.b16 %v215
      %v708 = vunpack.c.l.b16 %v216
      %v709 = vunpack.c.l.b16 %v217
      %v710 = vunpack.c.h.b16 %v217
      %v711 = vunpack.c.l.b16 %v218
      %v712 = vunpack.c.h.b16 %v218
      %v713 = vunpack.c.l.b16 %v219
      %v714 = vunpack.c.l.b16 %v220
      %v715 = vunpack.c.h.b16 %v220
      %v716 = vunpack.c.l.b16 %v221
      %v717 = vunpack.c.h.b16 %v221
      %v718 = vunpack.c.l.b16 %v222
      %v719 = vunpack.c.l.b16 %v223
      %v720 = vunpack.c.h.b16 %v223
      %v721 = vunpack.c.l.b16 %v224
      %v722 = vunpack.c.h.b16 %v224
      %v723 = vunpack.c.l.b16 %v225
      %v724 = vunpack.c.l.b16 %v226
      %v725 = vunpack.c.h.b16 %v226
      %v726 = vunpack.c.l.b16 %v227
      %v727 = vunpack.c.h.b16 %v227
      %v728 = vunpack.c.l.b16 %v228
      %v729 = vunpack.c.l.b16 %v229
      %v730 = vunpack.c.h.b16 %v229
      %v731 = vunpack.c.l.b16 %v230
      %v732 = vunpack.c.h.b16 %v230
      %v733 = vunpack.c.l.b16 %v231
      %v734 = vunpack.c.l.b16 %v232
      %v735 = vunpack.c.h.b16 %v232
      %v736 = vunpack.c.l.b16 %v233
      %v737 = vunpack.c.h.b16 %v233
      %v738 = vunpack.c.l.b16 %v234
      %v739 = vunpack.c.l.b16 %v235
      %v740 = vunpack.c.h.b16 %v235
      %v741 = vunpack.c.l.b16 %v236
      %v742 = vunpack.c.h.b16 %v236
      %v743 = vunpack.c.l.b16 %v237
      %v744 = vunpack.c.l.b16 %v238
      %v745 = vunpack.c.h.b16 %v238
      %v746 = vunpack.c.l.b16 %v239
      %v747 = vunpack.c.h.b16 %v239
      %v748 = vunpack.c.l.b16 %v240
      %v749 = vunpack.c.l.b16 %v241
      %v750 = vunpack.c.h.b16 %v241
      %v751 = vunpack.c.l.b16 %v242
      %v752 = vunpack.c.h.b16 %v242
      %v753 = vunpack.c.l.b16 %v243
      %v754 = vunpack.c.l.b16 %v244
      %v755 = vunpack.c.h.b16 %v244
      %v756 = vunpack.c.l.b16 %v245
      %v757 = vunpack.c.h.b16 %v245
      %v758 = vunpack.c.l.b16 %v246
      %v759 = vunpack.c.l.b16 %v247
      %v760 = vunpack.c.h.b16 %v247
      %v761 = vunpack.c.l.b16 %v248
      %v762 = vunpack.c.h.b16 %v248
      %v763 = vunpack.c.l.b16 %v249
      %v764 = vunpack.c.l.b16 %v250
      %v765 = vunpack.c.h.b16 %v250
      %v766 = vunpack.c.l.b16 %v251
      %v767 = vunpack.c.h.b16 %v251
      %v768 = vunpack.c.l.b16 %v252
      %v769 = vunpack.c.l.b16 %v253
      %v770 = vunpack.c.h.b16 %v253
      %v771 = vunpack.c.l.b16 %v254
      %v772 = vunpack.c.h.b16 %v254
      %v773 = vunpack.c.l.b16 %v255
      %v774 = vunpack.c.l.b16 %v256
      %v775 = vunpack.c.h.b16 %v256
      %v776 = vunpack.c.l.b16 %v257
      %v777 = vunpack.c.h.b16 %v257
      %v778 = vunpack.c.l.b16 %v258
      %v779 = vunpack.c.l.b16 %v259
      %v780 = vunpack.c.h.b16 %v259
      %v781 = vunpack.c.l.b16 %v260
      %v782 = vunpack.c.h.b16 %v260
      %v783 = vunpack.c.l.b16 %v261
      %v784 = vunpack.c.l.b16 %v262
      %v785 = vunpack.c.h.b16 %v262
      %v786 = vunpack.c.l.b16 %v263
      %v787 = vunpack.c.h.b16 %v263
      %v788 = vunpack.c.l.b16 %v264
      %v789 = vunpack.c.l.b16 %v265
      %v790 = vunpack.c.h.b16 %v265
      %v791 = vunpack.c.l.b16 %v266
      %v792 = vunpack.c.h.b16 %v266
      %v793 = vunpack.c.l.b16 %v267
      %v794 = vunpack.c.l.b16 %v268
      %v795 = vunpack.c.h.b16 %v268
      %v796 = vunpack.c.l.b16 %v269
      %v797 = vunpack.c.h.b16 %v269
      %v798 = vunpack.c.l.b16 %v270
      %v799 = vunpack.c.l.b16 %v271
      %v800 = vunpack.c.h.b16 %v271
      %v801 = vunpack.c.l.b16 %v272
      %v802 = vunpack.c.h.b16 %v272
      %v803 = vunpack.c.l.b16 %v273
      %v804 = vunpack.c.l.b16 %v274
      %v805 = vunpack.c.h.b16 %v274
      %v806 = vunpack.c.l.b16 %v275
      %v807 = vunpack.c.h.b16 %v275
      %v808 = vunpack.c.l.b16 %v276
      %v809 = vunpack.c.l.b16 %v277
      %v810 = vunpack.c.h.b16 %v277
      %v811 = vunpack.c.l.b16 %v278
      %v812 = vunpack.c.h.b16 %v278
      %v813 = vunpack.c.l.b16 %v279
      %v814 = vunpack.c.l.b16 %v280
      %v815 = vunpack.c.h.b16 %v280
      %v816 = vunpack.c.l.b16 %v281
      %v817 = vunpack.c.h.b16 %v281
      %v818 = vunpack.c.l.b16 %v282
      %v819 = vunpack.c.l.b16 %v283
      %v820 = vunpack.c.h.b16 %v283
      %v821 = vunpack.c.l.b16 %v284
      %v822 = vunpack.c.h.b16 %v284
      %v823 = vunpack.c.l.b16 %v285
      %v824 = vunpack.c.l.b16 %v286
      %v825 = vunpack.c.h.b16 %v286
      %v826 = vunpack.c.l.b16 %v287
      %v827 = vunpack.c.h.b16 %v287
      %v828 = vunpack.c.l.b16 %v288
      %v829 = vunpack.c.l.b16 %v289
      %v830 = vunpack.c.h.b16 %v289
      %v831 = vunpack.c.l.b16 %v290
      %v832 = vunpack.c.h.b16 %v290
      %v833 = vunpack.c.l.b16 %v291
      %v834 = vunpack.c.l.b16 %v292
      %v835 = vunpack.c.h.b16 %v292
      %v836 = vunpack.c.l.b16 %v293
      %v837 = vunpack.c.h.b16 %v293
      %v838 = vunpack.c.l.b16 %v294
      %v839 = vunpack.c.l.b16 %v295
      %v840 = vunpack.c.h.b16 %v295
      %v841 = vunpack.c.l.b16 %v296
      %v842 = vunpack.c.h.b16 %v296
      %v843 = vunpack.c.l.b16 %v297
      %v844 = vunpack.c.l.b16 %v298
      %v845 = vunpack.c.h.b16 %v298
      %v846 = vunpack.c.l.b16 %v299
      %v847 = vunpack.c.h.b16 %v299
      %v848 = vunpack.c.l.b16 %v300
      %v849 = vunpack.c.l.b16 %v301
      %v850 = vunpack.c.h.b16 %v301
      %v851 = vunpack.c.l.b16 %v302
      %v852 = vunpack.c.h.b16 %v302
      %v853 = vunpack.c.l.b16 %v303
      %v854 = vunpack.c.l.b16 %v304
      %v855 = vunpack.c.h.b16 %v304
      %v856 = vunpack.c.l.b16 %v305
      %v857 = vunpack.c.h.b16 %v305
      %v858 = vunpack.c.l.b16 %v306
      %v859 = vunpack.c.l.b16 %v307
      %v860 = vunpack.c.h.b16 %v307
      %v861 = vunpack.c.l.b16 %v308
      %v862 = vunpack.c.h.b16 %v308
      %v863 = vunpack.c.l.b16 %v309
      %v864 = vunpack.c.l.b16 %v310
      %v865 = vunpack.c.h.b16 %v310
      %v866 = vunpack.c.l.b16 %v311
      %v867 = vunpack.c.h.b16 %v311
      %v868 = vunpack.c.l.b16 %v312
      %v869 = vunpack.c.l.b16 %v313
      %v870 = vunpack.c.h.b16 %v313
      %v871 = vunpack.c.l.b16 %v314
      %v872 = vunpack.c.h.b16 %v314
      %v873 = vunpack.c.l.b16 %v315
      %v874 = vunpack.c.l.b16 %v316
      %v875 = vunpack.c.h.b16 %v316
      %v876 = vunpack.c.l.b16 %v317
      %v877 = vunpack.c.h.b16 %v317
      %v878 = vunpack.c.l.b16 %v318
      %v879 = vunpack.c.l.b16 %v319
      %v880 = vunpack.c.h.b16 %v319
      %v881 = vunpack.c.l.b16 %v320
      %v882 = vunpack.c.h.b16 %v320
      %v883 = vunpack.c.l.b16 %v321
      %v884 = vunpack.c.l.b16 %v322
      %v885 = vunpack.c.h.b16 %v322
      %v886 = vunpack.c.l.b16 %v323
      %v887 = vunpack.c.h.b16 %v323
      %v888 = vunpack.c.l.b16 %v324
      %v889 = vunpack.c.l.b16 %v325
      %v890 = vunpack.c.h.b16 %v325
      %v891 = vunpack.c.l.b16 %v326
      %v892 = vunpack.c.h.b16 %v326
      %v893 = vunpack.c.l.b16 %v327
      %v894 = vunpack.c.l.b16 %v328
      %v895 = vunpack.c.h.b16 %v328
      %v896 = vunpack.c.l.b16 %v329
      %v897 = vunpack.c.h.b16 %v329
      %v898 = vunpack.c.l.b16 %v330
      %v899 = vunpack.c.l.b16 %v331
      %v900 = vunpack.c.h.b16 %v331
      %v901 = vunpack.c.l.b16 %v332
      %v902 = vunpack.c.h.b16 %v332
      %v903 = vunpack.c.l.b16 %v333
      %v904 = vunpack.c.l.b16 %v334
      %v905 = vunpack.c.h.b16 %v334
      %v906 = vunpack.c.l.b16 %v335
      %v907 = vunpack.c.h.b16 %v335
      %v908 = vunpack.c.l.b16 %v336
      %v909 = vunpack.c.l.b16 %v337
      %v910 = vunpack.c.h.b16 %v337
      %v911 = vunpack.c.l.b16 %v338
      %v912 = vunpack.c.h.b16 %v338
      %v913 = vunpack.c.l.b16 %v339
      %v914 = vunpack.c.l.b16 %v340
      %v915 = vunpack.c.h.b16 %v340
      %v916 = vunpack.c.l.b16 %v341
      %v917 = vunpack.c.h.b16 %v341
      %v918 = vunpack.c.l.b16 %v342
      %v919 = vunpack.c.l.b16 %v343
      %v920 = vunpack.c.h.b16 %v343
      %v921 = vunpack.c.l.b16 %v344
      %v922 = vunpack.c.h.b16 %v344
      %v923 = vunpack.c.l.b16 %v345
      %v924 = vunpack.c.l.b16 %v346
      %v925 = vunpack.c.h.b16 %v346
      %v926 = vunpack.c.l.b16 %v347
      %v927 = vunpack.c.h.b16 %v347
      %v928 = vunpack.c.l.b16 %v348
      %v929 = vunpack.c.l.b16 %v349
      %v930 = vunpack.c.h.b16 %v349
      %v931 = vunpack.c.l.b16 %v350
      %v932 = vunpack.c.h.b16 %v350
      %v933 = vunpack.c.l.b16 %v351
      %v934 = vunpack.c.l.b16 %v352
      %v935 = vunpack.c.h.b16 %v352
      %v936 = vunpack.c.l.b16 %v353
      %v937 = vunpack.c.h.b16 %v353
      %v938 = vunpack.c.l.b16 %v354
      %v939 = vunpack.c.l.b16 %v355
      %v940 = vunpack.c.h.b16 %v355
      %v941 = vunpack.c.l.b16 %v356
      %v942 = vunpack.c.h.b16 %v356
      %v943 = vunpack.c.l.b16 %v357
      %v944 = vunpack.c.l.b16 %v358
      %v945 = vunpack.c.h.b16 %v358
      %v946 = vunpack.c.l.b16 %v359
      %v947 = vunpack.c.h.b16 %v359
      %v948 = vunpack.c.l.b16 %v360
      %v949 = vunpack.c.l.b16 %v361
      %v950 = vunpack.c.h.b16 %v361
      %v951 = vunpack.c.l.b16 %v362
      %v952 = vunpack.c.h.b16 %v362
      %v953 = vunpack.c.l.b16 %v363
      %v954 = vunpack.c.l.b16 %v364
      %v955 = vunpack.c.h.b16 %v364
      %v956 = vunpack.c.l.b16 %v365
      %v957 = vunpack.c.h.b16 %v365
      %v958 = vunpack.c.l.b16 %v366
      %v959 = vunpack.c.l.b16 %v367
      %v960 = vunpack.c.h.b16 %v367
      %v961 = vunpack.c.l.b16 %v368
      %v962 = vunpack.c.h.b16 %v368
      %v963 = vunpack.c.l.b16 %v369
      %v964 = vpack.c.b16 %v649, %v644
      %v965 = vpack.c.b16 %v650, %v645
      %v966 = vpack.c.b16 %v651, %v646
      %v967 = vpack.c.b16 %v652, %v647
      %v968 = vpack.c.b16 %v653, %v648
      %v969 = vpack.c.b16 %v659, %v654
      %v970 = vpack.c.b16 %v660, %v655
      %v971 = vpack.c.b16 %v661, %v656
      %v972 = vpack.c.b16 %v662, %v657
      %v973 = vpack.c.b16 %v663, %v658
      %v974 = vpack.c.b16 %v669, %v664
      %v975 = vpack.c.b16 %v670, %v665
      %v976 = vpack.c.b16 %v671, %v666
      %v977 = vpack.c.b16 %v672, %v667
      %v978 = vpack.c.b16 %v673, %v668
      %v979 = vpack.c.b16 %v679, %v674
      %v980 = vpack.c.b16 %v680, %v675
      %v981 = vpack.c.b16 %v681, %v676
      %v982 = vpack.c.b16 %v682, %v677
      %v983 = vpack.c.b16 %v683, %v678
      %v984 = vpack.c.b16 %v689, %v684
      %v985 = vpack.c.b16 %v690, %v685
      %v986 = vpack.c.b16 %v691, %v686
      %v987 = vpack.c.b16 %v692, %v687
      %v988 = vpack.c.b16 %v693, %v688
      %v989 = vpack.c.b16 %v699, %v694
      %v990 = vpack.c.b16 %v700, %v695
      %v991 = vpack.c.b16 %v701, %v696
      %v992 = vpack.c.b16 %v702, %v697
      %v993 = vpack.c.b16 %v703, %v698
      %v994 = vpack.c.b16 %v709, %v704
      %v995 = vpack.c.b16 %v710, %v705
      %v996 = vpack.c.b16 %v711, %v706
      %v997 = vpack.c.b16 %v712, %v707
      %v998 = vpack.c.b16 %v713, %v708
      %v999 = vpack.c.b16 %v719, %v714
      %v1000 = vpack.c.b16 %v720, %v715
      %v1001 = vpack.c.b16 %v721, %v716
      %v1002 = vpack.c.b16 %v722, %v717
      %v1003 = vpack.c.b16 %v723, %v718
      %v1004 = vpack.c.b16 %v729, %v724
      %v1005 = vpack.c.b16 %v730, %v725
      %v1006 = vpack.c.b16 %v731, %v726
      %v1007 = vpack.c.b16 %v732, %v727
      %v1008 = vpack.c.b16 %v733, %v728
      %v1009 = vpack.c.b16 %v739, %v734
      %v1010 = vpack.c.b16 %v740, %v735
      %v1011 = vpack.c.b16 %v741, %v736
      %v1012 = vpack.c.b16 %v742, %v737
      %v1013 = vpack.c.b16 %v743, %v738
      %v1014 = vpack.c.b16 %v749, %v744
      %v1015 = vpack.c.b16 %v750, %v745
      %v1016 = vpack.c.b16 %v751, %v746
      %v1017 = vpack.c.b16 %v752, %v747
      %v1018 = vpack.c.b16 %v753, %v748
      %v1019 = vpack.c.b16 %v759, %v754
      %v1020 = vpack.c.b16 %v760, %v755
      %v1021 = vpack.c.b16 %v761, %v756
      %v1022 = vpack.c.b16 %v762, %v757
      %v1023 = vpack.c.b16 %v763, %v758
      %v1024 = vpack.c.b16 %v769, %v764
      %v1025 = vpack.c.b16 %v770, %v765
      %v1026 = vpack.c.b16 %v771, %v766
      %v1027 = vpack.c.b16 %v772, %v767
      %v1028 = vpack.c.b16 %v773, %v768
      %v1029 = vpack.c.b16 %v779, %v774
      %v1030 = vpack.c.b16 %v780, %v775
      %v1031 = vpack.c.b16 %v781, %v776
      %v1032 = vpack.c.b16 %v782, %v777
      %v1033 = vpack.c.b16 %v783, %v778
      %v1034 = vpack.c.b16 %v789, %v784
      %v1035 = vpack.c.b16 %v790, %v785
      %v1036 = vpack.c.b16 %v791, %v786
      %v1037 = vpack.c.b16 %v792, %v787
      %v1038 = vpack.c.b16 %v793, %v788
      %v1039 = vpack.c.b16 %v799, %v794
      %v1040 = vpack.c.b16 %v800, %v795
      %v1041 = vpack.c.b16 %v801, %v796
      %v1042 = vpack.c.b16 %v802, %v797
      %v1043 = vpack.c.b16 %v803, %v798
      %v1044 = vpack.c.b16 %v809, %v804
      %v1045 = vpack.c.b16 %v810, %v805
      %v1046 = vpack.c.b16 %v811, %v806
      %v1047 = vpack.c.b16 %v812, %v807
      %v1048 = vpack.c.b16 %v813, %v808
      %v1049 = vpack.c.b16 %v819, %v814
      %v1050 = vpack.c.b16 %v820, %v815
      %v1051 = vpack.c.b16 %v821, %v816
      %v1052 = vpack.c.b16 %v822, %v817
      %v1053 = vpack.c.b16 %v823, %v818
      %v1054 = vpack.c.b16 %v829, %v824
      %v1055 = vpack.c.b16 %v830, %v825
      %v1056 = vpack.c.b16 %v831, %v826
      %v1057 = vpack.c.b16 %v832, %v827
      %v1058 = vpack.c.b16 %v833, %v828
      %v1059 = vpack.c.b16 %v839, %v834
      %v1060 = vpack.c.b16 %v840, %v835
      %v1061 = vpack.c.b16 %v841, %v836
      %v1062 = vpack.c.b16 %v842, %v837
      %v1063 = vpack.c.b16 %v843, %v838
      %v1064 = vpack.c.b16 %v849, %v844
      %v1065 = vpack.c.b16 %v850, %v845
      %v1066 = vpack.c.b16 %v851, %v846
      %v1067 = vpack.c.b16 %v852, %v847
      %v1068 = vpack.c.b16 %v853, %v848
      %v1069 = vpack.c.b16 %v859, %v854
      %v1070 = vpack.c.b16 %v860, %v855
      %v1071 = vpack.c.b16 %v861, %v856
      %v1072 = vpack.c.b16 %v862, %v857
      %v1073 = vpack.c.b16 %v863, %v858
      %v1074 = vpack.c.b16 %v869, %v864
      %v1075 = vpack.c.b16 %v870, %v865
      %v1076 = vpack.c.b16 %v871, %v866
      %v1077 = vpack.c.b16 %v872, %v867
      %v1078 = vpack.c.b16 %v873, %v868
      %v1079 = vpack.c.b16 %v879, %v874
      %v1080 = vpack.c.b16 %v880, %v875
      %v1081 = vpack.c.b16 %v881, %v876
      %v1082 = vpack.c.b16 %v882, %v877
      %v1083 = vpack.c.b16 %v883, %v878
      %v1084 = vpack.c.b16 %v889, %v884
      %v1085 = vpack.c.b16 %v890, %v885
      %v1086 = vpack.c.b16 %v891, %v886
      %v1087 = vpack.c.b16 %v892, %v887
      %v1088 = vpack.c.b16 %v893, %v888
      %v1089 = vpack.c.b16 %v899, %v894
      %v1090 = vpack.c.b16 %v900, %v895
      %v1091 = vpack.c.b16 %v901, %v896
      %v1092 = vpack.c.b16 %v902, %v897
      %v1093 = vpack.c.b16 %v903, %v898
      %v1094 = vpack.c.b16 %v909, %v904
      %v1095 = vpack.c.b16 %v910, %v905
      %v1096 = vpack.c.b16 %v911, %v906
      %v1097 = vpack.c.b16 %v912, %v907
      %v1098 = vpack.c.b16 %v913, %v908
      %v1099 = vpack.c.b16 %v919, %v914
      %v1100 = vpack.c.b16 %v920, %v915
      %v1101 = vpack.c.b16 %v921, %v916
      %v1102 = vpack.c.b16 %v922, %v917
      %v1103 = vpack.c.b16 %v923, %v918
      %v1104 = vpack.c.b16 %v929, %v924
      %v1105 = vpack.c.b16 %v930, %v925
      %v1106 = vpack.c.b16 %v931, %v926
      %v1107 = vpack.c.b16 %v932, %v927
      %v1108 = vpack.c.b16 %v933, %v928
      %v1109 = vpack.c.b16 %v939, %v934
      %v1110 = vpack.c.b16 %v940, %v935
      %v1111 = vpack.c.b16 %v941, %v936
      %v1112 = vpack.c.b16 %v942, %v937
      %v1113 = vpack.c.b16 %v943, %v938
      %v1114 = vpack.c.b16 %v949, %v944
      %v1115 = vpack.c.b16 %v950, %v945
      %v1116 = vpack.c.b16 %v951, %v946
      %v1117 = vpack.c.b16 %v952, %v947
      %v1118 = vpack.c.b16 %v953, %v948
      %v1119 = vpack.c.b16 %v959, %v954
      %v1120 = vpack.c.b16 %v960, %v955
      %v1121 = vpack.c.b16 %v961, %v956
      %v1122 = vpack.c.b16 %v962, %v957
      %v1123 = vpack.c.b16 %v963, %v958
      %v1327 = vunpack.c.l.b16 %v370
      %v1328 = vunpack.c.l.b16 %v371
      %v1329 = vunpack.c.l.b16 %v372
      %v1330 = vunpack.c.l.b16 %v373
      %v1331 = vunpack.c.l.b16 %v374
      %v1332 = vunpack.c.l.b16 %v375
      %v1333 = vunpack.c.l.b16 %v376
      %v1334 = vunpack.c.l.b16 %v377
      %v1335 = vunpack.c.l.b16 %v378
      %v1336 = vunpack.c.l.b16 %v379
      %v1337 = vunpack.c.l.b16 %v380
      %v1338 = vunpack.c.l.b16 %v381
      %v1339 = vunpack.c.l.b16 %v382
      %v1340 = vunpack.c.l.b16 %v383
      %v1341 = vunpack.c.l.b16 %v384
      %v1342 = vunpack.c.l.b16 %v385
      %v1343 = vunpack.c.l.b16 %v386
      %v1344 = vunpack.c.l.b16 %v387
      %v1345 = vunpack.c.l.b16 %v388
      %v1346 = vunpack.c.l.b16 %v389
      %v1347 = vunpack.c.l.b16 %v390
      %v1348 = vunpack.c.l.b16 %v391
      %v1349 = vunpack.c.l.b16 %v392
      %v1350 = vunpack.c.l.b16 %v393
      %v1351 = vunpack.c.l.b16 %v394
      %v1352 = vunpack.c.l.b16 %v395
      %v1353 = vunpack.c.l.b16 %v396
      %v1354 = vunpack.c.l.b16 %v397
      %v1355 = vunpack.c.l.b16 %v398
      %v1356 = vunpack.c.l.b16 %v399
      %v1357 = vunpack.c.l.b16 %v400
      %v1358 = vunpack.c.l.b16 %v401
      %v1359 = vunpack.c.l.b16 %v402
      %v1360 = vunpack.c.l.b16 %v403
      %v1361 = vunpack.c.l.b16 %v404
      %v1362 = vunpack.c.l.b16 %v405
      %v1363 = vunpack.c.l.b16 %v406
      %v1364 = vunpack.c.l.b16 %v407
      %v1365 = vunpack.c.l.b16 %v408
      %v1366 = vunpack.c.l.b16 %v409
      %v1367 = vunpack.c.l.b16 %v410
      %v1368 = vunpack.c.l.b16 %v411
      %v1369 = vunpack.c.l.b16 %v412
      %v1370 = vunpack.c.l.b16 %v413
      %v1371 = vunpack.c.l.b16 %v414
      %v1372 = vunpack.c.l.b16 %v415
      %v1373 = vunpack.c.l.b16 %v416
      %v1374 = vunpack.c.l.b16 %v417
      %v1375 = vunpack.c.l.b16 %v418
      %v1376 = vunpack.c.l.b16 %v419
      %v1377 = vunpack.c.l.b16 %v420
      %v1378 = vunpack.c.l.b16 %v421
      %v1379 = vunpack.c.l.b16 %v422
      %v1380 = vunpack.c.l.b16 %v423
      %v1381 = vunpack.c.l.b16 %v424
      %v1382 = vunpack.c.l.b16 %v425
      %v1383 = vunpack.c.l.b16 %v426
      %v1384 = vunpack.c.l.b16 %v427
      %v1385 = vunpack.c.l.b16 %v428
      %v1386 = vunpack.c.l.b16 %v429
      %v1387 = vunpack.c.l.b16 %v430
      %v1388 = vunpack.c.l.b16 %v431
      %v1389 = vunpack.c.l.b16 %v432
      %v1390 = vunpack.c.l.b16 %v433
      %v1391 = vunpack.c.l.b16 %v434
      %v1392 = vunpack.c.l.b16 %v435
      %v1393 = vunpack.c.l.b16 %v436
      %v1394 = vunpack.c.l.b16 %v437
      %v1395 = vunpack.c.l.b16 %v438
      %v1396 = vunpack.c.l.b16 %v439
      %v1397 = vunpack.c.l.b16 %v440
      %v1398 = vunpack.c.l.b16 %v441
      %v1399 = vunpack.c.l.b16 %v442
      %v1400 = vunpack.c.l.b16 %v443
      %v1401 = vunpack.c.l.b16 %v444
      %v1402 = vpack.c.b16 %v1328, %v1327
      %v1403 = vpack.c.b16 %v1330, %v1329
      %v1404 = vpack.c.b16 %v1332, %v1331
      %v1405 = vpack.c.b16 %v1334, %v1333
      %v1406 = vpack.c.b16 %v1336, %v1335
      %v1407 = vpack.c.b16 %v1338, %v1337
      %v1408 = vpack.c.b16 %v1340, %v1339
      %v1409 = vpack.c.b16 %v1342, %v1341
      %v1410 = vpack.c.b16 %v1344, %v1343
      %v1411 = vpack.c.b16 %v1346, %v1345
      %v1412 = vpack.c.b16 %v1348, %v1347
      %v1413 = vpack.c.b16 %v1350, %v1349
      %v1414 = vpack.c.b16 %v1352, %v1351
      %v1415 = vpack.c.b16 %v1354, %v1353
      %v1416 = vpack.c.b16 %v1356, %v1355
      %v1417 = vpack.c.b16 %v1358, %v1357
      %v1418 = vpack.c.b16 %v1360, %v1359
      %v1419 = vpack.c.b16 %v1362, %v1361
      %v1420 = vpack.c.b16 %v1364, %v1363
      %v1421 = vpack.c.b16 %v1366, %v1365
      %v1422 = vpack.c.b16 %v1368, %v1367
      %v1423 = vpack.c.b16 %v1370, %v1369
      %v1424 = vpack.c.b16 %v1372, %v1371
      %v1425 = vpack.c.b16 %v1374, %v1373
      %v1426 = vpack.c.b16 %v1376, %v1375
      %v1427 = vpack.c.b16 %v1378, %v1377
      %v1428 = vpack.c.b16 %v1380, %v1379
      %v1429 = vpack.c.b16 %v1382, %v1381
      %v1430 = vpack.c.b16 %v1384, %v1383
      %v1431 = vpack.c.b16 %v1386, %v1385
      %v1432 = vpack.c.b16 %v1388, %v1387
      %v1433 = vpack.c.b16 %v1390, %v1389
      %v1434 = vpack.c.b16 %v1392, %v1391
      %v1435 = vpack.c.b16 %v1394, %v1393
      %v1436 = vpack.c.b16 %v1396, %v1395
      %v1437 = vpack.c.b16 %v1398, %v1397
      %v1438 = vpack.c.b16 %v1400, %v1399
      %v1439 = vpack.c.b16 %v1401, %v1401
      %vm1477 = vcmask 719872
      %v1479 = vsel %vm1477, %v968, 0
      %v1482 = vsel %vm1477, %v973, 0
      %v1485 = vsel %vm1477, %v978, 0
      %v1488 = vsel %vm1477, %v983, 0
      %v1491 = vsel %vm1477, %v988, 0
      %v1494 = vsel %vm1477, %v993, 0
      %v1497 = vsel %vm1477, %v998, 0
      %v1500 = vsel %vm1477, %v1003, 0
      %v1503 = vsel %vm1477, %v1008, 0
      %v1506 = vsel %vm1477, %v1013, 0
      %v1509 = vsel %vm1477, %v1018, 0
      %v1512 = vsel %vm1477, %v1023, 0
      %v1515 = vsel %vm1477, %v1028, 0
      %v1518 = vsel %vm1477, %v1033, 0
      %v1521 = vsel %vm1477, %v1038, 0
      %v1524 = vsel %vm1477, %v1043, 0
      %v1527 = vsel %vm1477, %v1048, 0
      %v1530 = vsel %vm1477, %v1053, 0
      %v1533 = vsel %vm1477, %v1058, 0
      %v1536 = vsel %vm1477, %v1063, 0
      %v1539 = vsel %vm1477, %v1068, 0
      %v1542 = vsel %vm1477, %v1073, 0
      %v1545 = vsel %vm1477, %v1078, 0
      %v1548 = vsel %vm1477, %v1083, 0
      %v1551 = vsel %vm1477, %v1088, 0
      %v1554 = vsel %vm1477, %v1093, 0
      %v1557 = vsel %vm1477, %v1098, 0
      %v1560 = vsel %vm1477, %v1103, 0
      %v1563 = vsel %vm1477, %v1108, 0
      %v1566 = vsel %vm1477, %v1113, 0
      %v1569 = vsel %vm1477, %v1118, 0
      %v1572 = vsel %vm1477, %v1123, 0
      %vm1574 = vcmask 1043456
      %v1576 = vsel %vm1574, %v1439, 0
      %1578 = vmatprep.subr.bf16.mxu0 0
      %1579 = vmatpush1.bf16.msra.mxu0 %v1402
      %1580 = vmatprep.subr.bf16.mxu0 0
      %1581 = vmatpush1.bf16.msra.mxu0 %v1403
      %1582 = vmatprep.subr.bf16.mxu0 0
      %1583 = vmatpush1.bf16.msra.mxu0 %v1404
      %1584 = vmatprep.subr.bf16.mxu0 0
      %1585 = vmatpush1.bf16.msra.mxu0 %v1405
      %1586 = vmatprep.subr.bf16.mxu0 0
      %1587 = vmatpush1.bf16.msra.mxu0 %v1406
      %1588 = vmatprep.subr.bf16.mxu0 0
      %1589 = vmatpush1.bf16.msra.mxu0 %v1407
      %1590 = vmatprep.subr.bf16.mxu0 0
      %1591 = vmatpush1.bf16.msra.mxu0 %v1408
      %1592 = vmatprep.subr.bf16.mxu0 0
      %1593 = vmatpush1.bf16.msra.mxu0 %v1409
      %1594 = vmatprep.subr.bf16.mxu0 0
      %1595 = vmatpush1.bf16.msra.mxu0 %v1410
      %1596 = vmatprep.subr.bf16.mxu0 0
      %1597 = vmatpush1.bf16.msra.mxu0 %v1411
      %1598 = vmatprep.subr.bf16.mxu0 0
      %1599 = vmatpush1.bf16.msra.mxu0 %v1412
      %1600 = vmatprep.subr.bf16.mxu0 0
      %1601 = vmatpush1.bf16.msra.mxu0 %v1413
      %1602 = vmatprep.subr.bf16.mxu0 0
      %1603 = vmatpush1.bf16.msra.mxu0 %v1414
      %1604 = vmatprep.subr.bf16.mxu0 0
      %1605 = vmatpush1.bf16.msra.mxu0 %v1415
      %1606 = vmatprep.subr.bf16.mxu0 0
      %1607 = vmatpush1.bf16.msra.mxu0 %v1416
      %1608 = vmatprep.subr.bf16.mxu0 0
      %1609 = vmatpush1.bf16.msra.mxu0 %v1417
      %1610 = vmatprep.mubr.bf16.mxu0 %v965
      %1611 = vmatmul.mubr.bf16.gmra.mrb[0].mxu0 %v964
      %v1612 = vpop.f32.mrb[0].mxu0
      %v1613 = vadd.f32 %v450, %v1612
      %v1614 = vpop.f32.mrb[0].mxu0
      %v1615 = vpop.f32.mrb[0].mxu0
      %v1616 = vadd.f32 %v450, %v1615
      %v1617 = vpop.f32.mrb[0].mxu0
      %1618 = vmatprep.mubr.bf16.mxu0 %v970
      %1619 = vmatmul.mubr.bf16.gmra.mrb[0].mxu0 %v969
      %v1620 = vpop.f32.mrb[0].mxu0
      %v1621 = vadd.f32 %v450, %v1620
      %v1622 = vpop.f32.mrb[0].mxu0
      %v1623 = vpop.f32.mrb[0].mxu0
      %v1624 = vadd.f32 %v450, %v1623
      %v1625 = vpop.f32.mrb[0].mxu0
      %1626 = vmatprep.mubr.bf16.mxu0 %v975
      %1627 = vmatmul.mubr.bf16.gmra.mrb[0].mxu0 %v974
      %v1628 = vpop.f32.mrb[0].mxu0
      %v1629 = vadd.f32 %v450, %v1628
      %v1630 = vpop.f32.mrb[0].mxu0
      %v1631 = vpop.f32.mrb[0].mxu0
      %v1632 = vadd.f32 %v450, %v1631
      %v1633 = vpop.f32.mrb[0].mxu0
      %1634 = vmatprep.mubr.bf16.mxu0 %v980
      %1635 = vmatmul.mubr.bf16.gmra.mrb[0].mxu0 %v979
      %v1636 = vpop.f32.mrb[0].mxu0
      %v1637 = vadd.f32 %v450, %v1636
      %v1638 = vpop.f32.mrb[0].mxu0
      %v1639 = vpop.f32.mrb[0].mxu0
      %v1640 = vadd.f32 %v450, %v1639
      %v1641 = vpop.f32.mrb[0].mxu0
      %1642 = vmatprep.mubr.bf16.mxu0 %v985
      %1643 = vmatmul.mubr.bf16.gmra.mrb[0].mxu0 %v984
      %v1644 = vpop.f32.mrb[0].mxu0
      %v1645 = vadd.f32 %v450, %v1644
      %v1646 = vpop.f32.mrb[0].mxu0
      %v1647 = vpop.f32.mrb[0].mxu0
      %v1648 = vadd.f32 %v450, %v1647
      %v1649 = vpop.f32.mrb[0].mxu0
      %1650 = vmatprep.mubr.bf16.mxu0 %v990
      %1651 = vmatmul.mubr.bf16.gmra.mrb[0].mxu0 %v989
      %v1652 = vpop.f32.mrb[0].mxu0
      %v1653 = vadd.f32 %v450, %v1652
      %v1654 = vpop.f32.mrb[0].mxu0
      %v1655 = vpop.f32.mrb[0].mxu0
      %v1656 = vadd.f32 %v450, %v1655
      %v1657 = vpop.f32.mrb[0].mxu0
      %1658 = vmatprep.mubr.bf16.mxu0 %v995
      %1659 = vmatmul.mubr.bf16.gmra.mrb[0].mxu0 %v994
      %v1660 = vpop.f32.mrb[0].mxu0
      %v1661 = vadd.f32 %v450, %v1660
      %v1662 = vpop.f32.mrb[0].mxu0
      %v1663 = vpop.f32.mrb[0].mxu0
      %v1664 = vadd.f32 %v450, %v1663
      %v1665 = vpop.f32.mrb[0].mxu0
      %1666 = vmatprep.mubr.bf16.mxu0 %v1000
      %1667 = vmatmul.mubr.bf16.gmra.mrb[0].mxu0 %v999
      %v1668 = vpop.f32.mrb[0].mxu0
      %v1669 = vadd.f32 %v450, %v1668
      %v1670 = vpop.f32.mrb[0].mxu0
      %v1671 = vpop.f32.mrb[0].mxu0
      %v1672 = vadd.f32 %v450, %v1671
      %v1673 = vpop.f32.mrb[0].mxu0
      %1674 = vmatprep.mubr.bf16.mxu0 %v1005
      %1675 = vmatmul.mubr.bf16.gmra.mrb[0].mxu0 %v1004
      %v1676 = vpop.f32.mrb[0].mxu0
      %v1677 = vadd.f32 %v450, %v1676
      %v1678 = vpop.f32.mrb[0].mxu0
      %v1679 = vpop.f32.mrb[0].mxu0
      %v1680 = vadd.f32 %v450, %v1679
      %v1681 = vpop.f32.mrb[0].mxu0
      %1682 = vmatprep.mubr.bf16.mxu0 %v1010
      %1683 = vmatmul.mubr.bf16.gmra.mrb[0].mxu0 %v1009
      %v1684 = vpop.f32.mrb[0].mxu0
      %v1685 = vadd.f32 %v450, %v1684
      %v1686 = vpop.f32.mrb[0].mxu0
      %v1687 = vpop.f32.mrb[0].mxu0
      %v1688 = vadd.f32 %v450, %v1687
      %v1689 = vpop.f32.mrb[0].mxu0
      %1690 = vmatprep.mubr.bf16.mxu0 %v1015
      %1691 = vmatmul.mubr.bf16.gmra.mrb[0].mxu0 %v1014
      %v1692 = vpop.f32.mrb[0].mxu0
      %v1693 = vadd.f32 %v450, %v1692
      %v1694 = vpop.f32.mrb[0].mxu0
      %v1695 = vpop.f32.mrb[0].mxu0
      %v1696 = vadd.f32 %v450, %v1695
      %v1697 = vpop.f32.mrb[0].mxu0
      %1698 = vmatprep.mubr.bf16.mxu0 %v1020
      %1699 = vmatmul.mubr.bf16.gmra.mrb[0].mxu0 %v1019
      %v1700 = vpop.f32.mrb[0].mxu0
      %v1701 = vadd.f32 %v450, %v1700
      %v1702 = vpop.f32.mrb[0].mxu0
      %v1703 = vpop.f32.mrb[0].mxu0
      %v1704 = vadd.f32 %v450, %v1703
      %v1705 = vpop.f32.mrb[0].mxu0
      %1706 = vmatprep.mubr.bf16.mxu0 %v1025
      %1707 = vmatmul.mubr.bf16.gmra.mrb[0].mxu0 %v1024
      %v1708 = vpop.f32.mrb[0].mxu0
      %v1709 = vadd.f32 %v450, %v1708
      %v1710 = vpop.f32.mrb[0].mxu0
      %v1711 = vpop.f32.mrb[0].mxu0
      %v1712 = vadd.f32 %v450, %v1711
      %v1713 = vpop.f32.mrb[0].mxu0
      %1714 = vmatprep.mubr.bf16.mxu0 %v1030
      %1715 = vmatmul.mubr.bf16.gmra.mrb[0].mxu0 %v1029
      %v1716 = vpop.f32.mrb[0].mxu0
      %v1717 = vadd.f32 %v450, %v1716
      %v1718 = vpop.f32.mrb[0].mxu0
      %v1719 = vpop.f32.mrb[0].mxu0
      %v1720 = vadd.f32 %v450, %v1719
      %v1721 = vpop.f32.mrb[0].mxu0
      %1722 = vmatprep.mubr.bf16.mxu0 %v1035
      %1723 = vmatmul.mubr.bf16.gmra.mrb[0].mxu0 %v1034
      %v1724 = vpop.f32.mrb[0].mxu0
      %v1725 = vadd.f32 %v450, %v1724
      %v1726 = vpop.f32.mrb[0].mxu0
      %v1727 = vpop.f32.mrb[0].mxu0
      %v1728 = vadd.f32 %v450, %v1727
      %v1729 = vpop.f32.mrb[0].mxu0
      %1730 = vmatprep.mubr.bf16.mxu0 %v1040
      %1731 = vmatmul.mubr.bf16.gmra.mrb[0].mxu0 %v1039
      %v1732 = vpop.f32.mrb[0].mxu0
      %v1733 = vadd.f32 %v450, %v1732
      %v1734 = vpop.f32.mrb[0].mxu0
      %v1735 = vpop.f32.mrb[0].mxu0
      %v1736 = vadd.f32 %v450, %v1735
      %v1737 = vpop.f32.mrb[0].mxu0
      %1738 = vmatprep.mubr.bf16.mxu0 %v1045
      %1739 = vmatmul.mubr.bf16.gmra.mrb[0].mxu0 %v1044
      %v1740 = vpop.f32.mrb[0].mxu0
      %v1741 = vadd.f32 %v450, %v1740
      %v1742 = vpop.f32.mrb[0].mxu0
      %v1743 = vpop.f32.mrb[0].mxu0
      %v1744 = vadd.f32 %v450, %v1743
      %v1745 = vpop.f32.mrb[0].mxu0
      %1746 = vmatprep.mubr.bf16.mxu0 %v1050
      %1747 = vmatmul.mubr.bf16.gmra.mrb[0].mxu0 %v1049
      %v1748 = vpop.f32.mrb[0].mxu0
      %v1749 = vadd.f32 %v450, %v1748
      %v1750 = vpop.f32.mrb[0].mxu0
      %v1751 = vpop.f32.mrb[0].mxu0
      %v1752 = vadd.f32 %v450, %v1751
      %v1753 = vpop.f32.mrb[0].mxu0
      %1754 = vmatprep.mubr.bf16.mxu0 %v1055
      %1755 = vmatmul.mubr.bf16.gmra.mrb[0].mxu0 %v1054
      %v1756 = vpop.f32.mrb[0].mxu0
      %v1757 = vadd.f32 %v450, %v1756
      %v1758 = vpop.f32.mrb[0].mxu0
      %v1759 = vpop.f32.mrb[0].mxu0
      %v1760 = vadd.f32 %v450, %v1759
      %v1761 = vpop.f32.mrb[0].mxu0
      %1762 = vmatprep.mubr.bf16.mxu0 %v1060
      %1763 = vmatmul.mubr.bf16.gmra.mrb[0].mxu0 %v1059
      %v1764 = vpop.f32.mrb[0].mxu0
      %v1765 = vadd.f32 %v450, %v1764
      %v1766 = vpop.f32.mrb[0].mxu0
      %v1767 = vpop.f32.mrb[0].mxu0
      %v1768 = vadd.f32 %v450, %v1767
      %v1769 = vpop.f32.mrb[0].mxu0
      %1770 = vmatprep.mubr.bf16.mxu0 %v1065
      %1771 = vmatmul.mubr.bf16.gmra.mrb[0].mxu0 %v1064
      %v1772 = vpop.f32.mrb[0].mxu0
      %v1773 = vadd.f32 %v450, %v1772
      %v1774 = vpop.f32.mrb[0].mxu0
      %v1775 = vpop.f32.mrb[0].mxu0
      %v1776 = vadd.f32 %v450, %v1775
      %v1777 = vpop.f32.mrb[0].mxu0
      %1778 = vmatprep.mubr.bf16.mxu0 %v1070
      %1779 = vmatmul.mubr.bf16.gmra.mrb[0].mxu0 %v1069
      %v1780 = vpop.f32.mrb[0].mxu0
      %v1781 = vadd.f32 %v450, %v1780
      %v1782 = vpop.f32.mrb[0].mxu0
      %v1783 = vpop.f32.mrb[0].mxu0
      %v1784 = vadd.f32 %v450, %v1783
      %v1785 = vpop.f32.mrb[0].mxu0
      %1786 = vmatprep.mubr.bf16.mxu0 %v1075
      %1787 = vmatmul.mubr.bf16.gmra.mrb[0].mxu0 %v1074
      %v1788 = vpop.f32.mrb[0].mxu0
      %v1789 = vadd.f32 %v450, %v1788
      %v1790 = vpop.f32.mrb[0].mxu0
      %v1791 = vpop.f32.mrb[0].mxu0
      %v1792 = vadd.f32 %v450, %v1791
      %v1793 = vpop.f32.mrb[0].mxu0
      %1794 = vmatprep.mubr.bf16.mxu0 %v1080
      %1795 = vmatmul.mubr.bf16.gmra.mrb[0].mxu0 %v1079
      %v1796 = vpop.f32.mrb[0].mxu0
      %v1797 = vadd.f32 %v450, %v1796
      %v1798 = vpop.f32.mrb[0].mxu0
      %v1799 = vpop.f32.mrb[0].mxu0
      %v1800 = vadd.f32 %v450, %v1799
      %v1801 = vpop.f32.mrb[0].mxu0
      %1802 = vmatprep.mubr.bf16.mxu0 %v1085
      %1803 = vmatmul.mubr.bf16.gmra.mrb[0].mxu0 %v1084
      %v1804 = vpop.f32.mrb[0].mxu0
      %v1805 = vadd.f32 %v450, %v1804
      %v1806 = vpop.f32.mrb[0].mxu0
      %v1807 = vpop.f32.mrb[0].mxu0
      %v1808 = vadd.f32 %v450, %v1807
      %v1809 = vpop.f32.mrb[0].mxu0
      %1810 = vmatprep.mubr.bf16.mxu0 %v1090
      %1811 = vmatmul.mubr.bf16.gmra.mrb[0].mxu0 %v1089
      %v1812 = vpop.f32.mrb[0].mxu0
      %v1813 = vadd.f32 %v450, %v1812
      %v1814 = vpop.f32.mrb[0].mxu0
      %v1815 = vpop.f32.mrb[0].mxu0
      %v1816 = vadd.f32 %v450, %v1815
      %v1817 = vpop.f32.mrb[0].mxu0
      %1818 = vmatprep.mubr.bf16.mxu0 %v1095
      %1819 = vmatmul.mubr.bf16.gmra.mrb[0].mxu0 %v1094
      %v1820 = vpop.f32.mrb[0].mxu0
      %v1821 = vadd.f32 %v450, %v1820
      %v1822 = vpop.f32.mrb[0].mxu0
      %v1823 = vpop.f32.mrb[0].mxu0
      %v1824 = vadd.f32 %v450, %v1823
      %v1825 = vpop.f32.mrb[0].mxu0
      %1826 = vmatprep.mubr.bf16.mxu0 %v1100
      %1827 = vmatmul.mubr.bf16.gmra.mrb[0].mxu0 %v1099
      %v1828 = vpop.f32.mrb[0].mxu0
      %v1829 = vadd.f32 %v450, %v1828
      %v1830 = vpop.f32.mrb[0].mxu0
      %v1831 = vpop.f32.mrb[0].mxu0
      %v1832 = vadd.f32 %v450, %v1831
      %v1833 = vpop.f32.mrb[0].mxu0
      %1834 = vmatprep.mubr.bf16.mxu0 %v1105
      %1835 = vmatmul.mubr.bf16.gmra.mrb[0].mxu0 %v1104
      %v1836 = vpop.f32.mrb[0].mxu0
      %v1837 = vadd.f32 %v450, %v1836
      %v1838 = vpop.f32.mrb[0].mxu0
      %v1839 = vpop.f32.mrb[0].mxu0
      %v1840 = vadd.f32 %v450, %v1839
      %v1841 = vpop.f32.mrb[0].mxu0
      %1842 = vmatprep.mubr.bf16.mxu0 %v1110
      %1843 = vmatmul.mubr.bf16.gmra.mrb[0].mxu0 %v1109
      %v1844 = vpop.f32.mrb[0].mxu0
      %v1845 = vadd.f32 %v450, %v1844
      %v1846 = vpop.f32.mrb[0].mxu0
      %v1847 = vpop.f32.mrb[0].mxu0
      %v1848 = vadd.f32 %v450, %v1847
      %v1849 = vpop.f32.mrb[0].mxu0
      %1850 = vmatprep.mubr.bf16.mxu0 %v1115
      %1851 = vmatmul.mubr.bf16.gmra.mrb[0].mxu0 %v1114
      %v1852 = vpop.f32.mrb[0].mxu0
      %v1853 = vadd.f32 %v450, %v1852
      %v1854 = vpop.f32.mrb[0].mxu0
      %v1855 = vpop.f32.mrb[0].mxu0
      %v1856 = vadd.f32 %v450, %v1855
      %v1857 = vpop.f32.mrb[0].mxu0
      %1858 = vmatprep.mubr.bf16.mxu0 %v1120
      %1859 = vmatmul.mubr.bf16.gmra.mrb[0].mxu0 %v1119
      %v1860 = vpop.f32.mrb[0].mxu0
      %v1861 = vadd.f32 %v450, %v1860
      %v1862 = vpop.f32.mrb[0].mxu0
      %v1863 = vpop.f32.mrb[0].mxu0
      %v1864 = vadd.f32 %v450, %v1863
      %v1865 = vpop.f32.mrb[0].mxu0
      %1866 = vdwg.mxu0
      %1867 = vmatprep.subr.bf16.mxu0 0
      %1868 = vmatpush1.bf16.msra.mxu0 %v1418
      %1869 = vmatprep.subr.bf16.mxu0 0
      %1870 = vmatpush1.bf16.msra.mxu0 %v1419
      %1871 = vmatprep.subr.bf16.mxu0 0
      %1872 = vmatpush1.bf16.msra.mxu0 %v1420
      %1873 = vmatprep.subr.bf16.mxu0 0
      %1874 = vmatpush1.bf16.msra.mxu0 %v1421
      %1875 = vmatprep.subr.bf16.mxu0 0
      %1876 = vmatpush1.bf16.msra.mxu0 %v1422
      %1877 = vmatprep.subr.bf16.mxu0 0
      %1878 = vmatpush1.bf16.msra.mxu0 %v1423
      %1879 = vmatprep.subr.bf16.mxu0 0
      %1880 = vmatpush1.bf16.msra.mxu0 %v1424
      %1881 = vmatprep.subr.bf16.mxu0 0
      %1882 = vmatpush1.bf16.msra.mxu0 %v1425
      %1883 = vmatprep.subr.bf16.mxu0 0
      %1884 = vmatpush1.bf16.msra.mxu0 %v1426
      %1885 = vmatprep.subr.bf16.mxu0 0
      %1886 = vmatpush1.bf16.msra.mxu0 %v1427
      %1887 = vmatprep.subr.bf16.mxu0 0
      %1888 = vmatpush1.bf16.msra.mxu0 %v1428
      %1889 = vmatprep.subr.bf16.mxu0 0
      %1890 = vmatpush1.bf16.msra.mxu0 %v1429
      %1891 = vmatprep.subr.bf16.mxu0 0
      %1892 = vmatpush1.bf16.msra.mxu0 %v1430
      %1893 = vmatprep.subr.bf16.mxu0 0
      %1894 = vmatpush1.bf16.msra.mxu0 %v1431
      %1895 = vmatprep.subr.bf16.mxu0 0
      %1896 = vmatpush1.bf16.msra.mxu0 %v1432
      %1897 = vmatprep.subr.bf16.mxu0 0
      %1898 = vmatpush1.bf16.msra.mxu0 %v1433
      %1899 = vmatprep.mubr.bf16.mxu0 %v967
      %1900 = vmatmul.mubr.bf16.gmra.mrb[0].mxu0 %v966
      %v1901 = vpop.f32.mrb[0].mxu0
      %v1902 = vadd.f32 %v1613, %v1901
      %v1903 = vpop.f32.mrb[0].mxu0
      %v1904 = vpop.f32.mrb[0].mxu0
      %v1905 = vadd.f32 %v1616, %v1904
      %v1906 = vpop.f32.mrb[0].mxu0
      %1907 = vmatprep.mubr.bf16.mxu0 %v972
      %1908 = vmatmul.mubr.bf16.gmra.mrb[0].mxu0 %v971
      %v1909 = vpop.f32.mrb[0].mxu0
      %v1910 = vadd.f32 %v1621, %v1909
      %v1911 = vpop.f32.mrb[0].mxu0
      %v1912 = vpop.f32.mrb[0].mxu0
      %v1913 = vadd.f32 %v1624, %v1912
      %v1914 = vpop.f32.mrb[0].mxu0
      %1915 = vmatprep.mubr.bf16.mxu0 %v977
      %1916 = vmatmul.mubr.bf16.gmra.mrb[0].mxu0 %v976
      %v1917 = vpop.f32.mrb[0].mxu0
      %v1918 = vadd.f32 %v1629, %v1917
      %v1919 = vpop.f32.mrb[0].mxu0
      %v1920 = vpop.f32.mrb[0].mxu0
      %v1921 = vadd.f32 %v1632, %v1920
      %v1922 = vpop.f32.mrb[0].mxu0
      %1923 = vmatprep.mubr.bf16.mxu0 %v982
      %1924 = vmatmul.mubr.bf16.gmra.mrb[0].mxu0 %v981
      %v1925 = vpop.f32.mrb[0].mxu0
      %v1926 = vadd.f32 %v1637, %v1925
      %v1927 = vpop.f32.mrb[0].mxu0
      %v1928 = vpop.f32.mrb[0].mxu0
      %v1929 = vadd.f32 %v1640, %v1928
      %v1930 = vpop.f32.mrb[0].mxu0
      %1931 = vmatprep.mubr.bf16.mxu0 %v987
      %1932 = vmatmul.mubr.bf16.gmra.mrb[0].mxu0 %v986
      %v1933 = vpop.f32.mrb[0].mxu0
      %v1934 = vadd.f32 %v1645, %v1933
      %v1935 = vpop.f32.mrb[0].mxu0
      %v1936 = vpop.f32.mrb[0].mxu0
      %v1937 = vadd.f32 %v1648, %v1936
      %v1938 = vpop.f32.mrb[0].mxu0
      %1939 = vmatprep.mubr.bf16.mxu0 %v992
      %1940 = vmatmul.mubr.bf16.gmra.mrb[0].mxu0 %v991
      %v1941 = vpop.f32.mrb[0].mxu0
      %v1942 = vadd.f32 %v1653, %v1941
      %v1943 = vpop.f32.mrb[0].mxu0
      %v1944 = vpop.f32.mrb[0].mxu0
      %v1945 = vadd.f32 %v1656, %v1944
      %v1946 = vpop.f32.mrb[0].mxu0
      %1947 = vmatprep.mubr.bf16.mxu0 %v997
      %1948 = vmatmul.mubr.bf16.gmra.mrb[0].mxu0 %v996
      %v1949 = vpop.f32.mrb[0].mxu0
      %v1950 = vadd.f32 %v1661, %v1949
      %v1951 = vpop.f32.mrb[0].mxu0
      %v1952 = vpop.f32.mrb[0].mxu0
      %v1953 = vadd.f32 %v1664, %v1952
      %v1954 = vpop.f32.mrb[0].mxu0
      %1955 = vmatprep.mubr.bf16.mxu0 %v1002
      %1956 = vmatmul.mubr.bf16.gmra.mrb[0].mxu0 %v1001
      %v1957 = vpop.f32.mrb[0].mxu0
      %v1958 = vadd.f32 %v1669, %v1957
      %v1959 = vpop.f32.mrb[0].mxu0
      %v1960 = vpop.f32.mrb[0].mxu0
      %v1961 = vadd.f32 %v1672, %v1960
      %v1962 = vpop.f32.mrb[0].mxu0
      %1963 = vmatprep.mubr.bf16.mxu0 %v1007
      %1964 = vmatmul.mubr.bf16.gmra.mrb[0].mxu0 %v1006
      %v1965 = vpop.f32.mrb[0].mxu0
      %v1966 = vadd.f32 %v1677, %v1965
      %v1967 = vpop.f32.mrb[0].mxu0
      %v1968 = vpop.f32.mrb[0].mxu0
      %v1969 = vadd.f32 %v1680, %v1968
      %v1970 = vpop.f32.mrb[0].mxu0
      %1971 = vmatprep.mubr.bf16.mxu0 %v1012
      %1972 = vmatmul.mubr.bf16.gmra.mrb[0].mxu0 %v1011
      %v1973 = vpop.f32.mrb[0].mxu0
      %v1974 = vadd.f32 %v1685, %v1973
      %v1975 = vpop.f32.mrb[0].mxu0
      %v1976 = vpop.f32.mrb[0].mxu0
      %v1977 = vadd.f32 %v1688, %v1976
      %v1978 = vpop.f32.mrb[0].mxu0
      %1979 = vmatprep.mubr.bf16.mxu0 %v1017
      %1980 = vmatmul.mubr.bf16.gmra.mrb[0].mxu0 %v1016
      %v1981 = vpop.f32.mrb[0].mxu0
      %v1982 = vadd.f32 %v1693, %v1981
      %v1983 = vpop.f32.mrb[0].mxu0
      %v1984 = vpop.f32.mrb[0].mxu0
      %v1985 = vadd.f32 %v1696, %v1984
      %v1986 = vpop.f32.mrb[0].mxu0
      %1987 = vmatprep.mubr.bf16.mxu0 %v1022
      %1988 = vmatmul.mubr.bf16.gmra.mrb[0].mxu0 %v1021
      %v1989 = vpop.f32.mrb[0].mxu0
      %v1990 = vadd.f32 %v1701, %v1989
      %v1991 = vpop.f32.mrb[0].mxu0
      %v1992 = vpop.f32.mrb[0].mxu0
      %v1993 = vadd.f32 %v1704, %v1992
      %v1994 = vpop.f32.mrb[0].mxu0
      %1995 = vmatprep.mubr.bf16.mxu0 %v1027
      %1996 = vmatmul.mubr.bf16.gmra.mrb[0].mxu0 %v1026
      %v1997 = vpop.f32.mrb[0].mxu0
      %v1998 = vadd.f32 %v1709, %v1997
      %v1999 = vpop.f32.mrb[0].mxu0
      %v2000 = vpop.f32.mrb[0].mxu0
      %v2001 = vadd.f32 %v1712, %v2000
      %v2002 = vpop.f32.mrb[0].mxu0
      %2003 = vmatprep.mubr.bf16.mxu0 %v1032
      %2004 = vmatmul.mubr.bf16.gmra.mrb[0].mxu0 %v1031
      %v2005 = vpop.f32.mrb[0].mxu0
      %v2006 = vadd.f32 %v1717, %v2005
      %v2007 = vpop.f32.mrb[0].mxu0
      %v2008 = vpop.f32.mrb[0].mxu0
      %v2009 = vadd.f32 %v1720, %v2008
      %v2010 = vpop.f32.mrb[0].mxu0
      %2011 = vmatprep.mubr.bf16.mxu0 %v1037
      %2012 = vmatmul.mubr.bf16.gmra.mrb[0].mxu0 %v1036
      %v2013 = vpop.f32.mrb[0].mxu0
      %v2014 = vadd.f32 %v1725, %v2013
      %v2015 = vpop.f32.mrb[0].mxu0
      %v2016 = vpop.f32.mrb[0].mxu0
      %v2017 = vadd.f32 %v1728, %v2016
      %v2018 = vpop.f32.mrb[0].mxu0
      %2019 = vmatprep.mubr.bf16.mxu0 %v1042
      %2020 = vmatmul.mubr.bf16.gmra.mrb[0].mxu0 %v1041
      %v2021 = vpop.f32.mrb[0].mxu0
      %v2022 = vadd.f32 %v1733, %v2021
      %v2023 = vpop.f32.mrb[0].mxu0
      %v2024 = vpop.f32.mrb[0].mxu0
      %v2025 = vadd.f32 %v1736, %v2024
      %v2026 = vpop.f32.mrb[0].mxu0
      %2027 = vmatprep.mubr.bf16.mxu0 %v1047
      %2028 = vmatmul.mubr.bf16.gmra.mrb[0].mxu0 %v1046
      %v2029 = vpop.f32.mrb[0].mxu0
      %v2030 = vadd.f32 %v1741, %v2029
      %v2031 = vpop.f32.mrb[0].mxu0
      %v2032 = vpop.f32.mrb[0].mxu0
      %v2033 = vadd.f32 %v1744, %v2032
      %v2034 = vpop.f32.mrb[0].mxu0
      %2035 = vmatprep.mubr.bf16.mxu0 %v1052
      %2036 = vmatmul.mubr.bf16.gmra.mrb[0].mxu0 %v1051
      %v2037 = vpop.f32.mrb[0].mxu0
      %v2038 = vadd.f32 %v1749, %v2037
      %v2039 = vpop.f32.mrb[0].mxu0
      %v2040 = vpop.f32.mrb[0].mxu0
      %v2041 = vadd.f32 %v1752, %v2040
      %v2042 = vpop.f32.mrb[0].mxu0
      %2043 = vmatprep.mubr.bf16.mxu0 %v1057
      %2044 = vmatmul.mubr.bf16.gmra.mrb[0].mxu0 %v1056
      %v2045 = vpop.f32.mrb[0].mxu0
      %v2046 = vadd.f32 %v1757, %v2045
      %v2047 = vpop.f32.mrb[0].mxu0
      %v2048 = vpop.f32.mrb[0].mxu0
      %v2049 = vadd.f32 %v1760, %v2048
      %v2050 = vpop.f32.mrb[0].mxu0
      %2051 = vmatprep.mubr.bf16.mxu0 %v1062
      %2052 = vmatmul.mubr.bf16.gmra.mrb[0].mxu0 %v1061
      %v2053 = vpop.f32.mrb[0].mxu0
      %v2054 = vadd.f32 %v1765, %v2053
      %v2055 = vpop.f32.mrb[0].mxu0
      %v2056 = vpop.f32.mrb[0].mxu0
      %v2057 = vadd.f32 %v1768, %v2056
      %v2058 = vpop.f32.mrb[0].mxu0
      %2059 = vmatprep.mubr.bf16.mxu0 %v1067
      %2060 = vmatmul.mubr.bf16.gmra.mrb[0].mxu0 %v1066
      %v2061 = vpop.f32.mrb[0].mxu0
      %v2062 = vadd.f32 %v1773, %v2061
      %v2063 = vpop.f32.mrb[0].mxu0
      %v2064 = vpop.f32.mrb[0].mxu0
      %v2065 = vadd.f32 %v1776, %v2064
      %v2066 = vpop.f32.mrb[0].mxu0
      %2067 = vmatprep.mubr.bf16.mxu0 %v1072
      %2068 = vmatmul.mubr.bf16.gmra.mrb[0].mxu0 %v1071
      %v2069 = vpop.f32.mrb[0].mxu0
      %v2070 = vadd.f32 %v1781, %v2069
      %v2071 = vpop.f32.mrb[0].mxu0
      %v2072 = vpop.f32.mrb[0].mxu0
      %v2073 = vadd.f32 %v1784, %v2072
      %v2074 = vpop.f32.mrb[0].mxu0
      %2075 = vmatprep.mubr.bf16.mxu0 %v1077
      %2076 = vmatmul.mubr.bf16.gmra.mrb[0].mxu0 %v1076
      %v2077 = vpop.f32.mrb[0].mxu0
      %v2078 = vadd.f32 %v1789, %v2077
      %v2079 = vpop.f32.mrb[0].mxu0
      %v2080 = vpop.f32.mrb[0].mxu0
      %v2081 = vadd.f32 %v1792, %v2080
      %v2082 = vpop.f32.mrb[0].mxu0
      %2083 = vmatprep.mubr.bf16.mxu0 %v1082
      %2084 = vmatmul.mubr.bf16.gmra.mrb[0].mxu0 %v1081
      %v2085 = vpop.f32.mrb[0].mxu0
      %v2086 = vadd.f32 %v1797, %v2085
      %v2087 = vpop.f32.mrb[0].mxu0
      %v2088 = vpop.f32.mrb[0].mxu0
      %v2089 = vadd.f32 %v1800, %v2088
      %v2090 = vpop.f32.mrb[0].mxu0
      %2091 = vmatprep.mubr.bf16.mxu0 %v1087
      %2092 = vmatmul.mubr.bf16.gmra.mrb[0].mxu0 %v1086
      %v2093 = vpop.f32.mrb[0].mxu0
      %v2094 = vadd.f32 %v1805, %v2093
      %v2095 = vpop.f32.mrb[0].mxu0
      %v2096 = vpop.f32.mrb[0].mxu0
      %v2097 = vadd.f32 %v1808, %v2096
      %v2098 = vpop.f32.mrb[0].mxu0
      %2099 = vmatprep.mubr.bf16.mxu0 %v1092
      %2100 = vmatmul.mubr.bf16.gmra.mrb[0].mxu0 %v1091
      %v2101 = vpop.f32.mrb[0].mxu0
      %v2102 = vadd.f32 %v1813, %v2101
      %v2103 = vpop.f32.mrb[0].mxu0
      %v2104 = vpop.f32.mrb[0].mxu0
      %v2105 = vadd.f32 %v1816, %v2104
      %v2106 = vpop.f32.mrb[0].mxu0
      %2107 = vmatprep.mubr.bf16.mxu0 %v1097
      %2108 = vmatmul.mubr.bf16.gmra.mrb[0].mxu0 %v1096
      %v2109 = vpop.f32.mrb[0].mxu0
      %v2110 = vadd.f32 %v1821, %v2109
      %v2111 = vpop.f32.mrb[0].mxu0
      %v2112 = vpop.f32.mrb[0].mxu0
      %v2113 = vadd.f32 %v1824, %v2112
      %v2114 = vpop.f32.mrb[0].mxu0
      %2115 = vmatprep.mubr.bf16.mxu0 %v1102
      %2116 = vmatmul.mubr.bf16.gmra.mrb[0].mxu0 %v1101
      %v2117 = vpop.f32.mrb[0].mxu0
      %v2118 = vadd.f32 %v1829, %v2117
      %v2119 = vpop.f32.mrb[0].mxu0
      %v2120 = vpop.f32.mrb[0].mxu0
      %v2121 = vadd.f32 %v1832, %v2120
      %v2122 = vpop.f32.mrb[0].mxu0
      %2123 = vmatprep.mubr.bf16.mxu0 %v1107
      %2124 = vmatmul.mubr.bf16.gmra.mrb[0].mxu0 %v1106
      %v2125 = vpop.f32.mrb[0].mxu0
      %v2126 = vadd.f32 %v1837, %v2125
      %v2127 = vpop.f32.mrb[0].mxu0
      %v2128 = vpop.f32.mrb[0].mxu0
      %v2129 = vadd.f32 %v1840, %v2128
      %v2130 = vpop.f32.mrb[0].mxu0
      %2131 = vmatprep.mubr.bf16.mxu0 %v1112
      %2132 = vmatmul.mubr.bf16.gmra.mrb[0].mxu0 %v1111
      %v2133 = vpop.f32.mrb[0].mxu0
      %v2134 = vadd.f32 %v1845, %v2133
      %v2135 = vpop.f32.mrb[0].mxu0
      %v2136 = vpop.f32.mrb[0].mxu0
      %v2137 = vadd.f32 %v1848, %v2136
      %v2138 = vpop.f32.mrb[0].mxu0
      %2139 = vmatprep.mubr.bf16.mxu0 %v1117
      %2140 = vmatmul.mubr.bf16.gmra.mrb[0].mxu0 %v1116
      %v2141 = vpop.f32.mrb[0].mxu0
      %v2142 = vadd.f32 %v1853, %v2141
      %v2143 = vpop.f32.mrb[0].mxu0
      %v2144 = vpop.f32.mrb[0].mxu0
      %v2145 = vadd.f32 %v1856, %v2144
      %v2146 = vpop.f32.mrb[0].mxu0
      %2147 = vmatprep.mubr.bf16.mxu0 %v1122
      %2148 = vmatmul.mubr.bf16.gmra.mrb[0].mxu0 %v1121
      %v2149 = vpop.f32.mrb[0].mxu0
      %v2150 = vadd.f32 %v1861, %v2149
      %v2151 = vpop.f32.mrb[0].mxu0
      %v2152 = vpop.f32.mrb[0].mxu0
      %v2153 = vadd.f32 %v1864, %v2152
      %v2154 = vpop.f32.mrb[0].mxu0
      %2155 = vdwg.mxu0
      %2156 = vmatprep.subr.bf16.mxu0 0
      %2157 = vmatpush1.bf16.msra.mxu0 %v1434
      %2158 = vmatprep.subr.bf16.mxu0 0
      %2159 = vmatpush1.bf16.msra.mxu0 %v1435
      %2160 = vmatprep.subr.bf16.mxu0 0
      %2161 = vmatpush1.bf16.msra.mxu0 %v1436
      %2162 = vmatprep.subr.bf16.mxu0 0
      %2163 = vmatpush1.bf16.msra.mxu0 %v1437
      %2164 = vmatprep.subr.bf16.mxu0 0
      %2165 = vmatpush1.bf16.msra.mxu0 %v1438
      %2166 = vmatprep.subr.bf16.mxu0 0
      %2167 = vmatpush1.bf16.msra.mxu0 %v1576
      %2168 = vmatprep.subr.bf16.mxu0 0
      %2169 = vmatpush1.bf16.msra.mxu0 0
      %2170 = vmatprep.subr.bf16.mxu0 0
      %2171 = vmatpush1.bf16.msra.mxu0 0
      %2172 = vmatprep.subr.bf16.mxu0 0
      %2173 = vmatpush1.bf16.msra.mxu0 0
      %2174 = vmatprep.subr.bf16.mxu0 0
      %2175 = vmatpush1.bf16.msra.mxu0 0
      %2176 = vmatprep.subr.bf16.mxu0 0
      %2177 = vmatpush1.bf16.msra.mxu0 0
      %2178 = vmatprep.subr.bf16.mxu0 0
      %2179 = vmatpush1.bf16.msra.mxu0 0
      %2180 = vmatprep.subr.bf16.mxu0 0
      %2181 = vmatpush1.bf16.msra.mxu0 0
      %2182 = vmatprep.subr.bf16.mxu0 0
      %2183 = vmatpush1.bf16.msra.mxu0 0
      %2184 = vmatprep.subr.bf16.mxu0 0
      %2185 = vmatpush1.bf16.msra.mxu0 0
      %2186 = vmatprep.subr.bf16.mxu0 0
      %2187 = vmatpush1.bf16.msra.mxu0 0
      %2188 = vmatprep.mubr.bf16.mxu0 0
      %2189 = vmatmul.mubr.bf16.gmra.mrb[0].mxu0 %v1479
      %v2190 = vpop.f32.mrb[0].mxu0
      %v2191 = vadd.f32 %v1902, %v2190
      %v2192 = vpop.f32.mrb[0].mxu0
      %v2193 = vpop.f32.mrb[0].mxu0
      %v2194 = vadd.f32 %v1905, %v2193
      %v2195 = vpop.f32.mrb[0].mxu0
      %2196 = vmatprep.mubr.bf16.mxu0 0
      %2197 = vmatmul.mubr.bf16.gmra.mrb[0].mxu0 %v1482
      %v2198 = vpop.f32.mrb[0].mxu0
      %v2199 = vadd.f32 %v1910, %v2198
      %v2200 = vpop.f32.mrb[0].mxu0
      %v2201 = vpop.f32.mrb[0].mxu0
      %v2202 = vadd.f32 %v1913, %v2201
      %v2203 = vpop.f32.mrb[0].mxu0
      %2204 = vmatprep.mubr.bf16.mxu0 0
      %2205 = vmatmul.mubr.bf16.gmra.mrb[0].mxu0 %v1485
      %v2206 = vpop.f32.mrb[0].mxu0
      %v2207 = vadd.f32 %v1918, %v2206
      %v2208 = vpop.f32.mrb[0].mxu0
      %v2209 = vpop.f32.mrb[0].mxu0
      %v2210 = vadd.f32 %v1921, %v2209
      %v2211 = vpop.f32.mrb[0].mxu0
      %2212 = vmatprep.mubr.bf16.mxu0 0
      %2213 = vmatmul.mubr.bf16.gmra.mrb[0].mxu0 %v1488
      %v2214 = vpop.f32.mrb[0].mxu0
      %v2215 = vadd.f32 %v1926, %v2214
      %v2216 = vpop.f32.mrb[0].mxu0
      %v2217 = vpop.f32.mrb[0].mxu0
      %v2218 = vadd.f32 %v1929, %v2217
      %v2219 = vpop.f32.mrb[0].mxu0
      %2220 = vmatprep.mubr.bf16.mxu0 0
      %2221 = vmatmul.mubr.bf16.gmra.mrb[0].mxu0 %v1491
      %v2222 = vpop.f32.mrb[0].mxu0
      %v2223 = vadd.f32 %v1934, %v2222
      %v2224 = vpop.f32.mrb[0].mxu0
      %v2225 = vpop.f32.mrb[0].mxu0
      %v2226 = vadd.f32 %v1937, %v2225
      %v2227 = vpop.f32.mrb[0].mxu0
      %2228 = vmatprep.mubr.bf16.mxu0 0
      %2229 = vmatmul.mubr.bf16.gmra.mrb[0].mxu0 %v1494
      %v2230 = vpop.f32.mrb[0].mxu0
      %v2231 = vadd.f32 %v1942, %v2230
      %v2232 = vpop.f32.mrb[0].mxu0
      %v2233 = vpop.f32.mrb[0].mxu0
      %v2234 = vadd.f32 %v1945, %v2233
      %v2235 = vpop.f32.mrb[0].mxu0
      %2236 = vmatprep.mubr.bf16.mxu0 0
      %2237 = vmatmul.mubr.bf16.gmra.mrb[0].mxu0 %v1497
      %v2238 = vpop.f32.mrb[0].mxu0
      %v2239 = vadd.f32 %v1950, %v2238
      %v2240 = vpop.f32.mrb[0].mxu0
      %v2241 = vpop.f32.mrb[0].mxu0
      %v2242 = vadd.f32 %v1953, %v2241
      %v2243 = vpop.f32.mrb[0].mxu0
      %2244 = vmatprep.mubr.bf16.mxu0 0
      %2245 = vmatmul.mubr.bf16.gmra.mrb[0].mxu0 %v1500
      %v2246 = vpop.f32.mrb[0].mxu0
      %v2247 = vadd.f32 %v1958, %v2246
      %v2248 = vpop.f32.mrb[0].mxu0
      %v2249 = vpop.f32.mrb[0].mxu0
      %v2250 = vadd.f32 %v1961, %v2249
      %v2251 = vpop.f32.mrb[0].mxu0
      %2252 = vmatprep.mubr.bf16.mxu0 0
      %2253 = vmatmul.mubr.bf16.gmra.mrb[0].mxu0 %v1503
      %v2254 = vpop.f32.mrb[0].mxu0
      %v2255 = vadd.f32 %v1966, %v2254
      %v2256 = vpop.f32.mrb[0].mxu0
      %v2257 = vpop.f32.mrb[0].mxu0
      %v2258 = vadd.f32 %v1969, %v2257
      %v2259 = vpop.f32.mrb[0].mxu0
      %2260 = vmatprep.mubr.bf16.mxu0 0
      %2261 = vmatmul.mubr.bf16.gmra.mrb[0].mxu0 %v1506
      %v2262 = vpop.f32.mrb[0].mxu0
      %v2263 = vadd.f32 %v1974, %v2262
      %v2264 = vpop.f32.mrb[0].mxu0
      %v2265 = vpop.f32.mrb[0].mxu0
      %v2266 = vadd.f32 %v1977, %v2265
      %v2267 = vpop.f32.mrb[0].mxu0
      %2268 = vmatprep.mubr.bf16.mxu0 0
      %2269 = vmatmul.mubr.bf16.gmra.mrb[0].mxu0 %v1509
      %v2270 = vpop.f32.mrb[0].mxu0
      %v2271 = vadd.f32 %v1982, %v2270
      %v2272 = vpop.f32.mrb[0].mxu0
      %v2273 = vpop.f32.mrb[0].mxu0
      %v2274 = vadd.f32 %v1985, %v2273
      %v2275 = vpop.f32.mrb[0].mxu0
      %2276 = vmatprep.mubr.bf16.mxu0 0
      %2277 = vmatmul.mubr.bf16.gmra.mrb[0].mxu0 %v1512
      %v2278 = vpop.f32.mrb[0].mxu0
      %v2279 = vadd.f32 %v1990, %v2278
      %v2280 = vpop.f32.mrb[0].mxu0
      %v2281 = vpop.f32.mrb[0].mxu0
      %v2282 = vadd.f32 %v1993, %v2281
      %v2283 = vpop.f32.mrb[0].mxu0
      %2284 = vmatprep.mubr.bf16.mxu0 0
      %2285 = vmatmul.mubr.bf16.gmra.mrb[0].mxu0 %v1515
      %v2286 = vpop.f32.mrb[0].mxu0
      %v2287 = vadd.f32 %v1998, %v2286
      %v2288 = vpop.f32.mrb[0].mxu0
      %v2289 = vpop.f32.mrb[0].mxu0
      %v2290 = vadd.f32 %v2001, %v2289
      %v2291 = vpop.f32.mrb[0].mxu0
      %2292 = vmatprep.mubr.bf16.mxu0 0
      %2293 = vmatmul.mubr.bf16.gmra.mrb[0].mxu0 %v1518
      %v2294 = vpop.f32.mrb[0].mxu0
      %v2295 = vadd.f32 %v2006, %v2294
      %v2296 = vpop.f32.mrb[0].mxu0
      %v2297 = vpop.f32.mrb[0].mxu0
      %v2298 = vadd.f32 %v2009, %v2297
      %v2299 = vpop.f32.mrb[0].mxu0
      %2300 = vmatprep.mubr.bf16.mxu0 0
      %2301 = vmatmul.mubr.bf16.gmra.mrb[0].mxu0 %v1521
      %v2302 = vpop.f32.mrb[0].mxu0
      %v2303 = vadd.f32 %v2014, %v2302
      %v2304 = vpop.f32.mrb[0].mxu0
      %v2305 = vpop.f32.mrb[0].mxu0
      %v2306 = vadd.f32 %v2017, %v2305
      %v2307 = vpop.f32.mrb[0].mxu0
      %2308 = vmatprep.mubr.bf16.mxu0 0
      %2309 = vmatmul.mubr.bf16.gmra.mrb[0].mxu0 %v1524
      %v2310 = vpop.f32.mrb[0].mxu0
      %v2311 = vadd.f32 %v2022, %v2310
      %v2312 = vpop.f32.mrb[0].mxu0
      %v2313 = vpop.f32.mrb[0].mxu0
      %v2314 = vadd.f32 %v2025, %v2313
      %v2315 = vpop.f32.mrb[0].mxu0
      %2316 = vmatprep.mubr.bf16.mxu0 0
      %2317 = vmatmul.mubr.bf16.gmra.mrb[0].mxu0 %v1527
      %v2318 = vpop.f32.mrb[0].mxu0
      %v2319 = vadd.f32 %v2030, %v2318
      %v2320 = vpop.f32.mrb[0].mxu0
      %v2321 = vpop.f32.mrb[0].mxu0
      %v2322 = vadd.f32 %v2033, %v2321
      %v2323 = vpop.f32.mrb[0].mxu0
      %2324 = vmatprep.mubr.bf16.mxu0 0
      %2325 = vmatmul.mubr.bf16.gmra.mrb[0].mxu0 %v1530
      %v2326 = vpop.f32.mrb[0].mxu0
      %v2327 = vadd.f32 %v2038, %v2326
      %v2328 = vpop.f32.mrb[0].mxu0
      %v2329 = vpop.f32.mrb[0].mxu0
      %v2330 = vadd.f32 %v2041, %v2329
      %v2331 = vpop.f32.mrb[0].mxu0
      %2332 = vmatprep.mubr.bf16.mxu0 0
      %2333 = vmatmul.mubr.bf16.gmra.mrb[0].mxu0 %v1533
      %v2334 = vpop.f32.mrb[0].mxu0
      %v2335 = vadd.f32 %v2046, %v2334
      %v2336 = vpop.f32.mrb[0].mxu0
      %v2337 = vpop.f32.mrb[0].mxu0
      %v2338 = vadd.f32 %v2049, %v2337
      %v2339 = vpop.f32.mrb[0].mxu0
      %2340 = vmatprep.mubr.bf16.mxu0 0
      %2341 = vmatmul.mubr.bf16.gmra.mrb[0].mxu0 %v1536
      %v2342 = vpop.f32.mrb[0].mxu0
      %v2343 = vadd.f32 %v2054, %v2342
      %v2344 = vpop.f32.mrb[0].mxu0
      %v2345 = vpop.f32.mrb[0].mxu0
      %v2346 = vadd.f32 %v2057, %v2345
      %v2347 = vpop.f32.mrb[0].mxu0
      %2348 = vmatprep.mubr.bf16.mxu0 0
      %2349 = vmatmul.mubr.bf16.gmra.mrb[0].mxu0 %v1539
      %v2350 = vpop.f32.mrb[0].mxu0
      %v2351 = vadd.f32 %v2062, %v2350
      %v2352 = vpop.f32.mrb[0].mxu0
      %v2353 = vpop.f32.mrb[0].mxu0
      %v2354 = vadd.f32 %v2065, %v2353
      %v2355 = vpop.f32.mrb[0].mxu0
      %2356 = vmatprep.mubr.bf16.mxu0 0
      %2357 = vmatmul.mubr.bf16.gmra.mrb[0].mxu0 %v1542
      %v2358 = vpop.f32.mrb[0].mxu0
      %v2359 = vadd.f32 %v2070, %v2358
      %v2360 = vpop.f32.mrb[0].mxu0
      %v2361 = vpop.f32.mrb[0].mxu0
      %v2362 = vadd.f32 %v2073, %v2361
      %v2363 = vpop.f32.mrb[0].mxu0
      %2364 = vmatprep.mubr.bf16.mxu0 0
      %2365 = vmatmul.mubr.bf16.gmra.mrb[0].mxu0 %v1545
      %v2366 = vpop.f32.mrb[0].mxu0
      %v2367 = vadd.f32 %v2078, %v2366
      %v2368 = vpop.f32.mrb[0].mxu0
      %v2369 = vpop.f32.mrb[0].mxu0
      %v2370 = vadd.f32 %v2081, %v2369
      %v2371 = vpop.f32.mrb[0].mxu0
      %2372 = vmatprep.mubr.bf16.mxu0 0
      %2373 = vmatmul.mubr.bf16.gmra.mrb[0].mxu0 %v1548
      %v2374 = vpop.f32.mrb[0].mxu0
      %v2375 = vadd.f32 %v2086, %v2374
      %v2376 = vpop.f32.mrb[0].mxu0
      %v2377 = vpop.f32.mrb[0].mxu0
      %v2378 = vadd.f32 %v2089, %v2377
      %v2379 = vpop.f32.mrb[0].mxu0
      %2380 = vmatprep.mubr.bf16.mxu0 0
      %2381 = vmatmul.mubr.bf16.gmra.mrb[0].mxu0 %v1551
      %v2382 = vpop.f32.mrb[0].mxu0
      %v2383 = vadd.f32 %v2094, %v2382
      %v2384 = vpop.f32.mrb[0].mxu0
      %v2385 = vpop.f32.mrb[0].mxu0
      %v2386 = vadd.f32 %v2097, %v2385
      %v2387 = vpop.f32.mrb[0].mxu0
      %2388 = vmatprep.mubr.bf16.mxu0 0
      %2389 = vmatmul.mubr.bf16.gmra.mrb[0].mxu0 %v1554
      %v2390 = vpop.f32.mrb[0].mxu0
      %v2391 = vadd.f32 %v2102, %v2390
      %v2392 = vpop.f32.mrb[0].mxu0
      %v2393 = vpop.f32.mrb[0].mxu0
      %v2394 = vadd.f32 %v2105, %v2393
      %v2395 = vpop.f32.mrb[0].mxu0
      %2396 = vmatprep.mubr.bf16.mxu0 0
      %2397 = vmatmul.mubr.bf16.gmra.mrb[0].mxu0 %v1557
      %v2398 = vpop.f32.mrb[0].mxu0
      %v2399 = vadd.f32 %v2110, %v2398
      %v2400 = vpop.f32.mrb[0].mxu0
      %v2401 = vpop.f32.mrb[0].mxu0
      %v2402 = vadd.f32 %v2113, %v2401
      %v2403 = vpop.f32.mrb[0].mxu0
      %2404 = vmatprep.mubr.bf16.mxu0 0
      %2405 = vmatmul.mubr.bf16.gmra.mrb[0].mxu0 %v1560
      %v2406 = vpop.f32.mrb[0].mxu0
      %v2407 = vadd.f32 %v2118, %v2406
      %v2408 = vpop.f32.mrb[0].mxu0
      %v2409 = vpop.f32.mrb[0].mxu0
      %v2410 = vadd.f32 %v2121, %v2409
      %v2411 = vpop.f32.mrb[0].mxu0
      %2412 = vmatprep.mubr.bf16.mxu0 0
      %2413 = vmatmul.mubr.bf16.gmra.mrb[0].mxu0 %v1563
      %v2414 = vpop.f32.mrb[0].mxu0
      %v2415 = vadd.f32 %v2126, %v2414
      %v2416 = vpop.f32.mrb[0].mxu0
      %v2417 = vpop.f32.mrb[0].mxu0
      %v2418 = vadd.f32 %v2129, %v2417
      %v2419 = vpop.f32.mrb[0].mxu0
      %2420 = vmatprep.mubr.bf16.mxu0 0
      %2421 = vmatmul.mubr.bf16.gmra.mrb[0].mxu0 %v1566
      %v2422 = vpop.f32.mrb[0].mxu0
      %v2423 = vadd.f32 %v2134, %v2422
      %v2424 = vpop.f32.mrb[0].mxu0
      %v2425 = vpop.f32.mrb[0].mxu0
      %v2426 = vadd.f32 %v2137, %v2425
      %v2427 = vpop.f32.mrb[0].mxu0
      %2428 = vmatprep.mubr.bf16.mxu0 0
      %2429 = vmatmul.mubr.bf16.gmra.mrb[0].mxu0 %v1569
      %v2430 = vpop.f32.mrb[0].mxu0
      %v2431 = vadd.f32 %v2142, %v2430
      %v2432 = vpop.f32.mrb[0].mxu0
      %v2433 = vpop.f32.mrb[0].mxu0
      %v2434 = vadd.f32 %v2145, %v2433
      %v2435 = vpop.f32.mrb[0].mxu0
      %2436 = vmatprep.mubr.bf16.mxu0 0
      %2437 = vmatmul.mubr.bf16.gmra.mrb[0].mxu0 %v1572
      %v2438 = vpop.f32.mrb[0].mxu0
      %v2439 = vadd.f32 %v2150, %v2438
      %v2440 = vpop.f32.mrb[0].mxu0
      %v2441 = vpop.f32.mrb[0].mxu0
      %v2442 = vadd.f32 %v2153, %v2441
      %v2443 = vpop.f32.mrb[0].mxu0
      %2444 = vdwg.mxu0
      %v2445 = vmax.f32 %v2191, 0.0
      %v2446 = vmax.f32 %v2194, 0.0
      %v2447 = vmax.f32 %v2199, 0.0
      %v2448 = vmax.f32 %v2202, 0.0
      %v2449 = vmax.f32 %v2207, 0.0
      %v2450 = vmax.f32 %v2210, 0.0
      %v2451 = vmax.f32 %v2215, 0.0
      %v2452 = vmax.f32 %v2218, 0.0
      %v2453 = vmax.f32 %v2223, 0.0
      %v2454 = vmax.f32 %v2226, 0.0
      %v2455 = vmax.f32 %v2231, 0.0
      %v2456 = vmax.f32 %v2234, 0.0
      %v2457 = vmax.f32 %v2239, 0.0
      %v2458 = vmax.f32 %v2242, 0.0
      %v2459 = vmax.f32 %v2247, 0.0
      %v2460 = vmax.f32 %v2250, 0.0
      %v2461 = vmax.f32 %v2255, 0.0
      %v2462 = vmax.f32 %v2258, 0.0
      %v2463 = vmax.f32 %v2263, 0.0
      %v2464 = vmax.f32 %v2266, 0.0
      %v2465 = vmax.f32 %v2271, 0.0
      %v2466 = vmax.f32 %v2274, 0.0
      %v2467 = vmax.f32 %v2279, 0.0
      %v2468 = vmax.f32 %v2282, 0.0
      %v2469 = vmax.f32 %v2287, 0.0
      %v2470 = vmax.f32 %v2290, 0.0
      %v2471 = vmax.f32 %v2295, 0.0
      %v2472 = vmax.f32 %v2298, 0.0
      %v2473 = vmax.f32 %v2303, 0.0
      %v2474 = vmax.f32 %v2306, 0.0
      %v2475 = vmax.f32 %v2311, 0.0
      %v2476 = vmax.f32 %v2314, 0.0
      %v2477 = vmax.f32 %v2319, 0.0
      %v2478 = vmax.f32 %v2322, 0.0
      %v2479 = vmax.f32 %v2327, 0.0
      %v2480 = vmax.f32 %v2330, 0.0
      %v2481 = vmax.f32 %v2335, 0.0
      %v2482 = vmax.f32 %v2338, 0.0
      %v2483 = vmax.f32 %v2343, 0.0
      %v2484 = vmax.f32 %v2346, 0.0
      %v2485 = vmax.f32 %v2351, 0.0
      %v2486 = vmax.f32 %v2354, 0.0
      %v2487 = vmax.f32 %v2359, 0.0
      %v2488 = vmax.f32 %v2362, 0.0
      %v2489 = vmax.f32 %v2367, 0.0
      %v2490 = vmax.f32 %v2370, 0.0
      %v2491 = vmax.f32 %v2375, 0.0
      %v2492 = vmax.f32 %v2378, 0.0
      %v2493 = vmax.f32 %v2383, 0.0
      %v2494 = vmax.f32 %v2386, 0.0
      %v2495 = vmax.f32 %v2391, 0.0
      %v2496 = vmax.f32 %v2394, 0.0
      %v2497 = vmax.f32 %v2399, 0.0
      %v2498 = vmax.f32 %v2402, 0.0
      %v2499 = vmax.f32 %v2407, 0.0
      %v2500 = vmax.f32 %v2410, 0.0
      %v2501 = vmax.f32 %v2415, 0.0
      %v2502 = vmax.f32 %v2418, 0.0
      %v2503 = vmax.f32 %v2423, 0.0
      %v2504 = vmax.f32 %v2426, 0.0
      %v2505 = vmax.f32 %v2431, 0.0
      %v2506 = vmax.f32 %v2434, 0.0
      %v2507 = vmax.f32 %v2439, 0.0
      %v2508 = vmax.f32 %v2442, 0.0
      %v2509 = vpack.c.bf16 %v2446, %v2445
      %v2510 = vpack.c.bf16 %v2448, %v2447
      %v2511 = vpack.c.bf16 %v2450, %v2449
      %v2512 = vpack.c.bf16 %v2452, %v2451
      %v2513 = vpack.c.bf16 %v2454, %v2453
      %v2514 = vpack.c.bf16 %v2456, %v2455
      %v2515 = vpack.c.bf16 %v2458, %v2457
      %v2516 = vpack.c.bf16 %v2460, %v2459
      %v2517 = vpack.c.bf16 %v2462, %v2461
      %v2518 = vpack.c.bf16 %v2464, %v2463
      %v2519 = vpack.c.bf16 %v2466, %v2465
      %v2520 = vpack.c.bf16 %v2468, %v2467
      %v2521 = vpack.c.bf16 %v2470, %v2469
      %v2522 = vpack.c.bf16 %v2472, %v2471
      %v2523 = vpack.c.bf16 %v2474, %v2473
      %v2524 = vpack.c.bf16 %v2476, %v2475
      %v2525 = vpack.c.bf16 %v2478, %v2477
      %v2526 = vpack.c.bf16 %v2480, %v2479
      %v2527 = vpack.c.bf16 %v2482, %v2481
      %v2528 = vpack.c.bf16 %v2484, %v2483
      %v2529 = vpack.c.bf16 %v2486, %v2485
      %v2530 = vpack.c.bf16 %v2488, %v2487
      %v2531 = vpack.c.bf16 %v2490, %v2489
      %v2532 = vpack.c.bf16 %v2492, %v2491
      %v2533 = vpack.c.bf16 %v2494, %v2493
      %v2534 = vpack.c.bf16 %v2496, %v2495
      %v2535 = vpack.c.bf16 %v2498, %v2497
      %v2536 = vpack.c.bf16 %v2500, %v2499
      %v2537 = vpack.c.bf16 %v2502, %v2501
      %v2538 = vpack.c.bf16 %v2504, %v2503
      %v2539 = vpack.c.bf16 %v2506, %v2505
      %v2540 = vpack.c.bf16 %v2508, %v2507
      %v2573 = vunpack.c.l.b16 %v2509
      %v2574 = vunpack.c.h.b16 %v2509
      %v2575 = vunpack.c.l.b16 %v2510
      %v2576 = vunpack.c.h.b16 %v2510
      %v2577 = vunpack.c.l.b16 %v2511
      %v2578 = vunpack.c.h.b16 %v2511
      %v2579 = vunpack.c.l.b16 %v2512
      %v2580 = vunpack.c.h.b16 %v2512
      %v2581 = vunpack.c.l.b16 %v2513
      %v2582 = vunpack.c.h.b16 %v2513
      %v2583 = vunpack.c.l.b16 %v2514
      %v2584 = vunpack.c.h.b16 %v2514
      %v2585 = vunpack.c.l.b16 %v2515
      %v2586 = vunpack.c.h.b16 %v2515
      %v2587 = vunpack.c.l.b16 %v2516
      %v2588 = vunpack.c.h.b16 %v2516
      %v2589 = vunpack.c.l.b16 %v2517
      %v2590 = vunpack.c.h.b16 %v2517
      %v2591 = vunpack.c.l.b16 %v2518
      %v2592 = vunpack.c.h.b16 %v2518
      %v2593 = vunpack.c.l.b16 %v2519
      %v2594 = vunpack.c.h.b16 %v2519
      %v2595 = vunpack.c.l.b16 %v2520
      %v2596 = vunpack.c.h.b16 %v2520
      %v2597 = vunpack.c.l.b16 %v2521
      %v2598 = vunpack.c.h.b16 %v2521
      %v2599 = vunpack.c.l.b16 %v2522
      %v2600 = vunpack.c.h.b16 %v2522
      %v2601 = vunpack.c.l.b16 %v2523
      %v2602 = vunpack.c.h.b16 %v2523
      %v2603 = vunpack.c.l.b16 %v2524
      %v2604 = vunpack.c.h.b16 %v2524
      %v2605 = vunpack.c.l.b16 %v2525
      %v2606 = vunpack.c.h.b16 %v2525
      %v2607 = vunpack.c.l.b16 %v2526
      %v2608 = vunpack.c.h.b16 %v2526
      %v2609 = vunpack.c.l.b16 %v2527
      %v2610 = vunpack.c.h.b16 %v2527
      %v2611 = vunpack.c.l.b16 %v2528
      %v2612 = vunpack.c.h.b16 %v2528
      %v2613 = vunpack.c.l.b16 %v2529
      %v2614 = vunpack.c.h.b16 %v2529
      %v2615 = vunpack.c.l.b16 %v2530
      %v2616 = vunpack.c.h.b16 %v2530
      %v2617 = vunpack.c.l.b16 %v2531
      %v2618 = vunpack.c.h.b16 %v2531
      %v2619 = vunpack.c.l.b16 %v2532
      %v2620 = vunpack.c.h.b16 %v2532
      %v2621 = vunpack.c.l.b16 %v2533
      %v2622 = vunpack.c.h.b16 %v2533
      %v2623 = vunpack.c.l.b16 %v2534
      %v2624 = vunpack.c.h.b16 %v2534
      %v2625 = vunpack.c.l.b16 %v2535
      %v2626 = vunpack.c.h.b16 %v2535
      %v2627 = vunpack.c.l.b16 %v2536
      %v2628 = vunpack.c.h.b16 %v2536
      %v2629 = vunpack.c.l.b16 %v2537
      %v2630 = vunpack.c.h.b16 %v2537
      %v2631 = vunpack.c.l.b16 %v2538
      %v2632 = vunpack.c.h.b16 %v2538
      %v2633 = vunpack.c.l.b16 %v2539
      %v2634 = vunpack.c.h.b16 %v2539
      %v2635 = vunpack.c.l.b16 %v2540
      %v2636 = vunpack.c.h.b16 %v2540
      %v2637 = vpack.c.b16 %v2573, %v2573
      %v2638 = vpack.c.b16 %v2574, %v2574
      %v2639 = vpack.c.b16 %v2575, %v2575
      %v2640 = vpack.c.b16 %v2576, %v2576
      %v2641 = vpack.c.b16 %v2577, %v2577
      %v2642 = vpack.c.b16 %v2578, %v2578
      %v2643 = vpack.c.b16 %v2579, %v2579
      %v2644 = vpack.c.b16 %v2580, %v2580
      %v2645 = vpack.c.b16 %v2581, %v2581
      %v2646 = vpack.c.b16 %v2582, %v2582
      %v2647 = vpack.c.b16 %v2583, %v2583
      %v2648 = vpack.c.b16 %v2584, %v2584
      %v2649 = vpack.c.b16 %v2585, %v2585
      %v2650 = vpack.c.b16 %v2586, %v2586
      %v2651 = vpack.c.b16 %v2587, %v2587
      %v2652 = vpack.c.b16 %v2588, %v2588
      %v2653 = vpack.c.b16 %v2589, %v2589
      %v2654 = vpack.c.b16 %v2590, %v2590
      %v2655 = vpack.c.b16 %v2591, %v2591
      %v2656 = vpack.c.b16 %v2592, %v2592
      %v2657 = vpack.c.b16 %v2593, %v2593
      %v2658 = vpack.c.b16 %v2594, %v2594
      %v2659 = vpack.c.b16 %v2595, %v2595
      %v2660 = vpack.c.b16 %v2596, %v2596
      %v2661 = vpack.c.b16 %v2597, %v2597
      %v2662 = vpack.c.b16 %v2598, %v2598
      %v2663 = vpack.c.b16 %v2599, %v2599
      %v2664 = vpack.c.b16 %v2600, %v2600
      %v2665 = vpack.c.b16 %v2601, %v2601
      %v2666 = vpack.c.b16 %v2602, %v2602
      %v2667 = vpack.c.b16 %v2603, %v2603
      %v2668 = vpack.c.b16 %v2604, %v2604
      %v2669 = vpack.c.b16 %v2605, %v2605
      %v2670 = vpack.c.b16 %v2606, %v2606
      %v2671 = vpack.c.b16 %v2607, %v2607
      %v2672 = vpack.c.b16 %v2608, %v2608
      %v2673 = vpack.c.b16 %v2609, %v2609
      %v2674 = vpack.c.b16 %v2610, %v2610
      %v2675 = vpack.c.b16 %v2611, %v2611
      %v2676 = vpack.c.b16 %v2612, %v2612
      %v2677 = vpack.c.b16 %v2613, %v2613
      %v2678 = vpack.c.b16 %v2614, %v2614
      %v2679 = vpack.c.b16 %v2615, %v2615
      %v2680 = vpack.c.b16 %v2616, %v2616
      %v2681 = vpack.c.b16 %v2617, %v2617
      %v2682 = vpack.c.b16 %v2618, %v2618
      %v2683 = vpack.c.b16 %v2619, %v2619
      %v2684 = vpack.c.b16 %v2620, %v2620
      %v2685 = vpack.c.b16 %v2621, %v2621
      %v2686 = vpack.c.b16 %v2622, %v2622
      %v2687 = vpack.c.b16 %v2623, %v2623
      %v2688 = vpack.c.b16 %v2624, %v2624
      %v2689 = vpack.c.b16 %v2625, %v2625
      %v2690 = vpack.c.b16 %v2626, %v2626
      %v2691 = vpack.c.b16 %v2627, %v2627
      %v2692 = vpack.c.b16 %v2628, %v2628
      %v2693 = vpack.c.b16 %v2629, %v2629
      %v2694 = vpack.c.b16 %v2630, %v2630
      %v2695 = vpack.c.b16 %v2631, %v2631
      %v2696 = vpack.c.b16 %v2632, %v2632
      %v2697 = vpack.c.b16 %v2633, %v2633
      %v2698 = vpack.c.b16 %v2634, %v2634
      %v2699 = vpack.c.b16 %v2635, %v2635
      %v2700 = vpack.c.b16 %v2636, %v2636
      %2765 = vst [vmem:[%s175] sm:$0xf] %v2637
      %2766 = vst [vmem:[%s175 + $0x4] sm:$0xf] %v2638
      %2767 = vst [vmem:[%s175 + $0x8] sm:$0xf] %v2639
      %2768 = vst [vmem:[%s175 + $0xc] sm:$0xf] %v2640
      %2769 = vst [vmem:[%s175 + $0x10] sm:$0xf] %v2641
      %2770 = vst [vmem:[%s175 + $0x14] sm:$0xf] %v2642
      %2771 = vst [vmem:[%s175 + $0x18] sm:$0xf] %v2643
      %2772 = vst [vmem:[%s175 + $0x1c] sm:$0xf] %v2644
      %2773 = vst [vmem:[%s175 + $0x20] sm:$0xf] %v2645
      %2774 = vst [vmem:[%s175 + $0x24] sm:$0xf] %v2646
      %2775 = vst [vmem:[%s175 + $0x28] sm:$0xf] %v2647
      %2776 = vst [vmem:[%s175 + $0x2c] sm:$0xf] %v2648
      %2777 = vst [vmem:[%s175 + $0x30] sm:$0xf] %v2649
      %2778 = vst [vmem:[%s175 + $0x34] sm:$0xf] %v2650
      %2779 = vst [vmem:[%s175 + $0x38] sm:$0xf] %v2651
      %2780 = vst [vmem:[%s175 + $0x3c] sm:$0xf] %v2652
      %2781 = vst [vmem:[%s175 + $0x40] sm:$0xf] %v2653
      %2782 = vst [vmem:[%s175 + $0x44] sm:$0xf] %v2654
      %2783 = vst [vmem:[%s175 + $0x48] sm:$0xf] %v2655
      %2784 = vst [vmem:[%s175 + $0x4c] sm:$0xf] %v2656
      %2785 = vst [vmem:[%s175 + $0x50] sm:$0xf] %v2657
      %2786 = vst [vmem:[%s175 + $0x54] sm:$0xf] %v2658
      %2787 = vst [vmem:[%s175 + $0x58] sm:$0xf] %v2659
      %2788 = vst [vmem:[%s175 + $0x5c] sm:$0xf] %v2660
      %2789 = vst [vmem:[%s175 + $0x60] sm:$0xf] %v2661
      %2790 = vst [vmem:[%s175 + $0x64] sm:$0xf] %v2662
      %2791 = vst [vmem:[%s175 + $0x68] sm:$0xf] %v2663
      %2792 = vst [vmem:[%s175 + $0x6c] sm:$0xf] %v2664
      %2793 = vst [vmem:[%s175 + $0x70] sm:$0xf] %v2665
      %2794 = vst [vmem:[%s175 + $0x74] sm:$0xf] %v2666
      %2795 = vst [vmem:[%s175 + $0x78] sm:$0xf] %v2667
      %2796 = vst [vmem:[%s175 + $0x7c] sm:$0xf] %v2668
      %2797 = vst [vmem:[%s175 + $0x80] sm:$0xf] %v2669
      %2798 = vst [vmem:[%s175 + $0x84] sm:$0xf] %v2670
      %2799 = vst [vmem:[%s175 + $0x88] sm:$0xf] %v2671
      %2800 = vst [vmem:[%s175 + $0x8c] sm:$0xf] %v2672
      %2801 = vst [vmem:[%s175 + $0x90] sm:$0xf] %v2673
      %2802 = vst [vmem:[%s175 + $0x94] sm:$0xf] %v2674
      %2803 = vst [vmem:[%s175 + $0x98] sm:$0xf] %v2675
      %2804 = vst [vmem:[%s175 + $0x9c] sm:$0xf] %v2676
      %2805 = vst [vmem:[%s175 + $0xa0] sm:$0xf] %v2677
      %2806 = vst [vmem:[%s175 + $0xa4] sm:$0xf] %v2678
      %2807 = vst [vmem:[%s175 + $0xa8] sm:$0xf] %v2679
      %2808 = vst [vmem:[%s175 + $0xac] sm:$0xf] %v2680
      %2809 = vst [vmem:[%s175 + $0xb0] sm:$0xf] %v2681
      %2810 = vst [vmem:[%s175 + $0xb4] sm:$0xf] %v2682
      %2811 = vst [vmem:[%s175 + $0xb8] sm:$0xf] %v2683
      %2812 = vst [vmem:[%s175 + $0xbc] sm:$0xf] %v2684
      %2813 = vst [vmem:[%s175 + $0xc0] sm:$0xf] %v2685
      %2814 = vst [vmem:[%s175 + $0xc4] sm:$0xf] %v2686
      %2815 = vst [vmem:[%s175 + $0xc8] sm:$0xf] %v2687
      %2816 = vst [vmem:[%s175 + $0xcc] sm:$0xf] %v2688
      %2817 = vst [vmem:[%s175 + $0xd0] sm:$0xf] %v2689
      %2818 = vst [vmem:[%s175 + $0xd4] sm:$0xf] %v2690
      %2819 = vst [vmem:[%s175 + $0xd8] sm:$0xf] %v2691
      %2820 = vst [vmem:[%s175 + $0xdc] sm:$0xf] %v2692
      %2821 = vst [vmem:[%s175 + $0xe0] sm:$0xf] %v2693
      %2822 = vst [vmem:[%s175 + $0xe4] sm:$0xf] %v2694
      %2823 = vst [vmem:[%s175 + $0xe8] sm:$0xf] %v2695
      %2824 = vst [vmem:[%s175 + $0xec] sm:$0xf] %v2696
      %2825 = vst [vmem:[%s175 + $0xf0] sm:$0xf] %v2697
      %2826 = vst [vmem:[%s175 + $0xf4] sm:$0xf] %v2698
      %2827 = vst [vmem:[%s175 + $0xf8] sm:$0xf] %v2699
      %2828 = vst [vmem:[%s175 + $0xfc] sm:$0xf] %v2700
      %s2829 = smul.u32 64, %s14
      %p2830 = scmp.lt.s32.totalorder %s2829, 191
      %s2831 = scalar_select %p2830, %s2829, 191
      %s2832 = smul.addr %s2831, 4
      %s2833 = scalar_lea.vmem %s3, %s2832
      // Predicated region
      $region33: #{nvidia_forward.7} parent=31 // pred_check
        %p2834 = pneg %p100
      $region34: #{nvidia_forward.7} parent=31 // pred_check_branch
        %2836 = sbr.rel (%p2834) target = $region36
      $region35: #{nvidia_forward.7} parent=31 // pred_region
        %s2837 = smul.u32 64, %s14
      $region36: #{nvidia_forward.7} parent=31 // pred_fallthru
        _
    $region32: #{nvidia_forward.7} parent=5 // pred_fallthru
      _
    %p2838 = scmp.le.s32.totalorder 2, %s9
    // Predicated region
    $region37: #{nvidia_forward.7} parent=5 // pred_check
      %p2839 = pneg %p2838
    $region38: #{nvidia_forward.7} parent=5 // pred_check_branch
      %2841 = sbr.rel (%p2839) target = $region40
    $region39: #{nvidia_forward.7} parent=5 // pred_region
      %s2842 = ssub.s32 %s9, 2
      // Predicated region
      $region41: #{nvidia_forward.7} parent=39 // pred_check
        %p2843 = pneg %p106
      $region42: #{nvidia_forward.7} parent=39 // pred_check_branch
        %2845 = sbr.rel (%p2843) target = $region44
      $region43: #{nvidia_forward.7} parent=39 // pred_region
        %s2846 = smul.u32 64, %s15
        %p2847 = scmp.lt.s32.totalorder %s2846, 191
        %s2848 = scalar_select %p2847, %s2846, 191
        %s2849 = smul.addr %s2848, 4
        %s2850 = scalar_lea.vmem %s3, %s2849
      $region44: #{nvidia_forward.7} parent=39 // pred_fallthru
        _
    $region40: #{nvidia_forward.7} parent=5 // pred_fallthru
      _
  $region6: #{nvidia_forward.7} parent=0 // loop_footer
    %s13 = sadd.s32 1, %s9
  $region7: #{nvidia_forward.7} parent=0 // loop_footer_branch
    %8 = sbr.rel target = $region3
  $region8: #{nvidia_forward.7} parent=0 // loop_exit
    _

// kernel: nvidia_forward.8
$region0: #{nvidia_forward.8}
  #allocation0 [shape = 'u32[]', space=smem, size = 0x4, offset = 0x4, fixed_abs, tag = 'smem constant byte address 0x4 - core index']
  #allocation1 [shape = 'u32[144,128]{1,0:T(1,128)}', space=vmem, size = 0x12000, scoped, tag = 'internal scratch']
  %s0 = inlined_call_operand.vmem [shape: bf16[224,900], index: 0, kind: input, shape index: {}]
  %s1 = inlined_call_operand.vmem [shape: bf16[900,128], index: 1, kind: input, shape index: {}]
  %s2 = inlined_call_operand.vmem [shape: f32[1,128], index: 2, kind: input, shape index: {}]
  %s3 = inlined_call_operand.vmem [shape: bf16[224,128], index: 3, kind: output, shape index: {}]
  %s4 = sld [smem:[#allocation0]]
  $region22: #{nvidia_forward.8} parent=0
    _
  %s6 = ssub.s32 1, %s4
  %s7 = scalar_select 0, %s6, %s4
  // Predicated region
  $region2: #{nvidia_forward.8} parent=0 // pred_check
    _
  $region3: #{nvidia_forward.8} parent=0 // pred_check_branch
    %9 = sbr.rel (0) target = $region5
  $region4: #{nvidia_forward.8} parent=0 // pred_region
    _
  $region5: #{nvidia_forward.8} parent=0 // pred_fallthru
    _
  // Predicated region
  $region6: #{nvidia_forward.8} parent=0 // pred_check
    _
  $region7: #{nvidia_forward.8} parent=0 // pred_check_branch
    %11 = sbr.rel (0) target = $region9
  $region8: #{nvidia_forward.8} parent=0 // pred_region
    _
  $region9: #{nvidia_forward.8} parent=0 // pred_fallthru
    _
  // Predicated region
  $region10: #{nvidia_forward.8} parent=0 // pred_check
    _
  $region11: #{nvidia_forward.8} parent=0 // pred_check_branch
    %13 = sbr.rel (0) target = $region13
  $region12: #{nvidia_forward.8} parent=0 // pred_region
    _
  $region13: #{nvidia_forward.8} parent=0 // pred_fallthru
    _
  %v15 = vld [vmem:[%s0] sm:$0xff]
  %v16 = vld [vmem:[%s0 + $0x8] sm:$0xff]
  %v17 = vld [vmem:[%s0 + $0x10] sm:$0xff]
  %v18 = vld [vmem:[%s0 + $0x18] sm:$0xff]
  %v19 = vld [vmem:[%s0 + $0x20] sm:$0xff]
  %v20 = vld [vmem:[%s0 + $0x28] sm:$0xff]
  %v21 = vld [vmem:[%s0 + $0x30] sm:$0xff]
  %v22 = vld [vmem:[%s0 + $0x38] sm:$0xff]
  %v23 = vld [vmem:[%s0 + $0x40] sm:$0xff]
  %v24 = vld [vmem:[%s0 + $0x48] sm:$0xff]
  %v25 = vld [vmem:[%s0 + $0x50] sm:$0xff]
  %v26 = vld [vmem:[%s0 + $0x58] sm:$0xff]
  %v27 = vld [vmem:[%s0 + $0x60] sm:$0xff]
  %v28 = vld [vmem:[%s0 + $0x68] sm:$0xff]
  %v29 = vld [vmem:[%s0 + $0x70] sm:$0xff]
  %v30 = vld [vmem:[%s0 + $0x78] sm:$0xff]
  %v31 = vld [vmem:[%s0 + $0x80] sm:$0xff]
  %v32 = vld [vmem:[%s0 + $0x88] sm:$0xff]
  %v33 = vld [vmem:[%s0 + $0x90] sm:$0xff]
  %v34 = vld [vmem:[%s0 + $0x98] sm:$0xff]
  %v35 = vld [vmem:[%s0 + $0xa0] sm:$0xff]
  %v36 = vld [vmem:[%s0 + $0xa8] sm:$0xff]
  %v37 = vld [vmem:[%s0 + $0xb0] sm:$0xff]
  %v38 = vld [vmem:[%s0 + $0xb8] sm:$0xff]
  %v39 = vld [vmem:[%s0 + $0xc0] sm:$0xff]
  %v40 = vld [vmem:[%s0 + $0xc8] sm:$0xff]
  %v41 = vld [vmem:[%s0 + $0xd0] sm:$0xff]
  %v42 = vld [vmem:[%s0 + $0xd8] sm:$0xff]
  %v43 = vld [vmem:[%s0 + $0xe0] sm:$0xff]
  %v44 = vld [vmem:[%s0 + $0xe8] sm:$0xff]
  %v45 = vld [vmem:[%s0 + $0xf0] sm:$0xff]
  %v46 = vld [vmem:[%s0 + $0xf8] sm:$0xff]
  %v47 = vld [vmem:[%s0 + $0x100] sm:$0xff]
  %v48 = vld [vmem:[%s0 + $0x108] sm:$0xff]
  %v49 = vld [vmem:[%s0 + $0x110] sm:$0xff]
  %v50 = vld [vmem:[%s0 + $0x118] sm:$0xff]
  %v51 = vld [vmem:[%s0 + $0x120] sm:$0xff]
  %v52 = vld [vmem:[%s0 + $0x128] sm:$0xff]
  %v53 = vld [vmem:[%s0 + $0x130] sm:$0xff]
  %v54 = vld [vmem:[%s0 + $0x138] sm:$0xff]
  %v55 = vld [vmem:[%s0 + $0x140] sm:$0xff]
  %v56 = vld [vmem:[%s0 + $0x148] sm:$0xff]
  %v57 = vld [vmem:[%s0 + $0x150] sm:$0xff]
  %v58 = vld [vmem:[%s0 + $0x158] sm:$0xff]
  %v59 = vld [vmem:[%s0 + $0x160] sm:$0xff]
  %v60 = vld [vmem:[%s0 + $0x168] sm:$0xff]
  %v61 = vld [vmem:[%s0 + $0x170] sm:$0xff]
  %v62 = vld [vmem:[%s0 + $0x178] sm:$0xff]
  %v63 = vld [vmem:[%s0 + $0x180] sm:$0xff]
  %v64 = vld [vmem:[%s0 + $0x188] sm:$0xff]
  %v65 = vld [vmem:[%s0 + $0x190] sm:$0xff]
  %v66 = vld [vmem:[%s0 + $0x198] sm:$0xff]
  %v67 = vld [vmem:[%s0 + $0x1a0] sm:$0xff]
  %v68 = vld [vmem:[%s0 + $0x1a8] sm:$0xff]
  %v69 = vld [vmem:[%s0 + $0x1b0] sm:$0xff]
  %v70 = vld [vmem:[%s0 + $0x1b8] sm:$0xff]
  %v71 = vld [vmem:[%s0 + $0x1c0] sm:$0xff]
  %v72 = vld [vmem:[%s0 + $0x1c8] sm:$0xff]
  %v73 = vld [vmem:[%s0 + $0x1d0] sm:$0xff]
  %v74 = vld [vmem:[%s0 + $0x1d8] sm:$0xff]
  %v75 = vld [vmem:[%s0 + $0x1e0] sm:$0xff]
  %v76 = vld [vmem:[%s0 + $0x1e8] sm:$0xff]
  %v77 = vld [vmem:[%s0 + $0x1f0] sm:$0xff]
  %v78 = vld [vmem:[%s0 + $0x1f8] sm:$0xff]
  %v79 = vld [vmem:[%s0 + $0x200] sm:$0xff]
  %v80 = vld [vmem:[%s0 + $0x208] sm:$0xff]
  %v81 = vld [vmem:[%s0 + $0x210] sm:$0xff]
  %v82 = vld [vmem:[%s0 + $0x218] sm:$0xff]
  %v83 = vld [vmem:[%s0 + $0x220] sm:$0xff]
  %v84 = vld [vmem:[%s0 + $0x228] sm:$0xff]
  %v85 = vld [vmem:[%s0 + $0x230] sm:$0xff]
  %v86 = vld [vmem:[%s0 + $0x238] sm:$0xff]
  %v87 = vld [vmem:[%s0 + $0x240] sm:$0xff]
  %v88 = vld [vmem:[%s0 + $0x248] sm:$0xff]
  %v89 = vld [vmem:[%s0 + $0x250] sm:$0xff]
  %v90 = vld [vmem:[%s0 + $0x258] sm:$0xff]
  %v91 = vld [vmem:[%s0 + $0x260] sm:$0xff]
  %v92 = vld [vmem:[%s0 + $0x268] sm:$0xff]
  %v93 = vld [vmem:[%s0 + $0x270] sm:$0xff]
  %v94 = vld [vmem:[%s0 + $0x278] sm:$0xff]
  %v95 = vld [vmem:[%s0 + $0x280] sm:$0xff]
  %v96 = vld [vmem:[%s0 + $0x288] sm:$0xff]
  %v97 = vld [vmem:[%s0 + $0x290] sm:$0xff]
  %v98 = vld [vmem:[%s0 + $0x298] sm:$0xff]
  %v99 = vld [vmem:[%s0 + $0x2a0] sm:$0xff]
  %v100 = vld [vmem:[%s0 + $0x2a8] sm:$0xff]
  %v101 = vld [vmem:[%s0 + $0x2b0] sm:$0xff]
  %v102 = vld [vmem:[%s0 + $0x2b8] sm:$0xff]
  %v103 = vld [vmem:[%s0 + $0x2c0] sm:$0xff]
  %v104 = vld [vmem:[%s0 + $0x2c8] sm:$0xff]
  %v105 = vld [vmem:[%s0 + $0x2d0] sm:$0xff]
  %v106 = vld [vmem:[%s0 + $0x2d8] sm:$0xff]
  %v107 = vld [vmem:[%s0 + $0x2e0] sm:$0xff]
  %v108 = vld [vmem:[%s0 + $0x2e8] sm:$0xff]
  %v109 = vld [vmem:[%s0 + $0x2f0] sm:$0xff]
  %v110 = vld [vmem:[%s0 + $0x2f8] sm:$0xff]
  %v111 = vld [vmem:[%s0 + $0x300] sm:$0xff]
  %v112 = vld [vmem:[%s0 + $0x308] sm:$0xff]
  %v113 = vld [vmem:[%s0 + $0x310] sm:$0xff]
  %v114 = vld [vmem:[%s0 + $0x318] sm:$0xff]
  %v115 = vld [vmem:[%s0 + $0x320] sm:$0xff]
  %v116 = vld [vmem:[%s0 + $0x328] sm:$0xff]
  %v117 = vld [vmem:[%s0 + $0x330] sm:$0xff]
  %v118 = vld [vmem:[%s0 + $0x338] sm:$0xff]
  %v119 = vld [vmem:[%s0 + $0x340] sm:$0xff]
  %v120 = vld [vmem:[%s0 + $0x348] sm:$0xff]
  %v121 = vld [vmem:[%s0 + $0x350] sm:$0xff]
  %v122 = vld [vmem:[%s0 + $0x358] sm:$0xff]
  %v123 = vld [vmem:[%s0 + $0x360] sm:$0xff]
  %v124 = vld [vmem:[%s0 + $0x368] sm:$0xff]
  %v125 = vld [vmem:[%s0 + $0x370] sm:$0xff]
  %v126 = vld [vmem:[%s0 + $0x378] sm:$0xff]
  %v127 = vld [vmem:[%s1] sm:$0xf]
  %v128 = vld [vmem:[%s1 + $0x4] sm:$0xf]
  %v129 = vld [vmem:[%s1 + $0x8] sm:$0xf]
  %v130 = vld [vmem:[%s1 + $0xc] sm:$0xf]
  %v131 = vld [vmem:[%s1 + $0x10] sm:$0xf]
  %v132 = vld [vmem:[%s1 + $0x14] sm:$0xf]
  %v133 = vld [vmem:[%s1 + $0x18] sm:$0xf]
  %v134 = vld [vmem:[%s1 + $0x1c] sm:$0xf]
  %v135 = vld [vmem:[%s1 + $0x20] sm:$0xf]
  %v136 = vld [vmem:[%s1 + $0x24] sm:$0xf]
  %v137 = vld [vmem:[%s1 + $0x28] sm:$0xf]
  %v138 = vld [vmem:[%s1 + $0x2c] sm:$0xf]
  %v139 = vld [vmem:[%s1 + $0x30] sm:$0xf]
  %v140 = vld [vmem:[%s1 + $0x34] sm:$0xf]
  %v141 = vld [vmem:[%s1 + $0x38] sm:$0xf]
  %v142 = vld [vmem:[%s1 + $0x3c] sm:$0xf]
  %v143 = vld [vmem:[%s1 + $0x40] sm:$0xf]
  %v144 = vld [vmem:[%s1 + $0x44] sm:$0xf]
  %v145 = vld [vmem:[%s1 + $0x48] sm:$0xf]
  %v146 = vld [vmem:[%s1 + $0x4c] sm:$0xf]
  %v147 = vld [vmem:[%s1 + $0x50] sm:$0xf]
  %v148 = vld [vmem:[%s1 + $0x54] sm:$0xf]
  %v149 = vld [vmem:[%s1 + $0x58] sm:$0xf]
  %v150 = vld [vmem:[%s1 + $0x5c] sm:$0xf]
  %v151 = vld [vmem:[%s1 + $0x60] sm:$0xf]
  %v152 = vld [vmem:[%s1 + $0x64] sm:$0xf]
  %v153 = vld [vmem:[%s1 + $0x68] sm:$0xf]
  %v154 = vld [vmem:[%s1 + $0x6c] sm:$0xf]
  %v155 = vld [vmem:[%s1 + $0x70] sm:$0xf]
  %v156 = vld [vmem:[%s1 + $0x74] sm:$0xf]
  %v157 = vld [vmem:[%s1 + $0x78] sm:$0xf]
  %v158 = vld [vmem:[%s1 + $0x7c] sm:$0xf]
  %v159 = vld [vmem:[%s1 + $0x80] sm:$0xf]
  %v160 = vld [vmem:[%s1 + $0x84] sm:$0xf]
  %v161 = vld [vmem:[%s1 + $0x88] sm:$0xf]
  %v162 = vld [vmem:[%s1 + $0x8c] sm:$0xf]
  %v163 = vld [vmem:[%s1 + $0x90] sm:$0xf]
  %v164 = vld [vmem:[%s1 + $0x94] sm:$0xf]
  %v165 = vld [vmem:[%s1 + $0x98] sm:$0xf]
  %v166 = vld [vmem:[%s1 + $0x9c] sm:$0xf]
  %v167 = vld [vmem:[%s1 + $0xa0] sm:$0xf]
  %v168 = vld [vmem:[%s1 + $0xa4] sm:$0xf]
  %v169 = vld [vmem:[%s1 + $0xa8] sm:$0xf]
  %v170 = vld [vmem:[%s1 + $0xac] sm:$0xf]
  %v171 = vld [vmem:[%s1 + $0xb0] sm:$0xf]
  %v172 = vld [vmem:[%s1 + $0xb4] sm:$0xf]
  %v173 = vld [vmem:[%s1 + $0xb8] sm:$0xf]
  %v174 = vld [vmem:[%s1 + $0xbc] sm:$0xf]
  %v175 = vld [vmem:[%s1 + $0xc0] sm:$0xf]
  %v176 = vld [vmem:[%s1 + $0xc4] sm:$0xf]
  %v177 = vld [vmem:[%s1 + $0xc8] sm:$0xf]
  %v178 = vld [vmem:[%s1 + $0xcc] sm:$0xf]
  %v179 = vld [vmem:[%s1 + $0xd0] sm:$0xf]
  %v180 = vld [vmem:[%s1 + $0xd4] sm:$0xf]
  %v181 = vld [vmem:[%s1 + $0xd8] sm:$0xf]
  %v182 = vld [vmem:[%s1 + $0xdc] sm:$0xf]
  %v183 = vld [vmem:[%s1 + $0xe0] sm:$0xf]
  %v184 = vld [vmem:[%s1 + $0xe4] sm:$0xf]
  %v185 = vld [vmem:[%s1 + $0xe8] sm:$0xf]
  %v186 = vld [vmem:[%s1 + $0xec] sm:$0xf]
  %v187 = vld [vmem:[%s1 + $0xf0] sm:$0xf]
  %v188 = vld [vmem:[%s1 + $0xf4] sm:$0xf]
  %v189 = vld [vmem:[%s1 + $0xf8] sm:$0xf]
  %v190 = vld [vmem:[%s1 + $0xfc] sm:$0xf]
  %v191 = vld [vmem:[%s1 + $0x100] sm:$0xf]
  %v192 = vld [vmem:[%s1 + $0x104] sm:$0xf]
  %v193 = vld [vmem:[%s1 + $0x108] sm:$0xf]
  %v194 = vld [vmem:[%s1 + $0x10c] sm:$0xf]
  %v195 = vld [vmem:[%s1 + $0x110] sm:$0xf]
  %v196 = vld [vmem:[%s1 + $0x114] sm:$0xf]
  %v197 = vld [vmem:[%s1 + $0x118] sm:$0xf]
  %v198 = vld [vmem:[%s1 + $0x11c] sm:$0xf]
  %v199 = vld [vmem:[%s1 + $0x120] sm:$0xf]
  %v200 = vld [vmem:[%s1 + $0x124] sm:$0xf]
  %v201 = vld [vmem:[%s1 + $0x128] sm:$0xf]
  %v202 = vld [vmem:[%s1 + $0x12c] sm:$0xf]
  %v203 = vld [vmem:[%s1 + $0x130] sm:$0xf]
  %v204 = vld [vmem:[%s1 + $0x134] sm:$0xf]
  %v205 = vld [vmem:[%s1 + $0x138] sm:$0xf]
  %v206 = vld [vmem:[%s1 + $0x13c] sm:$0xf]
  %v207 = vld [vmem:[%s1 + $0x140] sm:$0xf]
  %v208 = vld [vmem:[%s1 + $0x144] sm:$0xf]
  %v209 = vld [vmem:[%s1 + $0x148] sm:$0xf]
  %v210 = vld [vmem:[%s1 + $0x14c] sm:$0xf]
  %v211 = vld [vmem:[%s1 + $0x150] sm:$0xf]
  %v212 = vld [vmem:[%s1 + $0x154] sm:$0xf]
  %v213 = vld [vmem:[%s1 + $0x158] sm:$0xf]
  %v214 = vld [vmem:[%s1 + $0x15c] sm:$0xf]
  %v215 = vld [vmem:[%s1 + $0x160] sm:$0xf]
  %v216 = vld [vmem:[%s1 + $0x164] sm:$0xf]
  %v217 = vld [vmem:[%s1 + $0x168] sm:$0xf]
  %v218 = vld [vmem:[%s1 + $0x16c] sm:$0xf]
  %v219 = vld [vmem:[%s1 + $0x170] sm:$0xf]
  %v220 = vld [vmem:[%s1 + $0x174] sm:$0xf]
  %v221 = vld [vmem:[%s1 + $0x178] sm:$0xf]
  %v222 = vld [vmem:[%s1 + $0x17c] sm:$0xf]
  %v223 = vld [vmem:[%s1 + $0x180] sm:$0xf]
  %v224 = vld [vmem:[%s1 + $0x184] sm:$0xf]
  %v225 = vld [vmem:[%s1 + $0x188] sm:$0xf]
  %v226 = vld [vmem:[%s1 + $0x18c] sm:$0xf]
  %v227 = vld [vmem:[%s1 + $0x190] sm:$0xf]
  %v228 = vld [vmem:[%s1 + $0x194] sm:$0xf]
  %v229 = vld [vmem:[%s1 + $0x198] sm:$0xf]
  %v230 = vld [vmem:[%s1 + $0x19c] sm:$0xf]
  %v231 = vld [vmem:[%s1 + $0x1a0] sm:$0xf]
  %v232 = vld [vmem:[%s1 + $0x1a4] sm:$0xf]
  %v233 = vld [vmem:[%s1 + $0x1a8] sm:$0xf]
  %v234 = vld [vmem:[%s1 + $0x1ac] sm:$0xf]
  %v235 = vld [vmem:[%s1 + $0x1b0] sm:$0xf]
  %v236 = vld [vmem:[%s1 + $0x1b4] sm:$0xf]
  %v237 = vld [vmem:[%s1 + $0x1b8] sm:$0xf]
  %v238 = vld [vmem:[%s1 + $0x1bc] sm:$0xf]
  %v239 = vld [vmem:[%s1 + $0x1c0] sm:$0x3]
  %v240 = vld [vmem:[%s2] sm:$0x1]
  %v242 = vlaneseq
  %v243 = vshrl.u32 %v242, 7
  %v244 = vsub.s32 0, %v243
  %v245 = vrot.slane %v240, %v244
  %v359 = vunpack.c.l.b16 %v15
  %v360 = vunpack.c.h.b16 %v15
  %v361 = vunpack.c.l.b16 %v16
  %v362 = vunpack.c.h.b16 %v16
  %v363 = vunpack.c.l.b16 %v17
  %v364 = vunpack.c.h.b16 %v17
  %v365 = vunpack.c.l.b16 %v18
  %v366 = vunpack.c.h.b16 %v18
  %v367 = vunpack.c.l.b16 %v19
  %v368 = vunpack.c.h.b16 %v19
  %v369 = vunpack.c.l.b16 %v20
  %v370 = vunpack.c.h.b16 %v20
  %v371 = vunpack.c.l.b16 %v21
  %v372 = vunpack.c.h.b16 %v21
  %v373 = vunpack.c.l.b16 %v22
  %v374 = vunpack.c.h.b16 %v22
  %v375 = vunpack.c.l.b16 %v23
  %v376 = vunpack.c.h.b16 %v23
  %v377 = vunpack.c.l.b16 %v24
  %v378 = vunpack.c.h.b16 %v24
  %v379 = vunpack.c.l.b16 %v25
  %v380 = vunpack.c.h.b16 %v25
  %v381 = vunpack.c.l.b16 %v26
  %v382 = vunpack.c.h.b16 %v26
  %v383 = vunpack.c.l.b16 %v27
  %v384 = vunpack.c.h.b16 %v27
  %v385 = vunpack.c.l.b16 %v28
  %v386 = vunpack.c.h.b16 %v28
  %v387 = vunpack.c.l.b16 %v29
  %v388 = vunpack.c.h.b16 %v29
  %v389 = vunpack.c.l.b16 %v30
  %v390 = vunpack.c.h.b16 %v30
  %v391 = vunpack.c.l.b16 %v31
  %v392 = vunpack.c.h.b16 %v31
  %v393 = vunpack.c.l.b16 %v32
  %v394 = vunpack.c.h.b16 %v32
  %v395 = vunpack.c.l.b16 %v33
  %v396 = vunpack.c.h.b16 %v33
  %v397 = vunpack.c.l.b16 %v34
  %v398 = vunpack.c.h.b16 %v34
  %v399 = vunpack.c.l.b16 %v35
  %v400 = vunpack.c.h.b16 %v35
  %v401 = vunpack.c.l.b16 %v36
  %v402 = vunpack.c.h.b16 %v36
  %v403 = vunpack.c.l.b16 %v37
  %v404 = vunpack.c.h.b16 %v37
  %v405 = vunpack.c.l.b16 %v38
  %v406 = vunpack.c.h.b16 %v38
  %v407 = vunpack.c.l.b16 %v39
  %v408 = vunpack.c.h.b16 %v39
  %v409 = vunpack.c.l.b16 %v40
  %v410 = vunpack.c.h.b16 %v40
  %v411 = vunpack.c.l.b16 %v41
  %v412 = vunpack.c.h.b16 %v41
  %v413 = vunpack.c.l.b16 %v42
  %v414 = vunpack.c.h.b16 %v42
  %v415 = vunpack.c.l.b16 %v43
  %v416 = vunpack.c.h.b16 %v43
  %v417 = vunpack.c.l.b16 %v44
  %v418 = vunpack.c.h.b16 %v44
  %v419 = vunpack.c.l.b16 %v45
  %v420 = vunpack.c.h.b16 %v45
  %v421 = vunpack.c.l.b16 %v46
  %v422 = vunpack.c.h.b16 %v46
  %v423 = vunpack.c.l.b16 %v47
  %v424 = vunpack.c.h.b16 %v47
  %v425 = vunpack.c.l.b16 %v48
  %v426 = vunpack.c.h.b16 %v48
  %v427 = vunpack.c.l.b16 %v49
  %v428 = vunpack.c.h.b16 %v49
  %v429 = vunpack.c.l.b16 %v50
  %v430 = vunpack.c.h.b16 %v50
  %v431 = vunpack.c.l.b16 %v51
  %v432 = vunpack.c.h.b16 %v51
  %v433 = vunpack.c.l.b16 %v52
  %v434 = vunpack.c.h.b16 %v52
  %v435 = vunpack.c.l.b16 %v53
  %v436 = vunpack.c.h.b16 %v53
  %v437 = vunpack.c.l.b16 %v54
  %v438 = vunpack.c.h.b16 %v54
  %v439 = vunpack.c.l.b16 %v55
  %v440 = vunpack.c.h.b16 %v55
  %v441 = vunpack.c.l.b16 %v56
  %v442 = vunpack.c.h.b16 %v56
  %v443 = vunpack.c.l.b16 %v57
  %v444 = vunpack.c.h.b16 %v57
  %v445 = vunpack.c.l.b16 %v58
  %v446 = vunpack.c.h.b16 %v58
  %v447 = vunpack.c.l.b16 %v59
  %v448 = vunpack.c.h.b16 %v59
  %v449 = vunpack.c.l.b16 %v60
  %v450 = vunpack.c.h.b16 %v60
  %v451 = vunpack.c.l.b16 %v61
  %v452 = vunpack.c.h.b16 %v61
  %v453 = vunpack.c.l.b16 %v62
  %v454 = vunpack.c.h.b16 %v62
  %v455 = vunpack.c.l.b16 %v63
  %v456 = vunpack.c.h.b16 %v63
  %v457 = vunpack.c.l.b16 %v64
  %v458 = vunpack.c.h.b16 %v64
  %v459 = vunpack.c.l.b16 %v65
  %v460 = vunpack.c.h.b16 %v65
  %v461 = vunpack.c.l.b16 %v66
  %v462 = vunpack.c.h.b16 %v66
  %v463 = vunpack.c.l.b16 %v67
  %v464 = vunpack.c.h.b16 %v67
  %v465 = vunpack.c.l.b16 %v68
  %v466 = vunpack.c.h.b16 %v68
  %v467 = vunpack.c.l.b16 %v69
  %v468 = vunpack.c.h.b16 %v69
  %v469 = vunpack.c.l.b16 %v70
  %v470 = vunpack.c.h.b16 %v70
  %v471 = vunpack.c.l.b16 %v71
  %v472 = vunpack.c.h.b16 %v71
  %v473 = vunpack.c.l.b16 %v72
  %v474 = vunpack.c.h.b16 %v72
  %v475 = vunpack.c.l.b16 %v73
  %v476 = vunpack.c.h.b16 %v73
  %v477 = vunpack.c.l.b16 %v74
  %v478 = vunpack.c.h.b16 %v74
  %v479 = vunpack.c.l.b16 %v75
  %v480 = vunpack.c.h.b16 %v75
  %v481 = vunpack.c.l.b16 %v76
  %v482 = vunpack.c.h.b16 %v76
  %v483 = vunpack.c.l.b16 %v77
  %v484 = vunpack.c.h.b16 %v77
  %v485 = vunpack.c.l.b16 %v78
  %v486 = vunpack.c.h.b16 %v78
  %v487 = vunpack.c.l.b16 %v79
  %v488 = vunpack.c.h.b16 %v79
  %v489 = vunpack.c.l.b16 %v80
  %v490 = vunpack.c.h.b16 %v80
  %v491 = vunpack.c.l.b16 %v81
  %v492 = vunpack.c.h.b16 %v81
  %v493 = vunpack.c.l.b16 %v82
  %v494 = vunpack.c.h.b16 %v82
  %v495 = vunpack.c.l.b16 %v83
  %v496 = vunpack.c.h.b16 %v83
  %v497 = vunpack.c.l.b16 %v84
  %v498 = vunpack.c.h.b16 %v84
  %v499 = vunpack.c.l.b16 %v85
  %v500 = vunpack.c.h.b16 %v85
  %v501 = vunpack.c.l.b16 %v86
  %v502 = vunpack.c.h.b16 %v86
  %v503 = vunpack.c.l.b16 %v87
  %v504 = vunpack.c.h.b16 %v87
  %v505 = vunpack.c.l.b16 %v88
  %v506 = vunpack.c.h.b16 %v88
  %v507 = vunpack.c.l.b16 %v89
  %v508 = vunpack.c.h.b16 %v89
  %v509 = vunpack.c.l.b16 %v90
  %v510 = vunpack.c.h.b16 %v90
  %v511 = vunpack.c.l.b16 %v91
  %v512 = vunpack.c.h.b16 %v91
  %v513 = vunpack.c.l.b16 %v92
  %v514 = vunpack.c.h.b16 %v92
  %v515 = vunpack.c.l.b16 %v93
  %v516 = vunpack.c.h.b16 %v93
  %v517 = vunpack.c.l.b16 %v94
  %v518 = vunpack.c.h.b16 %v94
  %v519 = vunpack.c.l.b16 %v95
  %v520 = vunpack.c.h.b16 %v95
  %v521 = vunpack.c.l.b16 %v96
  %v522 = vunpack.c.h.b16 %v96
  %v523 = vunpack.c.l.b16 %v97
  %v524 = vunpack.c.h.b16 %v97
  %v525 = vunpack.c.l.b16 %v98
  %v526 = vunpack.c.h.b16 %v98
  %v527 = vunpack.c.l.b16 %v99
  %v528 = vunpack.c.h.b16 %v99
  %v529 = vunpack.c.l.b16 %v100
  %v530 = vunpack.c.h.b16 %v100
  %v531 = vunpack.c.l.b16 %v101
  %v532 = vunpack.c.h.b16 %v101
  %v533 = vunpack.c.l.b16 %v102
  %v534 = vunpack.c.h.b16 %v102
  %v535 = vunpack.c.l.b16 %v103
  %v536 = vunpack.c.h.b16 %v103
  %v537 = vunpack.c.l.b16 %v104
  %v538 = vunpack.c.h.b16 %v104
  %v539 = vunpack.c.l.b16 %v105
  %v540 = vunpack.c.h.b16 %v105
  %v541 = vunpack.c.l.b16 %v106
  %v542 = vunpack.c.h.b16 %v106
  %v543 = vunpack.c.l.b16 %v107
  %v544 = vunpack.c.h.b16 %v107
  %v545 = vunpack.c.l.b16 %v108
  %v546 = vunpack.c.h.b16 %v108
  %v547 = vunpack.c.l.b16 %v109
  %v548 = vunpack.c.h.b16 %v109
  %v549 = vunpack.c.l.b16 %v110
  %v550 = vunpack.c.h.b16 %v110
  %v551 = vunpack.c.l.b16 %v111
  %v552 = vunpack.c.h.b16 %v111
  %v553 = vunpack.c.l.b16 %v112
  %v554 = vunpack.c.h.b16 %v112
  %v555 = vunpack.c.l.b16 %v113
  %v556 = vunpack.c.h.b16 %v113
  %v557 = vunpack.c.l.b16 %v114
  %v558 = vunpack.c.h.b16 %v114
  %v559 = vunpack.c.l.b16 %v115
  %v560 = vunpack.c.h.b16 %v115
  %v561 = vunpack.c.l.b16 %v116
  %v562 = vunpack.c.h.b16 %v116
  %v563 = vunpack.c.l.b16 %v117
  %v564 = vunpack.c.h.b16 %v117
  %v565 = vunpack.c.l.b16 %v118
  %v566 = vunpack.c.h.b16 %v118
  %v567 = vunpack.c.l.b16 %v119
  %v568 = vunpack.c.h.b16 %v119
  %v569 = vunpack.c.l.b16 %v120
  %v570 = vunpack.c.h.b16 %v120
  %v571 = vunpack.c.l.b16 %v121
  %v572 = vunpack.c.h.b16 %v121
  %v573 = vunpack.c.l.b16 %v122
  %v574 = vunpack.c.h.b16 %v122
  %v575 = vunpack.c.l.b16 %v123
  %v576 = vunpack.c.h.b16 %v123
  %v577 = vunpack.c.l.b16 %v124
  %v578 = vunpack.c.h.b16 %v124
  %v579 = vunpack.c.l.b16 %v125
  %v580 = vunpack.c.h.b16 %v125
  %v581 = vunpack.c.l.b16 %v126
  %v582 = vunpack.c.h.b16 %v126
  %v583 = vpack.c.b16 %v367, %v359
  %v584 = vpack.c.b16 %v368, %v360
  %v585 = vpack.c.b16 %v369, %v361
  %v586 = vpack.c.b16 %v370, %v362
  %v587 = vpack.c.b16 %v371, %v363
  %v588 = vpack.c.b16 %v372, %v364
  %v589 = vpack.c.b16 %v373, %v365
  %v590 = vpack.c.b16 %v374, %v366
  %v591 = vpack.c.b16 %v383, %v375
  %v592 = vpack.c.b16 %v384, %v376
  %v593 = vpack.c.b16 %v385, %v377
  %v594 = vpack.c.b16 %v386, %v378
  %v595 = vpack.c.b16 %v387, %v379
  %v596 = vpack.c.b16 %v388, %v380
  %v597 = vpack.c.b16 %v389, %v381
  %v598 = vpack.c.b16 %v390, %v382
  %v599 = vpack.c.b16 %v399, %v391
  %v600 = vpack.c.b16 %v400, %v392
  %v601 = vpack.c.b16 %v401, %v393
  %v602 = vpack.c.b16 %v402, %v394
  %v603 = vpack.c.b16 %v403, %v395
  %v604 = vpack.c.b16 %v404, %v396
  %v605 = vpack.c.b16 %v405, %v397
  %v606 = vpack.c.b16 %v406, %v398
  %v607 = vpack.c.b16 %v415, %v407
  %v608 = vpack.c.b16 %v416, %v408
  %v609 = vpack.c.b16 %v417, %v409
  %v610 = vpack.c.b16 %v418, %v410
  %v611 = vpack.c.b16 %v419, %v411
  %v612 = vpack.c.b16 %v420, %v412
  %v613 = vpack.c.b16 %v421, %v413
  %v614 = vpack.c.b16 %v422, %v414
  %v615 = vpack.c.b16 %v431, %v423
  %v616 = vpack.c.b16 %v432, %v424
  %v617 = vpack.c.b16 %v433, %v425
  %v618 = vpack.c.b16 %v434, %v426
  %v619 = vpack.c.b16 %v435, %v427
  %v620 = vpack.c.b16 %v436, %v428
  %v621 = vpack.c.b16 %v437, %v429
  %v622 = vpack.c.b16 %v438, %v430
  %v623 = vpack.c.b16 %v447, %v439
  %v624 = vpack.c.b16 %v448, %v440
  %v625 = vpack.c.b16 %v449, %v441
  %v626 = vpack.c.b16 %v450, %v442
  %v627 = vpack.c.b16 %v451, %v443
  %v628 = vpack.c.b16 %v452, %v444
  %v629 = vpack.c.b16 %v453, %v445
  %v630 = vpack.c.b16 %v454, %v446
  %v631 = vpack.c.b16 %v463, %v455
  %v632 = vpack.c.b16 %v464, %v456
  %v633 = vpack.c.b16 %v465, %v457
  %v634 = vpack.c.b16 %v466, %v458
  %v635 = vpack.c.b16 %v467, %v459
  %v636 = vpack.c.b16 %v468, %v460
  %v637 = vpack.c.b16 %v469, %v461
  %v638 = vpack.c.b16 %v470, %v462
  %v639 = vpack.c.b16 %v479, %v471
  %v640 = vpack.c.b16 %v480, %v472
  %v641 = vpack.c.b16 %v481, %v473
  %v642 = vpack.c.b16 %v482, %v474
  %v643 = vpack.c.b16 %v483, %v475
  %v644 = vpack.c.b16 %v484, %v476
  %v645 = vpack.c.b16 %v485, %v477
  %v646 = vpack.c.b16 %v486, %v478
  %v647 = vpack.c.b16 %v495, %v487
  %v648 = vpack.c.b16 %v496, %v488
  %v649 = vpack.c.b16 %v497, %v489
  %v650 = vpack.c.b16 %v498, %v490
  %v651 = vpack.c.b16 %v499, %v491
  %v652 = vpack.c.b16 %v500, %v492
  %v653 = vpack.c.b16 %v501, %v493
  %v654 = vpack.c.b16 %v502, %v494
  %v655 = vpack.c.b16 %v511, %v503
  %v656 = vpack.c.b16 %v512, %v504
  %v657 = vpack.c.b16 %v513, %v505
  %v658 = vpack.c.b16 %v514, %v506
  %v659 = vpack.c.b16 %v515, %v507
  %v660 = vpack.c.b16 %v516, %v508
  %v661 = vpack.c.b16 %v517, %v509
  %v662 = vpack.c.b16 %v518, %v510
  %v663 = vpack.c.b16 %v527, %v519
  %v664 = vpack.c.b16 %v528, %v520
  %v665 = vpack.c.b16 %v529, %v521
  %v666 = vpack.c.b16 %v530, %v522
  %v667 = vpack.c.b16 %v531, %v523
  %v668 = vpack.c.b16 %v532, %v524
  %v669 = vpack.c.b16 %v533, %v525
  %v670 = vpack.c.b16 %v534, %v526
  %v671 = vpack.c.b16 %v543, %v535
  %v672 = vpack.c.b16 %v544, %v536
  %v673 = vpack.c.b16 %v545, %v537
  %v674 = vpack.c.b16 %v546, %v538
  %v675 = vpack.c.b16 %v547, %v539
  %v676 = vpack.c.b16 %v548, %v540
  %v677 = vpack.c.b16 %v549, %v541
  %v678 = vpack.c.b16 %v550, %v542
  %v679 = vpack.c.b16 %v559, %v551
  %v680 = vpack.c.b16 %v560, %v552
  %v681 = vpack.c.b16 %v561, %v553
  %v682 = vpack.c.b16 %v562, %v554
  %v683 = vpack.c.b16 %v563, %v555
  %v684 = vpack.c.b16 %v564, %v556
  %v685 = vpack.c.b16 %v565, %v557
  %v686 = vpack.c.b16 %v566, %v558
  %v687 = vpack.c.b16 %v575, %v567
  %v688 = vpack.c.b16 %v576, %v568
  %v689 = vpack.c.b16 %v577, %v569
  %v690 = vpack.c.b16 %v578, %v570
  %v691 = vpack.c.b16 %v579, %v571
  %v692 = vpack.c.b16 %v580, %v572
  %v693 = vpack.c.b16 %v581, %v573
  %v694 = vpack.c.b16 %v582, %v574
  %v906 = vunpack.c.l.b16 %v127
  %v907 = vunpack.c.l.b16 %v128
  %v908 = vunpack.c.l.b16 %v129
  %v909 = vunpack.c.l.b16 %v130
  %v910 = vunpack.c.l.b16 %v131
  %v911 = vunpack.c.l.b16 %v132
  %v912 = vunpack.c.l.b16 %v133
  %v913 = vunpack.c.l.b16 %v134
  %v914 = vunpack.c.l.b16 %v135
  %v915 = vunpack.c.l.b16 %v136
  %v916 = vunpack.c.l.b16 %v137
  %v917 = vunpack.c.l.b16 %v138
  %v918 = vunpack.c.l.b16 %v139
  %v919 = vunpack.c.l.b16 %v140
  %v920 = vunpack.c.l.b16 %v141
  %v921 = vunpack.c.l.b16 %v142
  %v922 = vunpack.c.l.b16 %v143
  %v923 = vunpack.c.l.b16 %v144
  %v924 = vunpack.c.l.b16 %v145
  %v925 = vunpack.c.l.b16 %v146
  %v926 = vunpack.c.l.b16 %v147
  %v927 = vunpack.c.l.b16 %v148
  %v928 = vunpack.c.l.b16 %v149
  %v929 = vunpack.c.l.b16 %v150
  %v930 = vunpack.c.l.b16 %v151
  %v931 = vunpack.c.l.b16 %v152
  %v932 = vunpack.c.l.b16 %v153
  %v933 = vunpack.c.l.b16 %v154
  %v934 = vunpack.c.l.b16 %v155
  %v935 = vunpack.c.l.b16 %v156
  %v936 = vunpack.c.l.b16 %v157
  %v937 = vunpack.c.l.b16 %v158
  %v938 = vunpack.c.l.b16 %v159
  %v939 = vunpack.c.l.b16 %v160
  %v940 = vunpack.c.l.b16 %v161
  %v941 = vunpack.c.l.b16 %v162
  %v942 = vunpack.c.l.b16 %v163
  %v943 = vunpack.c.l.b16 %v164
  %v944 = vunpack.c.l.b16 %v165
  %v945 = vunpack.c.l.b16 %v166
  %v946 = vunpack.c.l.b16 %v167
  %v947 = vunpack.c.l.b16 %v168
  %v948 = vunpack.c.l.b16 %v169
  %v949 = vunpack.c.l.b16 %v170
  %v950 = vunpack.c.l.b16 %v171
  %v951 = vunpack.c.l.b16 %v172
  %v952 = vunpack.c.l.b16 %v173
  %v953 = vunpack.c.l.b16 %v174
  %v954 = vunpack.c.l.b16 %v175
  %v955 = vunpack.c.l.b16 %v176
  %v956 = vunpack.c.l.b16 %v177
  %v957 = vunpack.c.l.b16 %v178
  %v958 = vunpack.c.l.b16 %v179
  %v959 = vunpack.c.l.b16 %v180
  %v960 = vunpack.c.l.b16 %v181
  %v961 = vunpack.c.l.b16 %v182
  %v962 = vunpack.c.l.b16 %v183
  %v963 = vunpack.c.l.b16 %v184
  %v964 = vunpack.c.l.b16 %v185
  %v965 = vunpack.c.l.b16 %v186
  %v966 = vunpack.c.l.b16 %v187
  %v967 = vunpack.c.l.b16 %v188
  %v968 = vunpack.c.l.b16 %v189
  %v969 = vunpack.c.l.b16 %v190
  %v970 = vunpack.c.l.b16 %v191
  %v971 = vunpack.c.l.b16 %v192
  %v972 = vunpack.c.l.b16 %v193
  %v973 = vunpack.c.l.b16 %v194
  %v974 = vunpack.c.l.b16 %v195
  %v975 = vunpack.c.l.b16 %v196
  %v976 = vunpack.c.l.b16 %v197
  %v977 = vunpack.c.l.b16 %v198
  %v978 = vunpack.c.l.b16 %v199
  %v979 = vunpack.c.l.b16 %v200
  %v980 = vunpack.c.l.b16 %v201
  %v981 = vunpack.c.l.b16 %v202
  %v982 = vunpack.c.l.b16 %v203
  %v983 = vunpack.c.l.b16 %v204
  %v984 = vunpack.c.l.b16 %v205
  %v985 = vunpack.c.l.b16 %v206
  %v986 = vunpack.c.l.b16 %v207
  %v987 = vunpack.c.l.b16 %v208
  %v988 = vunpack.c.l.b16 %v209
  %v989 = vunpack.c.l.b16 %v210
  %v990 = vunpack.c.l.b16 %v211
  %v991 = vunpack.c.l.b16 %v212
  %v992 = vunpack.c.l.b16 %v213
  %v993 = vunpack.c.l.b16 %v214
  %v994 = vunpack.c.l.b16 %v215
  %v995 = vunpack.c.l.b16 %v216
  %v996 = vunpack.c.l.b16 %v217
  %v997 = vunpack.c.l.b16 %v218
  %v998 = vunpack.c.l.b16 %v219
  %v999 = vunpack.c.l.b16 %v220
  %v1000 = vunpack.c.l.b16 %v221
  %v1001 = vunpack.c.l.b16 %v222
  %v1002 = vunpack.c.l.b16 %v223
  %v1003 = vunpack.c.l.b16 %v224
  %v1004 = vunpack.c.l.b16 %v225
  %v1005 = vunpack.c.l.b16 %v226
  %v1006 = vunpack.c.l.b16 %v227
  %v1007 = vunpack.c.l.b16 %v228
  %v1008 = vunpack.c.l.b16 %v229
  %v1009 = vunpack.c.l.b16 %v230
  %v1010 = vunpack.c.l.b16 %v231
  %v1011 = vunpack.c.l.b16 %v232
  %v1012 = vunpack.c.l.b16 %v233
  %v1013 = vunpack.c.l.b16 %v234
  %v1014 = vunpack.c.l.b16 %v235
  %v1015 = vunpack.c.l.b16 %v236
  %v1016 = vunpack.c.l.b16 %v237
  %v1017 = vunpack.c.l.b16 %v238
  %v1018 = vunpack.c.l.b16 %v239
  %v1019 = vpack.c.b16 %v907, %v906
  %v1020 = vpack.c.b16 %v909, %v908
  %v1021 = vpack.c.b16 %v911, %v910
  %v1022 = vpack.c.b16 %v913, %v912
  %v1023 = vpack.c.b16 %v915, %v914
  %v1024 = vpack.c.b16 %v917, %v916
  %v1025 = vpack.c.b16 %v919, %v918
  %v1026 = vpack.c.b16 %v921, %v920
  %v1027 = vpack.c.b16 %v923, %v922
  %v1028 = vpack.c.b16 %v925, %v924
  %v1029 = vpack.c.b16 %v927, %v926
  %v1030 = vpack.c.b16 %v929, %v928
  %v1031 = vpack.c.b16 %v931, %v930
  %v1032 = vpack.c.b16 %v933, %v932
  %v1033 = vpack.c.b16 %v935, %v934
  %v1034 = vpack.c.b16 %v937, %v936
  %v1035 = vpack.c.b16 %v939, %v938
  %v1036 = vpack.c.b16 %v941, %v940
  %v1037 = vpack.c.b16 %v943, %v942
  %v1038 = vpack.c.b16 %v945, %v944
  %v1039 = vpack.c.b16 %v947, %v946
  %v1040 = vpack.c.b16 %v949, %v948
  %v1041 = vpack.c.b16 %v951, %v950
  %v1042 = vpack.c.b16 %v953, %v952
  %v1043 = vpack.c.b16 %v955, %v954
  %v1044 = vpack.c.b16 %v957, %v956
  %v1045 = vpack.c.b16 %v959, %v958
  %v1046 = vpack.c.b16 %v961, %v960
  %v1047 = vpack.c.b16 %v963, %v962
  %v1048 = vpack.c.b16 %v965, %v964
  %v1049 = vpack.c.b16 %v967, %v966
  %v1050 = vpack.c.b16 %v969, %v968
  %v1051 = vpack.c.b16 %v971, %v970
  %v1052 = vpack.c.b16 %v973, %v972
  %v1053 = vpack.c.b16 %v975, %v974
  %v1054 = vpack.c.b16 %v977, %v976
  %v1055 = vpack.c.b16 %v979, %v978
  %v1056 = vpack.c.b16 %v981, %v980
  %v1057 = vpack.c.b16 %v983, %v982
  %v1058 = vpack.c.b16 %v985, %v984
  %v1059 = vpack.c.b16 %v987, %v986
  %v1060 = vpack.c.b16 %v989, %v988
  %v1061 = vpack.c.b16 %v991, %v990
  %v1062 = vpack.c.b16 %v993, %v992
  %v1063 = vpack.c.b16 %v995, %v994
  %v1064 = vpack.c.b16 %v997, %v996
  %v1065 = vpack.c.b16 %v999, %v998
  %v1066 = vpack.c.b16 %v1001, %v1000
  %v1067 = vpack.c.b16 %v1003, %v1002
  %v1068 = vpack.c.b16 %v1005, %v1004
  %v1069 = vpack.c.b16 %v1007, %v1006
  %v1070 = vpack.c.b16 %v1009, %v1008
  %v1071 = vpack.c.b16 %v1011, %v1010
  %v1072 = vpack.c.b16 %v1013, %v1012
  %v1073 = vpack.c.b16 %v1015, %v1014
  %v1074 = vpack.c.b16 %v1017, %v1016
  %v1075 = vpack.c.b16 %v1018, %v1018
  %vm1132 = vcmask 31744
  %v1134 = vsel %vm1132, %v590, 0
  %v1137 = vsel %vm1132, %v598, 0
  %v1140 = vsel %vm1132, %v606, 0
  %v1143 = vsel %vm1132, %v614, 0
  %v1146 = vsel %vm1132, %v622, 0
  %v1149 = vsel %vm1132, %v630, 0
  %v1152 = vsel %vm1132, %v638, 0
  %v1155 = vsel %vm1132, %v646, 0
  %v1158 = vsel %vm1132, %v654, 0
  %v1161 = vsel %vm1132, %v662, 0
  %v1164 = vsel %vm1132, %v670, 0
  %v1167 = vsel %vm1132, %v678, 0
  %v1170 = vsel %vm1132, %v686, 0
  %v1173 = vsel %vm1132, %v694, 0
  %vm1175 = vcmask 1041408
  %v1177 = vsel %vm1175, %v1075, 0
  %1179 = vmatprep.subr.bf16.mxu0 0
  %1180 = vmatpush1.bf16.msra.mxu0 %v1019
  %1181 = vmatprep.subr.bf16.mxu0 0
  %1182 = vmatpush1.bf16.msra.mxu0 %v1020
  %1183 = vmatprep.subr.bf16.mxu0 0
  %1184 = vmatpush1.bf16.msra.mxu0 %v1021
  %1185 = vmatprep.subr.bf16.mxu0 0
  %1186 = vmatpush1.bf16.msra.mxu0 %v1022
  %1187 = vmatprep.subr.bf16.mxu0 0
  %1188 = vmatpush1.bf16.msra.mxu0 %v1023
  %1189 = vmatprep.subr.bf16.mxu0 0
  %1190 = vmatpush1.bf16.msra.mxu0 %v1024
  %1191 = vmatprep.subr.bf16.mxu0 0
  %1192 = vmatpush1.bf16.msra.mxu0 %v1025
  %1193 = vmatprep.subr.bf16.mxu0 0
  %1194 = vmatpush1.bf16.msra.mxu0 %v1026
  %1195 = vmatprep.subr.bf16.mxu0 0
  %1196 = vmatpush1.bf16.msra.mxu0 %v1027
  %1197 = vmatprep.subr.bf16.mxu0 0
  %1198 = vmatpush1.bf16.msra.mxu0 %v1028
  %1199 = vmatprep.subr.bf16.mxu0 0
  %1200 = vmatpush1.bf16.msra.mxu0 %v1029
  %1201 = vmatprep.subr.bf16.mxu0 0
  %1202 = vmatpush1.bf16.msra.mxu0 %v1030
  %1203 = vmatprep.subr.bf16.mxu0 0
  %1204 = vmatpush1.bf16.msra.mxu0 %v1031
  %1205 = vmatprep.subr.bf16.mxu0 0
  %1206 = vmatpush1.bf16.msra.mxu0 %v1032
  %1207 = vmatprep.subr.bf16.mxu0 0
  %1208 = vmatpush1.bf16.msra.mxu0 %v1033
  %1209 = vmatprep.subr.bf16.mxu0 0
  %1210 = vmatpush1.bf16.msra.mxu0 %v1034
  %1211 = vmatprep.mubr.bf16.mxu0 %v584
  %1212 = vmatmul.mubr.bf16.gmra.mrb[0].mxu0 %v583
  %v1213 = vpop.f32.mrb[0].mxu0
  %v1214 = vadd.f32 %v245, %v1213
  %v1215 = vpop.f32.mrb[0].mxu0
  %v1216 = vpop.f32.mrb[0].mxu0
  %v1217 = vadd.f32 %v245, %v1216
  %v1218 = vpop.f32.mrb[0].mxu0
  %1219 = vmatprep.mubr.bf16.mxu0 %v592
  %1220 = vmatmul.mubr.bf16.gmra.mrb[0].mxu0 %v591
  %v1221 = vpop.f32.mrb[0].mxu0
  %v1222 = vadd.f32 %v245, %v1221
  %v1223 = vpop.f32.mrb[0].mxu0
  %v1224 = vpop.f32.mrb[0].mxu0
  %v1225 = vadd.f32 %v245, %v1224
  %v1226 = vpop.f32.mrb[0].mxu0
  %1227 = vmatprep.mubr.bf16.mxu0 %v600
  %1228 = vmatmul.mubr.bf16.gmra.mrb[0].mxu0 %v599
  %v1229 = vpop.f32.mrb[0].mxu0
  %v1230 = vadd.f32 %v245, %v1229
  %v1231 = vpop.f32.mrb[0].mxu0
  %v1232 = vpop.f32.mrb[0].mxu0
  %v1233 = vadd.f32 %v245, %v1232
  %v1234 = vpop.f32.mrb[0].mxu0
  %1235 = vmatprep.mubr.bf16.mxu0 %v608
  %1236 = vmatmul.mubr.bf16.gmra.mrb[0].mxu0 %v607
  %v1237 = vpop.f32.mrb[0].mxu0
  %v1238 = vadd.f32 %v245, %v1237
  %v1239 = vpop.f32.mrb[0].mxu0
  %v1240 = vpop.f32.mrb[0].mxu0
  %v1241 = vadd.f32 %v245, %v1240
  %v1242 = vpop.f32.mrb[0].mxu0
  %1243 = vmatprep.mubr.bf16.mxu0 %v616
  %1244 = vmatmul.mubr.bf16.gmra.mrb[0].mxu0 %v615
  %v1245 = vpop.f32.mrb[0].mxu0
  %v1246 = vadd.f32 %v245, %v1245
  %v1247 = vpop.f32.mrb[0].mxu0
  %v1248 = vpop.f32.mrb[0].mxu0
  %v1249 = vadd.f32 %v245, %v1248
  %v1250 = vpop.f32.mrb[0].mxu0
  %1251 = vmatprep.mubr.bf16.mxu0 %v624
  %1252 = vmatmul.mubr.bf16.gmra.mrb[0].mxu0 %v623
  %v1253 = vpop.f32.mrb[0].mxu0
  %v1254 = vadd.f32 %v245, %v1253
  %v1255 = vpop.f32.mrb[0].mxu0
  %v1256 = vpop.f32.mrb[0].mxu0
  %v1257 = vadd.f32 %v245, %v1256
  %v1258 = vpop.f32.mrb[0].mxu0
  %1259 = vmatprep.mubr.bf16.mxu0 %v632
  %1260 = vmatmul.mubr.bf16.gmra.mrb[0].mxu0 %v631
  %v1261 = vpop.f32.mrb[0].mxu0
  %v1262 = vadd.f32 %v245, %v1261
  %v1263 = vpop.f32.mrb[0].mxu0
  %v1264 = vpop.f32.mrb[0].mxu0
  %v1265 = vadd.f32 %v245, %v1264
  %v1266 = vpop.f32.mrb[0].mxu0
  %1267 = vmatprep.mubr.bf16.mxu0 %v640
  %1268 = vmatmul.mubr.bf16.gmra.mrb[0].mxu0 %v639
  %v1269 = vpop.f32.mrb[0].mxu0
  %v1270 = vadd.f32 %v245, %v1269
  %v1271 = vpop.f32.mrb[0].mxu0
  %v1272 = vpop.f32.mrb[0].mxu0
  %v1273 = vadd.f32 %v245, %v1272
  %v1274 = vpop.f32.mrb[0].mxu0
  %1275 = vmatprep.mubr.bf16.mxu0 %v648
  %1276 = vmatmul.mubr.bf16.gmra.mrb[0].mxu0 %v647
  %v1277 = vpop.f32.mrb[0].mxu0
  %v1278 = vadd.f32 %v245, %v1277
  %v1279 = vpop.f32.mrb[0].mxu0
  %v1280 = vpop.f32.mrb[0].mxu0
  %v1281 = vadd.f32 %v245, %v1280
  %v1282 = vpop.f32.mrb[0].mxu0
  %1283 = vmatprep.mubr.bf16.mxu0 %v656
  %1284 = vmatmul.mubr.bf16.gmra.mrb[0].mxu0 %v655
  %v1285 = vpop.f32.mrb[0].mxu0
  %v1286 = vadd.f32 %v245, %v1285
  %v1287 = vpop.f32.mrb[0].mxu0
  %v1288 = vpop.f32.mrb[0].mxu0
  %v1289 = vadd.f32 %v245, %v1288
  %v1290 = vpop.f32.mrb[0].mxu0
  %1291 = vmatprep.mubr.bf16.mxu0 %v664
  %1292 = vmatmul.mubr.bf16.gmra.mrb[0].mxu0 %v663
  %v1293 = vpop.f32.mrb[0].mxu0
  %v1294 = vadd.f32 %v245, %v1293
  %v1295 = vpop.f32.mrb[0].mxu0
  %v1296 = vpop.f32.mrb[0].mxu0
  %v1297 = vadd.f32 %v245, %v1296
  %v1298 = vpop.f32.mrb[0].mxu0
  %1299 = vmatprep.mubr.bf16.mxu0 %v672
  %1300 = vmatmul.mubr.bf16.gmra.mrb[0].mxu0 %v671
  %v1301 = vpop.f32.mrb[0].mxu0
  %v1302 = vadd.f32 %v245, %v1301
  %v1303 = vpop.f32.mrb[0].mxu0
  %v1304 = vpop.f32.mrb[0].mxu0
  %v1305 = vadd.f32 %v245, %v1304
  %v1306 = vpop.f32.mrb[0].mxu0
  %1307 = vmatprep.mubr.bf16.mxu0 %v680
  %1308 = vmatmul.mubr.bf16.gmra.mrb[0].mxu0 %v679
  %v1309 = vpop.f32.mrb[0].mxu0
  %v1310 = vadd.f32 %v245, %v1309
  %v1311 = vpop.f32.mrb[0].mxu0
  %v1312 = vpop.f32.mrb[0].mxu0
  %v1313 = vadd.f32 %v245, %v1312
  %v1314 = vpop.f32.mrb[0].mxu0
  %1315 = vmatprep.mubr.bf16.mxu0 %v688
  %1316 = vmatmul.mubr.bf16.gmra.mrb[0].mxu0 %v687
  %v1317 = vpop.f32.mrb[0].mxu0
  %v1318 = vadd.f32 %v245, %v1317
  %v1319 = vpop.f32.mrb[0].mxu0
  %v1320 = vpop.f32.mrb[0].mxu0
  %v1321 = vadd.f32 %v245, %v1320
  %v1322 = vpop.f32.mrb[0].mxu0
  %1323 = vdwg.mxu0
  %1324 = vmatprep.subr.bf16.mxu0 0
  %1325 = vmatpush1.bf16.msra.mxu0 %v1035
  %1326 = vmatprep.subr.bf16.mxu0 0
  %1327 = vmatpush1.bf16.msra.mxu0 %v1036
  %1328 = vmatprep.subr.bf16.mxu0 0
  %1329 = vmatpush1.bf16.msra.mxu0 %v1037
  %1330 = vmatprep.subr.bf16.mxu0 0
  %1331 = vmatpush1.bf16.msra.mxu0 %v1038
  %1332 = vmatprep.subr.bf16.mxu0 0
  %1333 = vmatpush1.bf16.msra.mxu0 %v1039
  %1334 = vmatprep.subr.bf16.mxu0 0
  %1335 = vmatpush1.bf16.msra.mxu0 %v1040
  %1336 = vmatprep.subr.bf16.mxu0 0
  %1337 = vmatpush1.bf16.msra.mxu0 %v1041
  %1338 = vmatprep.subr.bf16.mxu0 0
  %1339 = vmatpush1.bf16.msra.mxu0 %v1042
  %1340 = vmatprep.subr.bf16.mxu0 0
  %1341 = vmatpush1.bf16.msra.mxu0 %v1043
  %1342 = vmatprep.subr.bf16.mxu0 0
  %1343 = vmatpush1.bf16.msra.mxu0 %v1044
  %1344 = vmatprep.subr.bf16.mxu0 0
  %1345 = vmatpush1.bf16.msra.mxu0 %v1045
  %1346 = vmatprep.subr.bf16.mxu0 0
  %1347 = vmatpush1.bf16.msra.mxu0 %v1046
  %1348 = vmatprep.subr.bf16.mxu0 0
  %1349 = vmatpush1.bf16.msra.mxu0 %v1047
  %1350 = vmatprep.subr.bf16.mxu0 0
  %1351 = vmatpush1.bf16.msra.mxu0 %v1048
  %1352 = vmatprep.subr.bf16.mxu0 0
  %1353 = vmatpush1.bf16.msra.mxu0 %v1049
  %1354 = vmatprep.subr.bf16.mxu0 0
  %1355 = vmatpush1.bf16.msra.mxu0 %v1050
  %1356 = vmatprep.mubr.bf16.mxu0 %v586
  %1357 = vmatmul.mubr.bf16.gmra.mrb[0].mxu0 %v585
  %v1358 = vpop.f32.mrb[0].mxu0
  %v1359 = vadd.f32 %v1214, %v1358
  %v1360 = vpop.f32.mrb[0].mxu0
  %v1361 = vpop.f32.mrb[0].mxu0
  %v1362 = vadd.f32 %v1217, %v1361
  %v1363 = vpop.f32.mrb[0].mxu0
  %1364 = vmatprep.mubr.bf16.mxu0 %v594
  %1365 = vmatmul.mubr.bf16.gmra.mrb[0].mxu0 %v593
  %v1366 = vpop.f32.mrb[0].mxu0
  %v1367 = vadd.f32 %v1222, %v1366
  %v1368 = vpop.f32.mrb[0].mxu0
  %v1369 = vpop.f32.mrb[0].mxu0
  %v1370 = vadd.f32 %v1225, %v1369
  %v1371 = vpop.f32.mrb[0].mxu0
  %1372 = vmatprep.mubr.bf16.mxu0 %v602
  %1373 = vmatmul.mubr.bf16.gmra.mrb[0].mxu0 %v601
  %v1374 = vpop.f32.mrb[0].mxu0
  %v1375 = vadd.f32 %v1230, %v1374
  %v1376 = vpop.f32.mrb[0].mxu0
  %v1377 = vpop.f32.mrb[0].mxu0
  %v1378 = vadd.f32 %v1233, %v1377
  %v1379 = vpop.f32.mrb[0].mxu0
  %1380 = vmatprep.mubr.bf16.mxu0 %v610
  %1381 = vmatmul.mubr.bf16.gmra.mrb[0].mxu0 %v609
  %v1382 = vpop.f32.mrb[0].mxu0
  %v1383 = vadd.f32 %v1238, %v1382
  %v1384 = vpop.f32.mrb[0].mxu0
  %v1385 = vpop.f32.mrb[0].mxu0
  %v1386 = vadd.f32 %v1241, %v1385
  %v1387 = vpop.f32.mrb[0].mxu0
  %1388 = vmatprep.mubr.bf16.mxu0 %v618
  %1389 = vmatmul.mubr.bf16.gmra.mrb[0].mxu0 %v617
  %v1390 = vpop.f32.mrb[0].mxu0
  %v1391 = vadd.f32 %v1246, %v1390
  %v1392 = vpop.f32.mrb[0].mxu0
  %v1393 = vpop.f32.mrb[0].mxu0
  %v1394 = vadd.f32 %v1249, %v1393
  %v1395 = vpop.f32.mrb[0].mxu0
  %1396 = vmatprep.mubr.bf16.mxu0 %v626
  %1397 = vmatmul.mubr.bf16.gmra.mrb[0].mxu0 %v625
  %v1398 = vpop.f32.mrb[0].mxu0
  %v1399 = vadd.f32 %v1254, %v1398
  %v1400 = vpop.f32.mrb[0].mxu0
  %v1401 = vpop.f32.mrb[0].mxu0
  %v1402 = vadd.f32 %v1257, %v1401
  %v1403 = vpop.f32.mrb[0].mxu0
  %1404 = vmatprep.mubr.bf16.mxu0 %v634
  %1405 = vmatmul.mubr.bf16.gmra.mrb[0].mxu0 %v633
  %v1406 = vpop.f32.mrb[0].mxu0
  %v1407 = vadd.f32 %v1262, %v1406
  %v1408 = vpop.f32.mrb[0].mxu0
  %v1409 = vpop.f32.mrb[0].mxu0
  %v1410 = vadd.f32 %v1265, %v1409
  %v1411 = vpop.f32.mrb[0].mxu0
  %1412 = vmatprep.mubr.bf16.mxu0 %v642
  %1413 = vmatmul.mubr.bf16.gmra.mrb[0].mxu0 %v641
  %v1414 = vpop.f32.mrb[0].mxu0
  %v1415 = vadd.f32 %v1270, %v1414
  %v1416 = vpop.f32.mrb[0].mxu0
  %v1417 = vpop.f32.mrb[0].mxu0
  %v1418 = vadd.f32 %v1273, %v1417
  %v1419 = vpop.f32.mrb[0].mxu0
  %1420 = vmatprep.mubr.bf16.mxu0 %v650
  %1421 = vmatmul.mubr.bf16.gmra.mrb[0].mxu0 %v649
  %v1422 = vpop.f32.mrb[0].mxu0
  %v1423 = vadd.f32 %v1278, %v1422
  %v1424 = vpop.f32.mrb[0].mxu0
  %v1425 = vpop.f32.mrb[0].mxu0
  %v1426 = vadd.f32 %v1281, %v1425
  %v1427 = vpop.f32.mrb[0].mxu0
  %1428 = vmatprep.mubr.bf16.mxu0 %v658
  %1429 = vmatmul.mubr.bf16.gmra.mrb[0].mxu0 %v657
  %v1430 = vpop.f32.mrb[0].mxu0
  %v1431 = vadd.f32 %v1286, %v1430
  %v1432 = vpop.f32.mrb[0].mxu0
  %v1433 = vpop.f32.mrb[0].mxu0
  %v1434 = vadd.f32 %v1289, %v1433
  %v1435 = vpop.f32.mrb[0].mxu0
  %1436 = vmatprep.mubr.bf16.mxu0 %v666
  %1437 = vmatmul.mubr.bf16.gmra.mrb[0].mxu0 %v665
  %v1438 = vpop.f32.mrb[0].mxu0
  %v1439 = vadd.f32 %v1294, %v1438
  %v1440 = vpop.f32.mrb[0].mxu0
  %v1441 = vpop.f32.mrb[0].mxu0
  %v1442 = vadd.f32 %v1297, %v1441
  %v1443 = vpop.f32.mrb[0].mxu0
  %1444 = vmatprep.mubr.bf16.mxu0 %v674
  %1445 = vmatmul.mubr.bf16.gmra.mrb[0].mxu0 %v673
  %v1446 = vpop.f32.mrb[0].mxu0
  %v1447 = vadd.f32 %v1302, %v1446
  %v1448 = vpop.f32.mrb[0].mxu0
  %v1449 = vpop.f32.mrb[0].mxu0
  %v1450 = vadd.f32 %v1305, %v1449
  %v1451 = vpop.f32.mrb[0].mxu0
  %1452 = vmatprep.mubr.bf16.mxu0 %v682
  %1453 = vmatmul.mubr.bf16.gmra.mrb[0].mxu0 %v681
  %v1454 = vpop.f32.mrb[0].mxu0
  %v1455 = vadd.f32 %v1310, %v1454
  %v1456 = vpop.f32.mrb[0].mxu0
  %v1457 = vpop.f32.mrb[0].mxu0
  %v1458 = vadd.f32 %v1313, %v1457
  %v1459 = vpop.f32.mrb[0].mxu0
  %1460 = vmatprep.mubr.bf16.mxu0 %v690
  %1461 = vmatmul.mubr.bf16.gmra.mrb[0].mxu0 %v689
  %v1462 = vpop.f32.mrb[0].mxu0
  %v1463 = vadd.f32 %v1318, %v1462
  %v1464 = vpop.f32.mrb[0].mxu0
  %v1465 = vpop.f32.mrb[0].mxu0
  %v1466 = vadd.f32 %v1321, %v1465
  %v1467 = vpop.f32.mrb[0].mxu0
  %1468 = vdwg.mxu0
  %1469 = vmatprep.subr.bf16.mxu0 0
  %1470 = vmatpush1.bf16.msra.mxu0 %v1051
  %1471 = vmatprep.subr.bf16.mxu0 0
  %1472 = vmatpush1.bf16.msra.mxu0 %v1052
  %1473 = vmatprep.subr.bf16.mxu0 0
  %1474 = vmatpush1.bf16.msra.mxu0 %v1053
  %1475 = vmatprep.subr.bf16.mxu0 0
  %1476 = vmatpush1.bf16.msra.mxu0 %v1054
  %1477 = vmatprep.subr.bf16.mxu0 0
  %1478 = vmatpush1.bf16.msra.mxu0 %v1055
  %1479 = vmatprep.subr.bf16.mxu0 0
  %1480 = vmatpush1.bf16.msra.mxu0 %v1056
  %1481 = vmatprep.subr.bf16.mxu0 0
  %1482 = vmatpush1.bf16.msra.mxu0 %v1057
  %1483 = vmatprep.subr.bf16.mxu0 0
  %1484 = vmatpush1.bf16.msra.mxu0 %v1058
  %1485 = vmatprep.subr.bf16.mxu0 0
  %1486 = vmatpush1.bf16.msra.mxu0 %v1059
  %1487 = vmatprep.subr.bf16.mxu0 0
  %1488 = vmatpush1.bf16.msra.mxu0 %v1060
  %1489 = vmatprep.subr.bf16.mxu0 0
  %1490 = vmatpush1.bf16.msra.mxu0 %v1061
  %1491 = vmatprep.subr.bf16.mxu0 0
  %1492 = vmatpush1.bf16.msra.mxu0 %v1062
  %1493 = vmatprep.subr.bf16.mxu0 0
  %1494 = vmatpush1.bf16.msra.mxu0 %v1063
  %1495 = vmatprep.subr.bf16.mxu0 0
  %1496 = vmatpush1.bf16.msra.mxu0 %v1064
  %1497 = vmatprep.subr.bf16.mxu0 0
  %1498 = vmatpush1.bf16.msra.mxu0 %v1065
  %1499 = vmatprep.subr.bf16.mxu0 0
  %1500 = vmatpush1.bf16.msra.mxu0 %v1066
  %1501 = vmatprep.mubr.bf16.mxu0 %v588
  %1502 = vmatmul.mubr.bf16.gmra.mrb[0].mxu0 %v587
  %v1503 = vpop.f32.mrb[0].mxu0
  %v1504 = vadd.f32 %v1359, %v1503
  %v1505 = vpop.f32.mrb[0].mxu0
  %v1506 = vpop.f32.mrb[0].mxu0
  %v1507 = vadd.f32 %v1362, %v1506
  %v1508 = vpop.f32.mrb[0].mxu0
  %1509 = vmatprep.mubr.bf16.mxu0 %v596
  %1510 = vmatmul.mubr.bf16.gmra.mrb[0].mxu0 %v595
  %v1511 = vpop.f32.mrb[0].mxu0
  %v1512 = vadd.f32 %v1367, %v1511
  %v1513 = vpop.f32.mrb[0].mxu0
  %v1514 = vpop.f32.mrb[0].mxu0
  %v1515 = vadd.f32 %v1370, %v1514
  %v1516 = vpop.f32.mrb[0].mxu0
  %1517 = vmatprep.mubr.bf16.mxu0 %v604
  %1518 = vmatmul.mubr.bf16.gmra.mrb[0].mxu0 %v603
  %v1519 = vpop.f32.mrb[0].mxu0
  %v1520 = vadd.f32 %v1375, %v1519
  %v1521 = vpop.f32.mrb[0].mxu0
  %v1522 = vpop.f32.mrb[0].mxu0
  %v1523 = vadd.f32 %v1378, %v1522
  %v1524 = vpop.f32.mrb[0].mxu0
  %1525 = vmatprep.mubr.bf16.mxu0 %v612
  %1526 = vmatmul.mubr.bf16.gmra.mrb[0].mxu0 %v611
  %v1527 = vpop.f32.mrb[0].mxu0
  %v1528 = vadd.f32 %v1383, %v1527
  %v1529 = vpop.f32.mrb[0].mxu0
  %v1530 = vpop.f32.mrb[0].mxu0
  %v1531 = vadd.f32 %v1386, %v1530
  %v1532 = vpop.f32.mrb[0].mxu0
  %1533 = vmatprep.mubr.bf16.mxu0 %v620
  %1534 = vmatmul.mubr.bf16.gmra.mrb[0].mxu0 %v619
  %v1535 = vpop.f32.mrb[0].mxu0
  %v1536 = vadd.f32 %v1391, %v1535
  %v1537 = vpop.f32.mrb[0].mxu0
  %v1538 = vpop.f32.mrb[0].mxu0
  %v1539 = vadd.f32 %v1394, %v1538
  %v1540 = vpop.f32.mrb[0].mxu0
  %1541 = vmatprep.mubr.bf16.mxu0 %v628
  %1542 = vmatmul.mubr.bf16.gmra.mrb[0].mxu0 %v627
  %v1543 = vpop.f32.mrb[0].mxu0
  %v1544 = vadd.f32 %v1399, %v1543
  %v1545 = vpop.f32.mrb[0].mxu0
  %v1546 = vpop.f32.mrb[0].mxu0
  %v1547 = vadd.f32 %v1402, %v1546
  %v1548 = vpop.f32.mrb[0].mxu0
  %1549 = vmatprep.mubr.bf16.mxu0 %v636
  %1550 = vmatmul.mubr.bf16.gmra.mrb[0].mxu0 %v635
  %v1551 = vpop.f32.mrb[0].mxu0
  %v1552 = vadd.f32 %v1407, %v1551
  %v1553 = vpop.f32.mrb[0].mxu0
  %v1554 = vpop.f32.mrb[0].mxu0
  %v1555 = vadd.f32 %v1410, %v1554
  %v1556 = vpop.f32.mrb[0].mxu0
  %1557 = vmatprep.mubr.bf16.mxu0 %v644
  %1558 = vmatmul.mubr.bf16.gmra.mrb[0].mxu0 %v643
  %v1559 = vpop.f32.mrb[0].mxu0
  %v1560 = vadd.f32 %v1415, %v1559
  %v1561 = vpop.f32.mrb[0].mxu0
  %v1562 = vpop.f32.mrb[0].mxu0
  %v1563 = vadd.f32 %v1418, %v1562
  %v1564 = vpop.f32.mrb[0].mxu0
  %1565 = vmatprep.mubr.bf16.mxu0 %v652
  %1566 = vmatmul.mubr.bf16.gmra.mrb[0].mxu0 %v651
  %v1567 = vpop.f32.mrb[0].mxu0
  %v1568 = vadd.f32 %v1423, %v1567
  %v1569 = vpop.f32.mrb[0].mxu0
  %v1570 = vpop.f32.mrb[0].mxu0
  %v1571 = vadd.f32 %v1426, %v1570
  %v1572 = vpop.f32.mrb[0].mxu0
  %1573 = vmatprep.mubr.bf16.mxu0 %v660
  %1574 = vmatmul.mubr.bf16.gmra.mrb[0].mxu0 %v659
  %v1575 = vpop.f32.mrb[0].mxu0
  %v1576 = vadd.f32 %v1431, %v1575
  %v1577 = vpop.f32.mrb[0].mxu0
  %v1578 = vpop.f32.mrb[0].mxu0
  %v1579 = vadd.f32 %v1434, %v1578
  %v1580 = vpop.f32.mrb[0].mxu0
  %1581 = vmatprep.mubr.bf16.mxu0 %v668
  %1582 = vmatmul.mubr.bf16.gmra.mrb[0].mxu0 %v667
  %v1583 = vpop.f32.mrb[0].mxu0
  %v1584 = vadd.f32 %v1439, %v1583
  %v1585 = vpop.f32.mrb[0].mxu0
  %v1586 = vpop.f32.mrb[0].mxu0
  %v1587 = vadd.f32 %v1442, %v1586
  %v1588 = vpop.f32.mrb[0].mxu0
  %1589 = vmatprep.mubr.bf16.mxu0 %v676
  %1590 = vmatmul.mubr.bf16.gmra.mrb[0].mxu0 %v675
  %v1591 = vpop.f32.mrb[0].mxu0
  %v1592 = vadd.f32 %v1447, %v1591
  %v1593 = vpop.f32.mrb[0].mxu0
  %v1594 = vpop.f32.mrb[0].mxu0
  %v1595 = vadd.f32 %v1450, %v1594
  %v1596 = vpop.f32.mrb[0].mxu0
  %1597 = vmatprep.mubr.bf16.mxu0 %v684
  %1598 = vmatmul.mubr.bf16.gmra.mrb[0].mxu0 %v683
  %v1599 = vpop.f32.mrb[0].mxu0
  %v1600 = vadd.f32 %v1455, %v1599
  %v1601 = vpop.f32.mrb[0].mxu0
  %v1602 = vpop.f32.mrb[0].mxu0
  %v1603 = vadd.f32 %v1458, %v1602
  %v1604 = vpop.f32.mrb[0].mxu0
  %1605 = vmatprep.mubr.bf16.mxu0 %v692
  %1606 = vmatmul.mubr.bf16.gmra.mrb[0].mxu0 %v691
  %v1607 = vpop.f32.mrb[0].mxu0
  %v1608 = vadd.f32 %v1463, %v1607
  %v1609 = vpop.f32.mrb[0].mxu0
  %v1610 = vpop.f32.mrb[0].mxu0
  %v1611 = vadd.f32 %v1466, %v1610
  %v1612 = vpop.f32.mrb[0].mxu0
  %1613 = vdwg.mxu0
  %1614 = vmatprep.subr.bf16.mxu0 0
  %1615 = vmatpush1.bf16.msra.mxu0 %v1067
  %1616 = vmatprep.subr.bf16.mxu0 0
  %1617 = vmatpush1.bf16.msra.mxu0 %v1068
  %1618 = vmatprep.subr.bf16.mxu0 0
  %1619 = vmatpush1.bf16.msra.mxu0 %v1069
  %1620 = vmatprep.subr.bf16.mxu0 0
  %1621 = vmatpush1.bf16.msra.mxu0 %v1070
  %1622 = vmatprep.subr.bf16.mxu0 0
  %1623 = vmatpush1.bf16.msra.mxu0 %v1071
  %1624 = vmatprep.subr.bf16.mxu0 0
  %1625 = vmatpush1.bf16.msra.mxu0 %v1072
  %1626 = vmatprep.subr.bf16.mxu0 0
  %1627 = vmatpush1.bf16.msra.mxu0 %v1073
  %1628 = vmatprep.subr.bf16.mxu0 0
  %1629 = vmatpush1.bf16.msra.mxu0 %v1074
  %1630 = vmatprep.subr.bf16.mxu0 0
  %1631 = vmatpush1.bf16.msra.mxu0 %v1177
  %1632 = vmatprep.subr.bf16.mxu0 0
  %1633 = vmatpush1.bf16.msra.mxu0 0
  %1634 = vmatprep.subr.bf16.mxu0 0
  %1635 = vmatpush1.bf16.msra.mxu0 0
  %1636 = vmatprep.subr.bf16.mxu0 0
  %1637 = vmatpush1.bf16.msra.mxu0 0
  %1638 = vmatprep.subr.bf16.mxu0 0
  %1639 = vmatpush1.bf16.msra.mxu0 0
  %1640 = vmatprep.subr.bf16.mxu0 0
  %1641 = vmatpush1.bf16.msra.mxu0 0
  %1642 = vmatprep.subr.bf16.mxu0 0
  %1643 = vmatpush1.bf16.msra.mxu0 0
  %1644 = vmatprep.subr.bf16.mxu0 0
  %1645 = vmatpush1.bf16.msra.mxu0 0
  %1646 = vmatprep.mubr.bf16.mxu0 %v1134
  %1647 = vmatmul.mubr.bf16.gmra.mrb[0].mxu0 %v589
  %v1648 = vpop.f32.mrb[0].mxu0
  %v1649 = vadd.f32 %v1504, %v1648
  %v1650 = vpop.f32.mrb[0].mxu0
  %v1651 = vpop.f32.mrb[0].mxu0
  %v1652 = vadd.f32 %v1507, %v1651
  %v1653 = vpop.f32.mrb[0].mxu0
  %1654 = vmatprep.mubr.bf16.mxu0 %v1137
  %1655 = vmatmul.mubr.bf16.gmra.mrb[0].mxu0 %v597
  %v1656 = vpop.f32.mrb[0].mxu0
  %v1657 = vadd.f32 %v1512, %v1656
  %v1658 = vpop.f32.mrb[0].mxu0
  %v1659 = vpop.f32.mrb[0].mxu0
  %v1660 = vadd.f32 %v1515, %v1659
  %v1661 = vpop.f32.mrb[0].mxu0
  %1662 = vmatprep.mubr.bf16.mxu0 %v1140
  %1663 = vmatmul.mubr.bf16.gmra.mrb[0].mxu0 %v605
  %v1664 = vpop.f32.mrb[0].mxu0
  %v1665 = vadd.f32 %v1520, %v1664
  %v1666 = vpop.f32.mrb[0].mxu0
  %v1667 = vpop.f32.mrb[0].mxu0
  %v1668 = vadd.f32 %v1523, %v1667
  %v1669 = vpop.f32.mrb[0].mxu0
  %1670 = vmatprep.mubr.bf16.mxu0 %v1143
  %1671 = vmatmul.mubr.bf16.gmra.mrb[0].mxu0 %v613
  %v1672 = vpop.f32.mrb[0].mxu0
  %v1673 = vadd.f32 %v1528, %v1672
  %v1674 = vpop.f32.mrb[0].mxu0
  %v1675 = vpop.f32.mrb[0].mxu0
  %v1676 = vadd.f32 %v1531, %v1675
  %v1677 = vpop.f32.mrb[0].mxu0
  %1678 = vmatprep.mubr.bf16.mxu0 %v1146
  %1679 = vmatmul.mubr.bf16.gmra.mrb[0].mxu0 %v621
  %v1680 = vpop.f32.mrb[0].mxu0
  %v1681 = vadd.f32 %v1536, %v1680
  %v1682 = vpop.f32.mrb[0].mxu0
  %v1683 = vpop.f32.mrb[0].mxu0
  %v1684 = vadd.f32 %v1539, %v1683
  %v1685 = vpop.f32.mrb[0].mxu0
  %1686 = vmatprep.mubr.bf16.mxu0 %v1149
  %1687 = vmatmul.mubr.bf16.gmra.mrb[0].mxu0 %v629
  %v1688 = vpop.f32.mrb[0].mxu0
  %v1689 = vadd.f32 %v1544, %v1688
  %v1690 = vpop.f32.mrb[0].mxu0
  %v1691 = vpop.f32.mrb[0].mxu0
  %v1692 = vadd.f32 %v1547, %v1691
  %v1693 = vpop.f32.mrb[0].mxu0
  %1694 = vmatprep.mubr.bf16.mxu0 %v1152
  %1695 = vmatmul.mubr.bf16.gmra.mrb[0].mxu0 %v637
  %v1696 = vpop.f32.mrb[0].mxu0
  %v1697 = vadd.f32 %v1552, %v1696
  %v1698 = vpop.f32.mrb[0].mxu0
  %v1699 = vpop.f32.mrb[0].mxu0
  %v1700 = vadd.f32 %v1555, %v1699
  %v1701 = vpop.f32.mrb[0].mxu0
  %1702 = vmatprep.mubr.bf16.mxu0 %v1155
  %1703 = vmatmul.mubr.bf16.gmra.mrb[0].mxu0 %v645
  %v1704 = vpop.f32.mrb[0].mxu0
  %v1705 = vadd.f32 %v1560, %v1704
  %v1706 = vpop.f32.mrb[0].mxu0
  %v1707 = vpop.f32.mrb[0].mxu0
  %v1708 = vadd.f32 %v1563, %v1707
  %v1709 = vpop.f32.mrb[0].mxu0
  %1710 = vmatprep.mubr.bf16.mxu0 %v1158
  %1711 = vmatmul.mubr.bf16.gmra.mrb[0].mxu0 %v653
  %v1712 = vpop.f32.mrb[0].mxu0
  %v1713 = vadd.f32 %v1568, %v1712
  %v1714 = vpop.f32.mrb[0].mxu0
  %v1715 = vpop.f32.mrb[0].mxu0
  %v1716 = vadd.f32 %v1571, %v1715
  %v1717 = vpop.f32.mrb[0].mxu0
  %1718 = vmatprep.mubr.bf16.mxu0 %v1161
  %1719 = vmatmul.mubr.bf16.gmra.mrb[0].mxu0 %v661
  %v1720 = vpop.f32.mrb[0].mxu0
  %v1721 = vadd.f32 %v1576, %v1720
  %v1722 = vpop.f32.mrb[0].mxu0
  %v1723 = vpop.f32.mrb[0].mxu0
  %v1724 = vadd.f32 %v1579, %v1723
  %v1725 = vpop.f32.mrb[0].mxu0
  %1726 = vmatprep.mubr.bf16.mxu0 %v1164
  %1727 = vmatmul.mubr.bf16.gmra.mrb[0].mxu0 %v669
  %v1728 = vpop.f32.mrb[0].mxu0
  %v1729 = vadd.f32 %v1584, %v1728
  %v1730 = vpop.f32.mrb[0].mxu0
  %v1731 = vpop.f32.mrb[0].mxu0
  %v1732 = vadd.f32 %v1587, %v1731
  %v1733 = vpop.f32.mrb[0].mxu0
  %1734 = vmatprep.mubr.bf16.mxu0 %v1167
  %1735 = vmatmul.mubr.bf16.gmra.mrb[0].mxu0 %v677
  %v1736 = vpop.f32.mrb[0].mxu0
  %v1737 = vadd.f32 %v1592, %v1736
  %v1738 = vpop.f32.mrb[0].mxu0
  %v1739 = vpop.f32.mrb[0].mxu0
  %v1740 = vadd.f32 %v1595, %v1739
  %v1741 = vpop.f32.mrb[0].mxu0
  %1742 = vmatprep.mubr.bf16.mxu0 %v1170
  %1743 = vmatmul.mubr.bf16.gmra.mrb[0].mxu0 %v685
  %v1744 = vpop.f32.mrb[0].mxu0
  %v1745 = vadd.f32 %v1600, %v1744
  %v1746 = vpop.f32.mrb[0].mxu0
  %v1747 = vpop.f32.mrb[0].mxu0
  %v1748 = vadd.f32 %v1603, %v1747
  %v1749 = vpop.f32.mrb[0].mxu0
  %1750 = vmatprep.mubr.bf16.mxu0 %v1173
  %1751 = vmatmul.mubr.bf16.gmra.mrb[0].mxu0 %v693
  %v1752 = vpop.f32.mrb[0].mxu0
  %v1753 = vadd.f32 %v1608, %v1752
  %v1754 = vpop.f32.mrb[0].mxu0
  %v1755 = vpop.f32.mrb[0].mxu0
  %v1756 = vadd.f32 %v1611, %v1755
  %v1757 = vpop.f32.mrb[0].mxu0
  %1758 = vdwg.mxu0
  %v1759 = vmax.f32 %v1649, 0.0
  %v1760 = vmax.f32 %v1652, 0.0
  %v1761 = vmax.f32 %v1657, 0.0
  %v1762 = vmax.f32 %v1660, 0.0
  %v1763 = vmax.f32 %v1665, 0.0
  %v1764 = vmax.f32 %v1668, 0.0
  %v1765 = vmax.f32 %v1673, 0.0
  %v1766 = vmax.f32 %v1676, 0.0
  %v1767 = vmax.f32 %v1681, 0.0
  %v1768 = vmax.f32 %v1684, 0.0
  %v1769 = vmax.f32 %v1689, 0.0
  %v1770 = vmax.f32 %v1692, 0.0
  %v1771 = vmax.f32 %v1697, 0.0
  %v1772 = vmax.f32 %v1700, 0.0
  %v1773 = vmax.f32 %v1705, 0.0
  %v1774 = vmax.f32 %v1708, 0.0
  %v1775 = vmax.f32 %v1713, 0.0
  %v1776 = vmax.f32 %v1716, 0.0
  %v1777 = vmax.f32 %v1721, 0.0
  %v1778 = vmax.f32 %v1724, 0.0
  %v1779 = vmax.f32 %v1729, 0.0
  %v1780 = vmax.f32 %v1732, 0.0
  %v1781 = vmax.f32 %v1737, 0.0
  %v1782 = vmax.f32 %v1740, 0.0
  %v1783 = vmax.f32 %v1745, 0.0
  %v1784 = vmax.f32 %v1748, 0.0
  %v1785 = vmax.f32 %v1753, 0.0
  %v1786 = vmax.f32 %v1756, 0.0
  %v1787 = vpack.c.bf16 %v1760, %v1759
  %v1788 = vpack.c.bf16 %v1762, %v1761
  %v1789 = vpack.c.bf16 %v1764, %v1763
  %v1790 = vpack.c.bf16 %v1766, %v1765
  %v1791 = vpack.c.bf16 %v1768, %v1767
  %v1792 = vpack.c.bf16 %v1770, %v1769
  %v1793 = vpack.c.bf16 %v1772, %v1771
  %v1794 = vpack.c.bf16 %v1774, %v1773
  %v1795 = vpack.c.bf16 %v1776, %v1775
  %v1796 = vpack.c.bf16 %v1778, %v1777
  %v1797 = vpack.c.bf16 %v1780, %v1779
  %v1798 = vpack.c.bf16 %v1782, %v1781
  %v1799 = vpack.c.bf16 %v1784, %v1783
  %v1800 = vpack.c.bf16 %v1786, %v1785
  %v1815 = vunpack.c.l.b16 %v1787
  %v1816 = vunpack.c.h.b16 %v1787
  %v1817 = vunpack.c.l.b16 %v1788
  %v1818 = vunpack.c.h.b16 %v1788
  %v1819 = vunpack.c.l.b16 %v1789
  %v1820 = vunpack.c.h.b16 %v1789
  %v1821 = vunpack.c.l.b16 %v1790
  %v1822 = vunpack.c.h.b16 %v1790
  %v1823 = vunpack.c.l.b16 %v1791
  %v1824 = vunpack.c.h.b16 %v1791
  %v1825 = vunpack.c.l.b16 %v1792
  %v1826 = vunpack.c.h.b16 %v1792
  %v1827 = vunpack.c.l.b16 %v1793
  %v1828 = vunpack.c.h.b16 %v1793
  %v1829 = vunpack.c.l.b16 %v1794
  %v1830 = vunpack.c.h.b16 %v1794
  %v1831 = vunpack.c.l.b16 %v1795
  %v1832 = vunpack.c.h.b16 %v1795
  %v1833 = vunpack.c.l.b16 %v1796
  %v1834 = vunpack.c.h.b16 %v1796
  %v1835 = vunpack.c.l.b16 %v1797
  %v1836 = vunpack.c.h.b16 %v1797
  %v1837 = vunpack.c.l.b16 %v1798
  %v1838 = vunpack.c.h.b16 %v1798
  %v1839 = vunpack.c.l.b16 %v1799
  %v1840 = vunpack.c.h.b16 %v1799
  %v1841 = vunpack.c.l.b16 %v1800
  %v1842 = vunpack.c.h.b16 %v1800
  %v1843 = vpack.c.b16 %v1815, %v1815
  %v1844 = vpack.c.b16 %v1816, %v1816
  %v1845 = vpack.c.b16 %v1817, %v1817
  %v1846 = vpack.c.b16 %v1818, %v1818
  %v1847 = vpack.c.b16 %v1819, %v1819
  %v1848 = vpack.c.b16 %v1820, %v1820
  %v1849 = vpack.c.b16 %v1821, %v1821
  %v1850 = vpack.c.b16 %v1822, %v1822
  %v1851 = vpack.c.b16 %v1823, %v1823
  %v1852 = vpack.c.b16 %v1824, %v1824
  %v1853 = vpack.c.b16 %v1825, %v1825
  %v1854 = vpack.c.b16 %v1826, %v1826
  %v1855 = vpack.c.b16 %v1827, %v1827
  %v1856 = vpack.c.b16 %v1828, %v1828
  %v1857 = vpack.c.b16 %v1829, %v1829
  %v1858 = vpack.c.b16 %v1830, %v1830
  %v1859 = vpack.c.b16 %v1831, %v1831
  %v1860 = vpack.c.b16 %v1832, %v1832
  %v1861 = vpack.c.b16 %v1833, %v1833
  %v1862 = vpack.c.b16 %v1834, %v1834
  %v1863 = vpack.c.b16 %v1835, %v1835
  %v1864 = vpack.c.b16 %v1836, %v1836
  %v1865 = vpack.c.b16 %v1837, %v1837
  %v1866 = vpack.c.b16 %v1838, %v1838
  %v1867 = vpack.c.b16 %v1839, %v1839
  %v1868 = vpack.c.b16 %v1840, %v1840
  %v1869 = vpack.c.b16 %v1841, %v1841
  %v1870 = vpack.c.b16 %v1842, %v1842
  %1899 = vst [vmem:[%s3] sm:$0xf] %v1843
  %1900 = vst [vmem:[%s3 + $0x4] sm:$0xf] %v1844
  %1901 = vst [vmem:[%s3 + $0x8] sm:$0xf] %v1845
  %1902 = vst [vmem:[%s3 + $0xc] sm:$0xf] %v1846
  %1903 = vst [vmem:[%s3 + $0x10] sm:$0xf] %v1847
  %1904 = vst [vmem:[%s3 + $0x14] sm:$0xf] %v1848
  %1905 = vst [vmem:[%s3 + $0x18] sm:$0xf] %v1849
  %1906 = vst [vmem:[%s3 + $0x1c] sm:$0xf] %v1850
  %1907 = vst [vmem:[%s3 + $0x20] sm:$0xf] %v1851
  %1908 = vst [vmem:[%s3 + $0x24] sm:$0xf] %v1852
  %1909 = vst [vmem:[%s3 + $0x28] sm:$0xf] %v1853
  %1910 = vst [vmem:[%s3 + $0x2c] sm:$0xf] %v1854
  %1911 = vst [vmem:[%s3 + $0x30] sm:$0xf] %v1855
  %1912 = vst [vmem:[%s3 + $0x34] sm:$0xf] %v1856
  %1913 = vst [vmem:[%s3 + $0x38] sm:$0xf] %v1857
  %1914 = vst [vmem:[%s3 + $0x3c] sm:$0xf] %v1858
  %1915 = vst [vmem:[%s3 + $0x40] sm:$0xf] %v1859
  %1916 = vst [vmem:[%s3 + $0x44] sm:$0xf] %v1860
  %1917 = vst [vmem:[%s3 + $0x48] sm:$0xf] %v1861
  %1918 = vst [vmem:[%s3 + $0x4c] sm:$0xf] %v1862
  %1919 = vst [vmem:[%s3 + $0x50] sm:$0xf] %v1863
  %1920 = vst [vmem:[%s3 + $0x54] sm:$0xf] %v1864
  %1921 = vst [vmem:[%s3 + $0x58] sm:$0xf] %v1865
  %1922 = vst [vmem:[%s3 + $0x5c] sm:$0xf] %v1866
  %1923 = vst [vmem:[%s3 + $0x60] sm:$0xf] %v1867
  %1924 = vst [vmem:[%s3 + $0x64] sm:$0xf] %v1868
  %1925 = vst [vmem:[%s3 + $0x68] sm:$0xf] %v1869
  %1926 = vst [vmem:[%s3 + $0x6c] sm:$0xf] %v1870
  // Predicated region
  $region14: #{nvidia_forward.8} parent=0 // pred_check
    _
  $region15: #{nvidia_forward.8} parent=0 // pred_check_branch
    %1928 = sbr.rel (0) target = $region17
  $region16: #{nvidia_forward.8} parent=0 // pred_region
    _
  $region17: #{nvidia_forward.8} parent=0 // pred_fallthru
    _
  // Predicated region
  $region18: #{nvidia_forward.8} parent=0 // pred_check
    _
  $region19: #{nvidia_forward.8} parent=0 // pred_check_branch
    %1930 = sbr.rel (0) target = $region21
  $region20: #{nvidia_forward.8} parent=0 // pred_region
    _
  $region21: #{nvidia_forward.8} parent=0 // pred_fallthru
    _

// kernel: nvidia_forward.9
$region0: #{nvidia_forward.9}
  #allocation0 [shape = 'u32[]', space=smem, size = 0x4, offset = 0x4, fixed_abs, tag = 'smem constant byte address 0x4 - core index']
  #allocation1 [shape = 'u32[144,128]{1,0:T(1,128)}', space=vmem, size = 0x12000, scoped, tag = 'internal scratch']
  %s0 = inlined_call_operand.vmem [shape: bf16[120,432], index: 0, kind: input, shape index: {}]
  %s1 = inlined_call_operand.vmem [shape: bf16[432,128], index: 1, kind: input, shape index: {}]
  %s2 = inlined_call_operand.vmem [shape: f32[1,128], index: 2, kind: input, shape index: {}]
  %s3 = inlined_call_operand.vmem [shape: bf16[120,128], index: 3, kind: output, shape index: {}]
  %s4 = sld [smem:[#allocation0]]
  $region22: #{nvidia_forward.9} parent=0
    _
  %s6 = ssub.s32 1, %s4
  %s7 = scalar_select 0, %s6, %s4
  // Predicated region
  $region2: #{nvidia_forward.9} parent=0 // pred_check
    _
  $region3: #{nvidia_forward.9} parent=0 // pred_check_branch
    %9 = sbr.rel (0) target = $region5
  $region4: #{nvidia_forward.9} parent=0 // pred_region
    _
  $region5: #{nvidia_forward.9} parent=0 // pred_fallthru
    _
  // Predicated region
  $region6: #{nvidia_forward.9} parent=0 // pred_check
    _
  $region7: #{nvidia_forward.9} parent=0 // pred_check_branch
    %11 = sbr.rel (0) target = $region9
  $region8: #{nvidia_forward.9} parent=0 // pred_region
    _
  $region9: #{nvidia_forward.9} parent=0 // pred_fallthru
    _
  // Predicated region
  $region10: #{nvidia_forward.9} parent=0 // pred_check
    _
  $region11: #{nvidia_forward.9} parent=0 // pred_check_branch
    %13 = sbr.rel (0) target = $region13
  $region12: #{nvidia_forward.9} parent=0 // pred_region
    _
  $region13: #{nvidia_forward.9} parent=0 // pred_fallthru
    _
  %v15 = vld [vmem:[%s0] sm:$0xff]
  %v16 = vld [vmem:[%s0 + $0x8] sm:$0xff]
  %v17 = vld [vmem:[%s0 + $0x10] sm:$0xff]
  %v18 = vld [vmem:[%s0 + $0x18] sm:$0xff]
  %v19 = vld [vmem:[%s0 + $0x20] sm:$0xff]
  %v20 = vld [vmem:[%s0 + $0x28] sm:$0xff]
  %v21 = vld [vmem:[%s0 + $0x30] sm:$0xff]
  %v22 = vld [vmem:[%s0 + $0x38] sm:$0xff]
  %v23 = vld [vmem:[%s0 + $0x40] sm:$0xff]
  %v24 = vld [vmem:[%s0 + $0x48] sm:$0xff]
  %v25 = vld [vmem:[%s0 + $0x50] sm:$0xff]
  %v26 = vld [vmem:[%s0 + $0x58] sm:$0xff]
  %v27 = vld [vmem:[%s0 + $0x60] sm:$0xff]
  %v28 = vld [vmem:[%s0 + $0x68] sm:$0xff]
  %v29 = vld [vmem:[%s0 + $0x70] sm:$0xff]
  %v30 = vld [vmem:[%s0 + $0x78] sm:$0xff]
  %v31 = vld [vmem:[%s0 + $0x80] sm:$0xff]
  %v32 = vld [vmem:[%s0 + $0x88] sm:$0xff]
  %v33 = vld [vmem:[%s0 + $0x90] sm:$0xff]
  %v34 = vld [vmem:[%s0 + $0x98] sm:$0xff]
  %v35 = vld [vmem:[%s0 + $0xa0] sm:$0xff]
  %v36 = vld [vmem:[%s0 + $0xa8] sm:$0xff]
  %v37 = vld [vmem:[%s0 + $0xb0] sm:$0xff]
  %v38 = vld [vmem:[%s0 + $0xb8] sm:$0xff]
  %v39 = vld [vmem:[%s0 + $0xc0] sm:$0xff]
  %v40 = vld [vmem:[%s0 + $0xc8] sm:$0xff]
  %v41 = vld [vmem:[%s0 + $0xd0] sm:$0xff]
  %v42 = vld [vmem:[%s0 + $0xd8] sm:$0xff]
  %v43 = vld [vmem:[%s0 + $0xe0] sm:$0xff]
  %v44 = vld [vmem:[%s0 + $0xe8] sm:$0xff]
  %v45 = vld [vmem:[%s1] sm:$0xf]
  %v46 = vld [vmem:[%s1 + $0x4] sm:$0xf]
  %v47 = vld [vmem:[%s1 + $0x8] sm:$0xf]
  %v48 = vld [vmem:[%s1 + $0xc] sm:$0xf]
  %v49 = vld [vmem:[%s1 + $0x10] sm:$0xf]
  %v50 = vld [vmem:[%s1 + $0x14] sm:$0xf]
  %v51 = vld [vmem:[%s1 + $0x18] sm:$0xf]
  %v52 = vld [vmem:[%s1 + $0x1c] sm:$0xf]
  %v53 = vld [vmem:[%s1 + $0x20] sm:$0xf]
  %v54 = vld [vmem:[%s1 + $0x24] sm:$0xf]
  %v55 = vld [vmem:[%s1 + $0x28] sm:$0xf]
  %v56 = vld [vmem:[%s1 + $0x2c] sm:$0xf]
  %v57 = vld [vmem:[%s1 + $0x30] sm:$0xf]
  %v58 = vld [vmem:[%s1 + $0x34] sm:$0xf]
  %v59 = vld [vmem:[%s1 + $0x38] sm:$0xf]
  %v60 = vld [vmem:[%s1 + $0x3c] sm:$0xf]
  %v61 = vld [vmem:[%s1 + $0x40] sm:$0xf]
  %v62 = vld [vmem:[%s1 + $0x44] sm:$0xf]
  %v63 = vld [vmem:[%s1 + $0x48] sm:$0xf]
  %v64 = vld [vmem:[%s1 + $0x4c] sm:$0xf]
  %v65 = vld [vmem:[%s1 + $0x50] sm:$0xf]
  %v66 = vld [vmem:[%s1 + $0x54] sm:$0xf]
  %v67 = vld [vmem:[%s1 + $0x58] sm:$0xf]
  %v68 = vld [vmem:[%s1 + $0x5c] sm:$0xf]
  %v69 = vld [vmem:[%s1 + $0x60] sm:$0xf]
  %v70 = vld [vmem:[%s1 + $0x64] sm:$0xf]
  %v71 = vld [vmem:[%s1 + $0x68] sm:$0xf]
  %v72 = vld [vmem:[%s1 + $0x6c] sm:$0xf]
  %v73 = vld [vmem:[%s1 + $0x70] sm:$0xf]
  %v74 = vld [vmem:[%s1 + $0x74] sm:$0xf]
  %v75 = vld [vmem:[%s1 + $0x78] sm:$0xf]
  %v76 = vld [vmem:[%s1 + $0x7c] sm:$0xf]
  %v77 = vld [vmem:[%s1 + $0x80] sm:$0xf]
  %v78 = vld [vmem:[%s1 + $0x84] sm:$0xf]
  %v79 = vld [vmem:[%s1 + $0x88] sm:$0xf]
  %v80 = vld [vmem:[%s1 + $0x8c] sm:$0xf]
  %v81 = vld [vmem:[%s1 + $0x90] sm:$0xf]
  %v82 = vld [vmem:[%s1 + $0x94] sm:$0xf]
  %v83 = vld [vmem:[%s1 + $0x98] sm:$0xf]
  %v84 = vld [vmem:[%s1 + $0x9c] sm:$0xf]
  %v85 = vld [vmem:[%s1 + $0xa0] sm:$0xf]
  %v86 = vld [vmem:[%s1 + $0xa4] sm:$0xf]
  %v87 = vld [vmem:[%s1 + $0xa8] sm:$0xf]
  %v88 = vld [vmem:[%s1 + $0xac] sm:$0xf]
  %v89 = vld [vmem:[%s1 + $0xb0] sm:$0xf]
  %v90 = vld [vmem:[%s1 + $0xb4] sm:$0xf]
  %v91 = vld [vmem:[%s1 + $0xb8] sm:$0xf]
  %v92 = vld [vmem:[%s1 + $0xbc] sm:$0xf]
  %v93 = vld [vmem:[%s1 + $0xc0] sm:$0xf]
  %v94 = vld [vmem:[%s1 + $0xc4] sm:$0xf]
  %v95 = vld [vmem:[%s1 + $0xc8] sm:$0xf]
  %v96 = vld [vmem:[%s1 + $0xcc] sm:$0xf]
  %v97 = vld [vmem:[%s1 + $0xd0] sm:$0xf]
  %v98 = vld [vmem:[%s1 + $0xd4] sm:$0xf]
  %v99 = vld [vmem:[%s2] sm:$0x1]
  %v101 = vlaneseq
  %v102 = vshrl.u32 %v101, 7
  %v103 = vsub.s32 0, %v102
  %v104 = vrot.slane %v99, %v103
  %v136 = vunpack.c.l.b16 %v15
  %v137 = vunpack.c.h.b16 %v15
  %v138 = vunpack.c.l.b16 %v16
  %v139 = vunpack.c.h.b16 %v16
  %v140 = vunpack.c.l.b16 %v17
  %v141 = vunpack.c.h.b16 %v17
  %v142 = vunpack.c.l.b16 %v18
  %v143 = vunpack.c.h.b16 %v18
  %v144 = vunpack.c.l.b16 %v19
  %v145 = vunpack.c.h.b16 %v19
  %v146 = vunpack.c.l.b16 %v20
  %v147 = vunpack.c.h.b16 %v20
  %v148 = vunpack.c.l.b16 %v21
  %v149 = vunpack.c.h.b16 %v21
  %v150 = vunpack.c.l.b16 %v22
  %v151 = vunpack.c.h.b16 %v22
  %v152 = vunpack.c.l.b16 %v23
  %v153 = vunpack.c.h.b16 %v23
  %v154 = vunpack.c.l.b16 %v24
  %v155 = vunpack.c.h.b16 %v24
  %v156 = vunpack.c.l.b16 %v25
  %v157 = vunpack.c.h.b16 %v25
  %v158 = vunpack.c.l.b16 %v26
  %v159 = vunpack.c.h.b16 %v26
  %v160 = vunpack.c.l.b16 %v27
  %v161 = vunpack.c.h.b16 %v27
  %v162 = vunpack.c.l.b16 %v28
  %v163 = vunpack.c.h.b16 %v28
  %v164 = vunpack.c.l.b16 %v29
  %v165 = vunpack.c.h.b16 %v29
  %v166 = vunpack.c.l.b16 %v30
  %v167 = vunpack.c.h.b16 %v30
  %v168 = vunpack.c.l.b16 %v31
  %v169 = vunpack.c.h.b16 %v31
  %v170 = vunpack.c.l.b16 %v32
  %v171 = vunpack.c.h.b16 %v32
  %v172 = vunpack.c.l.b16 %v33
  %v173 = vunpack.c.h.b16 %v33
  %v174 = vunpack.c.l.b16 %v34
  %v175 = vunpack.c.h.b16 %v34
  %v176 = vunpack.c.l.b16 %v35
  %v177 = vunpack.c.h.b16 %v35
  %v178 = vunpack.c.l.b16 %v36
  %v179 = vunpack.c.h.b16 %v36
  %v180 = vunpack.c.l.b16 %v37
  %v181 = vunpack.c.h.b16 %v37
  %v182 = vunpack.c.l.b16 %v38
  %v183 = vunpack.c.h.b16 %v38
  %v184 = vunpack.c.l.b16 %v39
  %v185 = vunpack.c.h.b16 %v39
  %v186 = vunpack.c.l.b16 %v40
  %v187 = vunpack.c.h.b16 %v40
  %v188 = vunpack.c.l.b16 %v41
  %v189 = vunpack.c.h.b16 %v41
  %v190 = vunpack.c.l.b16 %v42
  %v191 = vunpack.c.h.b16 %v42
  %v192 = vunpack.c.l.b16 %v43
  %v193 = vunpack.c.h.b16 %v43
  %v194 = vunpack.c.l.b16 %v44
  %v195 = vunpack.c.h.b16 %v44
  %v196 = vpack.c.b16 %v140, %v136
  %v197 = vpack.c.b16 %v141, %v137
  %v198 = vpack.c.b16 %v142, %v138
  %v199 = vpack.c.b16 %v143, %v139
  %v200 = vpack.c.b16 %v148, %v144
  %v201 = vpack.c.b16 %v149, %v145
  %v202 = vpack.c.b16 %v150, %v146
  %v203 = vpack.c.b16 %v151, %v147
  %v204 = vpack.c.b16 %v156, %v152
  %v205 = vpack.c.b16 %v157, %v153
  %v206 = vpack.c.b16 %v158, %v154
  %v207 = vpack.c.b16 %v159, %v155
  %v208 = vpack.c.b16 %v164, %v160
  %v209 = vpack.c.b16 %v165, %v161
  %v210 = vpack.c.b16 %v166, %v162
  %v211 = vpack.c.b16 %v167, %v163
  %v212 = vpack.c.b16 %v172, %v168
  %v213 = vpack.c.b16 %v173, %v169
  %v214 = vpack.c.b16 %v174, %v170
  %v215 = vpack.c.b16 %v175, %v171
  %v216 = vpack.c.b16 %v180, %v176
  %v217 = vpack.c.b16 %v181, %v177
  %v218 = vpack.c.b16 %v182, %v178
  %v219 = vpack.c.b16 %v183, %v179
  %v220 = vpack.c.b16 %v188, %v184
  %v221 = vpack.c.b16 %v189, %v185
  %v222 = vpack.c.b16 %v190, %v186
  %v223 = vpack.c.b16 %v191, %v187
  %v224 = vpack.c.b16 %v192, %v192
  %v225 = vpack.c.b16 %v193, %v193
  %v226 = vpack.c.b16 %v194, %v194
  %v227 = vpack.c.b16 %v195, %v195
  %v306 = vunpack.c.l.b16 %v45
  %v307 = vunpack.c.l.b16 %v46
  %v308 = vunpack.c.l.b16 %v47
  %v309 = vunpack.c.l.b16 %v48
  %v310 = vunpack.c.l.b16 %v49
  %v311 = vunpack.c.l.b16 %v50
  %v312 = vunpack.c.l.b16 %v51
  %v313 = vunpack.c.l.b16 %v52
  %v314 = vunpack.c.l.b16 %v53
  %v315 = vunpack.c.l.b16 %v54
  %v316 = vunpack.c.l.b16 %v55
  %v317 = vunpack.c.l.b16 %v56
  %v318 = vunpack.c.l.b16 %v57
  %v319 = vunpack.c.l.b16 %v58
  %v320 = vunpack.c.l.b16 %v59
  %v321 = vunpack.c.l.b16 %v60
  %v322 = vunpack.c.l.b16 %v61
  %v323 = vunpack.c.l.b16 %v62
  %v324 = vunpack.c.l.b16 %v63
  %v325 = vunpack.c.l.b16 %v64
  %v326 = vunpack.c.l.b16 %v65
  %v327 = vunpack.c.l.b16 %v66
  %v328 = vunpack.c.l.b16 %v67
  %v329 = vunpack.c.l.b16 %v68
  %v330 = vunpack.c.l.b16 %v69
  %v331 = vunpack.c.l.b16 %v70
  %v332 = vunpack.c.l.b16 %v71
  %v333 = vunpack.c.l.b16 %v72
  %v334 = vunpack.c.l.b16 %v73
  %v335 = vunpack.c.l.b16 %v74
  %v336 = vunpack.c.l.b16 %v75
  %v337 = vunpack.c.l.b16 %v76
  %v338 = vunpack.c.l.b16 %v77
  %v339 = vunpack.c.l.b16 %v78
  %v340 = vunpack.c.l.b16 %v79
  %v341 = vunpack.c.l.b16 %v80
  %v342 = vunpack.c.l.b16 %v81
  %v343 = vunpack.c.l.b16 %v82
  %v344 = vunpack.c.l.b16 %v83
  %v345 = vunpack.c.l.b16 %v84
  %v346 = vunpack.c.l.b16 %v85
  %v347 = vunpack.c.l.b16 %v86
  %v348 = vunpack.c.l.b16 %v87
  %v349 = vunpack.c.l.b16 %v88
  %v350 = vunpack.c.l.b16 %v89
  %v351 = vunpack.c.l.b16 %v90
  %v352 = vunpack.c.l.b16 %v91
  %v353 = vunpack.c.l.b16 %v92
  %v354 = vunpack.c.l.b16 %v93
  %v355 = vunpack.c.l.b16 %v94
  %v356 = vunpack.c.l.b16 %v95
  %v357 = vunpack.c.l.b16 %v96
  %v358 = vunpack.c.l.b16 %v97
  %v359 = vunpack.c.l.b16 %v98
  %v360 = vpack.c.b16 %v307, %v306
  %v361 = vpack.c.b16 %v309, %v308
  %v362 = vpack.c.b16 %v311, %v310
  %v363 = vpack.c.b16 %v313, %v312
  %v364 = vpack.c.b16 %v315, %v314
  %v365 = vpack.c.b16 %v317, %v316
  %v366 = vpack.c.b16 %v319, %v318
  %v367 = vpack.c.b16 %v321, %v320
  %v368 = vpack.c.b16 %v323, %v322
  %v369 = vpack.c.b16 %v325, %v324
  %v370 = vpack.c.b16 %v327, %v326
  %v371 = vpack.c.b16 %v329, %v328
  %v372 = vpack.c.b16 %v331, %v330
  %v373 = vpack.c.b16 %v333, %v332
  %v374 = vpack.c.b16 %v335, %v334
  %v375 = vpack.c.b16 %v337, %v336
  %v376 = vpack.c.b16 %v339, %v338
  %v377 = vpack.c.b16 %v341, %v340
  %v378 = vpack.c.b16 %v343, %v342
  %v379 = vpack.c.b16 %v345, %v344
  %v380 = vpack.c.b16 %v347, %v346
  %v381 = vpack.c.b16 %v349, %v348
  %v382 = vpack.c.b16 %v351, %v350
  %v383 = vpack.c.b16 %v353, %v352
  %v384 = vpack.c.b16 %v355, %v354
  %v385 = vpack.c.b16 %v357, %v356
  %v386 = vpack.c.b16 %v359, %v358
  %vm414 = vcmask 392192
  %v416 = vsel %vm414, %v199, 0
  %v419 = vsel %vm414, %v203, 0
  %v422 = vsel %vm414, %v207, 0
  %v425 = vsel %vm414, %v211, 0
  %v428 = vsel %vm414, %v215, 0
  %v431 = vsel %vm414, %v219, 0
  %v434 = vsel %vm414, %v223, 0
  %v437 = vsel %vm414, %v227, 0
  %439 = vmatprep.subr.bf16.mxu0 0
  %440 = vmatpush1.bf16.msra.mxu0 %v360
  %441 = vmatprep.subr.bf16.mxu0 0
  %442 = vmatpush1.bf16.msra.mxu0 %v361
  %443 = vmatprep.subr.bf16.mxu0 0
  %444 = vmatpush1.bf16.msra.mxu0 %v362
  %445 = vmatprep.subr.bf16.mxu0 0
  %446 = vmatpush1.bf16.msra.mxu0 %v363
  %447 = vmatprep.subr.bf16.mxu0 0
  %448 = vmatpush1.bf16.msra.mxu0 %v364
  %449 = vmatprep.subr.bf16.mxu0 0
  %450 = vmatpush1.bf16.msra.mxu0 %v365
  %451 = vmatprep.subr.bf16.mxu0 0
  %452 = vmatpush1.bf16.msra.mxu0 %v366
  %453 = vmatprep.subr.bf16.mxu0 0
  %454 = vmatpush1.bf16.msra.mxu0 %v367
  %455 = vmatprep.subr.bf16.mxu0 0
  %456 = vmatpush1.bf16.msra.mxu0 %v368
  %457 = vmatprep.subr.bf16.mxu0 0
  %458 = vmatpush1.bf16.msra.mxu0 %v369
  %459 = vmatprep.subr.bf16.mxu0 0
  %460 = vmatpush1.bf16.msra.mxu0 %v370
  %461 = vmatprep.subr.bf16.mxu0 0
  %462 = vmatpush1.bf16.msra.mxu0 %v371
  %463 = vmatprep.subr.bf16.mxu0 0
  %464 = vmatpush1.bf16.msra.mxu0 %v372
  %465 = vmatprep.subr.bf16.mxu0 0
  %466 = vmatpush1.bf16.msra.mxu0 %v373
  %467 = vmatprep.subr.bf16.mxu0 0
  %468 = vmatpush1.bf16.msra.mxu0 %v374
  %469 = vmatprep.subr.bf16.mxu0 0
  %470 = vmatpush1.bf16.msra.mxu0 %v375
  %471 = vmatprep.mubr.bf16.mxu0 %v197
  %472 = vmatmul.mubr.bf16.gmra.mrb[0].mxu0 %v196
  %v473 = vpop.f32.mrb[0].mxu0
  %v474 = vadd.f32 %v104, %v473
  %v475 = vpop.f32.mrb[0].mxu0
  %v476 = vpop.f32.mrb[0].mxu0
  %v477 = vadd.f32 %v104, %v476
  %v478 = vpop.f32.mrb[0].mxu0
  %479 = vmatprep.mubr.bf16.mxu0 %v201
  %480 = vmatmul.mubr.bf16.gmra.mrb[0].mxu0 %v200
  %v481 = vpop.f32.mrb[0].mxu0
  %v482 = vadd.f32 %v104, %v481
  %v483 = vpop.f32.mrb[0].mxu0
  %v484 = vpop.f32.mrb[0].mxu0
  %v485 = vadd.f32 %v104, %v484
  %v486 = vpop.f32.mrb[0].mxu0
  %487 = vmatprep.mubr.bf16.mxu0 %v205
  %488 = vmatmul.mubr.bf16.gmra.mrb[0].mxu0 %v204
  %v489 = vpop.f32.mrb[0].mxu0
  %v490 = vadd.f32 %v104, %v489
  %v491 = vpop.f32.mrb[0].mxu0
  %v492 = vpop.f32.mrb[0].mxu0
  %v493 = vadd.f32 %v104, %v492
  %v494 = vpop.f32.mrb[0].mxu0
  %495 = vmatprep.mubr.bf16.mxu0 %v209
  %496 = vmatmul.mubr.bf16.gmra.mrb[0].mxu0 %v208
  %v497 = vpop.f32.mrb[0].mxu0
  %v498 = vadd.f32 %v104, %v497
  %v499 = vpop.f32.mrb[0].mxu0
  %v500 = vpop.f32.mrb[0].mxu0
  %v501 = vadd.f32 %v104, %v500
  %v502 = vpop.f32.mrb[0].mxu0
  %503 = vmatprep.mubr.bf16.mxu0 %v213
  %504 = vmatmul.mubr.bf16.gmra.mrb[0].mxu0 %v212
  %v505 = vpop.f32.mrb[0].mxu0
  %v506 = vadd.f32 %v104, %v505
  %v507 = vpop.f32.mrb[0].mxu0
  %v508 = vpop.f32.mrb[0].mxu0
  %v509 = vadd.f32 %v104, %v508
  %v510 = vpop.f32.mrb[0].mxu0
  %511 = vmatprep.mubr.bf16.mxu0 %v217
  %512 = vmatmul.mubr.bf16.gmra.mrb[0].mxu0 %v216
  %v513 = vpop.f32.mrb[0].mxu0
  %v514 = vadd.f32 %v104, %v513
  %v515 = vpop.f32.mrb[0].mxu0
  %v516 = vpop.f32.mrb[0].mxu0
  %v517 = vadd.f32 %v104, %v516
  %v518 = vpop.f32.mrb[0].mxu0
  %519 = vmatprep.mubr.bf16.mxu0 %v221
  %520 = vmatmul.mubr.bf16.gmra.mrb[0].mxu0 %v220
  %v521 = vpop.f32.mrb[0].mxu0
  %v522 = vadd.f32 %v104, %v521
  %v523 = vpop.f32.mrb[0].mxu0
  %v524 = vpop.f32.mrb[0].mxu0
  %v525 = vadd.f32 %v104, %v524
  %v526 = vpop.f32.mrb[0].mxu0
  %527 = vmatprep.mubr.bf16.mxu0 %v225
  %528 = vmatmul.mubr.bf16.gmra.mrb[0].mxu0 %v224
  %v529 = vpop.f32.mrb[0].mxu0
  %v530 = vadd.f32 %v104, %v529
  %v531 = vpop.f32.mrb[0].mxu0
  %v532 = vpop.f32.mrb[0].mxu0
  %v533 = vpop.f32.mrb[0].mxu0
  %534 = vdwg.mxu0
  %535 = vmatprep.subr.bf16.mxu0 0
  %536 = vmatpush1.bf16.msra.mxu0 %v376
  %537 = vmatprep.subr.bf16.mxu0 0
  %538 = vmatpush1.bf16.msra.mxu0 %v377
  %539 = vmatprep.subr.bf16.mxu0 0
  %540 = vmatpush1.bf16.msra.mxu0 %v378
  %541 = vmatprep.subr.bf16.mxu0 0
  %542 = vmatpush1.bf16.msra.mxu0 %v379
  %543 = vmatprep.subr.bf16.mxu0 0
  %544 = vmatpush1.bf16.msra.mxu0 %v380
  %545 = vmatprep.subr.bf16.mxu0 0
  %546 = vmatpush1.bf16.msra.mxu0 %v381
  %547 = vmatprep.subr.bf16.mxu0 0
  %548 = vmatpush1.bf16.msra.mxu0 %v382
  %549 = vmatprep.subr.bf16.mxu0 0
  %550 = vmatpush1.bf16.msra.mxu0 %v383
  %551 = vmatprep.subr.bf16.mxu0 0
  %552 = vmatpush1.bf16.msra.mxu0 %v384
  %553 = vmatprep.subr.bf16.mxu0 0
  %554 = vmatpush1.bf16.msra.mxu0 %v385
  %555 = vmatprep.subr.bf16.mxu0 0
  %556 = vmatpush1.bf16.msra.mxu0 %v386
  %557 = vmatprep.subr.bf16.mxu0 0
  %558 = vmatpush1.bf16.msra.mxu0 0
  %559 = vmatprep.subr.bf16.mxu0 0
  %560 = vmatpush1.bf16.msra.mxu0 0
  %561 = vmatprep.subr.bf16.mxu0 0
  %562 = vmatpush1.bf16.msra.mxu0 0
  %563 = vmatprep.subr.bf16.mxu0 0
  %564 = vmatpush1.bf16.msra.mxu0 0
  %565 = vmatprep.subr.bf16.mxu0 0
  %566 = vmatpush1.bf16.msra.mxu0 0
  %567 = vmatprep.mubr.bf16.mxu0 %v416
  %568 = vmatmul.mubr.bf16.gmra.mrb[0].mxu0 %v198
  %v569 = vpop.f32.mrb[0].mxu0
  %v570 = vadd.f32 %v474, %v569
  %v571 = vpop.f32.mrb[0].mxu0
  %v572 = vpop.f32.mrb[0].mxu0
  %v573 = vadd.f32 %v477, %v572
  %v574 = vpop.f32.mrb[0].mxu0
  %575 = vmatprep.mubr.bf16.mxu0 %v419
  %576 = vmatmul.mubr.bf16.gmra.mrb[0].mxu0 %v202
  %v577 = vpop.f32.mrb[0].mxu0
  %v578 = vadd.f32 %v482, %v577
  %v579 = vpop.f32.mrb[0].mxu0
  %v580 = vpop.f32.mrb[0].mxu0
  %v581 = vadd.f32 %v485, %v580
  %v582 = vpop.f32.mrb[0].mxu0
  %583 = vmatprep.mubr.bf16.mxu0 %v422
  %584 = vmatmul.mubr.bf16.gmra.mrb[0].mxu0 %v206
  %v585 = vpop.f32.mrb[0].mxu0
  %v586 = vadd.f32 %v490, %v585
  %v587 = vpop.f32.mrb[0].mxu0
  %v588 = vpop.f32.mrb[0].mxu0
  %v589 = vadd.f32 %v493, %v588
  %v590 = vpop.f32.mrb[0].mxu0
  %591 = vmatprep.mubr.bf16.mxu0 %v425
  %592 = vmatmul.mubr.bf16.gmra.mrb[0].mxu0 %v210
  %v593 = vpop.f32.mrb[0].mxu0
  %v594 = vadd.f32 %v498, %v593
  %v595 = vpop.f32.mrb[0].mxu0
  %v596 = vpop.f32.mrb[0].mxu0
  %v597 = vadd.f32 %v501, %v596
  %v598 = vpop.f32.mrb[0].mxu0
  %599 = vmatprep.mubr.bf16.mxu0 %v428
  %600 = vmatmul.mubr.bf16.gmra.mrb[0].mxu0 %v214
  %v601 = vpop.f32.mrb[0].mxu0
  %v602 = vadd.f32 %v506, %v601
  %v603 = vpop.f32.mrb[0].mxu0
  %v604 = vpop.f32.mrb[0].mxu0
  %v605 = vadd.f32 %v509, %v604
  %v606 = vpop.f32.mrb[0].mxu0
  %607 = vmatprep.mubr.bf16.mxu0 %v431
  %608 = vmatmul.mubr.bf16.gmra.mrb[0].mxu0 %v218
  %v609 = vpop.f32.mrb[0].mxu0
  %v610 = vadd.f32 %v514, %v609
  %v611 = vpop.f32.mrb[0].mxu0
  %v612 = vpop.f32.mrb[0].mxu0
  %v613 = vadd.f32 %v517, %v612
  %v614 = vpop.f32.mrb[0].mxu0
  %615 = vmatprep.mubr.bf16.mxu0 %v434
  %616 = vmatmul.mubr.bf16.gmra.mrb[0].mxu0 %v222
  %v617 = vpop.f32.mrb[0].mxu0
  %v618 = vadd.f32 %v522, %v617
  %v619 = vpop.f32.mrb[0].mxu0
  %v620 = vpop.f32.mrb[0].mxu0
  %v621 = vadd.f32 %v525, %v620
  %v622 = vpop.f32.mrb[0].mxu0
  %623 = vmatprep.mubr.bf16.mxu0 %v437
  %624 = vmatmul.mubr.bf16.gmra.mrb[0].mxu0 %v226
  %v625 = vpop.f32.mrb[0].mxu0
  %v626 = vadd.f32 %v530, %v625
  %v627 = vpop.f32.mrb[0].mxu0
  %v628 = vpop.f32.mrb[0].mxu0
  %v629 = vpop.f32.mrb[0].mxu0
  %630 = vdwg.mxu0
  %v631 = vmax.f32 %v570, 0.0
  %v632 = vmax.f32 %v573, 0.0
  %v633 = vmax.f32 %v578, 0.0
  %v634 = vmax.f32 %v581, 0.0
  %v635 = vmax.f32 %v586, 0.0
  %v636 = vmax.f32 %v589, 0.0
  %v637 = vmax.f32 %v594, 0.0
  %v638 = vmax.f32 %v597, 0.0
  %v639 = vmax.f32 %v602, 0.0
  %v640 = vmax.f32 %v605, 0.0
  %v641 = vmax.f32 %v610, 0.0
  %v642 = vmax.f32 %v613, 0.0
  %v643 = vmax.f32 %v618, 0.0
  %v644 = vmax.f32 %v621, 0.0
  %v645 = vmax.f32 %v626, 0.0
  %v646 = vpack.c.bf16 %v632, %v631
  %v647 = vpack.c.bf16 %v634, %v633
  %v648 = vpack.c.bf16 %v636, %v635
  %v649 = vpack.c.bf16 %v638, %v637
  %v650 = vpack.c.bf16 %v640, %v639
  %v651 = vpack.c.bf16 %v642, %v641
  %v652 = vpack.c.bf16 %v644, %v643
  %v653 = vpack.c.bf16 %v645, %v645
  %v662 = vunpack.c.l.b16 %v646
  %v663 = vunpack.c.h.b16 %v646
  %v664 = vunpack.c.l.b16 %v647
  %v665 = vunpack.c.h.b16 %v647
  %v666 = vunpack.c.l.b16 %v648
  %v667 = vunpack.c.h.b16 %v648
  %v668 = vunpack.c.l.b16 %v649
  %v669 = vunpack.c.h.b16 %v649
  %v670 = vunpack.c.l.b16 %v650
  %v671 = vunpack.c.h.b16 %v650
  %v672 = vunpack.c.l.b16 %v651
  %v673 = vunpack.c.h.b16 %v651
  %v674 = vunpack.c.l.b16 %v652
  %v675 = vunpack.c.h.b16 %v652
  %v676 = vunpack.c.l.b16 %v653
  %v677 = vpack.c.b16 %v662, %v662
  %v678 = vpack.c.b16 %v663, %v663
  %v679 = vpack.c.b16 %v664, %v664
  %v680 = vpack.c.b16 %v665, %v665
  %v681 = vpack.c.b16 %v666, %v666
  %v682 = vpack.c.b16 %v667, %v667
  %v683 = vpack.c.b16 %v668, %v668
  %v684 = vpack.c.b16 %v669, %v669
  %v685 = vpack.c.b16 %v670, %v670
  %v686 = vpack.c.b16 %v671, %v671
  %v687 = vpack.c.b16 %v672, %v672
  %v688 = vpack.c.b16 %v673, %v673
  %v689 = vpack.c.b16 %v674, %v674
  %v690 = vpack.c.b16 %v675, %v675
  %v691 = vpack.c.b16 %v676, %v676
  %707 = vst [vmem:[%s3] sm:$0xf] %v677
  %708 = vst [vmem:[%s3 + $0x4] sm:$0xf] %v678
  %709 = vst [vmem:[%s3 + $0x8] sm:$0xf] %v679
  %710 = vst [vmem:[%s3 + $0xc] sm:$0xf] %v680
  %711 = vst [vmem:[%s3 + $0x10] sm:$0xf] %v681
  %712 = vst [vmem:[%s3 + $0x14] sm:$0xf] %v682
  %713 = vst [vmem:[%s3 + $0x18] sm:$0xf] %v683
  %714 = vst [vmem:[%s3 + $0x1c] sm:$0xf] %v684
  %715 = vst [vmem:[%s3 + $0x20] sm:$0xf] %v685
  %716 = vst [vmem:[%s3 + $0x24] sm:$0xf] %v686
  %717 = vst [vmem:[%s3 + $0x28] sm:$0xf] %v687
  %718 = vst [vmem:[%s3 + $0x2c] sm:$0xf] %v688
  %719 = vst [vmem:[%s3 + $0x30] sm:$0xf] %v689
  %720 = vst [vmem:[%s3 + $0x34] sm:$0xf] %v690
  %721 = vst [vmem:[%s3 + $0x38] sm:$0xf] %v691
  // Predicated region
  $region14: #{nvidia_forward.9} parent=0 // pred_check
    _
  $region15: #{nvidia_forward.9} parent=0 // pred_check_branch
    %723 = sbr.rel (0) target = $region17
  $region16: #{nvidia_forward.9} parent=0 // pred_region
    _
  $region17: #{nvidia_forward.9} parent=0 // pred_fallthru
    _
  // Predicated region
  $region18: #{nvidia_forward.9} parent=0 // pred_check
    _
  $region19: #{nvidia_forward.9} parent=0 // pred_check_branch
    %725 = sbr.rel (0) target = $region21
  $region20: #{nvidia_forward.9} parent=0 // pred_region
    _
  $region21: #{nvidia_forward.9} parent=0 // pred_fallthru
    _

// kernel: nvidia_forward.10
$region0: #{nvidia_forward.10}
  #allocation0 [shape = 'u32[]', space=smem, size = 0x4, offset = 0x4, fixed_abs, tag = 'smem constant byte address 0x4 - core index']
  #allocation1 [shape = 'u32[144,128]{1,0:T(1,128)}', space=vmem, size = 0x12000, scoped, tag = 'internal scratch']
  %s0 = inlined_call_operand.vmem [shape: bf16[40,576], index: 0, kind: input, shape index: {}]
  %s1 = inlined_call_operand.vmem [shape: bf16[576,128], index: 1, kind: input, shape index: {}]
  %s2 = inlined_call_operand.vmem [shape: f32[1,128], index: 2, kind: input, shape index: {}]
  %s3 = inlined_call_operand.vmem [shape: bf16[40,128], index: 3, kind: output, shape index: {}]
  %s4 = sld [smem:[#allocation0]]
  $region22: #{nvidia_forward.10} parent=0
    _
  %s6 = ssub.s32 1, %s4
  %s7 = scalar_select 0, %s6, %s4
  // Predicated region
  $region2: #{nvidia_forward.10} parent=0 // pred_check
    _
  $region3: #{nvidia_forward.10} parent=0 // pred_check_branch
    %9 = sbr.rel (0) target = $region5
  $region4: #{nvidia_forward.10} parent=0 // pred_region
    _
  $region5: #{nvidia_forward.10} parent=0 // pred_fallthru
    _
  // Predicated region
  $region6: #{nvidia_forward.10} parent=0 // pred_check
    _
  $region7: #{nvidia_forward.10} parent=0 // pred_check_branch
    %11 = sbr.rel (0) target = $region9
  $region8: #{nvidia_forward.10} parent=0 // pred_region
    _
  $region9: #{nvidia_forward.10} parent=0 // pred_fallthru
    _
  // Predicated region
  $region10: #{nvidia_forward.10} parent=0 // pred_check
    _
  $region11: #{nvidia_forward.10} parent=0 // pred_check_branch
    %13 = sbr.rel (0) target = $region13
  $region12: #{nvidia_forward.10} parent=0 // pred_region
    _
  $region13: #{nvidia_forward.10} parent=0 // pred_fallthru
    _
  %v15 = vld [vmem:[%s0] sm:$0xff]
  %v16 = vld [vmem:[%s0 + $0x8] sm:$0xff]
  %v17 = vld [vmem:[%s0 + $0x10] sm:$0xf]
  %v18 = vld [vmem:[%s0 + $0x14] sm:$0xff]
  %v19 = vld [vmem:[%s0 + $0x1c] sm:$0xff]
  %v20 = vld [vmem:[%s0 + $0x24] sm:$0xf]
  %v21 = vld [vmem:[%s0 + $0x28] sm:$0xff]
  %v22 = vld [vmem:[%s0 + $0x30] sm:$0xff]
  %v23 = vld [vmem:[%s0 + $0x38] sm:$0xf]
  %v24 = vld [vmem:[%s0 + $0x3c] sm:$0xff]
  %v25 = vld [vmem:[%s0 + $0x44] sm:$0xff]
  %v26 = vld [vmem:[%s0 + $0x4c] sm:$0xf]
  %v27 = vld [vmem:[%s0 + $0x50] sm:$0xff]
  %v28 = vld [vmem:[%s0 + $0x58] sm:$0xff]
  %v29 = vld [vmem:[%s0 + $0x60] sm:$0xf]
  %v30 = vld [vmem:[%s1] sm:$0xf]
  %v31 = vld [vmem:[%s1 + $0x4] sm:$0xf]
  %v32 = vld [vmem:[%s1 + $0x8] sm:$0xf]
  %v33 = vld [vmem:[%s1 + $0xc] sm:$0xf]
  %v34 = vld [vmem:[%s1 + $0x10] sm:$0xf]
  %v35 = vld [vmem:[%s1 + $0x14] sm:$0xf]
  %v36 = vld [vmem:[%s1 + $0x18] sm:$0xf]
  %v37 = vld [vmem:[%s1 + $0x1c] sm:$0xf]
  %v38 = vld [vmem:[%s1 + $0x20] sm:$0xf]
  %v39 = vld [vmem:[%s1 + $0x24] sm:$0xf]
  %v40 = vld [vmem:[%s1 + $0x28] sm:$0xf]
  %v41 = vld [vmem:[%s1 + $0x2c] sm:$0xf]
  %v42 = vld [vmem:[%s1 + $0x30] sm:$0xf]
  %v43 = vld [vmem:[%s1 + $0x34] sm:$0xf]
  %v44 = vld [vmem:[%s1 + $0x38] sm:$0xf]
  %v45 = vld [vmem:[%s1 + $0x3c] sm:$0xf]
  %v46 = vld [vmem:[%s1 + $0x40] sm:$0xf]
  %v47 = vld [vmem:[%s1 + $0x44] sm:$0xf]
  %v48 = vld [vmem:[%s1 + $0x48] sm:$0xf]
  %v49 = vld [vmem:[%s1 + $0x4c] sm:$0xf]
  %v50 = vld [vmem:[%s1 + $0x50] sm:$0xf]
  %v51 = vld [vmem:[%s1 + $0x54] sm:$0xf]
  %v52 = vld [vmem:[%s1 + $0x58] sm:$0xf]
  %v53 = vld [vmem:[%s1 + $0x5c] sm:$0xf]
  %v54 = vld [vmem:[%s1 + $0x60] sm:$0xf]
  %v55 = vld [vmem:[%s1 + $0x64] sm:$0xf]
  %v56 = vld [vmem:[%s1 + $0x68] sm:$0xf]
  %v57 = vld [vmem:[%s1 + $0x6c] sm:$0xf]
  %v58 = vld [vmem:[%s1 + $0x70] sm:$0xf]
  %v59 = vld [vmem:[%s1 + $0x74] sm:$0xf]
  %v60 = vld [vmem:[%s1 + $0x78] sm:$0xf]
  %v61 = vld [vmem:[%s1 + $0x7c] sm:$0xf]
  %v62 = vld [vmem:[%s1 + $0x80] sm:$0xf]
  %v63 = vld [vmem:[%s1 + $0x84] sm:$0xf]
  %v64 = vld [vmem:[%s1 + $0x88] sm:$0xf]
  %v65 = vld [vmem:[%s1 + $0x8c] sm:$0xf]
  %v66 = vld [vmem:[%s1 + $0x90] sm:$0xf]
  %v67 = vld [vmem:[%s1 + $0x94] sm:$0xf]
  %v68 = vld [vmem:[%s1 + $0x98] sm:$0xf]
  %v69 = vld [vmem:[%s1 + $0x9c] sm:$0xf]
  %v70 = vld [vmem:[%s1 + $0xa0] sm:$0xf]
  %v71 = vld [vmem:[%s1 + $0xa4] sm:$0xf]
  %v72 = vld [vmem:[%s1 + $0xa8] sm:$0xf]
  %v73 = vld [vmem:[%s1 + $0xac] sm:$0xf]
  %v74 = vld [vmem:[%s1 + $0xb0] sm:$0xf]
  %v75 = vld [vmem:[%s1 + $0xb4] sm:$0xf]
  %v76 = vld [vmem:[%s1 + $0xb8] sm:$0xf]
  %v77 = vld [vmem:[%s1 + $0xbc] sm:$0xf]
  %v78 = vld [vmem:[%s1 + $0xc0] sm:$0xf]
  %v79 = vld [vmem:[%s1 + $0xc4] sm:$0xf]
  %v80 = vld [vmem:[%s1 + $0xc8] sm:$0xf]
  %v81 = vld [vmem:[%s1 + $0xcc] sm:$0xf]
  %v82 = vld [vmem:[%s1 + $0xd0] sm:$0xf]
  %v83 = vld [vmem:[%s1 + $0xd4] sm:$0xf]
  %v84 = vld [vmem:[%s1 + $0xd8] sm:$0xf]
  %v85 = vld [vmem:[%s1 + $0xdc] sm:$0xf]
  %v86 = vld [vmem:[%s1 + $0xe0] sm:$0xf]
  %v87 = vld [vmem:[%s1 + $0xe4] sm:$0xf]
  %v88 = vld [vmem:[%s1 + $0xe8] sm:$0xf]
  %v89 = vld [vmem:[%s1 + $0xec] sm:$0xf]
  %v90 = vld [vmem:[%s1 + $0xf0] sm:$0xf]
  %v91 = vld [vmem:[%s1 + $0xf4] sm:$0xf]
  %v92 = vld [vmem:[%s1 + $0xf8] sm:$0xf]
  %v93 = vld [vmem:[%s1 + $0xfc] sm:$0xf]
  %v94 = vld [vmem:[%s1 + $0x100] sm:$0xf]
  %v95 = vld [vmem:[%s1 + $0x104] sm:$0xf]
  %v96 = vld [vmem:[%s1 + $0x108] sm:$0xf]
  %v97 = vld [vmem:[%s1 + $0x10c] sm:$0xf]
  %v98 = vld [vmem:[%s1 + $0x110] sm:$0xf]
  %v99 = vld [vmem:[%s1 + $0x114] sm:$0xf]
  %v100 = vld [vmem:[%s1 + $0x118] sm:$0xf]
  %v101 = vld [vmem:[%s1 + $0x11c] sm:$0xf]
  %v102 = vld [vmem:[%s2] sm:$0x1]
  %v104 = vlaneseq
  %v105 = vshrl.u32 %v104, 7
  %v106 = vsub.s32 0, %v105
  %v107 = vrot.slane %v102, %v106
  %v124 = vunpack.c.l.b16 %v15
  %v125 = vunpack.c.h.b16 %v15
  %v126 = vunpack.c.l.b16 %v16
  %v127 = vunpack.c.h.b16 %v16
  %v128 = vunpack.c.l.b16 %v17
  %v129 = vunpack.c.l.b16 %v18
  %v130 = vunpack.c.h.b16 %v18
  %v131 = vunpack.c.l.b16 %v19
  %v132 = vunpack.c.h.b16 %v19
  %v133 = vunpack.c.l.b16 %v20
  %v134 = vunpack.c.l.b16 %v21
  %v135 = vunpack.c.h.b16 %v21
  %v136 = vunpack.c.l.b16 %v22
  %v137 = vunpack.c.h.b16 %v22
  %v138 = vunpack.c.l.b16 %v23
  %v139 = vunpack.c.l.b16 %v24
  %v140 = vunpack.c.h.b16 %v24
  %v141 = vunpack.c.l.b16 %v25
  %v142 = vunpack.c.h.b16 %v25
  %v143 = vunpack.c.l.b16 %v26
  %v144 = vunpack.c.l.b16 %v27
  %v145 = vunpack.c.h.b16 %v27
  %v146 = vunpack.c.l.b16 %v28
  %v147 = vunpack.c.h.b16 %v28
  %v148 = vunpack.c.l.b16 %v29
  %v149 = vpack.c.b16 %v129, %v124
  %v150 = vpack.c.b16 %v130, %v125
  %v151 = vpack.c.b16 %v131, %v126
  %v152 = vpack.c.b16 %v132, %v127
  %v153 = vpack.c.b16 %v133, %v128
  %v154 = vpack.c.b16 %v139, %v134
  %v155 = vpack.c.b16 %v140, %v135
  %v156 = vpack.c.b16 %v141, %v136
  %v157 = vpack.c.b16 %v142, %v137
  %v158 = vpack.c.b16 %v143, %v138
  %v159 = vpack.c.b16 %v144, %v144
  %v160 = vpack.c.b16 %v145, %v145
  %v161 = vpack.c.b16 %v146, %v146
  %v162 = vpack.c.b16 %v147, %v147
  %v163 = vpack.c.b16 %v148, %v148
  %v248 = vunpack.c.l.b16 %v30
  %v249 = vunpack.c.l.b16 %v31
  %v250 = vunpack.c.l.b16 %v32
  %v251 = vunpack.c.l.b16 %v33
  %v252 = vunpack.c.l.b16 %v34
  %v253 = vunpack.c.l.b16 %v35
  %v254 = vunpack.c.l.b16 %v36
  %v255 = vunpack.c.l.b16 %v37
  %v256 = vunpack.c.l.b16 %v38
  %v257 = vunpack.c.l.b16 %v39
  %v258 = vunpack.c.l.b16 %v40
  %v259 = vunpack.c.l.b16 %v41
  %v260 = vunpack.c.l.b16 %v42
  %v261 = vunpack.c.l.b16 %v43
  %v262 = vunpack.c.l.b16 %v44
  %v263 = vunpack.c.l.b16 %v45
  %v264 = vunpack.c.l.b16 %v46
  %v265 = vunpack.c.l.b16 %v47
  %v266 = vunpack.c.l.b16 %v48
  %v267 = vunpack.c.l.b16 %v49
  %v268 = vunpack.c.l.b16 %v50
  %v269 = vunpack.c.l.b16 %v51
  %v270 = vunpack.c.l.b16 %v52
  %v271 = vunpack.c.l.b16 %v53
  %v272 = vunpack.c.l.b16 %v54
  %v273 = vunpack.c.l.b16 %v55
  %v274 = vunpack.c.l.b16 %v56
  %v275 = vunpack.c.l.b16 %v57
  %v276 = vunpack.c.l.b16 %v58
  %v277 = vunpack.c.l.b16 %v59
  %v278 = vunpack.c.l.b16 %v60
  %v279 = vunpack.c.l.b16 %v61
  %v280 = vunpack.c.l.b16 %v62
  %v281 = vunpack.c.l.b16 %v63
  %v282 = vunpack.c.l.b16 %v64
  %v283 = vunpack.c.l.b16 %v65
  %v284 = vunpack.c.l.b16 %v66
  %v285 = vunpack.c.l.b16 %v67
  %v286 = vunpack.c.l.b16 %v68
  %v287 = vunpack.c.l.b16 %v69
  %v288 = vunpack.c.l.b16 %v70
  %v289 = vunpack.c.l.b16 %v71
  %v290 = vunpack.c.l.b16 %v72
  %v291 = vunpack.c.l.b16 %v73
  %v292 = vunpack.c.l.b16 %v74
  %v293 = vunpack.c.l.b16 %v75
  %v294 = vunpack.c.l.b16 %v76
  %v295 = vunpack.c.l.b16 %v77
  %v296 = vunpack.c.l.b16 %v78
  %v297 = vunpack.c.l.b16 %v79
  %v298 = vunpack.c.l.b16 %v80
  %v299 = vunpack.c.l.b16 %v81
  %v300 = vunpack.c.l.b16 %v82
  %v301 = vunpack.c.l.b16 %v83
  %v302 = vunpack.c.l.b16 %v84
  %v303 = vunpack.c.l.b16 %v85
  %v304 = vunpack.c.l.b16 %v86
  %v305 = vunpack.c.l.b16 %v87
  %v306 = vunpack.c.l.b16 %v88
  %v307 = vunpack.c.l.b16 %v89
  %v308 = vunpack.c.l.b16 %v90
  %v309 = vunpack.c.l.b16 %v91
  %v310 = vunpack.c.l.b16 %v92
  %v311 = vunpack.c.l.b16 %v93
  %v312 = vunpack.c.l.b16 %v94
  %v313 = vunpack.c.l.b16 %v95
  %v314 = vunpack.c.l.b16 %v96
  %v315 = vunpack.c.l.b16 %v97
  %v316 = vunpack.c.l.b16 %v98
  %v317 = vunpack.c.l.b16 %v99
  %v318 = vunpack.c.l.b16 %v100
  %v319 = vunpack.c.l.b16 %v101
  %v320 = vpack.c.b16 %v249, %v248
  %v321 = vpack.c.b16 %v251, %v250
  %v322 = vpack.c.b16 %v253, %v252
  %v323 = vpack.c.b16 %v255, %v254
  %v324 = vpack.c.b16 %v257, %v256
  %v325 = vpack.c.b16 %v259, %v258
  %v326 = vpack.c.b16 %v261, %v260
  %v327 = vpack.c.b16 %v263, %v262
  %v328 = vpack.c.b16 %v265, %v264
  %v329 = vpack.c.b16 %v267, %v266
  %v330 = vpack.c.b16 %v269, %v268
  %v331 = vpack.c.b16 %v271, %v270
  %v332 = vpack.c.b16 %v273, %v272
  %v333 = vpack.c.b16 %v275, %v274
  %v334 = vpack.c.b16 %v277, %v276
  %v335 = vpack.c.b16 %v279, %v278
  %v336 = vpack.c.b16 %v281, %v280
  %v337 = vpack.c.b16 %v283, %v282
  %v338 = vpack.c.b16 %v285, %v284
  %v339 = vpack.c.b16 %v287, %v286
  %v340 = vpack.c.b16 %v289, %v288
  %v341 = vpack.c.b16 %v291, %v290
  %v342 = vpack.c.b16 %v293, %v292
  %v343 = vpack.c.b16 %v295, %v294
  %v344 = vpack.c.b16 %v297, %v296
  %v345 = vpack.c.b16 %v299, %v298
  %v346 = vpack.c.b16 %v301, %v300
  %v347 = vpack.c.b16 %v303, %v302
  %v348 = vpack.c.b16 %v305, %v304
  %v349 = vpack.c.b16 %v307, %v306
  %v350 = vpack.c.b16 %v309, %v308
  %v351 = vpack.c.b16 %v311, %v310
  %v352 = vpack.c.b16 %v313, %v312
  %v353 = vpack.c.b16 %v315, %v314
  %v354 = vpack.c.b16 %v317, %v316
  %v355 = vpack.c.b16 %v319, %v318
  %vm392 = vcmask 523264
  %v394 = vsel %vm392, %v153, 0
  %v397 = vsel %vm392, %v158, 0
  %v400 = vsel %vm392, %v163, 0
  %402 = vmatprep.subr.bf16.mxu0 0
  %403 = vmatpush1.bf16.msra.mxu0 %v320
  %404 = vmatprep.subr.bf16.mxu0 0
  %405 = vmatpush1.bf16.msra.mxu0 %v321
  %406 = vmatprep.subr.bf16.mxu0 0
  %407 = vmatpush1.bf16.msra.mxu0 %v322
  %408 = vmatprep.subr.bf16.mxu0 0
  %409 = vmatpush1.bf16.msra.mxu0 %v323
  %410 = vmatprep.subr.bf16.mxu0 0
  %411 = vmatpush1.bf16.msra.mxu0 %v324
  %412 = vmatprep.subr.bf16.mxu0 0
  %413 = vmatpush1.bf16.msra.mxu0 %v325
  %414 = vmatprep.subr.bf16.mxu0 0
  %415 = vmatpush1.bf16.msra.mxu0 %v326
  %416 = vmatprep.subr.bf16.mxu0 0
  %417 = vmatpush1.bf16.msra.mxu0 %v327
  %418 = vmatprep.subr.bf16.mxu0 0
  %419 = vmatpush1.bf16.msra.mxu0 %v328
  %420 = vmatprep.subr.bf16.mxu0 0
  %421 = vmatpush1.bf16.msra.mxu0 %v329
  %422 = vmatprep.subr.bf16.mxu0 0
  %423 = vmatpush1.bf16.msra.mxu0 %v330
  %424 = vmatprep.subr.bf16.mxu0 0
  %425 = vmatpush1.bf16.msra.mxu0 %v331
  %426 = vmatprep.subr.bf16.mxu0 0
  %427 = vmatpush1.bf16.msra.mxu0 %v332
  %428 = vmatprep.subr.bf16.mxu0 0
  %429 = vmatpush1.bf16.msra.mxu0 %v333
  %430 = vmatprep.subr.bf16.mxu0 0
  %431 = vmatpush1.bf16.msra.mxu0 %v334
  %432 = vmatprep.subr.bf16.mxu0 0
  %433 = vmatpush1.bf16.msra.mxu0 %v335
  %434 = vmatprep.mubr.bf16.mxu0 %v150
  %435 = vmatmul.mubr.bf16.gmra.mrb[0].mxu0 %v149
  %v436 = vpop.f32.mrb[0].mxu0
  %v437 = vadd.f32 %v107, %v436
  %v438 = vpop.f32.mrb[0].mxu0
  %v439 = vpop.f32.mrb[0].mxu0
  %v440 = vadd.f32 %v107, %v439
  %v441 = vpop.f32.mrb[0].mxu0
  %442 = vmatprep.mubr.bf16.mxu0 %v155
  %443 = vmatmul.mubr.bf16.gmra.mrb[0].mxu0 %v154
  %v444 = vpop.f32.mrb[0].mxu0
  %v445 = vadd.f32 %v107, %v444
  %v446 = vpop.f32.mrb[0].mxu0
  %v447 = vpop.f32.mrb[0].mxu0
  %v448 = vadd.f32 %v107, %v447
  %v449 = vpop.f32.mrb[0].mxu0
  %450 = vmatprep.mubr.bf16.mxu0 %v160
  %451 = vmatmul.mubr.bf16.gmra.mrb[0].mxu0 %v159
  %v452 = vpop.f32.mrb[0].mxu0
  %v453 = vadd.f32 %v107, %v452
  %v454 = vpop.f32.mrb[0].mxu0
  %v455 = vpop.f32.mrb[0].mxu0
  %v456 = vpop.f32.mrb[0].mxu0
  %457 = vdwg.mxu0
  %458 = vmatprep.subr.bf16.mxu0 0
  %459 = vmatpush1.bf16.msra.mxu0 %v336
  %460 = vmatprep.subr.bf16.mxu0 0
  %461 = vmatpush1.bf16.msra.mxu0 %v337
  %462 = vmatprep.subr.bf16.mxu0 0
  %463 = vmatpush1.bf16.msra.mxu0 %v338
  %464 = vmatprep.subr.bf16.mxu0 0
  %465 = vmatpush1.bf16.msra.mxu0 %v339
  %466 = vmatprep.subr.bf16.mxu0 0
  %467 = vmatpush1.bf16.msra.mxu0 %v340
  %468 = vmatprep.subr.bf16.mxu0 0
  %469 = vmatpush1.bf16.msra.mxu0 %v341
  %470 = vmatprep.subr.bf16.mxu0 0
  %471 = vmatpush1.bf16.msra.mxu0 %v342
  %472 = vmatprep.subr.bf16.mxu0 0
  %473 = vmatpush1.bf16.msra.mxu0 %v343
  %474 = vmatprep.subr.bf16.mxu0 0
  %475 = vmatpush1.bf16.msra.mxu0 %v344
  %476 = vmatprep.subr.bf16.mxu0 0
  %477 = vmatpush1.bf16.msra.mxu0 %v345
  %478 = vmatprep.subr.bf16.mxu0 0
  %479 = vmatpush1.bf16.msra.mxu0 %v346
  %480 = vmatprep.subr.bf16.mxu0 0
  %481 = vmatpush1.bf16.msra.mxu0 %v347
  %482 = vmatprep.subr.bf16.mxu0 0
  %483 = vmatpush1.bf16.msra.mxu0 %v348
  %484 = vmatprep.subr.bf16.mxu0 0
  %485 = vmatpush1.bf16.msra.mxu0 %v349
  %486 = vmatprep.subr.bf16.mxu0 0
  %487 = vmatpush1.bf16.msra.mxu0 %v350
  %488 = vmatprep.subr.bf16.mxu0 0
  %489 = vmatpush1.bf16.msra.mxu0 %v351
  %490 = vmatprep.mubr.bf16.mxu0 %v152
  %491 = vmatmul.mubr.bf16.gmra.mrb[0].mxu0 %v151
  %v492 = vpop.f32.mrb[0].mxu0
  %v493 = vadd.f32 %v437, %v492
  %v494 = vpop.f32.mrb[0].mxu0
  %v495 = vpop.f32.mrb[0].mxu0
  %v496 = vadd.f32 %v440, %v495
  %v497 = vpop.f32.mrb[0].mxu0
  %498 = vmatprep.mubr.bf16.mxu0 %v157
  %499 = vmatmul.mubr.bf16.gmra.mrb[0].mxu0 %v156
  %v500 = vpop.f32.mrb[0].mxu0
  %v501 = vadd.f32 %v445, %v500
  %v502 = vpop.f32.mrb[0].mxu0
  %v503 = vpop.f32.mrb[0].mxu0
  %v504 = vadd.f32 %v448, %v503
  %v505 = vpop.f32.mrb[0].mxu0
  %506 = vmatprep.mubr.bf16.mxu0 %v162
  %507 = vmatmul.mubr.bf16.gmra.mrb[0].mxu0 %v161
  %v508 = vpop.f32.mrb[0].mxu0
  %v509 = vadd.f32 %v453, %v508
  %v510 = vpop.f32.mrb[0].mxu0
  %v511 = vpop.f32.mrb[0].mxu0
  %v512 = vpop.f32.mrb[0].mxu0
  %513 = vdwg.mxu0
  %514 = vmatprep.subr.bf16.mxu0 0
  %515 = vmatpush1.bf16.msra.mxu0 %v352
  %516 = vmatprep.subr.bf16.mxu0 0
  %517 = vmatpush1.bf16.msra.mxu0 %v353
  %518 = vmatprep.subr.bf16.mxu0 0
  %519 = vmatpush1.bf16.msra.mxu0 %v354
  %520 = vmatprep.subr.bf16.mxu0 0
  %521 = vmatpush1.bf16.msra.mxu0 %v355
  %522 = vmatprep.subr.bf16.mxu0 0
  %523 = vmatpush1.bf16.msra.mxu0 0
  %524 = vmatprep.subr.bf16.mxu0 0
  %525 = vmatpush1.bf16.msra.mxu0 0
  %526 = vmatprep.subr.bf16.mxu0 0
  %527 = vmatpush1.bf16.msra.mxu0 0
  %528 = vmatprep.subr.bf16.mxu0 0
  %529 = vmatpush1.bf16.msra.mxu0 0
  %530 = vmatprep.subr.bf16.mxu0 0
  %531 = vmatpush1.bf16.msra.mxu0 0
  %532 = vmatprep.subr.bf16.mxu0 0
  %533 = vmatpush1.bf16.msra.mxu0 0
  %534 = vmatprep.subr.bf16.mxu0 0
  %535 = vmatpush1.bf16.msra.mxu0 0
  %536 = vmatprep.subr.bf16.mxu0 0
  %537 = vmatpush1.bf16.msra.mxu0 0
  %538 = vmatprep.subr.bf16.mxu0 0
  %539 = vmatpush1.bf16.msra.mxu0 0
  %540 = vmatprep.subr.bf16.mxu0 0
  %541 = vmatpush1.bf16.msra.mxu0 0
  %542 = vmatprep.subr.bf16.mxu0 0
  %543 = vmatpush1.bf16.msra.mxu0 0
  %544 = vmatprep.subr.bf16.mxu0 0
  %545 = vmatpush1.bf16.msra.mxu0 0
  %546 = vmatprep.mubr.bf16.mxu0 0
  %547 = vmatmul.mubr.bf16.gmra.mrb[0].mxu0 %v394
  %v548 = vpop.f32.mrb[0].mxu0
  %v549 = vadd.f32 %v493, %v548
  %v550 = vpop.f32.mrb[0].mxu0
  %v551 = vpop.f32.mrb[0].mxu0
  %v552 = vadd.f32 %v496, %v551
  %v553 = vpop.f32.mrb[0].mxu0
  %554 = vmatprep.mubr.bf16.mxu0 0
  %555 = vmatmul.mubr.bf16.gmra.mrb[0].mxu0 %v397
  %v556 = vpop.f32.mrb[0].mxu0
  %v557 = vadd.f32 %v501, %v556
  %v558 = vpop.f32.mrb[0].mxu0
  %v559 = vpop.f32.mrb[0].mxu0
  %v560 = vadd.f32 %v504, %v559
  %v561 = vpop.f32.mrb[0].mxu0
  %562 = vmatprep.mubr.bf16.mxu0 0
  %563 = vmatmul.mubr.bf16.gmra.mrb[0].mxu0 %v400
  %v564 = vpop.f32.mrb[0].mxu0
  %v565 = vadd.f32 %v509, %v564
  %v566 = vpop.f32.mrb[0].mxu0
  %v567 = vpop.f32.mrb[0].mxu0
  %v568 = vpop.f32.mrb[0].mxu0
  %569 = vdwg.mxu0
  %v570 = vmax.f32 %v549, 0.0
  %v571 = vmax.f32 %v552, 0.0
  %v572 = vmax.f32 %v557, 0.0
  %v573 = vmax.f32 %v560, 0.0
  %v574 = vmax.f32 %v565, 0.0
  %v575 = vpack.c.bf16 %v571, %v570
  %v576 = vpack.c.bf16 %v573, %v572
  %v577 = vpack.c.bf16 %v574, %v574
  %v581 = vunpack.c.l.b16 %v575
  %v582 = vunpack.c.h.b16 %v575
  %v583 = vunpack.c.l.b16 %v576
  %v584 = vunpack.c.h.b16 %v576
  %v585 = vunpack.c.l.b16 %v577
  %v586 = vpack.c.b16 %v581, %v581
  %v587 = vpack.c.b16 %v582, %v582
  %v588 = vpack.c.b16 %v583, %v583
  %v589 = vpack.c.b16 %v584, %v584
  %v590 = vpack.c.b16 %v585, %v585
  %596 = vst [vmem:[%s3] sm:$0xf] %v586
  %597 = vst [vmem:[%s3 + $0x4] sm:$0xf] %v587
  %598 = vst [vmem:[%s3 + $0x8] sm:$0xf] %v588
  %599 = vst [vmem:[%s3 + $0xc] sm:$0xf] %v589
  %600 = vst [vmem:[%s3 + $0x10] sm:$0xf] %v590
  // Predicated region
  $region14: #{nvidia_forward.10} parent=0 // pred_check
    _
  $region15: #{nvidia_forward.10} parent=0 // pred_check_branch
    %602 = sbr.rel (0) target = $region17
  $region16: #{nvidia_forward.10} parent=0 // pred_region
    _
  $region17: #{nvidia_forward.10} parent=0 // pred_fallthru
    _
  // Predicated region
  $region18: #{nvidia_forward.10} parent=0 // pred_check
    _
  $region19: #{nvidia_forward.10} parent=0 // pred_check_branch
    %604 = sbr.rel (0) target = $region21
  $region20: #{nvidia_forward.10} parent=0 // pred_region
    _
  $region21: #{nvidia_forward.10} parent=0 // pred_fallthru
    _

// kernel: nvidia_forward.11
$region0: #{nvidia_forward.11}
  #allocation0 [shape = 'u32[]', space=smem, size = 0x4, offset = 0x4, fixed_abs, tag = 'smem constant byte address 0x4 - core index']
  #allocation1 [shape = 'u32[144,128]{1,0:T(1,128)}', space=vmem, size = 0x12000, scoped, tag = 'internal scratch']
  %s0 = inlined_call_operand.vmem [shape: bf16[8,1152], index: 0, kind: input, shape index: {}]
  %s1 = inlined_call_operand.vmem [shape: bf16[1152,1280], index: 1, kind: input, shape index: {}]
  %s2 = inlined_call_operand.vmem [shape: f32[1,1280], index: 2, kind: input, shape index: {}]
  %s3 = inlined_call_operand.vmem [shape: bf16[1280,128], index: 3, kind: input, shape index: {}]
  %s4 = inlined_call_operand.vmem [shape: f32[1,128], index: 4, kind: input, shape index: {}]
  %s5 = inlined_call_operand.vmem [shape: bf16[128,128], index: 5, kind: input, shape index: {}]
  %s6 = inlined_call_operand.vmem [shape: f32[1,128], index: 6, kind: input, shape index: {}]
  %s7 = inlined_call_operand.vmem [shape: bf16[128,128], index: 7, kind: input, shape index: {}]
  %s8 = inlined_call_operand.vmem [shape: f32[1,128], index: 8, kind: input, shape index: {}]
  %s9 = inlined_call_operand.vmem [shape: bf16[128,128], index: 9, kind: input, shape index: {}]
  %s10 = inlined_call_operand.vmem [shape: f32[1,128], index: 10, kind: input, shape index: {}]
  %s11 = inlined_call_operand.vmem [shape: f32[8,128], index: 11, kind: output, shape index: {}]
  %s12 = sld [smem:[#allocation0]]
  $region54: #{nvidia_forward.11} parent=0
    _
  %s14 = ssub.s32 1, %s12
  %s15 = scalar_select 0, %s14, %s12
  // Predicated region
  $region2: #{nvidia_forward.11} parent=0 // pred_check
    _
  $region3: #{nvidia_forward.11} parent=0 // pred_check_branch
    %17 = sbr.rel (0) target = $region5
  $region4: #{nvidia_forward.11} parent=0 // pred_region
    _
  $region5: #{nvidia_forward.11} parent=0 // pred_fallthru
    _
  // Predicated region
  $region6: #{nvidia_forward.11} parent=0 // pred_check
    _
  $region7: #{nvidia_forward.11} parent=0 // pred_check_branch
    %19 = sbr.rel (0) target = $region9
  $region8: #{nvidia_forward.11} parent=0 // pred_region
    _
  $region9: #{nvidia_forward.11} parent=0 // pred_fallthru
    _
  // Predicated region
  $region10: #{nvidia_forward.11} parent=0 // pred_check
    _
  $region11: #{nvidia_forward.11} parent=0 // pred_check_branch
    %21 = sbr.rel (0) target = $region13
  $region12: #{nvidia_forward.11} parent=0 // pred_region
    _
  $region13: #{nvidia_forward.11} parent=0 // pred_fallthru
    _
  // Predicated region
  $region14: #{nvidia_forward.11} parent=0 // pred_check
    _
  $region15: #{nvidia_forward.11} parent=0 // pred_check_branch
    %23 = sbr.rel (0) target = $region17
  $region16: #{nvidia_forward.11} parent=0 // pred_region
    _
  $region17: #{nvidia_forward.11} parent=0 // pred_fallthru
    _
  // Predicated region
  $region18: #{nvidia_forward.11} parent=0 // pred_check
    _
  $region19: #{nvidia_forward.11} parent=0 // pred_check_branch
    %25 = sbr.rel (0) target = $region21
  $region20: #{nvidia_forward.11} parent=0 // pred_region
    _
  $region21: #{nvidia_forward.11} parent=0 // pred_fallthru
    _
  // Predicated region
  $region22: #{nvidia_forward.11} parent=0 // pred_check
    _
  $region23: #{nvidia_forward.11} parent=0 // pred_check_branch
    %27 = sbr.rel (0) target = $region25
  $region24: #{nvidia_forward.11} parent=0 // pred_region
    _
  $region25: #{nvidia_forward.11} parent=0 // pred_fallthru
    _
  // Predicated region
  $region26: #{nvidia_forward.11} parent=0 // pred_check
    _
  $region27: #{nvidia_forward.11} parent=0 // pred_check_branch
    %29 = sbr.rel (0) target = $region29
  $region28: #{nvidia_forward.11} parent=0 // pred_region
    _
  $region29: #{nvidia_forward.11} parent=0 // pred_fallthru
    _
  // Predicated region
  $region30: #{nvidia_forward.11} parent=0 // pred_check
    _
  $region31: #{nvidia_forward.11} parent=0 // pred_check_branch
    %31 = sbr.rel (0) target = $region33
  $region32: #{nvidia_forward.11} parent=0 // pred_region
    _
  $region33: #{nvidia_forward.11} parent=0 // pred_fallthru
    _
  // Predicated region
  $region34: #{nvidia_forward.11} parent=0 // pred_check
    _
  $region35: #{nvidia_forward.11} parent=0 // pred_check_branch
    %33 = sbr.rel (0) target = $region37
  $region36: #{nvidia_forward.11} parent=0 // pred_region
    _
  $region37: #{nvidia_forward.11} parent=0 // pred_fallthru
    _
  // Predicated region
  $region38: #{nvidia_forward.11} parent=0 // pred_check
    _
  $region39: #{nvidia_forward.11} parent=0 // pred_check_branch
    %35 = sbr.rel (0) target = $region41
  $region40: #{nvidia_forward.11} parent=0 // pred_region
    _
  $region41: #{nvidia_forward.11} parent=0 // pred_fallthru
    _
  // Predicated region
  $region42: #{nvidia_forward.11} parent=0 // pred_check
    _
  $region43: #{nvidia_forward.11} parent=0 // pred_check_branch
    %37 = sbr.rel (0) target = $region45
  $region44: #{nvidia_forward.11} parent=0 // pred_region
    _
  $region45: #{nvidia_forward.11} parent=0 // pred_fallthru
    _
  %v39 = vld [vmem:[%s0] sm:$0xff]
  %v40 = vld [vmem:[%s0 + $0x8] sm:$0xff]
  %v41 = vld [vmem:[%s0 + $0x10] sm:$0xff]
  %v42 = vld [vmem:[%s0 + $0x18] sm:$0xff]
  %v43 = vld [vmem:[%s0 + $0x20] sm:$0xf]
  %v44 = vld [vmem:[%s1] sm:$0xff]
  %v45 = vld [vmem:[%s1 + $0x8] sm:$0xff]
  %v46 = vld [vmem:[%s1 + $0x10] sm:$0xff]
  %v47 = vld [vmem:[%s1 + $0x18] sm:$0xff]
  %v48 = vld [vmem:[%s1 + $0x20] sm:$0xff]
  %v49 = vld [vmem:[%s1 + $0x28] sm:$0xff]
  %v50 = vld [vmem:[%s1 + $0x30] sm:$0xff]
  %v51 = vld [vmem:[%s1 + $0x38] sm:$0xff]
  %v52 = vld [vmem:[%s1 + $0x40] sm:$0xff]
  %v53 = vld [vmem:[%s1 + $0x48] sm:$0xff]
  %v54 = vld [vmem:[%s1 + $0x50] sm:$0xff]
  %v55 = vld [vmem:[%s1 + $0x58] sm:$0xff]
  %v56 = vld [vmem:[%s1 + $0x60] sm:$0xff]
  %v57 = vld [vmem:[%s1 + $0x68] sm:$0xff]
  %v58 = vld [vmem:[%s1 + $0x70] sm:$0xff]
  %v59 = vld [vmem:[%s1 + $0x78] sm:$0xff]
  %v60 = vld [vmem:[%s1 + $0x80] sm:$0xff]
  %v61 = vld [vmem:[%s1 + $0x88] sm:$0xff]
  %v62 = vld [vmem:[%s1 + $0x90] sm:$0xff]
  %v63 = vld [vmem:[%s1 + $0x98] sm:$0xff]
  %v64 = vld [vmem:[%s1 + $0xa0] sm:$0xff]
  %v65 = vld [vmem:[%s1 + $0xa8] sm:$0xff]
  %v66 = vld [vmem:[%s1 + $0xb0] sm:$0xff]
  %v67 = vld [vmem:[%s1 + $0xb8] sm:$0xff]
  %v68 = vld [vmem:[%s1 + $0xc0] sm:$0xff]
  %v69 = vld [vmem:[%s1 + $0xc8] sm:$0xff]
  %v70 = vld [vmem:[%s1 + $0xd0] sm:$0xff]
  %v71 = vld [vmem:[%s1 + $0xd8] sm:$0xff]
  %v72 = vld [vmem:[%s1 + $0xe0] sm:$0xff]
  %v73 = vld [vmem:[%s1 + $0xe8] sm:$0xff]
  %v74 = vld [vmem:[%s1 + $0xf0] sm:$0xff]
  %v75 = vld [vmem:[%s1 + $0xf8] sm:$0xff]
  %v76 = vld [vmem:[%s1 + $0x100] sm:$0xff]
  %v77 = vld [vmem:[%s1 + $0x108] sm:$0xff]
  %v78 = vld [vmem:[%s1 + $0x110] sm:$0xff]
  %v79 = vld [vmem:[%s1 + $0x118] sm:$0xff]
  %v80 = vld [vmem:[%s1 + $0x120] sm:$0xff]
  %v81 = vld [vmem:[%s1 + $0x128] sm:$0xff]
  %v82 = vld [vmem:[%s1 + $0x130] sm:$0xff]
  %v83 = vld [vmem:[%s1 + $0x138] sm:$0xff]
  %v84 = vld [vmem:[%s1 + $0x140] sm:$0xff]
  %v85 = vld [vmem:[%s1 + $0x148] sm:$0xff]
  %v86 = vld [vmem:[%s1 + $0x150] sm:$0xff]
  %v87 = vld [vmem:[%s1 + $0x158] sm:$0xff]
  %v88 = vld [vmem:[%s1 + $0x160] sm:$0xff]
  %v89 = vld [vmem:[%s1 + $0x168] sm:$0xff]
  %v90 = vld [vmem:[%s1 + $0x170] sm:$0xff]
  %v91 = vld [vmem:[%s1 + $0x178] sm:$0xff]
  %v92 = vld [vmem:[%s1 + $0x180] sm:$0xff]
  %v93 = vld [vmem:[%s1 + $0x188] sm:$0xff]
  %v94 = vld [vmem:[%s1 + $0x190] sm:$0xff]
  %v95 = vld [vmem:[%s1 + $0x198] sm:$0xff]
  %v96 = vld [vmem:[%s1 + $0x1a0] sm:$0xff]
  %v97 = vld [vmem:[%s1 + $0x1a8] sm:$0xff]
  %v98 = vld [vmem:[%s1 + $0x1b0] sm:$0xff]
  %v99 = vld [vmem:[%s1 + $0x1b8] sm:$0xff]
  %v100 = vld [vmem:[%s1 + $0x1c0] sm:$0xff]
  %v101 = vld [vmem:[%s1 + $0x1c8] sm:$0xff]
  %v102 = vld [vmem:[%s1 + $0x1d0] sm:$0xff]
  %v103 = vld [vmem:[%s1 + $0x1d8] sm:$0xff]
  %v104 = vld [vmem:[%s1 + $0x1e0] sm:$0xff]
  %v105 = vld [vmem:[%s1 + $0x1e8] sm:$0xff]
  %v106 = vld [vmem:[%s1 + $0x1f0] sm:$0xff]
  %v107 = vld [vmem:[%s1 + $0x1f8] sm:$0xff]
  %v108 = vld [vmem:[%s1 + $0x200] sm:$0xff]
  %v109 = vld [vmem:[%s1 + $0x208] sm:$0xff]
  %v110 = vld [vmem:[%s1 + $0x210] sm:$0xff]
  %v111 = vld [vmem:[%s1 + $0x218] sm:$0xff]
  %v112 = vld [vmem:[%s1 + $0x220] sm:$0xff]
  %v113 = vld [vmem:[%s1 + $0x228] sm:$0xff]
  %v114 = vld [vmem:[%s1 + $0x230] sm:$0xff]
  %v115 = vld [vmem:[%s1 + $0x238] sm:$0xff]
  %v116 = vld [vmem:[%s1 + $0x240] sm:$0xff]
  %v117 = vld [vmem:[%s1 + $0x248] sm:$0xff]
  %v118 = vld [vmem:[%s1 + $0x250] sm:$0xff]
  %v119 = vld [vmem:[%s1 + $0x258] sm:$0xff]
  %v120 = vld [vmem:[%s1 + $0x260] sm:$0xff]
  %v121 = vld [vmem:[%s1 + $0x268] sm:$0xff]
  %v122 = vld [vmem:[%s1 + $0x270] sm:$0xff]
  %v123 = vld [vmem:[%s1 + $0x278] sm:$0xff]
  %v124 = vld [vmem:[%s1 + $0x280] sm:$0xff]
  %v125 = vld [vmem:[%s1 + $0x288] sm:$0xff]
  %v126 = vld [vmem:[%s1 + $0x290] sm:$0xff]
  %v127 = vld [vmem:[%s1 + $0x298] sm:$0xff]
  %v128 = vld [vmem:[%s1 + $0x2a0] sm:$0xff]
  %v129 = vld [vmem:[%s1 + $0x2a8] sm:$0xff]
  %v130 = vld [vmem:[%s1 + $0x2b0] sm:$0xff]
  %v131 = vld [vmem:[%s1 + $0x2b8] sm:$0xff]
  %v132 = vld [vmem:[%s1 + $0x2c0] sm:$0xff]
  %v133 = vld [vmem:[%s1 + $0x2c8] sm:$0xff]
  %v134 = vld [vmem:[%s1 + $0x2d0] sm:$0xff]
  %v135 = vld [vmem:[%s1 + $0x2d8] sm:$0xff]
  %v136 = vld [vmem:[%s1 + $0x2e0] sm:$0xff]
  %v137 = vld [vmem:[%s1 + $0x2e8] sm:$0xff]
  %v138 = vld [vmem:[%s1 + $0x2f0] sm:$0xff]
  %v139 = vld [vmem:[%s1 + $0x2f8] sm:$0xff]
  %v140 = vld [vmem:[%s1 + $0x300] sm:$0xff]
  %v141 = vld [vmem:[%s1 + $0x308] sm:$0xff]
  %v142 = vld [vmem:[%s1 + $0x310] sm:$0xff]
  %v143 = vld [vmem:[%s1 + $0x318] sm:$0xff]
  %v144 = vld [vmem:[%s1 + $0x320] sm:$0xff]
  %v145 = vld [vmem:[%s1 + $0x328] sm:$0xff]
  %v146 = vld [vmem:[%s1 + $0x330] sm:$0xff]
  %v147 = vld [vmem:[%s1 + $0x338] sm:$0xff]
  %v148 = vld [vmem:[%s1 + $0x340] sm:$0xff]
  %v149 = vld [vmem:[%s1 + $0x348] sm:$0xff]
  %v150 = vld [vmem:[%s1 + $0x350] sm:$0xff]
  %v151 = vld [vmem:[%s1 + $0x358] sm:$0xff]
  %v152 = vld [vmem:[%s1 + $0x360] sm:$0xff]
  %v153 = vld [vmem:[%s1 + $0x368] sm:$0xff]
  %v154 = vld [vmem:[%s1 + $0x370] sm:$0xff]
  %v155 = vld [vmem:[%s1 + $0x378] sm:$0xff]
  %v156 = vld [vmem:[%s1 + $0x380] sm:$0xff]
  %v157 = vld [vmem:[%s1 + $0x388] sm:$0xff]
  %v158 = vld [vmem:[%s1 + $0x390] sm:$0xff]
  %v159 = vld [vmem:[%s1 + $0x398] sm:$0xff]
  %v160 = vld [vmem:[%s1 + $0x3a0] sm:$0xff]
  %v161 = vld [vmem:[%s1 + $0x3a8] sm:$0xff]
  %v162 = vld [vmem:[%s1 + $0x3b0] sm:$0xff]
  %v163 = vld [vmem:[%s1 + $0x3b8] sm:$0xff]
  %v164 = vld [vmem:[%s1 + $0x3c0] sm:$0xff]
  %v165 = vld [vmem:[%s1 + $0x3c8] sm:$0xff]
  %v166 = vld [vmem:[%s1 + $0x3d0] sm:$0xff]
  %v167 = vld [vmem:[%s1 + $0x3d8] sm:$0xff]
  %v168 = vld [vmem:[%s1 + $0x3e0] sm:$0xff]
  %v169 = vld [vmem:[%s1 + $0x3e8] sm:$0xff]
  %v170 = vld [vmem:[%s1 + $0x3f0] sm:$0xff]
  %v171 = vld [vmem:[%s1 + $0x3f8] sm:$0xff]
  %v172 = vld [vmem:[%s1 + $0x400] sm:$0xff]
  %v173 = vld [vmem:[%s1 + $0x408] sm:$0xff]
  %v174 = vld [vmem:[%s1 + $0x410] sm:$0xff]
  %v175 = vld [vmem:[%s1 + $0x418] sm:$0xff]
  %v176 = vld [vmem:[%s1 + $0x420] sm:$0xff]
  %v177 = vld [vmem:[%s1 + $0x428] sm:$0xff]
  %v178 = vld [vmem:[%s1 + $0x430] sm:$0xff]
  %v179 = vld [vmem:[%s1 + $0x438] sm:$0xff]
  %v180 = vld [vmem:[%s1 + $0x440] sm:$0xff]
  %v181 = vld [vmem:[%s1 + $0x448] sm:$0xff]
  %v182 = vld [vmem:[%s1 + $0x450] sm:$0xff]
  %v183 = vld [vmem:[%s1 + $0x458] sm:$0xff]
  %v184 = vld [vmem:[%s1 + $0x460] sm:$0xff]
  %v185 = vld [vmem:[%s1 + $0x468] sm:$0xff]
  %v186 = vld [vmem:[%s1 + $0x470] sm:$0xff]
  %v187 = vld [vmem:[%s1 + $0x478] sm:$0xff]
  %v188 = vld [vmem:[%s1 + $0x480] sm:$0xff]
  %v189 = vld [vmem:[%s1 + $0x488] sm:$0xff]
  %v190 = vld [vmem:[%s1 + $0x490] sm:$0xff]
  %v191 = vld [vmem:[%s1 + $0x498] sm:$0xff]
  %v192 = vld [vmem:[%s1 + $0x4a0] sm:$0xff]
  %v193 = vld [vmem:[%s1 + $0x4a8] sm:$0xff]
  %v194 = vld [vmem:[%s1 + $0x4b0] sm:$0xff]
  %v195 = vld [vmem:[%s1 + $0x4b8] sm:$0xff]
  %v196 = vld [vmem:[%s1 + $0x4c0] sm:$0xff]
  %v197 = vld [vmem:[%s1 + $0x4c8] sm:$0xff]
  %v198 = vld [vmem:[%s1 + $0x4d0] sm:$0xff]
  %v199 = vld [vmem:[%s1 + $0x4d8] sm:$0xff]
  %v200 = vld [vmem:[%s1 + $0x4e0] sm:$0xff]
  %v201 = vld [vmem:[%s1 + $0x4e8] sm:$0xff]
  %v202 = vld [vmem:[%s1 + $0x4f0] sm:$0xff]
  %v203 = vld [vmem:[%s1 + $0x4f8] sm:$0xff]
  %v204 = vld [vmem:[%s1 + $0x500] sm:$0xff]
  %v205 = vld [vmem:[%s1 + $0x508] sm:$0xff]
  %v206 = vld [vmem:[%s1 + $0x510] sm:$0xff]
  %v207 = vld [vmem:[%s1 + $0x518] sm:$0xff]
  %v208 = vld [vmem:[%s1 + $0x520] sm:$0xff]
  %v209 = vld [vmem:[%s1 + $0x528] sm:$0xff]
  %v210 = vld [vmem:[%s1 + $0x530] sm:$0xff]
  %v211 = vld [vmem:[%s1 + $0x538] sm:$0xff]
  %v212 = vld [vmem:[%s1 + $0x540] sm:$0xff]
  %v213 = vld [vmem:[%s1 + $0x548] sm:$0xff]
  %v214 = vld [vmem:[%s1 + $0x550] sm:$0xff]
  %v215 = vld [vmem:[%s1 + $0x558] sm:$0xff]
  %v216 = vld [vmem:[%s1 + $0x560] sm:$0xff]
  %v217 = vld [vmem:[%s1 + $0x568] sm:$0xff]
  %v218 = vld [vmem:[%s1 + $0x570] sm:$0xff]
  %v219 = vld [vmem:[%s1 + $0x578] sm:$0xff]
  %v220 = vld [vmem:[%s1 + $0x580] sm:$0xff]
  %v221 = vld [vmem:[%s1 + $0x588] sm:$0xff]
  %v222 = vld [vmem:[%s1 + $0x590] sm:$0xff]
  %v223 = vld [vmem:[%s1 + $0x598] sm:$0xff]
  %v224 = vld [vmem:[%s1 + $0x5a0] sm:$0xff]
  %v225 = vld [vmem:[%s1 + $0x5a8] sm:$0xff]
  %v226 = vld [vmem:[%s1 + $0x5b0] sm:$0xff]
  %v227 = vld [vmem:[%s1 + $0x5b8] sm:$0xff]
  %v228 = vld [vmem:[%s1 + $0x5c0] sm:$0xff]
  %v229 = vld [vmem:[%s1 + $0x5c8] sm:$0xff]
  %v230 = vld [vmem:[%s1 + $0x5d0] sm:$0xff]
  %v231 = vld [vmem:[%s1 + $0x5d8] sm:$0xff]
  %v232 = vld [vmem:[%s1 + $0x5e0] sm:$0xff]
  %v233 = vld [vmem:[%s1 + $0x5e8] sm:$0xff]
  %v234 = vld [vmem:[%s1 + $0x5f0] sm:$0xff]
  %v235 = vld [vmem:[%s1 + $0x5f8] sm:$0xff]
  %v236 = vld [vmem:[%s1 + $0x600] sm:$0xff]
  %v237 = vld [vmem:[%s1 + $0x608] sm:$0xff]
  %v238 = vld [vmem:[%s1 + $0x610] sm:$0xff]
  %v239 = vld [vmem:[%s1 + $0x618] sm:$0xff]
  %v240 = vld [vmem:[%s1 + $0x620] sm:$0xff]
  %v241 = vld [vmem:[%s1 + $0x628] sm:$0xff]
  %v242 = vld [vmem:[%s1 + $0x630] sm:$0xff]
  %v243 = vld [vmem:[%s1 + $0x638] sm:$0xff]
  %v244 = vld [vmem:[%s1 + $0x640] sm:$0xff]
  %v245 = vld [vmem:[%s1 + $0x648] sm:$0xff]
  %v246 = vld [vmem:[%s1 + $0x650] sm:$0xff]
  %v247 = vld [vmem:[%s1 + $0x658] sm:$0xff]
  %v248 = vld [vmem:[%s1 + $0x660] sm:$0xff]
  %v249 = vld [vmem:[%s1 + $0x668] sm:$0xff]
  %v250 = vld [vmem:[%s1 + $0x670] sm:$0xff]
  %v251 = vld [vmem:[%s1 + $0x678] sm:$0xff]
  %v252 = vld [vmem:[%s1 + $0x680] sm:$0xff]
  %v253 = vld [vmem:[%s1 + $0x688] sm:$0xff]
  %v254 = vld [vmem:[%s1 + $0x690] sm:$0xff]
  %v255 = vld [vmem:[%s1 + $0x698] sm:$0xff]
  %v256 = vld [vmem:[%s1 + $0x6a0] sm:$0xff]
  %v257 = vld [vmem:[%s1 + $0x6a8] sm:$0xff]
  %v258 = vld [vmem:[%s1 + $0x6b0] sm:$0xff]
  %v259 = vld [vmem:[%s1 + $0x6b8] sm:$0xff]
  %v260 = vld [vmem:[%s1 + $0x6c0] sm:$0xff]
  %v261 = vld [vmem:[%s1 + $0x6c8] sm:$0xff]
  %v262 = vld [vmem:[%s1 + $0x6d0] sm:$0xff]
  %v263 = vld [vmem:[%s1 + $0x6d8] sm:$0xff]
  %v264 = vld [vmem:[%s1 + $0x6e0] sm:$0xff]
  %v265 = vld [vmem:[%s1 + $0x6e8] sm:$0xff]
  %v266 = vld [vmem:[%s1 + $0x6f0] sm:$0xff]
  %v267 = vld [vmem:[%s1 + $0x6f8] sm:$0xff]
  %v268 = vld [vmem:[%s1 + $0x700] sm:$0xff]
  %v269 = vld [vmem:[%s1 + $0x708] sm:$0xff]
  %v270 = vld [vmem:[%s1 + $0x710] sm:$0xff]
  %v271 = vld [vmem:[%s1 + $0x718] sm:$0xff]
  %v272 = vld [vmem:[%s1 + $0x720] sm:$0xff]
  %v273 = vld [vmem:[%s1 + $0x728] sm:$0xff]
  %v274 = vld [vmem:[%s1 + $0x730] sm:$0xff]
  %v275 = vld [vmem:[%s1 + $0x738] sm:$0xff]
  %v276 = vld [vmem:[%s1 + $0x740] sm:$0xff]
  %v277 = vld [vmem:[%s1 + $0x748] sm:$0xff]
  %v278 = vld [vmem:[%s1 + $0x750] sm:$0xff]
  %v279 = vld [vmem:[%s1 + $0x758] sm:$0xff]
  %v280 = vld [vmem:[%s1 + $0x760] sm:$0xff]
  %v281 = vld [vmem:[%s1 + $0x768] sm:$0xff]
  %v282 = vld [vmem:[%s1 + $0x770] sm:$0xff]
  %v283 = vld [vmem:[%s1 + $0x778] sm:$0xff]
  %v284 = vld [vmem:[%s1 + $0x780] sm:$0xff]
  %v285 = vld [vmem:[%s1 + $0x788] sm:$0xff]
  %v286 = vld [vmem:[%s1 + $0x790] sm:$0xff]
  %v287 = vld [vmem:[%s1 + $0x798] sm:$0xff]
  %v288 = vld [vmem:[%s1 + $0x7a0] sm:$0xff]
  %v289 = vld [vmem:[%s1 + $0x7a8] sm:$0xff]
  %v290 = vld [vmem:[%s1 + $0x7b0] sm:$0xff]
  %v291 = vld [vmem:[%s1 + $0x7b8] sm:$0xff]
  %v292 = vld [vmem:[%s1 + $0x7c0] sm:$0xff]
  %v293 = vld [vmem:[%s1 + $0x7c8] sm:$0xff]
  %v294 = vld [vmem:[%s1 + $0x7d0] sm:$0xff]
  %v295 = vld [vmem:[%s1 + $0x7d8] sm:$0xff]
  %v296 = vld [vmem:[%s1 + $0x7e0] sm:$0xff]
  %v297 = vld [vmem:[%s1 + $0x7e8] sm:$0xff]
  %v298 = vld [vmem:[%s1 + $0x7f0] sm:$0xff]
  %v299 = vld [vmem:[%s1 + $0x7f8] sm:$0xff]
  %v300 = vld [vmem:[%s1 + $0x800] sm:$0xff]
  %v301 = vld [vmem:[%s1 + $0x808] sm:$0xff]
  %v302 = vld [vmem:[%s1 + $0x810] sm:$0xff]
  %v303 = vld [vmem:[%s1 + $0x818] sm:$0xff]
  %v304 = vld [vmem:[%s1 + $0x820] sm:$0xff]
  %v305 = vld [vmem:[%s1 + $0x828] sm:$0xff]
  %v306 = vld [vmem:[%s1 + $0x830] sm:$0xff]
  %v307 = vld [vmem:[%s1 + $0x838] sm:$0xff]
  %v308 = vld [vmem:[%s1 + $0x840] sm:$0xff]
  %v309 = vld [vmem:[%s1 + $0x848] sm:$0xff]
  %v310 = vld [vmem:[%s1 + $0x850] sm:$0xff]
  %v311 = vld [vmem:[%s1 + $0x858] sm:$0xff]
  %v312 = vld [vmem:[%s1 + $0x860] sm:$0xff]
  %v313 = vld [vmem:[%s1 + $0x868] sm:$0xff]
  %v314 = vld [vmem:[%s1 + $0x870] sm:$0xff]
  %v315 = vld [vmem:[%s1 + $0x878] sm:$0xff]
  %v316 = vld [vmem:[%s1 + $0x880] sm:$0xff]
  %v317 = vld [vmem:[%s1 + $0x888] sm:$0xff]
  %v318 = vld [vmem:[%s1 + $0x890] sm:$0xff]
  %v319 = vld [vmem:[%s1 + $0x898] sm:$0xff]
  %v320 = vld [vmem:[%s1 + $0x8a0] sm:$0xff]
  %v321 = vld [vmem:[%s1 + $0x8a8] sm:$0xff]
  %v322 = vld [vmem:[%s1 + $0x8b0] sm:$0xff]
  %v323 = vld [vmem:[%s1 + $0x8b8] sm:$0xff]
  %v324 = vld [vmem:[%s1 + $0x8c0] sm:$0xff]
  %v325 = vld [vmem:[%s1 + $0x8c8] sm:$0xff]
  %v326 = vld [vmem:[%s1 + $0x8d0] sm:$0xff]
  %v327 = vld [vmem:[%s1 + $0x8d8] sm:$0xff]
  %v328 = vld [vmem:[%s1 + $0x8e0] sm:$0xff]
  %v329 = vld [vmem:[%s1 + $0x8e8] sm:$0xff]
  %v330 = vld [vmem:[%s1 + $0x8f0] sm:$0xff]
  %v331 = vld [vmem:[%s1 + $0x8f8] sm:$0xff]
  %v332 = vld [vmem:[%s1 + $0x900] sm:$0xff]
  %v333 = vld [vmem:[%s1 + $0x908] sm:$0xff]
  %v334 = vld [vmem:[%s1 + $0x910] sm:$0xff]
  %v335 = vld [vmem:[%s1 + $0x918] sm:$0xff]
  %v336 = vld [vmem:[%s1 + $0x920] sm:$0xff]
  %v337 = vld [vmem:[%s1 + $0x928] sm:$0xff]
  %v338 = vld [vmem:[%s1 + $0x930] sm:$0xff]
  %v339 = vld [vmem:[%s1 + $0x938] sm:$0xff]
  %v340 = vld [vmem:[%s1 + $0x940] sm:$0xff]
  %v341 = vld [vmem:[%s1 + $0x948] sm:$0xff]
  %v342 = vld [vmem:[%s1 + $0x950] sm:$0xff]
  %v343 = vld [vmem:[%s1 + $0x958] sm:$0xff]
  %v344 = vld [vmem:[%s1 + $0x960] sm:$0xff]
  %v345 = vld [vmem:[%s1 + $0x968] sm:$0xff]
  %v346 = vld [vmem:[%s1 + $0x970] sm:$0xff]
  %v347 = vld [vmem:[%s1 + $0x978] sm:$0xff]
  %v348 = vld [vmem:[%s1 + $0x980] sm:$0xff]
  %v349 = vld [vmem:[%s1 + $0x988] sm:$0xff]
  %v350 = vld [vmem:[%s1 + $0x990] sm:$0xff]
  %v351 = vld [vmem:[%s1 + $0x998] sm:$0xff]
  %v352 = vld [vmem:[%s1 + $0x9a0] sm:$0xff]
  %v353 = vld [vmem:[%s1 + $0x9a8] sm:$0xff]
  %v354 = vld [vmem:[%s1 + $0x9b0] sm:$0xff]
  %v355 = vld [vmem:[%s1 + $0x9b8] sm:$0xff]
  %v356 = vld [vmem:[%s1 + $0x9c0] sm:$0xff]
  %v357 = vld [vmem:[%s1 + $0x9c8] sm:$0xff]
  %v358 = vld [vmem:[%s1 + $0x9d0] sm:$0xff]
  %v359 = vld [vmem:[%s1 + $0x9d8] sm:$0xff]
  %v360 = vld [vmem:[%s1 + $0x9e0] sm:$0xff]
  %v361 = vld [vmem:[%s1 + $0x9e8] sm:$0xff]
  %v362 = vld [vmem:[%s1 + $0x9f0] sm:$0xff]
  %v363 = vld [vmem:[%s1 + $0x9f8] sm:$0xff]
  %v364 = vld [vmem:[%s1 + $0xa00] sm:$0xff]
  %v365 = vld [vmem:[%s1 + $0xa08] sm:$0xff]
  %v366 = vld [vmem:[%s1 + $0xa10] sm:$0xff]
  %v367 = vld [vmem:[%s1 + $0xa18] sm:$0xff]
  %v368 = vld [vmem:[%s1 + $0xa20] sm:$0xff]
  %v369 = vld [vmem:[%s1 + $0xa28] sm:$0xff]
  %v370 = vld [vmem:[%s1 + $0xa30] sm:$0xff]
  %v371 = vld [vmem:[%s1 + $0xa38] sm:$0xff]
  %v372 = vld [vmem:[%s1 + $0xa40] sm:$0xff]
  %v373 = vld [vmem:[%s1 + $0xa48] sm:$0xff]
  %v374 = vld [vmem:[%s1 + $0xa50] sm:$0xff]
  %v375 = vld [vmem:[%s1 + $0xa58] sm:$0xff]
  %v376 = vld [vmem:[%s1 + $0xa60] sm:$0xff]
  %v377 = vld [vmem:[%s1 + $0xa68] sm:$0xff]
  %v378 = vld [vmem:[%s1 + $0xa70] sm:$0xff]
  %v379 = vld [vmem:[%s1 + $0xa78] sm:$0xff]
  %v380 = vld [vmem:[%s1 + $0xa80] sm:$0xff]
  %v381 = vld [vmem:[%s1 + $0xa88] sm:$0xff]
  %v382 = vld [vmem:[%s1 + $0xa90] sm:$0xff]
  %v383 = vld [vmem:[%s1 + $0xa98] sm:$0xff]
  %v384 = vld [vmem:[%s1 + $0xaa0] sm:$0xff]
  %v385 = vld [vmem:[%s1 + $0xaa8] sm:$0xff]
  %v386 = vld [vmem:[%s1 + $0xab0] sm:$0xff]
  %v387 = vld [vmem:[%s1 + $0xab8] sm:$0xff]
  %v388 = vld [vmem:[%s1 + $0xac0] sm:$0xff]
  %v389 = vld [vmem:[%s1 + $0xac8] sm:$0xff]
  %v390 = vld [vmem:[%s1 + $0xad0] sm:$0xff]
  %v391 = vld [vmem:[%s1 + $0xad8] sm:$0xff]
  %v392 = vld [vmem:[%s1 + $0xae0] sm:$0xff]
  %v393 = vld [vmem:[%s1 + $0xae8] sm:$0xff]
  %v394 = vld [vmem:[%s1 + $0xaf0] sm:$0xff]
  %v395 = vld [vmem:[%s1 + $0xaf8] sm:$0xff]
  %v396 = vld [vmem:[%s1 + $0xb00] sm:$0xff]
  %v397 = vld [vmem:[%s1 + $0xb08] sm:$0xff]
  %v398 = vld [vmem:[%s1 + $0xb10] sm:$0xff]
  %v399 = vld [vmem:[%s1 + $0xb18] sm:$0xff]
  %v400 = vld [vmem:[%s1 + $0xb20] sm:$0xff]
  %v401 = vld [vmem:[%s1 + $0xb28] sm:$0xff]
  %v402 = vld [vmem:[%s1 + $0xb30] sm:$0xff]
  %v403 = vld [vmem:[%s1 + $0xb38] sm:$0xff]
  %v404 = vld [vmem:[%s1 + $0xb40] sm:$0xff]
  %v405 = vld [vmem:[%s1 + $0xb48] sm:$0xff]
  %v406 = vld [vmem:[%s1 + $0xb50] sm:$0xff]
  %v407 = vld [vmem:[%s1 + $0xb58] sm:$0xff]
  %v408 = vld [vmem:[%s1 + $0xb60] sm:$0xff]
  %v409 = vld [vmem:[%s1 + $0xb68] sm:$0xff]
  %v410 = vld [vmem:[%s1 + $0xb70] sm:$0xff]
  %v411 = vld [vmem:[%s1 + $0xb78] sm:$0xff]
  %v412 = vld [vmem:[%s1 + $0xb80] sm:$0xff]
  %v413 = vld [vmem:[%s1 + $0xb88] sm:$0xff]
  %v414 = vld [vmem:[%s1 + $0xb90] sm:$0xff]
  %v415 = vld [vmem:[%s1 + $0xb98] sm:$0xff]
  %v416 = vld [vmem:[%s1 + $0xba0] sm:$0xff]
  %v417 = vld [vmem:[%s1 + $0xba8] sm:$0xff]
  %v418 = vld [vmem:[%s1 + $0xbb0] sm:$0xff]
  %v419 = vld [vmem:[%s1 + $0xbb8] sm:$0xff]
  %v420 = vld [vmem:[%s1 + $0xbc0] sm:$0xff]
  %v421 = vld [vmem:[%s1 + $0xbc8] sm:$0xff]
  %v422 = vld [vmem:[%s1 + $0xbd0] sm:$0xff]
  %v423 = vld [vmem:[%s1 + $0xbd8] sm:$0xff]
  %v424 = vld [vmem:[%s1 + $0xbe0] sm:$0xff]
  %v425 = vld [vmem:[%s1 + $0xbe8] sm:$0xff]
  %v426 = vld [vmem:[%s1 + $0xbf0] sm:$0xff]
  %v427 = vld [vmem:[%s1 + $0xbf8] sm:$0xff]
  %v428 = vld [vmem:[%s1 + $0xc00] sm:$0xff]
  %v429 = vld [vmem:[%s1 + $0xc08] sm:$0xff]
  %v430 = vld [vmem:[%s1 + $0xc10] sm:$0xff]
  %v431 = vld [vmem:[%s1 + $0xc18] sm:$0xff]
  %v432 = vld [vmem:[%s1 + $0xc20] sm:$0xff]
  %v433 = vld [vmem:[%s1 + $0xc28] sm:$0xff]
  %v434 = vld [vmem:[%s1 + $0xc30] sm:$0xff]
  %v435 = vld [vmem:[%s1 + $0xc38] sm:$0xff]
  %v436 = vld [vmem:[%s1 + $0xc40] sm:$0xff]
  %v437 = vld [vmem:[%s1 + $0xc48] sm:$0xff]
  %v438 = vld [vmem:[%s1 + $0xc50] sm:$0xff]
  %v439 = vld [vmem:[%s1 + $0xc58] sm:$0xff]
  %v440 = vld [vmem:[%s1 + $0xc60] sm:$0xff]
  %v441 = vld [vmem:[%s1 + $0xc68] sm:$0xff]
  %v442 = vld [vmem:[%s1 + $0xc70] sm:$0xff]
  %v443 = vld [vmem:[%s1 + $0xc78] sm:$0xff]
  %v444 = vld [vmem:[%s1 + $0xc80] sm:$0xff]
  %v445 = vld [vmem:[%s1 + $0xc88] sm:$0xff]
  %v446 = vld [vmem:[%s1 + $0xc90] sm:$0xff]
  %v447 = vld [vmem:[%s1 + $0xc98] sm:$0xff]
  %v448 = vld [vmem:[%s1 + $0xca0] sm:$0xff]
  %v449 = vld [vmem:[%s1 + $0xca8] sm:$0xff]
  %v450 = vld [vmem:[%s1 + $0xcb0] sm:$0xff]
  %v451 = vld [vmem:[%s1 + $0xcb8] sm:$0xff]
  %v452 = vld [vmem:[%s1 + $0xcc0] sm:$0xff]
  %v453 = vld [vmem:[%s1 + $0xcc8] sm:$0xff]
  %v454 = vld [vmem:[%s1 + $0xcd0] sm:$0xff]
  %v455 = vld [vmem:[%s1 + $0xcd8] sm:$0xff]
  %v456 = vld [vmem:[%s1 + $0xce0] sm:$0xff]
  %v457 = vld [vmem:[%s1 + $0xce8] sm:$0xff]
  %v458 = vld [vmem:[%s1 + $0xcf0] sm:$0xff]
  %v459 = vld [vmem:[%s1 + $0xcf8] sm:$0xff]
  %v460 = vld [vmem:[%s1 + $0xd00] sm:$0xff]
  %v461 = vld [vmem:[%s1 + $0xd08] sm:$0xff]
  %v462 = vld [vmem:[%s1 + $0xd10] sm:$0xff]
  %v463 = vld [vmem:[%s1 + $0xd18] sm:$0xff]
  %v464 = vld [vmem:[%s1 + $0xd20] sm:$0xff]
  %v465 = vld [vmem:[%s1 + $0xd28] sm:$0xff]
  %v466 = vld [vmem:[%s1 + $0xd30] sm:$0xff]
  %v467 = vld [vmem:[%s1 + $0xd38] sm:$0xff]
  %v468 = vld [vmem:[%s1 + $0xd40] sm:$0xff]
  %v469 = vld [vmem:[%s1 + $0xd48] sm:$0xff]
  %v470 = vld [vmem:[%s1 + $0xd50] sm:$0xff]
  %v471 = vld [vmem:[%s1 + $0xd58] sm:$0xff]
  %v472 = vld [vmem:[%s1 + $0xd60] sm:$0xff]
  %v473 = vld [vmem:[%s1 + $0xd68] sm:$0xff]
  %v474 = vld [vmem:[%s1 + $0xd70] sm:$0xff]
  %v475 = vld [vmem:[%s1 + $0xd78] sm:$0xff]
  %v476 = vld [vmem:[%s1 + $0xd80] sm:$0xff]
  %v477 = vld [vmem:[%s1 + $0xd88] sm:$0xff]
  %v478 = vld [vmem:[%s1 + $0xd90] sm:$0xff]
  %v479 = vld [vmem:[%s1 + $0xd98] sm:$0xff]
  %v480 = vld [vmem:[%s1 + $0xda0] sm:$0xff]
  %v481 = vld [vmem:[%s1 + $0xda8] sm:$0xff]
  %v482 = vld [vmem:[%s1 + $0xdb0] sm:$0xff]
  %v483 = vld [vmem:[%s1 + $0xdb8] sm:$0xff]
  %v484 = vld [vmem:[%s1 + $0xdc0] sm:$0xff]
  %v485 = vld [vmem:[%s1 + $0xdc8] sm:$0xff]
  %v486 = vld [vmem:[%s1 + $0xdd0] sm:$0xff]
  %v487 = vld [vmem:[%s1 + $0xdd8] sm:$0xff]
  %v488 = vld [vmem:[%s1 + $0xde0] sm:$0xff]
  %v489 = vld [vmem:[%s1 + $0xde8] sm:$0xff]
  %v490 = vld [vmem:[%s1 + $0xdf0] sm:$0xff]
  %v491 = vld [vmem:[%s1 + $0xdf8] sm:$0xff]
  %v492 = vld [vmem:[%s1 + $0xe00] sm:$0xff]
  %v493 = vld [vmem:[%s1 + $0xe08] sm:$0xff]
  %v494 = vld [vmem:[%s1 + $0xe10] sm:$0xff]
  %v495 = vld [vmem:[%s1 + $0xe18] sm:$0xff]
  %v496 = vld [vmem:[%s1 + $0xe20] sm:$0xff]
  %v497 = vld [vmem:[%s1 + $0xe28] sm:$0xff]
  %v498 = vld [vmem:[%s1 + $0xe30] sm:$0xff]
  %v499 = vld [vmem:[%s1 + $0xe38] sm:$0xff]
  %v500 = vld [vmem:[%s1 + $0xe40] sm:$0xff]
  %v501 = vld [vmem:[%s1 + $0xe48] sm:$0xff]
  %v502 = vld [vmem:[%s1 + $0xe50] sm:$0xff]
  %v503 = vld [vmem:[%s1 + $0xe58] sm:$0xff]
  %v504 = vld [vmem:[%s1 + $0xe60] sm:$0xff]
  %v505 = vld [vmem:[%s1 + $0xe68] sm:$0xff]
  %v506 = vld [vmem:[%s1 + $0xe70] sm:$0xff]
  %v507 = vld [vmem:[%s1 + $0xe78] sm:$0xff]
  %v508 = vld [vmem:[%s1 + $0xe80] sm:$0xff]
  %v509 = vld [vmem:[%s1 + $0xe88] sm:$0xff]
  %v510 = vld [vmem:[%s1 + $0xe90] sm:$0xff]
  %v511 = vld [vmem:[%s1 + $0xe98] sm:$0xff]
  %v512 = vld [vmem:[%s1 + $0xea0] sm:$0xff]
  %v513 = vld [vmem:[%s1 + $0xea8] sm:$0xff]
  %v514 = vld [vmem:[%s1 + $0xeb0] sm:$0xff]
  %v515 = vld [vmem:[%s1 + $0xeb8] sm:$0xff]
  %v516 = vld [vmem:[%s1 + $0xec0] sm:$0xff]
  %v517 = vld [vmem:[%s1 + $0xec8] sm:$0xff]
  %v518 = vld [vmem:[%s1 + $0xed0] sm:$0xff]
  %v519 = vld [vmem:[%s1 + $0xed8] sm:$0xff]
  %v520 = vld [vmem:[%s1 + $0xee0] sm:$0xff]
  %v521 = vld [vmem:[%s1 + $0xee8] sm:$0xff]
  %v522 = vld [vmem:[%s1 + $0xef0] sm:$0xff]
  %v523 = vld [vmem:[%s1 + $0xef8] sm:$0xff]
  %v524 = vld [vmem:[%s1 + $0xf00] sm:$0xff]
  %v525 = vld [vmem:[%s1 + $0xf08] sm:$0xff]
  %v526 = vld [vmem:[%s1 + $0xf10] sm:$0xff]
  %v527 = vld [vmem:[%s1 + $0xf18] sm:$0xff]
  %v528 = vld [vmem:[%s1 + $0xf20] sm:$0xff]
  %v529 = vld [vmem:[%s1 + $0xf28] sm:$0xff]
  %v530 = vld [vmem:[%s1 + $0xf30] sm:$0xff]
  %v531 = vld [vmem:[%s1 + $0xf38] sm:$0xff]
  %v532 = vld [vmem:[%s1 + $0xf40] sm:$0xff]
  %v533 = vld [vmem:[%s1 + $0xf48] sm:$0xff]
  %v534 = vld [vmem:[%s1 + $0xf50] sm:$0xff]
  %v535 = vld [vmem:[%s1 + $0xf58] sm:$0xff]
  %v536 = vld [vmem:[%s1 + $0xf60] sm:$0xff]
  %v537 = vld [vmem:[%s1 + $0xf68] sm:$0xff]
  %v538 = vld [vmem:[%s1 + $0xf70] sm:$0xff]
  %v539 = vld [vmem:[%s1 + $0xf78] sm:$0xff]
  %v540 = vld [vmem:[%s1 + $0xf80] sm:$0xff]
  %v541 = vld [vmem:[%s1 + $0xf88] sm:$0xff]
  %v542 = vld [vmem:[%s1 + $0xf90] sm:$0xff]
  %v543 = vld [vmem:[%s1 + $0xf98] sm:$0xff]
  %v544 = vld [vmem:[%s1 + $0xfa0] sm:$0xff]
  %v545 = vld [vmem:[%s1 + $0xfa8] sm:$0xff]
  %v546 = vld [vmem:[%s1 + $0xfb0] sm:$0xff]
  %v547 = vld [vmem:[%s1 + $0xfb8] sm:$0xff]
  %v548 = vld [vmem:[%s1 + $0xfc0] sm:$0xff]
  %v549 = vld [vmem:[%s1 + $0xfc8] sm:$0xff]
  %v550 = vld [vmem:[%s1 + $0xfd0] sm:$0xff]
  %v551 = vld [vmem:[%s1 + $0xfd8] sm:$0xff]
  %v552 = vld [vmem:[%s1 + $0xfe0] sm:$0xff]
  %v553 = vld [vmem:[%s1 + $0xfe8] sm:$0xff]
  %v554 = vld [vmem:[%s1 + $0xff0] sm:$0xff]
  %v555 = vld [vmem:[%s1 + $0xff8] sm:$0xff]
  %v556 = vld [vmem:[%s1 + $0x1000] sm:$0xff]
  %v557 = vld [vmem:[%s1 + $0x1008] sm:$0xff]
  %v558 = vld [vmem:[%s1 + $0x1010] sm:$0xff]
  %v559 = vld [vmem:[%s1 + $0x1018] sm:$0xff]
  %v560 = vld [vmem:[%s1 + $0x1020] sm:$0xff]
  %v561 = vld [vmem:[%s1 + $0x1028] sm:$0xff]
  %v562 = vld [vmem:[%s1 + $0x1030] sm:$0xff]
  %v563 = vld [vmem:[%s1 + $0x1038] sm:$0xff]
  %v564 = vld [vmem:[%s1 + $0x1040] sm:$0xff]
  %v565 = vld [vmem:[%s1 + $0x1048] sm:$0xff]
  %v566 = vld [vmem:[%s1 + $0x1050] sm:$0xff]
  %v567 = vld [vmem:[%s1 + $0x1058] sm:$0xff]
  %v568 = vld [vmem:[%s1 + $0x1060] sm:$0xff]
  %v569 = vld [vmem:[%s1 + $0x1068] sm:$0xff]
  %v570 = vld [vmem:[%s1 + $0x1070] sm:$0xff]
  %v571 = vld [vmem:[%s1 + $0x1078] sm:$0xff]
  %v572 = vld [vmem:[%s1 + $0x1080] sm:$0xff]
  %v573 = vld [vmem:[%s1 + $0x1088] sm:$0xff]
  %v574 = vld [vmem:[%s1 + $0x1090] sm:$0xff]
  %v575 = vld [vmem:[%s1 + $0x1098] sm:$0xff]
  %v576 = vld [vmem:[%s1 + $0x10a0] sm:$0xff]
  %v577 = vld [vmem:[%s1 + $0x10a8] sm:$0xff]
  %v578 = vld [vmem:[%s1 + $0x10b0] sm:$0xff]
  %v579 = vld [vmem:[%s1 + $0x10b8] sm:$0xff]
  %v580 = vld [vmem:[%s1 + $0x10c0] sm:$0xff]
  %v581 = vld [vmem:[%s1 + $0x10c8] sm:$0xff]
  %v582 = vld [vmem:[%s1 + $0x10d0] sm:$0xff]
  %v583 = vld [vmem:[%s1 + $0x10d8] sm:$0xff]
  %v584 = vld [vmem:[%s1 + $0x10e0] sm:$0xff]
  %v585 = vld [vmem:[%s1 + $0x10e8] sm:$0xff]
  %v586 = vld [vmem:[%s1 + $0x10f0] sm:$0xff]
  %v587 = vld [vmem:[%s1 + $0x10f8] sm:$0xff]
  %v588 = vld [vmem:[%s1 + $0x1100] sm:$0xff]
  %v589 = vld [vmem:[%s1 + $0x1108] sm:$0xff]
  %v590 = vld [vmem:[%s1 + $0x1110] sm:$0xff]
  %v591 = vld [vmem:[%s1 + $0x1118] sm:$0xff]
  %v592 = vld [vmem:[%s1 + $0x1120] sm:$0xff]
  %v593 = vld [vmem:[%s1 + $0x1128] sm:$0xff]
  %v594 = vld [vmem:[%s1 + $0x1130] sm:$0xff]
  %v595 = vld [vmem:[%s1 + $0x1138] sm:$0xff]
  %v596 = vld [vmem:[%s1 + $0x1140] sm:$0xff]
  %v597 = vld [vmem:[%s1 + $0x1148] sm:$0xff]
  %v598 = vld [vmem:[%s1 + $0x1150] sm:$0xff]
  %v599 = vld [vmem:[%s1 + $0x1158] sm:$0xff]
  %v600 = vld [vmem:[%s1 + $0x1160] sm:$0xff]
  %v601 = vld [vmem:[%s1 + $0x1168] sm:$0xff]
  %v602 = vld [vmem:[%s1 + $0x1170] sm:$0xff]
  %v603 = vld [vmem:[%s1 + $0x1178] sm:$0xff]
  %v604 = vld [vmem:[%s1 + $0x1180] sm:$0xff]
  %v605 = vld [vmem:[%s1 + $0x1188] sm:$0xff]
  %v606 = vld [vmem:[%s1 + $0x1190] sm:$0xff]
  %v607 = vld [vmem:[%s1 + $0x1198] sm:$0xff]
  %v608 = vld [vmem:[%s1 + $0x11a0] sm:$0xff]
  %v609 = vld [vmem:[%s1 + $0x11a8] sm:$0xff]
  %v610 = vld [vmem:[%s1 + $0x11b0] sm:$0xff]
  %v611 = vld [vmem:[%s1 + $0x11b8] sm:$0xff]
  %v612 = vld [vmem:[%s1 + $0x11c0] sm:$0xff]
  %v613 = vld [vmem:[%s1 + $0x11c8] sm:$0xff]
  %v614 = vld [vmem:[%s1 + $0x11d0] sm:$0xff]
  %v615 = vld [vmem:[%s1 + $0x11d8] sm:$0xff]
  %v616 = vld [vmem:[%s1 + $0x11e0] sm:$0xff]
  %v617 = vld [vmem:[%s1 + $0x11e8] sm:$0xff]
  %v618 = vld [vmem:[%s1 + $0x11f0] sm:$0xff]
  %v619 = vld [vmem:[%s1 + $0x11f8] sm:$0xff]
  %v620 = vld [vmem:[%s1 + $0x1200] sm:$0xff]
  %v621 = vld [vmem:[%s1 + $0x1208] sm:$0xff]
  %v622 = vld [vmem:[%s1 + $0x1210] sm:$0xff]
  %v623 = vld [vmem:[%s1 + $0x1218] sm:$0xff]
  %v624 = vld [vmem:[%s1 + $0x1220] sm:$0xff]
  %v625 = vld [vmem:[%s1 + $0x1228] sm:$0xff]
  %v626 = vld [vmem:[%s1 + $0x1230] sm:$0xff]
  %v627 = vld [vmem:[%s1 + $0x1238] sm:$0xff]
  %v628 = vld [vmem:[%s1 + $0x1240] sm:$0xff]
  %v629 = vld [vmem:[%s1 + $0x1248] sm:$0xff]
  %v630 = vld [vmem:[%s1 + $0x1250] sm:$0xff]
  %v631 = vld [vmem:[%s1 + $0x1258] sm:$0xff]
  %v632 = vld [vmem:[%s1 + $0x1260] sm:$0xff]
  %v633 = vld [vmem:[%s1 + $0x1268] sm:$0xff]
  %v634 = vld [vmem:[%s1 + $0x1270] sm:$0xff]
  %v635 = vld [vmem:[%s1 + $0x1278] sm:$0xff]
  %v636 = vld [vmem:[%s1 + $0x1280] sm:$0xff]
  %v637 = vld [vmem:[%s1 + $0x1288] sm:$0xff]
  %v638 = vld [vmem:[%s1 + $0x1290] sm:$0xff]
  %v639 = vld [vmem:[%s1 + $0x1298] sm:$0xff]
  %v640 = vld [vmem:[%s1 + $0x12a0] sm:$0xff]
  %v641 = vld [vmem:[%s1 + $0x12a8] sm:$0xff]
  %v642 = vld [vmem:[%s1 + $0x12b0] sm:$0xff]
  %v643 = vld [vmem:[%s1 + $0x12b8] sm:$0xff]
  %v644 = vld [vmem:[%s1 + $0x12c0] sm:$0xff]
  %v645 = vld [vmem:[%s1 + $0x12c8] sm:$0xff]
  %v646 = vld [vmem:[%s1 + $0x12d0] sm:$0xff]
  %v647 = vld [vmem:[%s1 + $0x12d8] sm:$0xff]
  %v648 = vld [vmem:[%s1 + $0x12e0] sm:$0xff]
  %v649 = vld [vmem:[%s1 + $0x12e8] sm:$0xff]
  %v650 = vld [vmem:[%s1 + $0x12f0] sm:$0xff]
  %v651 = vld [vmem:[%s1 + $0x12f8] sm:$0xff]
  %v652 = vld [vmem:[%s1 + $0x1300] sm:$0xff]
  %v653 = vld [vmem:[%s1 + $0x1308] sm:$0xff]
  %v654 = vld [vmem:[%s1 + $0x1310] sm:$0xff]
  %v655 = vld [vmem:[%s1 + $0x1318] sm:$0xff]
  %v656 = vld [vmem:[%s1 + $0x1320] sm:$0xff]
  %v657 = vld [vmem:[%s1 + $0x1328] sm:$0xff]
  %v658 = vld [vmem:[%s1 + $0x1330] sm:$0xff]
  %v659 = vld [vmem:[%s1 + $0x1338] sm:$0xff]
  %v660 = vld [vmem:[%s1 + $0x1340] sm:$0xff]
  %v661 = vld [vmem:[%s1 + $0x1348] sm:$0xff]
  %v662 = vld [vmem:[%s1 + $0x1350] sm:$0xff]
  %v663 = vld [vmem:[%s1 + $0x1358] sm:$0xff]
  %v664 = vld [vmem:[%s1 + $0x1360] sm:$0xff]
  %v665 = vld [vmem:[%s1 + $0x1368] sm:$0xff]
  %v666 = vld [vmem:[%s1 + $0x1370] sm:$0xff]
  %v667 = vld [vmem:[%s1 + $0x1378] sm:$0xff]
  %v668 = vld [vmem:[%s1 + $0x1380] sm:$0xff]
  %v669 = vld [vmem:[%s1 + $0x1388] sm:$0xff]
  %v670 = vld [vmem:[%s1 + $0x1390] sm:$0xff]
  %v671 = vld [vmem:[%s1 + $0x1398] sm:$0xff]
  %v672 = vld [vmem:[%s1 + $0x13a0] sm:$0xff]
  %v673 = vld [vmem:[%s1 + $0x13a8] sm:$0xff]
  %v674 = vld [vmem:[%s1 + $0x13b0] sm:$0xff]
  %v675 = vld [vmem:[%s1 + $0x13b8] sm:$0xff]
  %v676 = vld [vmem:[%s1 + $0x13c0] sm:$0xff]
  %v677 = vld [vmem:[%s1 + $0x13c8] sm:$0xff]
  %v678 = vld [vmem:[%s1 + $0x13d0] sm:$0xff]
  %v679 = vld [vmem:[%s1 + $0x13d8] sm:$0xff]
  %v680 = vld [vmem:[%s1 + $0x13e0] sm:$0xff]
  %v681 = vld [vmem:[%s1 + $0x13e8] sm:$0xff]
  %v682 = vld [vmem:[%s1 + $0x13f0] sm:$0xff]
  %v683 = vld [vmem:[%s1 + $0x13f8] sm:$0xff]
  %v684 = vld [vmem:[%s1 + $0x1400] sm:$0xff]
  %v685 = vld [vmem:[%s1 + $0x1408] sm:$0xff]
  %v686 = vld [vmem:[%s1 + $0x1410] sm:$0xff]
  %v687 = vld [vmem:[%s1 + $0x1418] sm:$0xff]
  %v688 = vld [vmem:[%s1 + $0x1420] sm:$0xff]
  %v689 = vld [vmem:[%s1 + $0x1428] sm:$0xff]
  %v690 = vld [vmem:[%s1 + $0x1430] sm:$0xff]
  %v691 = vld [vmem:[%s1 + $0x1438] sm:$0xff]
  %v692 = vld [vmem:[%s1 + $0x1440] sm:$0xff]
  %v693 = vld [vmem:[%s1 + $0x1448] sm:$0xff]
  %v694 = vld [vmem:[%s1 + $0x1450] sm:$0xff]
  %v695 = vld [vmem:[%s1 + $0x1458] sm:$0xff]
  %v696 = vld [vmem:[%s1 + $0x1460] sm:$0xff]
  %v697 = vld [vmem:[%s1 + $0x1468] sm:$0xff]
  %v698 = vld [vmem:[%s1 + $0x1470] sm:$0xff]
  %v699 = vld [vmem:[%s1 + $0x1478] sm:$0xff]
  %v700 = vld [vmem:[%s1 + $0x1480] sm:$0xff]
  %v701 = vld [vmem:[%s1 + $0x1488] sm:$0xff]
  %v702 = vld [vmem:[%s1 + $0x1490] sm:$0xff]
  %v703 = vld [vmem:[%s1 + $0x1498] sm:$0xff]
  %v704 = vld [vmem:[%s1 + $0x14a0] sm:$0xff]
  %v705 = vld [vmem:[%s1 + $0x14a8] sm:$0xff]
  %v706 = vld [vmem:[%s1 + $0x14b0] sm:$0xff]
  %v707 = vld [vmem:[%s1 + $0x14b8] sm:$0xff]
  %v708 = vld [vmem:[%s1 + $0x14c0] sm:$0xff]
  %v709 = vld [vmem:[%s1 + $0x14c8] sm:$0xff]
  %v710 = vld [vmem:[%s1 + $0x14d0] sm:$0xff]
  %v711 = vld [vmem:[%s1 + $0x14d8] sm:$0xff]
  %v712 = vld [vmem:[%s1 + $0x14e0] sm:$0xff]
  %v713 = vld [vmem:[%s1 + $0x14e8] sm:$0xff]
  %v714 = vld [vmem:[%s1 + $0x14f0] sm:$0xff]
  %v715 = vld [vmem:[%s1 + $0x14f8] sm:$0xff]
  %v716 = vld [vmem:[%s1 + $0x1500] sm:$0xff]
  %v717 = vld [vmem:[%s1 + $0x1508] sm:$0xff]
  %v718 = vld [vmem:[%s1 + $0x1510] sm:$0xff]
  %v719 = vld [vmem:[%s1 + $0x1518] sm:$0xff]
  %v720 = vld [vmem:[%s1 + $0x1520] sm:$0xff]
  %v721 = vld [vmem:[%s1 + $0x1528] sm:$0xff]
  %v722 = vld [vmem:[%s1 + $0x1530] sm:$0xff]
  %v723 = vld [vmem:[%s1 + $0x1538] sm:$0xff]
  %v724 = vld [vmem:[%s1 + $0x1540] sm:$0xff]
  %v725 = vld [vmem:[%s1 + $0x1548] sm:$0xff]
  %v726 = vld [vmem:[%s1 + $0x1550] sm:$0xff]
  %v727 = vld [vmem:[%s1 + $0x1558] sm:$0xff]
  %v728 = vld [vmem:[%s1 + $0x1560] sm:$0xff]
  %v729 = vld [vmem:[%s1 + $0x1568] sm:$0xff]
  %v730 = vld [vmem:[%s1 + $0x1570] sm:$0xff]
  %v731 = vld [vmem:[%s1 + $0x1578] sm:$0xff]
  %v732 = vld [vmem:[%s1 + $0x1580] sm:$0xff]
  %v733 = vld [vmem:[%s1 + $0x1588] sm:$0xff]
  %v734 = vld [vmem:[%s1 + $0x1590] sm:$0xff]
  %v735 = vld [vmem:[%s1 + $0x1598] sm:$0xff]
  %v736 = vld [vmem:[%s1 + $0x15a0] sm:$0xff]
  %v737 = vld [vmem:[%s1 + $0x15a8] sm:$0xff]
  %v738 = vld [vmem:[%s1 + $0x15b0] sm:$0xff]
  %v739 = vld [vmem:[%s1 + $0x15b8] sm:$0xff]
  %v740 = vld [vmem:[%s1 + $0x15c0] sm:$0xff]
  %v741 = vld [vmem:[%s1 + $0x15c8] sm:$0xff]
  %v742 = vld [vmem:[%s1 + $0x15d0] sm:$0xff]
  %v743 = vld [vmem:[%s1 + $0x15d8] sm:$0xff]
  %v744 = vld [vmem:[%s1 + $0x15e0] sm:$0xff]
  %v745 = vld [vmem:[%s1 + $0x15e8] sm:$0xff]
  %v746 = vld [vmem:[%s1 + $0x15f0] sm:$0xff]
  %v747 = vld [vmem:[%s1 + $0x15f8] sm:$0xff]
  %v748 = vld [vmem:[%s1 + $0x1600] sm:$0xff]
  %v749 = vld [vmem:[%s1 + $0x1608] sm:$0xff]
  %v750 = vld [vmem:[%s1 + $0x1610] sm:$0xff]
  %v751 = vld [vmem:[%s1 + $0x1618] sm:$0xff]
  %v752 = vld [vmem:[%s1 + $0x1620] sm:$0xff]
  %v753 = vld [vmem:[%s1 + $0x1628] sm:$0xff]
  %v754 = vld [vmem:[%s1 + $0x1630] sm:$0xff]
  %v755 = vld [vmem:[%s1 + $0x1638] sm:$0xff]
  %v756 = vld [vmem:[%s1 + $0x1640] sm:$0xff]
  %v757 = vld [vmem:[%s1 + $0x1648] sm:$0xff]
  %v758 = vld [vmem:[%s1 + $0x1650] sm:$0xff]
  %v759 = vld [vmem:[%s1 + $0x1658] sm:$0xff]
  %v760 = vld [vmem:[%s1 + $0x1660] sm:$0xff]
  %v761 = vld [vmem:[%s1 + $0x1668] sm:$0xff]
  %v762 = vld [vmem:[%s1 + $0x1670] sm:$0xff]
  %v763 = vld [vmem:[%s1 + $0x1678] sm:$0xff]
  %v764 = vld [vmem:[%s2] sm:$0xff]
  %v765 = vld [vmem:[%s2 + $0x8] sm:$0x3]
  %v768 = vlaneseq
  %v769 = vshrl.u32 %v768, 7
  %v770 = vsub.s32 0, %v769
  %v771 = vrot.slane %v764, %v770
  %v772 = vlaneseq
  %v773 = vshrl.u32 %v772, 7
  %v774 = vsub.s32 1, %v773
  %v775 = vrot.slane %v764, %v774
  %v776 = vlaneseq
  %v777 = vshrl.u32 %v776, 7
  %v778 = vsub.s32 2, %v777
  %v779 = vrot.slane %v764, %v778
  %v780 = vlaneseq
  %v781 = vshrl.u32 %v780, 7
  %v782 = vsub.s32 3, %v781
  %v783 = vrot.slane %v764, %v782
  %v784 = vlaneseq
  %v785 = vshrl.u32 %v784, 7
  %v786 = vsub.s32 4, %v785
  %v787 = vrot.slane %v764, %v786
  %v788 = vlaneseq
  %v789 = vshrl.u32 %v788, 7
  %v790 = vsub.s32 5, %v789
  %v791 = vrot.slane %v764, %v790
  %v792 = vlaneseq
  %v793 = vshrl.u32 %v792, 7
  %v794 = vsub.s32 6, %v793
  %v795 = vrot.slane %v764, %v794
  %v796 = vlaneseq
  %v797 = vshrl.u32 %v796, 7
  %v798 = vsub.s32 7, %v797
  %v799 = vrot.slane %v764, %v798
  %v800 = vlaneseq
  %v801 = vshrl.u32 %v800, 7
  %v802 = vsub.s32 0, %v801
  %v803 = vrot.slane %v765, %v802
  %v804 = vlaneseq
  %v805 = vshrl.u32 %v804, 7
  %v806 = vsub.s32 1, %v805
  %v807 = vrot.slane %v765, %v806
  %v823 = vunpack.c.l.b16 %v39
  %v824 = vunpack.c.h.b16 %v39
  %v825 = vunpack.c.l.b16 %v40
  %v826 = vunpack.c.h.b16 %v40
  %v827 = vunpack.c.l.b16 %v41
  %v828 = vunpack.c.h.b16 %v41
  %v829 = vunpack.c.l.b16 %v42
  %v830 = vunpack.c.h.b16 %v42
  %v831 = vunpack.c.l.b16 %v43
  %v832 = vpack.c.b16 %v823, %v823
  %v833 = vpack.c.b16 %v824, %v824
  %v834 = vpack.c.b16 %v825, %v825
  %v835 = vpack.c.b16 %v826, %v826
  %v836 = vpack.c.b16 %v827, %v827
  %v837 = vpack.c.b16 %v828, %v828
  %v838 = vpack.c.b16 %v829, %v829
  %v839 = vpack.c.b16 %v830, %v830
  %v840 = vpack.c.b16 %v831, %v831
  %v1570 = vunpack.c.l.b16 %v44
  %v1571 = vunpack.c.h.b16 %v44
  %v1572 = vunpack.c.l.b16 %v45
  %v1573 = vunpack.c.h.b16 %v45
  %v1574 = vunpack.c.l.b16 %v46
  %v1575 = vunpack.c.h.b16 %v46
  %v1576 = vunpack.c.l.b16 %v47
  %v1577 = vunpack.c.h.b16 %v47
  %v1578 = vunpack.c.l.b16 %v48
  %v1579 = vunpack.c.h.b16 %v48
  %v1580 = vunpack.c.l.b16 %v49
  %v1581 = vunpack.c.h.b16 %v49
  %v1582 = vunpack.c.l.b16 %v50
  %v1583 = vunpack.c.h.b16 %v50
  %v1584 = vunpack.c.l.b16 %v51
  %v1585 = vunpack.c.h.b16 %v51
  %v1586 = vunpack.c.l.b16 %v52
  %v1587 = vunpack.c.h.b16 %v52
  %v1588 = vunpack.c.l.b16 %v53
  %v1589 = vunpack.c.h.b16 %v53
  %v1590 = vunpack.c.l.b16 %v54
  %v1591 = vunpack.c.h.b16 %v54
  %v1592 = vunpack.c.l.b16 %v55
  %v1593 = vunpack.c.h.b16 %v55
  %v1594 = vunpack.c.l.b16 %v56
  %v1595 = vunpack.c.h.b16 %v56
  %v1596 = vunpack.c.l.b16 %v57
  %v1597 = vunpack.c.h.b16 %v57
  %v1598 = vunpack.c.l.b16 %v58
  %v1599 = vunpack.c.h.b16 %v58
  %v1600 = vunpack.c.l.b16 %v59
  %v1601 = vunpack.c.h.b16 %v59
  %v1602 = vunpack.c.l.b16 %v60
  %v1603 = vunpack.c.h.b16 %v60
  %v1604 = vunpack.c.l.b16 %v61
  %v1605 = vunpack.c.h.b16 %v61
  %v1606 = vunpack.c.l.b16 %v62
  %v1607 = vunpack.c.h.b16 %v62
  %v1608 = vunpack.c.l.b16 %v63
  %v1609 = vunpack.c.h.b16 %v63
  %v1610 = vunpack.c.l.b16 %v64
  %v1611 = vunpack.c.h.b16 %v64
  %v1612 = vunpack.c.l.b16 %v65
  %v1613 = vunpack.c.h.b16 %v65
  %v1614 = vunpack.c.l.b16 %v66
  %v1615 = vunpack.c.h.b16 %v66
  %v1616 = vunpack.c.l.b16 %v67
  %v1617 = vunpack.c.h.b16 %v67
  %v1618 = vunpack.c.l.b16 %v68
  %v1619 = vunpack.c.h.b16 %v68
  %v1620 = vunpack.c.l.b16 %v69
  %v1621 = vunpack.c.h.b16 %v69
  %v1622 = vunpack.c.l.b16 %v70
  %v1623 = vunpack.c.h.b16 %v70
  %v1624 = vunpack.c.l.b16 %v71
  %v1625 = vunpack.c.h.b16 %v71
  %v1626 = vunpack.c.l.b16 %v72
  %v1627 = vunpack.c.h.b16 %v72
  %v1628 = vunpack.c.l.b16 %v73
  %v1629 = vunpack.c.h.b16 %v73
  %v1630 = vunpack.c.l.b16 %v74
  %v1631 = vunpack.c.h.b16 %v74
  %v1632 = vunpack.c.l.b16 %v75
  %v1633 = vunpack.c.h.b16 %v75
  %v1634 = vunpack.c.l.b16 %v76
  %v1635 = vunpack.c.h.b16 %v76
  %v1636 = vunpack.c.l.b16 %v77
  %v1637 = vunpack.c.h.b16 %v77
  %v1638 = vunpack.c.l.b16 %v78
  %v1639 = vunpack.c.h.b16 %v78
  %v1640 = vunpack.c.l.b16 %v79
  %v1641 = vunpack.c.h.b16 %v79
  %v1642 = vunpack.c.l.b16 %v80
  %v1643 = vunpack.c.h.b16 %v80
  %v1644 = vunpack.c.l.b16 %v81
  %v1645 = vunpack.c.h.b16 %v81
  %v1646 = vunpack.c.l.b16 %v82
  %v1647 = vunpack.c.h.b16 %v82
  %v1648 = vunpack.c.l.b16 %v83
  %v1649 = vunpack.c.h.b16 %v83
  %v1650 = vunpack.c.l.b16 %v84
  %v1651 = vunpack.c.h.b16 %v84
  %v1652 = vunpack.c.l.b16 %v85
  %v1653 = vunpack.c.h.b16 %v85
  %v1654 = vunpack.c.l.b16 %v86
  %v1655 = vunpack.c.h.b16 %v86
  %v1656 = vunpack.c.l.b16 %v87
  %v1657 = vunpack.c.h.b16 %v87
  %v1658 = vunpack.c.l.b16 %v88
  %v1659 = vunpack.c.h.b16 %v88
  %v1660 = vunpack.c.l.b16 %v89
  %v1661 = vunpack.c.h.b16 %v89
  %v1662 = vunpack.c.l.b16 %v90
  %v1663 = vunpack.c.h.b16 %v90
  %v1664 = vunpack.c.l.b16 %v91
  %v1665 = vunpack.c.h.b16 %v91
  %v1666 = vunpack.c.l.b16 %v92
  %v1667 = vunpack.c.h.b16 %v92
  %v1668 = vunpack.c.l.b16 %v93
  %v1669 = vunpack.c.h.b16 %v93
  %v1670 = vunpack.c.l.b16 %v94
  %v1671 = vunpack.c.h.b16 %v94
  %v1672 = vunpack.c.l.b16 %v95
  %v1673 = vunpack.c.h.b16 %v95
  %v1674 = vunpack.c.l.b16 %v96
  %v1675 = vunpack.c.h.b16 %v96
  %v1676 = vunpack.c.l.b16 %v97
  %v1677 = vunpack.c.h.b16 %v97
  %v1678 = vunpack.c.l.b16 %v98
  %v1679 = vunpack.c.h.b16 %v98
  %v1680 = vunpack.c.l.b16 %v99
  %v1681 = vunpack.c.h.b16 %v99
  %v1682 = vunpack.c.l.b16 %v100
  %v1683 = vunpack.c.h.b16 %v100
  %v1684 = vunpack.c.l.b16 %v101
  %v1685 = vunpack.c.h.b16 %v101
  %v1686 = vunpack.c.l.b16 %v102
  %v1687 = vunpack.c.h.b16 %v102
  %v1688 = vunpack.c.l.b16 %v103
  %v1689 = vunpack.c.h.b16 %v103
  %v1690 = vunpack.c.l.b16 %v104
  %v1691 = vunpack.c.h.b16 %v104
  %v1692 = vunpack.c.l.b16 %v105
  %v1693 = vunpack.c.h.b16 %v105
  %v1694 = vunpack.c.l.b16 %v106
  %v1695 = vunpack.c.h.b16 %v106
  %v1696 = vunpack.c.l.b16 %v107
  %v1697 = vunpack.c.h.b16 %v107
  %v1698 = vunpack.c.l.b16 %v108
  %v1699 = vunpack.c.h.b16 %v108
  %v1700 = vunpack.c.l.b16 %v109
  %v1701 = vunpack.c.h.b16 %v109
  %v1702 = vunpack.c.l.b16 %v110
  %v1703 = vunpack.c.h.b16 %v110
  %v1704 = vunpack.c.l.b16 %v111
  %v1705 = vunpack.c.h.b16 %v111
  %v1706 = vunpack.c.l.b16 %v112
  %v1707 = vunpack.c.h.b16 %v112
  %v1708 = vunpack.c.l.b16 %v113
  %v1709 = vunpack.c.h.b16 %v113
  %v1710 = vunpack.c.l.b16 %v114
  %v1711 = vunpack.c.h.b16 %v114
  %v1712 = vunpack.c.l.b16 %v115
  %v1713 = vunpack.c.h.b16 %v115
  %v1714 = vunpack.c.l.b16 %v116
  %v1715 = vunpack.c.h.b16 %v116
  %v1716 = vunpack.c.l.b16 %v117
  %v1717 = vunpack.c.h.b16 %v117
  %v1718 = vunpack.c.l.b16 %v118
  %v1719 = vunpack.c.h.b16 %v118
  %v1720 = vunpack.c.l.b16 %v119
  %v1721 = vunpack.c.h.b16 %v119
  %v1722 = vunpack.c.l.b16 %v120
  %v1723 = vunpack.c.h.b16 %v120
  %v1724 = vunpack.c.l.b16 %v121
  %v1725 = vunpack.c.h.b16 %v121
  %v1726 = vunpack.c.l.b16 %v122
  %v1727 = vunpack.c.h.b16 %v122
  %v1728 = vunpack.c.l.b16 %v123
  %v1729 = vunpack.c.h.b16 %v123
  %v1730 = vunpack.c.l.b16 %v124
  %v1731 = vunpack.c.h.b16 %v124
  %v1732 = vunpack.c.l.b16 %v125
  %v1733 = vunpack.c.h.b16 %v125
  %v1734 = vunpack.c.l.b16 %v126
  %v1735 = vunpack.c.h.b16 %v126
  %v1736 = vunpack.c.l.b16 %v127
  %v1737 = vunpack.c.h.b16 %v127
  %v1738 = vunpack.c.l.b16 %v128
  %v1739 = vunpack.c.h.b16 %v128
  %v1740 = vunpack.c.l.b16 %v129
  %v1741 = vunpack.c.h.b16 %v129
  %v1742 = vunpack.c.l.b16 %v130
  %v1743 = vunpack.c.h.b16 %v130
  %v1744 = vunpack.c.l.b16 %v131
  %v1745 = vunpack.c.h.b16 %v131
  %v1746 = vunpack.c.l.b16 %v132
  %v1747 = vunpack.c.h.b16 %v132
  %v1748 = vunpack.c.l.b16 %v133
  %v1749 = vunpack.c.h.b16 %v133
  %v1750 = vunpack.c.l.b16 %v134
  %v1751 = vunpack.c.h.b16 %v134
  %v1752 = vunpack.c.l.b16 %v135
  %v1753 = vunpack.c.h.b16 %v135
  %v1754 = vunpack.c.l.b16 %v136
  %v1755 = vunpack.c.h.b16 %v136
  %v1756 = vunpack.c.l.b16 %v137
  %v1757 = vunpack.c.h.b16 %v137
  %v1758 = vunpack.c.l.b16 %v138
  %v1759 = vunpack.c.h.b16 %v138
  %v1760 = vunpack.c.l.b16 %v139
  %v1761 = vunpack.c.h.b16 %v139
  %v1762 = vunpack.c.l.b16 %v140
  %v1763 = vunpack.c.h.b16 %v140
  %v1764 = vunpack.c.l.b16 %v141
  %v1765 = vunpack.c.h.b16 %v141
  %v1766 = vunpack.c.l.b16 %v142
  %v1767 = vunpack.c.h.b16 %v142
  %v1768 = vunpack.c.l.b16 %v143
  %v1769 = vunpack.c.h.b16 %v143
  %v1770 = vunpack.c.l.b16 %v144
  %v1771 = vunpack.c.h.b16 %v144
  %v1772 = vunpack.c.l.b16 %v145
  %v1773 = vunpack.c.h.b16 %v145
  %v1774 = vunpack.c.l.b16 %v146
  %v1775 = vunpack.c.h.b16 %v146
  %v1776 = vunpack.c.l.b16 %v147
  %v1777 = vunpack.c.h.b16 %v147
  %v1778 = vunpack.c.l.b16 %v148
  %v1779 = vunpack.c.h.b16 %v148
  %v1780 = vunpack.c.l.b16 %v149
  %v1781 = vunpack.c.h.b16 %v149
  %v1782 = vunpack.c.l.b16 %v150
  %v1783 = vunpack.c.h.b16 %v150
  %v1784 = vunpack.c.l.b16 %v151
  %v1785 = vunpack.c.h.b16 %v151
  %v1786 = vunpack.c.l.b16 %v152
  %v1787 = vunpack.c.h.b16 %v152
  %v1788 = vunpack.c.l.b16 %v153
  %v1789 = vunpack.c.h.b16 %v153
  %v1790 = vunpack.c.l.b16 %v154
  %v1791 = vunpack.c.h.b16 %v154
  %v1792 = vunpack.c.l.b16 %v155
  %v1793 = vunpack.c.h.b16 %v155
  %v1794 = vunpack.c.l.b16 %v156
  %v1795 = vunpack.c.h.b16 %v156
  %v1796 = vunpack.c.l.b16 %v157
  %v1797 = vunpack.c.h.b16 %v157
  %v1798 = vunpack.c.l.b16 %v158
  %v1799 = vunpack.c.h.b16 %v158
  %v1800 = vunpack.c.l.b16 %v159
  %v1801 = vunpack.c.h.b16 %v159
  %v1802 = vunpack.c.l.b16 %v160
  %v1803 = vunpack.c.h.b16 %v160
  %v1804 = vunpack.c.l.b16 %v161
  %v1805 = vunpack.c.h.b16 %v161
  %v1806 = vunpack.c.l.b16 %v162
  %v1807 = vunpack.c.h.b16 %v162
  %v1808 = vunpack.c.l.b16 %v163
  %v1809 = vunpack.c.h.b16 %v163
  %v1810 = vunpack.c.l.b16 %v164
  %v1811 = vunpack.c.h.b16 %v164
  %v1812 = vunpack.c.l.b16 %v165
  %v1813 = vunpack.c.h.b16 %v165
  %v1814 = vunpack.c.l.b16 %v166
  %v1815 = vunpack.c.h.b16 %v166
  %v1816 = vunpack.c.l.b16 %v167
  %v1817 = vunpack.c.h.b16 %v167
  %v1818 = vunpack.c.l.b16 %v168
  %v1819 = vunpack.c.h.b16 %v168
  %v1820 = vunpack.c.l.b16 %v169
  %v1821 = vunpack.c.h.b16 %v169
  %v1822 = vunpack.c.l.b16 %v170
  %v1823 = vunpack.c.h.b16 %v170
  %v1824 = vunpack.c.l.b16 %v171
  %v1825 = vunpack.c.h.b16 %v171
  %v1826 = vunpack.c.l.b16 %v172
  %v1827 = vunpack.c.h.b16 %v172
  %v1828 = vunpack.c.l.b16 %v173
  %v1829 = vunpack.c.h.b16 %v173
  %v1830 = vunpack.c.l.b16 %v174
  %v1831 = vunpack.c.h.b16 %v174
  %v1832 = vunpack.c.l.b16 %v175
  %v1833 = vunpack.c.h.b16 %v175
  %v1834 = vunpack.c.l.b16 %v176
  %v1835 = vunpack.c.h.b16 %v176
  %v1836 = vunpack.c.l.b16 %v177
  %v1837 = vunpack.c.h.b16 %v177
  %v1838 = vunpack.c.l.b16 %v178
  %v1839 = vunpack.c.h.b16 %v178
  %v1840 = vunpack.c.l.b16 %v179
  %v1841 = vunpack.c.h.b16 %v179
  %v1842 = vunpack.c.l.b16 %v180
  %v1843 = vunpack.c.h.b16 %v180
  %v1844 = vunpack.c.l.b16 %v181
  %v1845 = vunpack.c.h.b16 %v181
  %v1846 = vunpack.c.l.b16 %v182
  %v1847 = vunpack.c.h.b16 %v182
  %v1848 = vunpack.c.l.b16 %v183
  %v1849 = vunpack.c.h.b16 %v183
  %v1850 = vunpack.c.l.b16 %v184
  %v1851 = vunpack.c.h.b16 %v184
  %v1852 = vunpack.c.l.b16 %v185
  %v1853 = vunpack.c.h.b16 %v185
  %v1854 = vunpack.c.l.b16 %v186
  %v1855 = vunpack.c.h.b16 %v186
  %v1856 = vunpack.c.l.b16 %v187
  %v1857 = vunpack.c.h.b16 %v187
  %v1858 = vunpack.c.l.b16 %v188
  %v1859 = vunpack.c.h.b16 %v188
  %v1860 = vunpack.c.l.b16 %v189
  %v1861 = vunpack.c.h.b16 %v189
  %v1862 = vunpack.c.l.b16 %v190
  %v1863 = vunpack.c.h.b16 %v190
  %v1864 = vunpack.c.l.b16 %v191
  %v1865 = vunpack.c.h.b16 %v191
  %v1866 = vunpack.c.l.b16 %v192
  %v1867 = vunpack.c.h.b16 %v192
  %v1868 = vunpack.c.l.b16 %v193
  %v1869 = vunpack.c.h.b16 %v193
  %v1870 = vunpack.c.l.b16 %v194
  %v1871 = vunpack.c.h.b16 %v194
  %v1872 = vunpack.c.l.b16 %v195
  %v1873 = vunpack.c.h.b16 %v195
  %v1874 = vunpack.c.l.b16 %v196
  %v1875 = vunpack.c.h.b16 %v196
  %v1876 = vunpack.c.l.b16 %v197
  %v1877 = vunpack.c.h.b16 %v197
  %v1878 = vunpack.c.l.b16 %v198
  %v1879 = vunpack.c.h.b16 %v198
  %v1880 = vunpack.c.l.b16 %v199
  %v1881 = vunpack.c.h.b16 %v199
  %v1882 = vunpack.c.l.b16 %v200
  %v1883 = vunpack.c.h.b16 %v200
  %v1884 = vunpack.c.l.b16 %v201
  %v1885 = vunpack.c.h.b16 %v201
  %v1886 = vunpack.c.l.b16 %v202
  %v1887 = vunpack.c.h.b16 %v202
  %v1888 = vunpack.c.l.b16 %v203
  %v1889 = vunpack.c.h.b16 %v203
  %v1890 = vunpack.c.l.b16 %v204
  %v1891 = vunpack.c.h.b16 %v204
  %v1892 = vunpack.c.l.b16 %v205
  %v1893 = vunpack.c.h.b16 %v205
  %v1894 = vunpack.c.l.b16 %v206
  %v1895 = vunpack.c.h.b16 %v206
  %v1896 = vunpack.c.l.b16 %v207
  %v1897 = vunpack.c.h.b16 %v207
  %v1898 = vunpack.c.l.b16 %v208
  %v1899 = vunpack.c.h.b16 %v208
  %v1900 = vunpack.c.l.b16 %v209
  %v1901 = vunpack.c.h.b16 %v209
  %v1902 = vunpack.c.l.b16 %v210
  %v1903 = vunpack.c.h.b16 %v210
  %v1904 = vunpack.c.l.b16 %v211
  %v1905 = vunpack.c.h.b16 %v211
  %v1906 = vunpack.c.l.b16 %v212
  %v1907 = vunpack.c.h.b16 %v212
  %v1908 = vunpack.c.l.b16 %v213
  %v1909 = vunpack.c.h.b16 %v213
  %v1910 = vunpack.c.l.b16 %v214
  %v1911 = vunpack.c.h.b16 %v214
  %v1912 = vunpack.c.l.b16 %v215
  %v1913 = vunpack.c.h.b16 %v215
  %v1914 = vunpack.c.l.b16 %v216
  %v1915 = vunpack.c.h.b16 %v216
  %v1916 = vunpack.c.l.b16 %v217
  %v1917 = vunpack.c.h.b16 %v217
  %v1918 = vunpack.c.l.b16 %v218
  %v1919 = vunpack.c.h.b16 %v218
  %v1920 = vunpack.c.l.b16 %v219
  %v1921 = vunpack.c.h.b16 %v219
  %v1922 = vunpack.c.l.b16 %v220
  %v1923 = vunpack.c.h.b16 %v220
  %v1924 = vunpack.c.l.b16 %v221
  %v1925 = vunpack.c.h.b16 %v221
  %v1926 = vunpack.c.l.b16 %v222
  %v1927 = vunpack.c.h.b16 %v222
  %v1928 = vunpack.c.l.b16 %v223
  %v1929 = vunpack.c.h.b16 %v223
  %v1930 = vunpack.c.l.b16 %v224
  %v1931 = vunpack.c.h.b16 %v224
  %v1932 = vunpack.c.l.b16 %v225
  %v1933 = vunpack.c.h.b16 %v225
  %v1934 = vunpack.c.l.b16 %v226
  %v1935 = vunpack.c.h.b16 %v226
  %v1936 = vunpack.c.l.b16 %v227
  %v1937 = vunpack.c.h.b16 %v227
  %v1938 = vunpack.c.l.b16 %v228
  %v1939 = vunpack.c.h.b16 %v228
  %v1940 = vunpack.c.l.b16 %v229
  %v1941 = vunpack.c.h.b16 %v229
  %v1942 = vunpack.c.l.b16 %v230
  %v1943 = vunpack.c.h.b16 %v230
  %v1944 = vunpack.c.l.b16 %v231
  %v1945 = vunpack.c.h.b16 %v231
  %v1946 = vunpack.c.l.b16 %v232
  %v1947 = vunpack.c.h.b16 %v232
  %v1948 = vunpack.c.l.b16 %v233
  %v1949 = vunpack.c.h.b16 %v233
  %v1950 = vunpack.c.l.b16 %v234
  %v1951 = vunpack.c.h.b16 %v234
  %v1952 = vunpack.c.l.b16 %v235
  %v1953 = vunpack.c.h.b16 %v235
  %v1954 = vunpack.c.l.b16 %v236
  %v1955 = vunpack.c.h.b16 %v236
  %v1956 = vunpack.c.l.b16 %v237
  %v1957 = vunpack.c.h.b16 %v237
  %v1958 = vunpack.c.l.b16 %v238
  %v1959 = vunpack.c.h.b16 %v238
  %v1960 = vunpack.c.l.b16 %v239
  %v1961 = vunpack.c.h.b16 %v239
  %v1962 = vunpack.c.l.b16 %v240
  %v1963 = vunpack.c.h.b16 %v240
  %v1964 = vunpack.c.l.b16 %v241
  %v1965 = vunpack.c.h.b16 %v241
  %v1966 = vunpack.c.l.b16 %v242
  %v1967 = vunpack.c.h.b16 %v242
  %v1968 = vunpack.c.l.b16 %v243
  %v1969 = vunpack.c.h.b16 %v243
  %v1970 = vunpack.c.l.b16 %v244
  %v1971 = vunpack.c.h.b16 %v244
  %v1972 = vunpack.c.l.b16 %v245
  %v1973 = vunpack.c.h.b16 %v245
  %v1974 = vunpack.c.l.b16 %v246
  %v1975 = vunpack.c.h.b16 %v246
  %v1976 = vunpack.c.l.b16 %v247
  %v1977 = vunpack.c.h.b16 %v247
  %v1978 = vunpack.c.l.b16 %v248
  %v1979 = vunpack.c.h.b16 %v248
  %v1980 = vunpack.c.l.b16 %v249
  %v1981 = vunpack.c.h.b16 %v249
  %v1982 = vunpack.c.l.b16 %v250
  %v1983 = vunpack.c.h.b16 %v250
  %v1984 = vunpack.c.l.b16 %v251
  %v1985 = vunpack.c.h.b16 %v251
  %v1986 = vunpack.c.l.b16 %v252
  %v1987 = vunpack.c.h.b16 %v252
  %v1988 = vunpack.c.l.b16 %v253
  %v1989 = vunpack.c.h.b16 %v253
  %v1990 = vunpack.c.l.b16 %v254
  %v1991 = vunpack.c.h.b16 %v254
  %v1992 = vunpack.c.l.b16 %v255
  %v1993 = vunpack.c.h.b16 %v255
  %v1994 = vunpack.c.l.b16 %v256
  %v1995 = vunpack.c.h.b16 %v256
  %v1996 = vunpack.c.l.b16 %v257
  %v1997 = vunpack.c.h.b16 %v257
  %v1998 = vunpack.c.l.b16 %v258
  %v1999 = vunpack.c.h.b16 %v258
  %v2000 = vunpack.c.l.b16 %v259
  %v2001 = vunpack.c.h.b16 %v259
  %v2002 = vunpack.c.l.b16 %v260
  %v2003 = vunpack.c.h.b16 %v260
  %v2004 = vunpack.c.l.b16 %v261
  %v2005 = vunpack.c.h.b16 %v261
  %v2006 = vunpack.c.l.b16 %v262
  %v2007 = vunpack.c.h.b16 %v262
  %v2008 = vunpack.c.l.b16 %v263
  %v2009 = vunpack.c.h.b16 %v263
  %v2010 = vunpack.c.l.b16 %v264
  %v2011 = vunpack.c.h.b16 %v264
  %v2012 = vunpack.c.l.b16 %v265
  %v2013 = vunpack.c.h.b16 %v265
  %v2014 = vunpack.c.l.b16 %v266
  %v2015 = vunpack.c.h.b16 %v266
  %v2016 = vunpack.c.l.b16 %v267
  %v2017 = vunpack.c.h.b16 %v267
  %v2018 = vunpack.c.l.b16 %v268
  %v2019 = vunpack.c.h.b16 %v268
  %v2020 = vunpack.c.l.b16 %v269
  %v2021 = vunpack.c.h.b16 %v269
  %v2022 = vunpack.c.l.b16 %v270
  %v2023 = vunpack.c.h.b16 %v270
  %v2024 = vunpack.c.l.b16 %v271
  %v2025 = vunpack.c.h.b16 %v271
  %v2026 = vunpack.c.l.b16 %v272
  %v2027 = vunpack.c.h.b16 %v272
  %v2028 = vunpack.c.l.b16 %v273
  %v2029 = vunpack.c.h.b16 %v273
  %v2030 = vunpack.c.l.b16 %v274
  %v2031 = vunpack.c.h.b16 %v274
  %v2032 = vunpack.c.l.b16 %v275
  %v2033 = vunpack.c.h.b16 %v275
  %v2034 = vunpack.c.l.b16 %v276
  %v2035 = vunpack.c.h.b16 %v276
  %v2036 = vunpack.c.l.b16 %v277
  %v2037 = vunpack.c.h.b16 %v277
  %v2038 = vunpack.c.l.b16 %v278
  %v2039 = vunpack.c.h.b16 %v278
  %v2040 = vunpack.c.l.b16 %v279
  %v2041 = vunpack.c.h.b16 %v279
  %v2042 = vunpack.c.l.b16 %v280
  %v2043 = vunpack.c.h.b16 %v280
  %v2044 = vunpack.c.l.b16 %v281
  %v2045 = vunpack.c.h.b16 %v281
  %v2046 = vunpack.c.l.b16 %v282
  %v2047 = vunpack.c.h.b16 %v282
  %v2048 = vunpack.c.l.b16 %v283
  %v2049 = vunpack.c.h.b16 %v283
  %v2050 = vunpack.c.l.b16 %v284
  %v2051 = vunpack.c.h.b16 %v284
  %v2052 = vunpack.c.l.b16 %v285
  %v2053 = vunpack.c.h.b16 %v285
  %v2054 = vunpack.c.l.b16 %v286
  %v2055 = vunpack.c.h.b16 %v286
  %v2056 = vunpack.c.l.b16 %v287
  %v2057 = vunpack.c.h.b16 %v287
  %v2058 = vunpack.c.l.b16 %v288
  %v2059 = vunpack.c.h.b16 %v288
  %v2060 = vunpack.c.l.b16 %v289
  %v2061 = vunpack.c.h.b16 %v289
  %v2062 = vunpack.c.l.b16 %v290
  %v2063 = vunpack.c.h.b16 %v290
  %v2064 = vunpack.c.l.b16 %v291
  %v2065 = vunpack.c.h.b16 %v291
  %v2066 = vunpack.c.l.b16 %v292
  %v2067 = vunpack.c.h.b16 %v292
  %v2068 = vunpack.c.l.b16 %v293
  %v2069 = vunpack.c.h.b16 %v293
  %v2070 = vunpack.c.l.b16 %v294
  %v2071 = vunpack.c.h.b16 %v294
  %v2072 = vunpack.c.l.b16 %v295
  %v2073 = vunpack.c.h.b16 %v295
  %v2074 = vunpack.c.l.b16 %v296
  %v2075 = vunpack.c.h.b16 %v296
  %v2076 = vunpack.c.l.b16 %v297
  %v2077 = vunpack.c.h.b16 %v297
  %v2078 = vunpack.c.l.b16 %v298
  %v2079 = vunpack.c.h.b16 %v298
  %v2080 = vunpack.c.l.b16 %v299
  %v2081 = vunpack.c.h.b16 %v299
  %v2082 = vunpack.c.l.b16 %v300
  %v2083 = vunpack.c.h.b16 %v300
  %v2084 = vunpack.c.l.b16 %v301
  %v2085 = vunpack.c.h.b16 %v301
  %v2086 = vunpack.c.l.b16 %v302
  %v2087 = vunpack.c.h.b16 %v302
  %v2088 = vunpack.c.l.b16 %v303
  %v2089 = vunpack.c.h.b16 %v303
  %v2090 = vunpack.c.l.b16 %v304
  %v2091 = vunpack.c.h.b16 %v304
  %v2092 = vunpack.c.l.b16 %v305
  %v2093 = vunpack.c.h.b16 %v305
  %v2094 = vunpack.c.l.b16 %v306
  %v2095 = vunpack.c.h.b16 %v306
  %v2096 = vunpack.c.l.b16 %v307
  %v2097 = vunpack.c.h.b16 %v307
  %v2098 = vunpack.c.l.b16 %v308
  %v2099 = vunpack.c.h.b16 %v308
  %v2100 = vunpack.c.l.b16 %v309
  %v2101 = vunpack.c.h.b16 %v309
  %v2102 = vunpack.c.l.b16 %v310
  %v2103 = vunpack.c.h.b16 %v310
  %v2104 = vunpack.c.l.b16 %v311
  %v2105 = vunpack.c.h.b16 %v311
  %v2106 = vunpack.c.l.b16 %v312
  %v2107 = vunpack.c.h.b16 %v312
  %v2108 = vunpack.c.l.b16 %v313
  %v2109 = vunpack.c.h.b16 %v313
  %v2110 = vunpack.c.l.b16 %v314
  %v2111 = vunpack.c.h.b16 %v314
  %v2112 = vunpack.c.l.b16 %v315
  %v2113 = vunpack.c.h.b16 %v315
  %v2114 = vunpack.c.l.b16 %v316
  %v2115 = vunpack.c.h.b16 %v316
  %v2116 = vunpack.c.l.b16 %v317
  %v2117 = vunpack.c.h.b16 %v317
  %v2118 = vunpack.c.l.b16 %v318
  %v2119 = vunpack.c.h.b16 %v318
  %v2120 = vunpack.c.l.b16 %v319
  %v2121 = vunpack.c.h.b16 %v319
  %v2122 = vunpack.c.l.b16 %v320
  %v2123 = vunpack.c.h.b16 %v320
  %v2124 = vunpack.c.l.b16 %v321
  %v2125 = vunpack.c.h.b16 %v321
  %v2126 = vunpack.c.l.b16 %v322
  %v2127 = vunpack.c.h.b16 %v322
  %v2128 = vunpack.c.l.b16 %v323
  %v2129 = vunpack.c.h.b16 %v323
  %v2130 = vunpack.c.l.b16 %v324
  %v2131 = vunpack.c.h.b16 %v324
  %v2132 = vunpack.c.l.b16 %v325
  %v2133 = vunpack.c.h.b16 %v325
  %v2134 = vunpack.c.l.b16 %v326
  %v2135 = vunpack.c.h.b16 %v326
  %v2136 = vunpack.c.l.b16 %v327
  %v2137 = vunpack.c.h.b16 %v327
  %v2138 = vunpack.c.l.b16 %v328
  %v2139 = vunpack.c.h.b16 %v328
  %v2140 = vunpack.c.l.b16 %v329
  %v2141 = vunpack.c.h.b16 %v329
  %v2142 = vunpack.c.l.b16 %v330
  %v2143 = vunpack.c.h.b16 %v330
  %v2144 = vunpack.c.l.b16 %v331
  %v2145 = vunpack.c.h.b16 %v331
  %v2146 = vunpack.c.l.b16 %v332
  %v2147 = vunpack.c.h.b16 %v332
  %v2148 = vunpack.c.l.b16 %v333
  %v2149 = vunpack.c.h.b16 %v333
  %v2150 = vunpack.c.l.b16 %v334
  %v2151 = vunpack.c.h.b16 %v334
  %v2152 = vunpack.c.l.b16 %v335
  %v2153 = vunpack.c.h.b16 %v335
  %v2154 = vunpack.c.l.b16 %v336
  %v2155 = vunpack.c.h.b16 %v336
  %v2156 = vunpack.c.l.b16 %v337
  %v2157 = vunpack.c.h.b16 %v337
  %v2158 = vunpack.c.l.b16 %v338
  %v2159 = vunpack.c.h.b16 %v338
  %v2160 = vunpack.c.l.b16 %v339
  %v2161 = vunpack.c.h.b16 %v339
  %v2162 = vunpack.c.l.b16 %v340
  %v2163 = vunpack.c.h.b16 %v340
  %v2164 = vunpack.c.l.b16 %v341
  %v2165 = vunpack.c.h.b16 %v341
  %v2166 = vunpack.c.l.b16 %v342
  %v2167 = vunpack.c.h.b16 %v342
  %v2168 = vunpack.c.l.b16 %v343
  %v2169 = vunpack.c.h.b16 %v343
  %v2170 = vunpack.c.l.b16 %v344
  %v2171 = vunpack.c.h.b16 %v344
  %v2172 = vunpack.c.l.b16 %v345
  %v2173 = vunpack.c.h.b16 %v345
  %v2174 = vunpack.c.l.b16 %v346
  %v2175 = vunpack.c.h.b16 %v346
  %v2176 = vunpack.c.l.b16 %v347
  %v2177 = vunpack.c.h.b16 %v347
  %v2178 = vunpack.c.l.b16 %v348
  %v2179 = vunpack.c.h.b16 %v348
  %v2180 = vunpack.c.l.b16 %v349
  %v2181 = vunpack.c.h.b16 %v349
  %v2182 = vunpack.c.l.b16 %v350
  %v2183 = vunpack.c.h.b16 %v350
  %v2184 = vunpack.c.l.b16 %v351
  %v2185 = vunpack.c.h.b16 %v351
  %v2186 = vunpack.c.l.b16 %v352
  %v2187 = vunpack.c.h.b16 %v352
  %v2188 = vunpack.c.l.b16 %v353
  %v2189 = vunpack.c.h.b16 %v353
  %v2190 = vunpack.c.l.b16 %v354
  %v2191 = vunpack.c.h.b16 %v354
  %v2192 = vunpack.c.l.b16 %v355
  %v2193 = vunpack.c.h.b16 %v355
  %v2194 = vunpack.c.l.b16 %v356
  %v2195 = vunpack.c.h.b16 %v356
  %v2196 = vunpack.c.l.b16 %v357
  %v2197 = vunpack.c.h.b16 %v357
  %v2198 = vunpack.c.l.b16 %v358
  %v2199 = vunpack.c.h.b16 %v358
  %v2200 = vunpack.c.l.b16 %v359
  %v2201 = vunpack.c.h.b16 %v359
  %v2202 = vunpack.c.l.b16 %v360
  %v2203 = vunpack.c.h.b16 %v360
  %v2204 = vunpack.c.l.b16 %v361
  %v2205 = vunpack.c.h.b16 %v361
  %v2206 = vunpack.c.l.b16 %v362
  %v2207 = vunpack.c.h.b16 %v362
  %v2208 = vunpack.c.l.b16 %v363
  %v2209 = vunpack.c.h.b16 %v363
  %v2210 = vunpack.c.l.b16 %v364
  %v2211 = vunpack.c.h.b16 %v364
  %v2212 = vunpack.c.l.b16 %v365
  %v2213 = vunpack.c.h.b16 %v365
  %v2214 = vunpack.c.l.b16 %v366
  %v2215 = vunpack.c.h.b16 %v366
  %v2216 = vunpack.c.l.b16 %v367
  %v2217 = vunpack.c.h.b16 %v367
  %v2218 = vunpack.c.l.b16 %v368
  %v2219 = vunpack.c.h.b16 %v368
  %v2220 = vunpack.c.l.b16 %v369
  %v2221 = vunpack.c.h.b16 %v369
  %v2222 = vunpack.c.l.b16 %v370
  %v2223 = vunpack.c.h.b16 %v370
  %v2224 = vunpack.c.l.b16 %v371
  %v2225 = vunpack.c.h.b16 %v371
  %v2226 = vunpack.c.l.b16 %v372
  %v2227 = vunpack.c.h.b16 %v372
  %v2228 = vunpack.c.l.b16 %v373
  %v2229 = vunpack.c.h.b16 %v373
  %v2230 = vunpack.c.l.b16 %v374
  %v2231 = vunpack.c.h.b16 %v374
  %v2232 = vunpack.c.l.b16 %v375
  %v2233 = vunpack.c.h.b16 %v375
  %v2234 = vunpack.c.l.b16 %v376
  %v2235 = vunpack.c.h.b16 %v376
  %v2236 = vunpack.c.l.b16 %v377
  %v2237 = vunpack.c.h.b16 %v377
  %v2238 = vunpack.c.l.b16 %v378
  %v2239 = vunpack.c.h.b16 %v378
  %v2240 = vunpack.c.l.b16 %v379
  %v2241 = vunpack.c.h.b16 %v379
  %v2242 = vunpack.c.l.b16 %v380
  %v2243 = vunpack.c.h.b16 %v380
  %v2244 = vunpack.c.l.b16 %v381
  %v2245 = vunpack.c.h.b16 %v381
  %v2246 = vunpack.c.l.b16 %v382
  %v2247 = vunpack.c.h.b16 %v382
  %v2248 = vunpack.c.l.b16 %v383
  %v2249 = vunpack.c.h.b16 %v383
  %v2250 = vunpack.c.l.b16 %v384
  %v2251 = vunpack.c.h.b16 %v384
  %v2252 = vunpack.c.l.b16 %v385
  %v2253 = vunpack.c.h.b16 %v385
  %v2254 = vunpack.c.l.b16 %v386
  %v2255 = vunpack.c.h.b16 %v386
  %v2256 = vunpack.c.l.b16 %v387
  %v2257 = vunpack.c.h.b16 %v387
  %v2258 = vunpack.c.l.b16 %v388
  %v2259 = vunpack.c.h.b16 %v388
  %v2260 = vunpack.c.l.b16 %v389
  %v2261 = vunpack.c.h.b16 %v389
  %v2262 = vunpack.c.l.b16 %v390
  %v2263 = vunpack.c.h.b16 %v390
  %v2264 = vunpack.c.l.b16 %v391
  %v2265 = vunpack.c.h.b16 %v391
  %v2266 = vunpack.c.l.b16 %v392
  %v2267 = vunpack.c.h.b16 %v392
  %v2268 = vunpack.c.l.b16 %v393
  %v2269 = vunpack.c.h.b16 %v393
  %v2270 = vunpack.c.l.b16 %v394
  %v2271 = vunpack.c.h.b16 %v394
  %v2272 = vunpack.c.l.b16 %v395
  %v2273 = vunpack.c.h.b16 %v395
  %v2274 = vunpack.c.l.b16 %v396
  %v2275 = vunpack.c.h.b16 %v396
  %v2276 = vunpack.c.l.b16 %v397
  %v2277 = vunpack.c.h.b16 %v397
  %v2278 = vunpack.c.l.b16 %v398
  %v2279 = vunpack.c.h.b16 %v398
  %v2280 = vunpack.c.l.b16 %v399
  %v2281 = vunpack.c.h.b16 %v399
  %v2282 = vunpack.c.l.b16 %v400
  %v2283 = vunpack.c.h.b16 %v400
  %v2284 = vunpack.c.l.b16 %v401
  %v2285 = vunpack.c.h.b16 %v401
  %v2286 = vunpack.c.l.b16 %v402
  %v2287 = vunpack.c.h.b16 %v402
  %v2288 = vunpack.c.l.b16 %v403
  %v2289 = vunpack.c.h.b16 %v403
  %v2290 = vunpack.c.l.b16 %v404
  %v2291 = vunpack.c.h.b16 %v404
  %v2292 = vunpack.c.l.b16 %v405
  %v2293 = vunpack.c.h.b16 %v405
  %v2294 = vunpack.c.l.b16 %v406
  %v2295 = vunpack.c.h.b16 %v406
  %v2296 = vunpack.c.l.b16 %v407
  %v2297 = vunpack.c.h.b16 %v407
  %v2298 = vunpack.c.l.b16 %v408
  %v2299 = vunpack.c.h.b16 %v408
  %v2300 = vunpack.c.l.b16 %v409
  %v2301 = vunpack.c.h.b16 %v409
  %v2302 = vunpack.c.l.b16 %v410
  %v2303 = vunpack.c.h.b16 %v410
  %v2304 = vunpack.c.l.b16 %v411
  %v2305 = vunpack.c.h.b16 %v411
  %v2306 = vunpack.c.l.b16 %v412
  %v2307 = vunpack.c.h.b16 %v412
  %v2308 = vunpack.c.l.b16 %v413
  %v2309 = vunpack.c.h.b16 %v413
  %v2310 = vunpack.c.l.b16 %v414
  %v2311 = vunpack.c.h.b16 %v414
  %v2312 = vunpack.c.l.b16 %v415
  %v2313 = vunpack.c.h.b16 %v415
  %v2314 = vunpack.c.l.b16 %v416
  %v2315 = vunpack.c.h.b16 %v416
  %v2316 = vunpack.c.l.b16 %v417
  %v2317 = vunpack.c.h.b16 %v417
  %v2318 = vunpack.c.l.b16 %v418
  %v2319 = vunpack.c.h.b16 %v418
  %v2320 = vunpack.c.l.b16 %v419
  %v2321 = vunpack.c.h.b16 %v419
  %v2322 = vunpack.c.l.b16 %v420
  %v2323 = vunpack.c.h.b16 %v420
  %v2324 = vunpack.c.l.b16 %v421
  %v2325 = vunpack.c.h.b16 %v421
  %v2326 = vunpack.c.l.b16 %v422
  %v2327 = vunpack.c.h.b16 %v422
  %v2328 = vunpack.c.l.b16 %v423
  %v2329 = vunpack.c.h.b16 %v423
  %v2330 = vunpack.c.l.b16 %v424
  %v2331 = vunpack.c.h.b16 %v424
  %v2332 = vunpack.c.l.b16 %v425
  %v2333 = vunpack.c.h.b16 %v425
  %v2334 = vunpack.c.l.b16 %v426
  %v2335 = vunpack.c.h.b16 %v426
  %v2336 = vunpack.c.l.b16 %v427
  %v2337 = vunpack.c.h.b16 %v427
  %v2338 = vunpack.c.l.b16 %v428
  %v2339 = vunpack.c.h.b16 %v428
  %v2340 = vunpack.c.l.b16 %v429
  %v2341 = vunpack.c.h.b16 %v429
  %v2342 = vunpack.c.l.b16 %v430
  %v2343 = vunpack.c.h.b16 %v430
  %v2344 = vunpack.c.l.b16 %v431
  %v2345 = vunpack.c.h.b16 %v431
  %v2346 = vunpack.c.l.b16 %v432
  %v2347 = vunpack.c.h.b16 %v432
  %v2348 = vunpack.c.l.b16 %v433
  %v2349 = vunpack.c.h.b16 %v433
  %v2350 = vunpack.c.l.b16 %v434
  %v2351 = vunpack.c.h.b16 %v434
  %v2352 = vunpack.c.l.b16 %v435
  %v2353 = vunpack.c.h.b16 %v435
  %v2354 = vunpack.c.l.b16 %v436
  %v2355 = vunpack.c.h.b16 %v436
  %v2356 = vunpack.c.l.b16 %v437
  %v2357 = vunpack.c.h.b16 %v437
  %v2358 = vunpack.c.l.b16 %v438
  %v2359 = vunpack.c.h.b16 %v438
  %v2360 = vunpack.c.l.b16 %v439
  %v2361 = vunpack.c.h.b16 %v439
  %v2362 = vunpack.c.l.b16 %v440
  %v2363 = vunpack.c.h.b16 %v440
  %v2364 = vunpack.c.l.b16 %v441
  %v2365 = vunpack.c.h.b16 %v441
  %v2366 = vunpack.c.l.b16 %v442
  %v2367 = vunpack.c.h.b16 %v442
  %v2368 = vunpack.c.l.b16 %v443
  %v2369 = vunpack.c.h.b16 %v443
  %v2370 = vunpack.c.l.b16 %v444
  %v2371 = vunpack.c.h.b16 %v444
  %v2372 = vunpack.c.l.b16 %v445
  %v2373 = vunpack.c.h.b16 %v445
  %v2374 = vunpack.c.l.b16 %v446
  %v2375 = vunpack.c.h.b16 %v446
  %v2376 = vunpack.c.l.b16 %v447
  %v2377 = vunpack.c.h.b16 %v447
  %v2378 = vunpack.c.l.b16 %v448
  %v2379 = vunpack.c.h.b16 %v448
  %v2380 = vunpack.c.l.b16 %v449
  %v2381 = vunpack.c.h.b16 %v449
  %v2382 = vunpack.c.l.b16 %v450
  %v2383 = vunpack.c.h.b16 %v450
  %v2384 = vunpack.c.l.b16 %v451
  %v2385 = vunpack.c.h.b16 %v451
  %v2386 = vunpack.c.l.b16 %v452
  %v2387 = vunpack.c.h.b16 %v452
  %v2388 = vunpack.c.l.b16 %v453
  %v2389 = vunpack.c.h.b16 %v453
  %v2390 = vunpack.c.l.b16 %v454
  %v2391 = vunpack.c.h.b16 %v454
  %v2392 = vunpack.c.l.b16 %v455
  %v2393 = vunpack.c.h.b16 %v455
  %v2394 = vunpack.c.l.b16 %v456
  %v2395 = vunpack.c.h.b16 %v456
  %v2396 = vunpack.c.l.b16 %v457
  %v2397 = vunpack.c.h.b16 %v457
  %v2398 = vunpack.c.l.b16 %v458
  %v2399 = vunpack.c.h.b16 %v458
  %v2400 = vunpack.c.l.b16 %v459
  %v2401 = vunpack.c.h.b16 %v459
  %v2402 = vunpack.c.l.b16 %v460
  %v2403 = vunpack.c.h.b16 %v460
  %v2404 = vunpack.c.l.b16 %v461
  %v2405 = vunpack.c.h.b16 %v461
  %v2406 = vunpack.c.l.b16 %v462
  %v2407 = vunpack.c.h.b16 %v462
  %v2408 = vunpack.c.l.b16 %v463
  %v2409 = vunpack.c.h.b16 %v463
  %v2410 = vunpack.c.l.b16 %v464
  %v2411 = vunpack.c.h.b16 %v464
  %v2412 = vunpack.c.l.b16 %v465
  %v2413 = vunpack.c.h.b16 %v465
  %v2414 = vunpack.c.l.b16 %v466
  %v2415 = vunpack.c.h.b16 %v466
  %v2416 = vunpack.c.l.b16 %v467
  %v2417 = vunpack.c.h.b16 %v467
  %v2418 = vunpack.c.l.b16 %v468
  %v2419 = vunpack.c.h.b16 %v468
  %v2420 = vunpack.c.l.b16 %v469
  %v2421 = vunpack.c.h.b16 %v469
  %v2422 = vunpack.c.l.b16 %v470
  %v2423 = vunpack.c.h.b16 %v470
  %v2424 = vunpack.c.l.b16 %v471
  %v2425 = vunpack.c.h.b16 %v471
  %v2426 = vunpack.c.l.b16 %v472
  %v2427 = vunpack.c.h.b16 %v472
  %v2428 = vunpack.c.l.b16 %v473
  %v2429 = vunpack.c.h.b16 %v473
  %v2430 = vunpack.c.l.b16 %v474
  %v2431 = vunpack.c.h.b16 %v474
  %v2432 = vunpack.c.l.b16 %v475
  %v2433 = vunpack.c.h.b16 %v475
  %v2434 = vunpack.c.l.b16 %v476
  %v2435 = vunpack.c.h.b16 %v476
  %v2436 = vunpack.c.l.b16 %v477
  %v2437 = vunpack.c.h.b16 %v477
  %v2438 = vunpack.c.l.b16 %v478
  %v2439 = vunpack.c.h.b16 %v478
  %v2440 = vunpack.c.l.b16 %v479
  %v2441 = vunpack.c.h.b16 %v479
  %v2442 = vunpack.c.l.b16 %v480
  %v2443 = vunpack.c.h.b16 %v480
  %v2444 = vunpack.c.l.b16 %v481
  %v2445 = vunpack.c.h.b16 %v481
  %v2446 = vunpack.c.l.b16 %v482
  %v2447 = vunpack.c.h.b16 %v482
  %v2448 = vunpack.c.l.b16 %v483
  %v2449 = vunpack.c.h.b16 %v483
  %v2450 = vunpack.c.l.b16 %v484
  %v2451 = vunpack.c.h.b16 %v484
  %v2452 = vunpack.c.l.b16 %v485
  %v2453 = vunpack.c.h.b16 %v485
  %v2454 = vunpack.c.l.b16 %v486
  %v2455 = vunpack.c.h.b16 %v486
  %v2456 = vunpack.c.l.b16 %v487
  %v2457 = vunpack.c.h.b16 %v487
  %v2458 = vunpack.c.l.b16 %v488
  %v2459 = vunpack.c.h.b16 %v488
  %v2460 = vunpack.c.l.b16 %v489
  %v2461 = vunpack.c.h.b16 %v489
  %v2462 = vunpack.c.l.b16 %v490
  %v2463 = vunpack.c.h.b16 %v490
  %v2464 = vunpack.c.l.b16 %v491
  %v2465 = vunpack.c.h.b16 %v491
  %v2466 = vunpack.c.l.b16 %v492
  %v2467 = vunpack.c.h.b16 %v492
  %v2468 = vunpack.c.l.b16 %v493
  %v2469 = vunpack.c.h.b16 %v493
  %v2470 = vunpack.c.l.b16 %v494
  %v2471 = vunpack.c.h.b16 %v494
  %v2472 = vunpack.c.l.b16 %v495
  %v2473 = vunpack.c.h.b16 %v495
  %v2474 = vunpack.c.l.b16 %v496
  %v2475 = vunpack.c.h.b16 %v496
  %v2476 = vunpack.c.l.b16 %v497
  %v2477 = vunpack.c.h.b16 %v497
  %v2478 = vunpack.c.l.b16 %v498
  %v2479 = vunpack.c.h.b16 %v498
  %v2480 = vunpack.c.l.b16 %v499
  %v2481 = vunpack.c.h.b16 %v499
  %v2482 = vunpack.c.l.b16 %v500
  %v2483 = vunpack.c.h.b16 %v500
  %v2484 = vunpack.c.l.b16 %v501
  %v2485 = vunpack.c.h.b16 %v501
  %v2486 = vunpack.c.l.b16 %v502
  %v2487 = vunpack.c.h.b16 %v502
  %v2488 = vunpack.c.l.b16 %v503
  %v2489 = vunpack.c.h.b16 %v503
  %v2490 = vunpack.c.l.b16 %v504
  %v2491 = vunpack.c.h.b16 %v504
  %v2492 = vunpack.c.l.b16 %v505
  %v2493 = vunpack.c.h.b16 %v505
  %v2494 = vunpack.c.l.b16 %v506
  %v2495 = vunpack.c.h.b16 %v506
  %v2496 = vunpack.c.l.b16 %v507
  %v2497 = vunpack.c.h.b16 %v507
  %v2498 = vunpack.c.l.b16 %v508
  %v2499 = vunpack.c.h.b16 %v508
  %v2500 = vunpack.c.l.b16 %v509
  %v2501 = vunpack.c.h.b16 %v509
  %v2502 = vunpack.c.l.b16 %v510
  %v2503 = vunpack.c.h.b16 %v510
  %v2504 = vunpack.c.l.b16 %v511
  %v2505 = vunpack.c.h.b16 %v511
  %v2506 = vunpack.c.l.b16 %v512
  %v2507 = vunpack.c.h.b16 %v512
  %v2508 = vunpack.c.l.b16 %v513
  %v2509 = vunpack.c.h.b16 %v513
  %v2510 = vunpack.c.l.b16 %v514
  %v2511 = vunpack.c.h.b16 %v514
  %v2512 = vunpack.c.l.b16 %v515
  %v2513 = vunpack.c.h.b16 %v515
  %v2514 = vunpack.c.l.b16 %v516
  %v2515 = vunpack.c.h.b16 %v516
  %v2516 = vunpack.c.l.b16 %v517
  %v2517 = vunpack.c.h.b16 %v517
  %v2518 = vunpack.c.l.b16 %v518
  %v2519 = vunpack.c.h.b16 %v518
  %v2520 = vunpack.c.l.b16 %v519
  %v2521 = vunpack.c.h.b16 %v519
  %v2522 = vunpack.c.l.b16 %v520
  %v2523 = vunpack.c.h.b16 %v520
  %v2524 = vunpack.c.l.b16 %v521
  %v2525 = vunpack.c.h.b16 %v521
  %v2526 = vunpack.c.l.b16 %v522
  %v2527 = vunpack.c.h.b16 %v522
  %v2528 = vunpack.c.l.b16 %v523
  %v2529 = vunpack.c.h.b16 %v523
  %v2530 = vunpack.c.l.b16 %v524
  %v2531 = vunpack.c.h.b16 %v524
  %v2532 = vunpack.c.l.b16 %v525
  %v2533 = vunpack.c.h.b16 %v525
  %v2534 = vunpack.c.l.b16 %v526
  %v2535 = vunpack.c.h.b16 %v526
  %v2536 = vunpack.c.l.b16 %v527
  %v2537 = vunpack.c.h.b16 %v527
  %v2538 = vunpack.c.l.b16 %v528
  %v2539 = vunpack.c.h.b16 %v528
  %v2540 = vunpack.c.l.b16 %v529
  %v2541 = vunpack.c.h.b16 %v529
  %v2542 = vunpack.c.l.b16 %v530
  %v2543 = vunpack.c.h.b16 %v530
  %v2544 = vunpack.c.l.b16 %v531
  %v2545 = vunpack.c.h.b16 %v531
  %v2546 = vunpack.c.l.b16 %v532
  %v2547 = vunpack.c.h.b16 %v532
  %v2548 = vunpack.c.l.b16 %v533
  %v2549 = vunpack.c.h.b16 %v533
  %v2550 = vunpack.c.l.b16 %v534
  %v2551 = vunpack.c.h.b16 %v534
  %v2552 = vunpack.c.l.b16 %v535
  %v2553 = vunpack.c.h.b16 %v535
  %v2554 = vunpack.c.l.b16 %v536
  %v2555 = vunpack.c.h.b16 %v536
  %v2556 = vunpack.c.l.b16 %v537
  %v2557 = vunpack.c.h.b16 %v537
  %v2558 = vunpack.c.l.b16 %v538
  %v2559 = vunpack.c.h.b16 %v538
  %v2560 = vunpack.c.l.b16 %v539
  %v2561 = vunpack.c.h.b16 %v539
  %v2562 = vunpack.c.l.b16 %v540
  %v2563 = vunpack.c.h.b16 %v540
  %v2564 = vunpack.c.l.b16 %v541
  %v2565 = vunpack.c.h.b16 %v541
  %v2566 = vunpack.c.l.b16 %v542
  %v2567 = vunpack.c.h.b16 %v542
  %v2568 = vunpack.c.l.b16 %v543
  %v2569 = vunpack.c.h.b16 %v543
  %v2570 = vunpack.c.l.b16 %v544
  %v2571 = vunpack.c.h.b16 %v544
  %v2572 = vunpack.c.l.b16 %v545
  %v2573 = vunpack.c.h.b16 %v545
  %v2574 = vunpack.c.l.b16 %v546
  %v2575 = vunpack.c.h.b16 %v546
  %v2576 = vunpack.c.l.b16 %v547
  %v2577 = vunpack.c.h.b16 %v547
  %v2578 = vunpack.c.l.b16 %v548
  %v2579 = vunpack.c.h.b16 %v548
  %v2580 = vunpack.c.l.b16 %v549
  %v2581 = vunpack.c.h.b16 %v549
  %v2582 = vunpack.c.l.b16 %v550
  %v2583 = vunpack.c.h.b16 %v550
  %v2584 = vunpack.c.l.b16 %v551
  %v2585 = vunpack.c.h.b16 %v551
  %v2586 = vunpack.c.l.b16 %v552
  %v2587 = vunpack.c.h.b16 %v552
  %v2588 = vunpack.c.l.b16 %v553
  %v2589 = vunpack.c.h.b16 %v553
  %v2590 = vunpack.c.l.b16 %v554
  %v2591 = vunpack.c.h.b16 %v554
  %v2592 = vunpack.c.l.b16 %v555
  %v2593 = vunpack.c.h.b16 %v555
  %v2594 = vunpack.c.l.b16 %v556
  %v2595 = vunpack.c.h.b16 %v556
  %v2596 = vunpack.c.l.b16 %v557
  %v2597 = vunpack.c.h.b16 %v557
  %v2598 = vunpack.c.l.b16 %v558
  %v2599 = vunpack.c.h.b16 %v558
  %v2600 = vunpack.c.l.b16 %v559
  %v2601 = vunpack.c.h.b16 %v559
  %v2602 = vunpack.c.l.b16 %v560
  %v2603 = vunpack.c.h.b16 %v560
  %v2604 = vunpack.c.l.b16 %v561
  %v2605 = vunpack.c.h.b16 %v561
  %v2606 = vunpack.c.l.b16 %v562
  %v2607 = vunpack.c.h.b16 %v562
  %v2608 = vunpack.c.l.b16 %v563
  %v2609 = vunpack.c.h.b16 %v563
  %v2610 = vunpack.c.l.b16 %v564
  %v2611 = vunpack.c.h.b16 %v564
  %v2612 = vunpack.c.l.b16 %v565
  %v2613 = vunpack.c.h.b16 %v565
  %v2614 = vunpack.c.l.b16 %v566
  %v2615 = vunpack.c.h.b16 %v566
  %v2616 = vunpack.c.l.b16 %v567
  %v2617 = vunpack.c.h.b16 %v567
  %v2618 = vunpack.c.l.b16 %v568
  %v2619 = vunpack.c.h.b16 %v568
  %v2620 = vunpack.c.l.b16 %v569
  %v2621 = vunpack.c.h.b16 %v569
  %v2622 = vunpack.c.l.b16 %v570
  %v2623 = vunpack.c.h.b16 %v570
  %v2624 = vunpack.c.l.b16 %v571
  %v2625 = vunpack.c.h.b16 %v571
  %v2626 = vunpack.c.l.b16 %v572
  %v2627 = vunpack.c.h.b16 %v572
  %v2628 = vunpack.c.l.b16 %v573
  %v2629 = vunpack.c.h.b16 %v573
  %v2630 = vunpack.c.l.b16 %v574
  %v2631 = vunpack.c.h.b16 %v574
  %v2632 = vunpack.c.l.b16 %v575
  %v2633 = vunpack.c.h.b16 %v575
  %v2634 = vunpack.c.l.b16 %v576
  %v2635 = vunpack.c.h.b16 %v576
  %v2636 = vunpack.c.l.b16 %v577
  %v2637 = vunpack.c.h.b16 %v577
  %v2638 = vunpack.c.l.b16 %v578
  %v2639 = vunpack.c.h.b16 %v578
  %v2640 = vunpack.c.l.b16 %v579
  %v2641 = vunpack.c.h.b16 %v579
  %v2642 = vunpack.c.l.b16 %v580
  %v2643 = vunpack.c.h.b16 %v580
  %v2644 = vunpack.c.l.b16 %v581
  %v2645 = vunpack.c.h.b16 %v581
  %v2646 = vunpack.c.l.b16 %v582
  %v2647 = vunpack.c.h.b16 %v582
  %v2648 = vunpack.c.l.b16 %v583
  %v2649 = vunpack.c.h.b16 %v583
  %v2650 = vunpack.c.l.b16 %v584
  %v2651 = vunpack.c.h.b16 %v584
  %v2652 = vunpack.c.l.b16 %v585
  %v2653 = vunpack.c.h.b16 %v585
  %v2654 = vunpack.c.l.b16 %v586
  %v2655 = vunpack.c.h.b16 %v586
  %v2656 = vunpack.c.l.b16 %v587
  %v2657 = vunpack.c.h.b16 %v587
  %v2658 = vunpack.c.l.b16 %v588
  %v2659 = vunpack.c.h.b16 %v588
  %v2660 = vunpack.c.l.b16 %v589
  %v2661 = vunpack.c.h.b16 %v589
  %v2662 = vunpack.c.l.b16 %v590
  %v2663 = vunpack.c.h.b16 %v590
  %v2664 = vunpack.c.l.b16 %v591
  %v2665 = vunpack.c.h.b16 %v591
  %v2666 = vunpack.c.l.b16 %v592
  %v2667 = vunpack.c.h.b16 %v592
  %v2668 = vunpack.c.l.b16 %v593
  %v2669 = vunpack.c.h.b16 %v593
  %v2670 = vunpack.c.l.b16 %v594
  %v2671 = vunpack.c.h.b16 %v594
  %v2672 = vunpack.c.l.b16 %v595
  %v2673 = vunpack.c.h.b16 %v595
  %v2674 = vunpack.c.l.b16 %v596
  %v2675 = vunpack.c.h.b16 %v596
  %v2676 = vunpack.c.l.b16 %v597
  %v2677 = vunpack.c.h.b16 %v597
  %v2678 = vunpack.c.l.b16 %v598
  %v2679 = vunpack.c.h.b16 %v598
  %v2680 = vunpack.c.l.b16 %v599
  %v2681 = vunpack.c.h.b16 %v599
  %v2682 = vunpack.c.l.b16 %v600
  %v2683 = vunpack.c.h.b16 %v600
  %v2684 = vunpack.c.l.b16 %v601
  %v2685 = vunpack.c.h.b16 %v601
  %v2686 = vunpack.c.l.b16 %v602
  %v2687 = vunpack.c.h.b16 %v602
  %v2688 = vunpack.c.l.b16 %v603
  %v2689 = vunpack.c.h.b16 %v603
  %v2690 = vunpack.c.l.b16 %v604
  %v2691 = vunpack.c.h.b16 %v604
  %v2692 = vunpack.c.l.b16 %v605
  %v2693 = vunpack.c.h.b16 %v605
  %v2694 = vunpack.c.l.b16 %v606
  %v2695 = vunpack.c.h.b16 %v606
  %v2696 = vunpack.c.l.b16 %v607
  %v2697 = vunpack.c.h.b16 %v607
  %v2698 = vunpack.c.l.b16 %v608
  %v2699 = vunpack.c.h.b16 %v608
  %v2700 = vunpack.c.l.b16 %v609
  %v2701 = vunpack.c.h.b16 %v609
  %v2702 = vunpack.c.l.b16 %v610
  %v2703 = vunpack.c.h.b16 %v610
  %v2704 = vunpack.c.l.b16 %v611
  %v2705 = vunpack.c.h.b16 %v611
  %v2706 = vunpack.c.l.b16 %v612
  %v2707 = vunpack.c.h.b16 %v612
  %v2708 = vunpack.c.l.b16 %v613
  %v2709 = vunpack.c.h.b16 %v613
  %v2710 = vunpack.c.l.b16 %v614
  %v2711 = vunpack.c.h.b16 %v614
  %v2712 = vunpack.c.l.b16 %v615
  %v2713 = vunpack.c.h.b16 %v615
  %v2714 = vunpack.c.l.b16 %v616
  %v2715 = vunpack.c.h.b16 %v616
  %v2716 = vunpack.c.l.b16 %v617
  %v2717 = vunpack.c.h.b16 %v617
  %v2718 = vunpack.c.l.b16 %v618
  %v2719 = vunpack.c.h.b16 %v618
  %v2720 = vunpack.c.l.b16 %v619
  %v2721 = vunpack.c.h.b16 %v619
  %v2722 = vunpack.c.l.b16 %v620
  %v2723 = vunpack.c.h.b16 %v620
  %v2724 = vunpack.c.l.b16 %v621
  %v2725 = vunpack.c.h.b16 %v621
  %v2726 = vunpack.c.l.b16 %v622
  %v2727 = vunpack.c.h.b16 %v622
  %v2728 = vunpack.c.l.b16 %v623
  %v2729 = vunpack.c.h.b16 %v623
  %v2730 = vunpack.c.l.b16 %v624
  %v2731 = vunpack.c.h.b16 %v624
  %v2732 = vunpack.c.l.b16 %v625
  %v2733 = vunpack.c.h.b16 %v625
  %v2734 = vunpack.c.l.b16 %v626
  %v2735 = vunpack.c.h.b16 %v626
  %v2736 = vunpack.c.l.b16 %v627
  %v2737 = vunpack.c.h.b16 %v627
  %v2738 = vunpack.c.l.b16 %v628
  %v2739 = vunpack.c.h.b16 %v628
  %v2740 = vunpack.c.l.b16 %v629
  %v2741 = vunpack.c.h.b16 %v629
  %v2742 = vunpack.c.l.b16 %v630
  %v2743 = vunpack.c.h.b16 %v630
  %v2744 = vunpack.c.l.b16 %v631
  %v2745 = vunpack.c.h.b16 %v631
  %v2746 = vunpack.c.l.b16 %v632
  %v2747 = vunpack.c.h.b16 %v632
  %v2748 = vunpack.c.l.b16 %v633
  %v2749 = vunpack.c.h.b16 %v633
  %v2750 = vunpack.c.l.b16 %v634
  %v2751 = vunpack.c.h.b16 %v634
  %v2752 = vunpack.c.l.b16 %v635
  %v2753 = vunpack.c.h.b16 %v635
  %v2754 = vunpack.c.l.b16 %v636
  %v2755 = vunpack.c.h.b16 %v636
  %v2756 = vunpack.c.l.b16 %v637
  %v2757 = vunpack.c.h.b16 %v637
  %v2758 = vunpack.c.l.b16 %v638
  %v2759 = vunpack.c.h.b16 %v638
  %v2760 = vunpack.c.l.b16 %v639
  %v2761 = vunpack.c.h.b16 %v639
  %v2762 = vunpack.c.l.b16 %v640
  %v2763 = vunpack.c.h.b16 %v640
  %v2764 = vunpack.c.l.b16 %v641
  %v2765 = vunpack.c.h.b16 %v641
  %v2766 = vunpack.c.l.b16 %v642
  %v2767 = vunpack.c.h.b16 %v642
  %v2768 = vunpack.c.l.b16 %v643
  %v2769 = vunpack.c.h.b16 %v643
  %v2770 = vunpack.c.l.b16 %v644
  %v2771 = vunpack.c.h.b16 %v644
  %v2772 = vunpack.c.l.b16 %v645
  %v2773 = vunpack.c.h.b16 %v645
  %v2774 = vunpack.c.l.b16 %v646
  %v2775 = vunpack.c.h.b16 %v646
  %v2776 = vunpack.c.l.b16 %v647
  %v2777 = vunpack.c.h.b16 %v647
  %v2778 = vunpack.c.l.b16 %v648
  %v2779 = vunpack.c.h.b16 %v648
  %v2780 = vunpack.c.l.b16 %v649
  %v2781 = vunpack.c.h.b16 %v649
  %v2782 = vunpack.c.l.b16 %v650
  %v2783 = vunpack.c.h.b16 %v650
  %v2784 = vunpack.c.l.b16 %v651
  %v2785 = vunpack.c.h.b16 %v651
  %v2786 = vunpack.c.l.b16 %v652
  %v2787 = vunpack.c.h.b16 %v652
  %v2788 = vunpack.c.l.b16 %v653
  %v2789 = vunpack.c.h.b16 %v653
  %v2790 = vunpack.c.l.b16 %v654
  %v2791 = vunpack.c.h.b16 %v654
  %v2792 = vunpack.c.l.b16 %v655
  %v2793 = vunpack.c.h.b16 %v655
  %v2794 = vunpack.c.l.b16 %v656
  %v2795 = vunpack.c.h.b16 %v656
  %v2796 = vunpack.c.l.b16 %v657
  %v2797 = vunpack.c.h.b16 %v657
  %v2798 = vunpack.c.l.b16 %v658
  %v2799 = vunpack.c.h.b16 %v658
  %v2800 = vunpack.c.l.b16 %v659
  %v2801 = vunpack.c.h.b16 %v659
  %v2802 = vunpack.c.l.b16 %v660
  %v2803 = vunpack.c.h.b16 %v660
  %v2804 = vunpack.c.l.b16 %v661
  %v2805 = vunpack.c.h.b16 %v661
  %v2806 = vunpack.c.l.b16 %v662
  %v2807 = vunpack.c.h.b16 %v662
  %v2808 = vunpack.c.l.b16 %v663
  %v2809 = vunpack.c.h.b16 %v663
  %v2810 = vunpack.c.l.b16 %v664
  %v2811 = vunpack.c.h.b16 %v664
  %v2812 = vunpack.c.l.b16 %v665
  %v2813 = vunpack.c.h.b16 %v665
  %v2814 = vunpack.c.l.b16 %v666
  %v2815 = vunpack.c.h.b16 %v666
  %v2816 = vunpack.c.l.b16 %v667
  %v2817 = vunpack.c.h.b16 %v667
  %v2818 = vunpack.c.l.b16 %v668
  %v2819 = vunpack.c.h.b16 %v668
  %v2820 = vunpack.c.l.b16 %v669
  %v2821 = vunpack.c.h.b16 %v669
  %v2822 = vunpack.c.l.b16 %v670
  %v2823 = vunpack.c.h.b16 %v670
  %v2824 = vunpack.c.l.b16 %v671
  %v2825 = vunpack.c.h.b16 %v671
  %v2826 = vunpack.c.l.b16 %v672
  %v2827 = vunpack.c.h.b16 %v672
  %v2828 = vunpack.c.l.b16 %v673
  %v2829 = vunpack.c.h.b16 %v673
  %v2830 = vunpack.c.l.b16 %v674
  %v2831 = vunpack.c.h.b16 %v674
  %v2832 = vunpack.c.l.b16 %v675
  %v2833 = vunpack.c.h.b16 %v675
  %v2834 = vunpack.c.l.b16 %v676
  %v2835 = vunpack.c.h.b16 %v676
  %v2836 = vunpack.c.l.b16 %v677
  %v2837 = vunpack.c.h.b16 %v677
  %v2838 = vunpack.c.l.b16 %v678
  %v2839 = vunpack.c.h.b16 %v678
  %v2840 = vunpack.c.l.b16 %v679
  %v2841 = vunpack.c.h.b16 %v679
  %v2842 = vunpack.c.l.b16 %v680
  %v2843 = vunpack.c.h.b16 %v680
  %v2844 = vunpack.c.l.b16 %v681
  %v2845 = vunpack.c.h.b16 %v681
  %v2846 = vunpack.c.l.b16 %v682
  %v2847 = vunpack.c.h.b16 %v682
  %v2848 = vunpack.c.l.b16 %v683
  %v2849 = vunpack.c.h.b16 %v683
  %v2850 = vunpack.c.l.b16 %v684
  %v2851 = vunpack.c.h.b16 %v684
  %v2852 = vunpack.c.l.b16 %v685
  %v2853 = vunpack.c.h.b16 %v685
  %v2854 = vunpack.c.l.b16 %v686
  %v2855 = vunpack.c.h.b16 %v686
  %v2856 = vunpack.c.l.b16 %v687
  %v2857 = vunpack.c.h.b16 %v687
  %v2858 = vunpack.c.l.b16 %v688
  %v2859 = vunpack.c.h.b16 %v688
  %v2860 = vunpack.c.l.b16 %v689
  %v2861 = vunpack.c.h.b16 %v689
  %v2862 = vunpack.c.l.b16 %v690
  %v2863 = vunpack.c.h.b16 %v690
  %v2864 = vunpack.c.l.b16 %v691
  %v2865 = vunpack.c.h.b16 %v691
  %v2866 = vunpack.c.l.b16 %v692
  %v2867 = vunpack.c.h.b16 %v692
  %v2868 = vunpack.c.l.b16 %v693
  %v2869 = vunpack.c.h.b16 %v693
  %v2870 = vunpack.c.l.b16 %v694
  %v2871 = vunpack.c.h.b16 %v694
  %v2872 = vunpack.c.l.b16 %v695
  %v2873 = vunpack.c.h.b16 %v695
  %v2874 = vunpack.c.l.b16 %v696
  %v2875 = vunpack.c.h.b16 %v696
  %v2876 = vunpack.c.l.b16 %v697
  %v2877 = vunpack.c.h.b16 %v697
  %v2878 = vunpack.c.l.b16 %v698
  %v2879 = vunpack.c.h.b16 %v698
  %v2880 = vunpack.c.l.b16 %v699
  %v2881 = vunpack.c.h.b16 %v699
  %v2882 = vunpack.c.l.b16 %v700
  %v2883 = vunpack.c.h.b16 %v700
  %v2884 = vunpack.c.l.b16 %v701
  %v2885 = vunpack.c.h.b16 %v701
  %v2886 = vunpack.c.l.b16 %v702
  %v2887 = vunpack.c.h.b16 %v702
  %v2888 = vunpack.c.l.b16 %v703
  %v2889 = vunpack.c.h.b16 %v703
  %v2890 = vunpack.c.l.b16 %v704
  %v2891 = vunpack.c.h.b16 %v704
  %v2892 = vunpack.c.l.b16 %v705
  %v2893 = vunpack.c.h.b16 %v705
  %v2894 = vunpack.c.l.b16 %v706
  %v2895 = vunpack.c.h.b16 %v706
  %v2896 = vunpack.c.l.b16 %v707
  %v2897 = vunpack.c.h.b16 %v707
  %v2898 = vunpack.c.l.b16 %v708
  %v2899 = vunpack.c.h.b16 %v708
  %v2900 = vunpack.c.l.b16 %v709
  %v2901 = vunpack.c.h.b16 %v709
  %v2902 = vunpack.c.l.b16 %v710
  %v2903 = vunpack.c.h.b16 %v710
  %v2904 = vunpack.c.l.b16 %v711
  %v2905 = vunpack.c.h.b16 %v711
  %v2906 = vunpack.c.l.b16 %v712
  %v2907 = vunpack.c.h.b16 %v712
  %v2908 = vunpack.c.l.b16 %v713
  %v2909 = vunpack.c.h.b16 %v713
  %v2910 = vunpack.c.l.b16 %v714
  %v2911 = vunpack.c.h.b16 %v714
  %v2912 = vunpack.c.l.b16 %v715
  %v2913 = vunpack.c.h.b16 %v715
  %v2914 = vunpack.c.l.b16 %v716
  %v2915 = vunpack.c.h.b16 %v716
  %v2916 = vunpack.c.l.b16 %v717
  %v2917 = vunpack.c.h.b16 %v717
  %v2918 = vunpack.c.l.b16 %v718
  %v2919 = vunpack.c.h.b16 %v718
  %v2920 = vunpack.c.l.b16 %v719
  %v2921 = vunpack.c.h.b16 %v719
  %v2922 = vunpack.c.l.b16 %v720
  %v2923 = vunpack.c.h.b16 %v720
  %v2924 = vunpack.c.l.b16 %v721
  %v2925 = vunpack.c.h.b16 %v721
  %v2926 = vunpack.c.l.b16 %v722
  %v2927 = vunpack.c.h.b16 %v722
  %v2928 = vunpack.c.l.b16 %v723
  %v2929 = vunpack.c.h.b16 %v723
  %v2930 = vunpack.c.l.b16 %v724
  %v2931 = vunpack.c.h.b16 %v724
  %v2932 = vunpack.c.l.b16 %v725
  %v2933 = vunpack.c.h.b16 %v725
  %v2934 = vunpack.c.l.b16 %v726
  %v2935 = vunpack.c.h.b16 %v726
  %v2936 = vunpack.c.l.b16 %v727
  %v2937 = vunpack.c.h.b16 %v727
  %v2938 = vunpack.c.l.b16 %v728
  %v2939 = vunpack.c.h.b16 %v728
  %v2940 = vunpack.c.l.b16 %v729
  %v2941 = vunpack.c.h.b16 %v729
  %v2942 = vunpack.c.l.b16 %v730
  %v2943 = vunpack.c.h.b16 %v730
  %v2944 = vunpack.c.l.b16 %v731
  %v2945 = vunpack.c.h.b16 %v731
  %v2946 = vunpack.c.l.b16 %v732
  %v2947 = vunpack.c.h.b16 %v732
  %v2948 = vunpack.c.l.b16 %v733
  %v2949 = vunpack.c.h.b16 %v733
  %v2950 = vunpack.c.l.b16 %v734
  %v2951 = vunpack.c.h.b16 %v734
  %v2952 = vunpack.c.l.b16 %v735
  %v2953 = vunpack.c.h.b16 %v735
  %v2954 = vunpack.c.l.b16 %v736
  %v2955 = vunpack.c.h.b16 %v736
  %v2956 = vunpack.c.l.b16 %v737
  %v2957 = vunpack.c.h.b16 %v737
  %v2958 = vunpack.c.l.b16 %v738
  %v2959 = vunpack.c.h.b16 %v738
  %v2960 = vunpack.c.l.b16 %v739
  %v2961 = vunpack.c.h.b16 %v739
  %v2962 = vunpack.c.l.b16 %v740
  %v2963 = vunpack.c.h.b16 %v740
  %v2964 = vunpack.c.l.b16 %v741
  %v2965 = vunpack.c.h.b16 %v741
  %v2966 = vunpack.c.l.b16 %v742
  %v2967 = vunpack.c.h.b16 %v742
  %v2968 = vunpack.c.l.b16 %v743
  %v2969 = vunpack.c.h.b16 %v743
  %v2970 = vunpack.c.l.b16 %v744
  %v2971 = vunpack.c.h.b16 %v744
  %v2972 = vunpack.c.l.b16 %v745
  %v2973 = vunpack.c.h.b16 %v745
  %v2974 = vunpack.c.l.b16 %v746
  %v2975 = vunpack.c.h.b16 %v746
  %v2976 = vunpack.c.l.b16 %v747
  %v2977 = vunpack.c.h.b16 %v747
  %v2978 = vunpack.c.l.b16 %v748
  %v2979 = vunpack.c.h.b16 %v748
  %v2980 = vunpack.c.l.b16 %v749
  %v2981 = vunpack.c.h.b16 %v749
  %v2982 = vunpack.c.l.b16 %v750
  %v2983 = vunpack.c.h.b16 %v750
  %v2984 = vunpack.c.l.b16 %v751
  %v2985 = vunpack.c.h.b16 %v751
  %v2986 = vunpack.c.l.b16 %v752
  %v2987 = vunpack.c.h.b16 %v752
  %v2988 = vunpack.c.l.b16 %v753
  %v2989 = vunpack.c.h.b16 %v753
  %v2990 = vunpack.c.l.b16 %v754
  %v2991 = vunpack.c.h.b16 %v754
  %v2992 = vunpack.c.l.b16 %v755
  %v2993 = vunpack.c.h.b16 %v755
  %v2994 = vunpack.c.l.b16 %v756
  %v2995 = vunpack.c.h.b16 %v756
  %v2996 = vunpack.c.l.b16 %v757
  %v2997 = vunpack.c.h.b16 %v757
  %v2998 = vunpack.c.l.b16 %v758
  %v2999 = vunpack.c.h.b16 %v758
  %v3000 = vunpack.c.l.b16 %v759
  %v3001 = vunpack.c.h.b16 %v759
  %v3002 = vunpack.c.l.b16 %v760
  %v3003 = vunpack.c.h.b16 %v760
  %v3004 = vunpack.c.l.b16 %v761
  %v3005 = vunpack.c.h.b16 %v761
  %v3006 = vunpack.c.l.b16 %v762
  %v3007 = vunpack.c.h.b16 %v762
  %v3008 = vunpack.c.l.b16 %v763
  %v3009 = vunpack.c.h.b16 %v763
  %v3010 = vpack.c.b16 %v1580, %v1570
  %v3011 = vpack.c.b16 %v1581, %v1571
  %v3012 = vpack.c.b16 %v1582, %v1572
  %v3013 = vpack.c.b16 %v1583, %v1573
  %v3014 = vpack.c.b16 %v1584, %v1574
  %v3015 = vpack.c.b16 %v1585, %v1575
  %v3016 = vpack.c.b16 %v1586, %v1576
  %v3017 = vpack.c.b16 %v1587, %v1577
  %v3018 = vpack.c.b16 %v1588, %v1578
  %v3019 = vpack.c.b16 %v1589, %v1579
  %v3020 = vpack.c.b16 %v1600, %v1590
  %v3021 = vpack.c.b16 %v1601, %v1591
  %v3022 = vpack.c.b16 %v1602, %v1592
  %v3023 = vpack.c.b16 %v1603, %v1593
  %v3024 = vpack.c.b16 %v1604, %v1594
  %v3025 = vpack.c.b16 %v1605, %v1595
  %v3026 = vpack.c.b16 %v1606, %v1596
  %v3027 = vpack.c.b16 %v1607, %v1597
  %v3028 = vpack.c.b16 %v1608, %v1598
  %v3029 = vpack.c.b16 %v1609, %v1599
  %v3030 = vpack.c.b16 %v1620, %v1610
  %v3031 = vpack.c.b16 %v1621, %v1611
  %v3032 = vpack.c.b16 %v1622, %v1612
  %v3033 = vpack.c.b16 %v1623, %v1613
  %v3034 = vpack.c.b16 %v1624, %v1614
  %v3035 = vpack.c.b16 %v1625, %v1615
  %v3036 = vpack.c.b16 %v1626, %v1616
  %v3037 = vpack.c.b16 %v1627, %v1617
  %v3038 = vpack.c.b16 %v1628, %v1618
  %v3039 = vpack.c.b16 %v1629, %v1619
  %v3040 = vpack.c.b16 %v1640, %v1630
  %v3041 = vpack.c.b16 %v1641, %v1631
  %v3042 = vpack.c.b16 %v1642, %v1632
  %v3043 = vpack.c.b16 %v1643, %v1633
  %v3044 = vpack.c.b16 %v1644, %v1634
  %v3045 = vpack.c.b16 %v1645, %v1635
  %v3046 = vpack.c.b16 %v1646, %v1636
  %v3047 = vpack.c.b16 %v1647, %v1637
  %v3048 = vpack.c.b16 %v1648, %v1638
  %v3049 = vpack.c.b16 %v1649, %v1639
  %v3050 = vpack.c.b16 %v1660, %v1650
  %v3051 = vpack.c.b16 %v1661, %v1651
  %v3052 = vpack.c.b16 %v1662, %v1652
  %v3053 = vpack.c.b16 %v1663, %v1653
  %v3054 = vpack.c.b16 %v1664, %v1654
  %v3055 = vpack.c.b16 %v1665, %v1655
  %v3056 = vpack.c.b16 %v1666, %v1656
  %v3057 = vpack.c.b16 %v1667, %v1657
  %v3058 = vpack.c.b16 %v1668, %v1658
  %v3059 = vpack.c.b16 %v1669, %v1659
  %v3060 = vpack.c.b16 %v1680, %v1670
  %v3061 = vpack.c.b16 %v1681, %v1671
  %v3062 = vpack.c.b16 %v1682, %v1672
  %v3063 = vpack.c.b16 %v1683, %v1673
  %v3064 = vpack.c.b16 %v1684, %v1674
  %v3065 = vpack.c.b16 %v1685, %v1675
  %v3066 = vpack.c.b16 %v1686, %v1676
  %v3067 = vpack.c.b16 %v1687, %v1677
  %v3068 = vpack.c.b16 %v1688, %v1678
  %v3069 = vpack.c.b16 %v1689, %v1679
  %v3070 = vpack.c.b16 %v1700, %v1690
  %v3071 = vpack.c.b16 %v1701, %v1691
  %v3072 = vpack.c.b16 %v1702, %v1692
  %v3073 = vpack.c.b16 %v1703, %v1693
  %v3074 = vpack.c.b16 %v1704, %v1694
  %v3075 = vpack.c.b16 %v1705, %v1695
  %v3076 = vpack.c.b16 %v1706, %v1696
  %v3077 = vpack.c.b16 %v1707, %v1697
  %v3078 = vpack.c.b16 %v1708, %v1698
  %v3079 = vpack.c.b16 %v1709, %v1699
  %v3080 = vpack.c.b16 %v1720, %v1710
  %v3081 = vpack.c.b16 %v1721, %v1711
  %v3082 = vpack.c.b16 %v1722, %v1712
  %v3083 = vpack.c.b16 %v1723, %v1713
  %v3084 = vpack.c.b16 %v1724, %v1714
  %v3085 = vpack.c.b16 %v1725, %v1715
  %v3086 = vpack.c.b16 %v1726, %v1716
  %v3087 = vpack.c.b16 %v1727, %v1717
  %v3088 = vpack.c.b16 %v1728, %v1718
  %v3089 = vpack.c.b16 %v1729, %v1719
  %v3090 = vpack.c.b16 %v1740, %v1730
  %v3091 = vpack.c.b16 %v1741, %v1731
  %v3092 = vpack.c.b16 %v1742, %v1732
  %v3093 = vpack.c.b16 %v1743, %v1733
  %v3094 = vpack.c.b16 %v1744, %v1734
  %v3095 = vpack.c.b16 %v1745, %v1735
  %v3096 = vpack.c.b16 %v1746, %v1736
  %v3097 = vpack.c.b16 %v1747, %v1737
  %v3098 = vpack.c.b16 %v1748, %v1738
  %v3099 = vpack.c.b16 %v1749, %v1739
  %v3100 = vpack.c.b16 %v1760, %v1750
  %v3101 = vpack.c.b16 %v1761, %v1751
  %v3102 = vpack.c.b16 %v1762, %v1752
  %v3103 = vpack.c.b16 %v1763, %v1753
  %v3104 = vpack.c.b16 %v1764, %v1754
  %v3105 = vpack.c.b16 %v1765, %v1755
  %v3106 = vpack.c.b16 %v1766, %v1756
  %v3107 = vpack.c.b16 %v1767, %v1757
  %v3108 = vpack.c.b16 %v1768, %v1758
  %v3109 = vpack.c.b16 %v1769, %v1759
  %v3110 = vpack.c.b16 %v1780, %v1770
  %v3111 = vpack.c.b16 %v1781, %v1771
  %v3112 = vpack.c.b16 %v1782, %v1772
  %v3113 = vpack.c.b16 %v1783, %v1773
  %v3114 = vpack.c.b16 %v1784, %v1774
  %v3115 = vpack.c.b16 %v1785, %v1775
  %v3116 = vpack.c.b16 %v1786, %v1776
  %v3117 = vpack.c.b16 %v1787, %v1777
  %v3118 = vpack.c.b16 %v1788, %v1778
  %v3119 = vpack.c.b16 %v1789, %v1779
  %v3120 = vpack.c.b16 %v1800, %v1790
  %v3121 = vpack.c.b16 %v1801, %v1791
  %v3122 = vpack.c.b16 %v1802, %v1792
  %v3123 = vpack.c.b16 %v1803, %v1793
  %v3124 = vpack.c.b16 %v1804, %v1794
  %v3125 = vpack.c.b16 %v1805, %v1795
  %v3126 = vpack.c.b16 %v1806, %v1796
  %v3127 = vpack.c.b16 %v1807, %v1797
  %v3128 = vpack.c.b16 %v1808, %v1798
  %v3129 = vpack.c.b16 %v1809, %v1799
  %v3130 = vpack.c.b16 %v1820, %v1810
  %v3131 = vpack.c.b16 %v1821, %v1811
  %v3132 = vpack.c.b16 %v1822, %v1812
  %v3133 = vpack.c.b16 %v1823, %v1813
  %v3134 = vpack.c.b16 %v1824, %v1814
  %v3135 = vpack.c.b16 %v1825, %v1815
  %v3136 = vpack.c.b16 %v1826, %v1816
  %v3137 = vpack.c.b16 %v1827, %v1817
  %v3138 = vpack.c.b16 %v1828, %v1818
  %v3139 = vpack.c.b16 %v1829, %v1819
  %v3140 = vpack.c.b16 %v1840, %v1830
  %v3141 = vpack.c.b16 %v1841, %v1831
  %v3142 = vpack.c.b16 %v1842, %v1832
  %v3143 = vpack.c.b16 %v1843, %v1833
  %v3144 = vpack.c.b16 %v1844, %v1834
  %v3145 = vpack.c.b16 %v1845, %v1835
  %v3146 = vpack.c.b16 %v1846, %v1836
  %v3147 = vpack.c.b16 %v1847, %v1837
  %v3148 = vpack.c.b16 %v1848, %v1838
  %v3149 = vpack.c.b16 %v1849, %v1839
  %v3150 = vpack.c.b16 %v1860, %v1850
  %v3151 = vpack.c.b16 %v1861, %v1851
  %v3152 = vpack.c.b16 %v1862, %v1852
  %v3153 = vpack.c.b16 %v1863, %v1853
  %v3154 = vpack.c.b16 %v1864, %v1854
  %v3155 = vpack.c.b16 %v1865, %v1855
  %v3156 = vpack.c.b16 %v1866, %v1856
  %v3157 = vpack.c.b16 %v1867, %v1857
  %v3158 = vpack.c.b16 %v1868, %v1858
  %v3159 = vpack.c.b16 %v1869, %v1859
  %v3160 = vpack.c.b16 %v1880, %v1870
  %v3161 = vpack.c.b16 %v1881, %v1871
  %v3162 = vpack.c.b16 %v1882, %v1872
  %v3163 = vpack.c.b16 %v1883, %v1873
  %v3164 = vpack.c.b16 %v1884, %v1874
  %v3165 = vpack.c.b16 %v1885, %v1875
  %v3166 = vpack.c.b16 %v1886, %v1876
  %v3167 = vpack.c.b16 %v1887, %v1877
  %v3168 = vpack.c.b16 %v1888, %v1878
  %v3169 = vpack.c.b16 %v1889, %v1879
  %v3170 = vpack.c.b16 %v1900, %v1890
  %v3171 = vpack.c.b16 %v1901, %v1891
  %v3172 = vpack.c.b16 %v1902, %v1892
  %v3173 = vpack.c.b16 %v1903, %v1893
  %v3174 = vpack.c.b16 %v1904, %v1894
  %v3175 = vpack.c.b16 %v1905, %v1895
  %v3176 = vpack.c.b16 %v1906, %v1896
  %v3177 = vpack.c.b16 %v1907, %v1897
  %v3178 = vpack.c.b16 %v1908, %v1898
  %v3179 = vpack.c.b16 %v1909, %v1899
  %v3180 = vpack.c.b16 %v1920, %v1910
  %v3181 = vpack.c.b16 %v1921, %v1911
  %v3182 = vpack.c.b16 %v1922, %v1912
  %v3183 = vpack.c.b16 %v1923, %v1913
  %v3184 = vpack.c.b16 %v1924, %v1914
  %v3185 = vpack.c.b16 %v1925, %v1915
  %v3186 = vpack.c.b16 %v1926, %v1916
  %v3187 = vpack.c.b16 %v1927, %v1917
  %v3188 = vpack.c.b16 %v1928, %v1918
  %v3189 = vpack.c.b16 %v1929, %v1919
  %v3190 = vpack.c.b16 %v1940, %v1930
  %v3191 = vpack.c.b16 %v1941, %v1931
  %v3192 = vpack.c.b16 %v1942, %v1932
  %v3193 = vpack.c.b16 %v1943, %v1933
  %v3194 = vpack.c.b16 %v1944, %v1934
  %v3195 = vpack.c.b16 %v1945, %v1935
  %v3196 = vpack.c.b16 %v1946, %v1936
  %v3197 = vpack.c.b16 %v1947, %v1937
  %v3198 = vpack.c.b16 %v1948, %v1938
  %v3199 = vpack.c.b16 %v1949, %v1939
  %v3200 = vpack.c.b16 %v1960, %v1950
  %v3201 = vpack.c.b16 %v1961, %v1951
  %v3202 = vpack.c.b16 %v1962, %v1952
  %v3203 = vpack.c.b16 %v1963, %v1953
  %v3204 = vpack.c.b16 %v1964, %v1954
  %v3205 = vpack.c.b16 %v1965, %v1955
  %v3206 = vpack.c.b16 %v1966, %v1956
  %v3207 = vpack.c.b16 %v1967, %v1957
  %v3208 = vpack.c.b16 %v1968, %v1958
  %v3209 = vpack.c.b16 %v1969, %v1959
  %v3210 = vpack.c.b16 %v1980, %v1970
  %v3211 = vpack.c.b16 %v1981, %v1971
  %v3212 = vpack.c.b16 %v1982, %v1972
  %v3213 = vpack.c.b16 %v1983, %v1973
  %v3214 = vpack.c.b16 %v1984, %v1974
  %v3215 = vpack.c.b16 %v1985, %v1975
  %v3216 = vpack.c.b16 %v1986, %v1976
  %v3217 = vpack.c.b16 %v1987, %v1977
  %v3218 = vpack.c.b16 %v1988, %v1978
  %v3219 = vpack.c.b16 %v1989, %v1979
  %v3220 = vpack.c.b16 %v2000, %v1990
  %v3221 = vpack.c.b16 %v2001, %v1991
  %v3222 = vpack.c.b16 %v2002, %v1992
  %v3223 = vpack.c.b16 %v2003, %v1993
  %v3224 = vpack.c.b16 %v2004, %v1994
  %v3225 = vpack.c.b16 %v2005, %v1995
  %v3226 = vpack.c.b16 %v2006, %v1996
  %v3227 = vpack.c.b16 %v2007, %v1997
  %v3228 = vpack.c.b16 %v2008, %v1998
  %v3229 = vpack.c.b16 %v2009, %v1999
  %v3230 = vpack.c.b16 %v2020, %v2010
  %v3231 = vpack.c.b16 %v2021, %v2011
  %v3232 = vpack.c.b16 %v2022, %v2012
  %v3233 = vpack.c.b16 %v2023, %v2013
  %v3234 = vpack.c.b16 %v2024, %v2014
  %v3235 = vpack.c.b16 %v2025, %v2015
  %v3236 = vpack.c.b16 %v2026, %v2016
  %v3237 = vpack.c.b16 %v2027, %v2017
  %v3238 = vpack.c.b16 %v2028, %v2018
  %v3239 = vpack.c.b16 %v2029, %v2019
  %v3240 = vpack.c.b16 %v2040, %v2030
  %v3241 = vpack.c.b16 %v2041, %v2031
  %v3242 = vpack.c.b16 %v2042, %v2032
  %v3243 = vpack.c.b16 %v2043, %v2033
  %v3244 = vpack.c.b16 %v2044, %v2034
  %v3245 = vpack.c.b16 %v2045, %v2035
  %v3246 = vpack.c.b16 %v2046, %v2036
  %v3247 = vpack.c.b16 %v2047, %v2037
  %v3248 = vpack.c.b16 %v2048, %v2038
  %v3249 = vpack.c.b16 %v2049, %v2039
  %v3250 = vpack.c.b16 %v2060, %v2050
  %v3251 = vpack.c.b16 %v2061, %v2051
  %v3252 = vpack.c.b16 %v2062, %v2052
  %v3253 = vpack.c.b16 %v2063, %v2053
  %v3254 = vpack.c.b16 %v2064, %v2054
  %v3255 = vpack.c.b16 %v2065, %v2055
  %v3256 = vpack.c.b16 %v2066, %v2056
  %v3257 = vpack.c.b16 %v2067, %v2057
  %v3258 = vpack.c.b16 %v2068, %v2058
  %v3259 = vpack.c.b16 %v2069, %v2059
  %v3260 = vpack.c.b16 %v2080, %v2070
  %v3261 = vpack.c.b16 %v2081, %v2071
  %v3262 = vpack.c.b16 %v2082, %v2072
  %v3263 = vpack.c.b16 %v2083, %v2073
  %v3264 = vpack.c.b16 %v2084, %v2074
  %v3265 = vpack.c.b16 %v2085, %v2075
  %v3266 = vpack.c.b16 %v2086, %v2076
  %v3267 = vpack.c.b16 %v2087, %v2077
  %v3268 = vpack.c.b16 %v2088, %v2078
  %v3269 = vpack.c.b16 %v2089, %v2079
  %v3270 = vpack.c.b16 %v2100, %v2090
  %v3271 = vpack.c.b16 %v2101, %v2091
  %v3272 = vpack.c.b16 %v2102, %v2092
  %v3273 = vpack.c.b16 %v2103, %v2093
  %v3274 = vpack.c.b16 %v2104, %v2094
  %v3275 = vpack.c.b16 %v2105, %v2095
  %v3276 = vpack.c.b16 %v2106, %v2096
  %v3277 = vpack.c.b16 %v2107, %v2097
  %v3278 = vpack.c.b16 %v2108, %v2098
  %v3279 = vpack.c.b16 %v2109, %v2099
  %v3280 = vpack.c.b16 %v2120, %v2110
  %v3281 = vpack.c.b16 %v2121, %v2111
  %v3282 = vpack.c.b16 %v2122, %v2112
  %v3283 = vpack.c.b16 %v2123, %v2113
  %v3284 = vpack.c.b16 %v2124, %v2114
  %v3285 = vpack.c.b16 %v2125, %v2115
  %v3286 = vpack.c.b16 %v2126, %v2116
  %v3287 = vpack.c.b16 %v2127, %v2117
  %v3288 = vpack.c.b16 %v2128, %v2118
  %v3289 = vpack.c.b16 %v2129, %v2119
  %v3290 = vpack.c.b16 %v2140, %v2130
  %v3291 = vpack.c.b16 %v2141, %v2131
  %v3292 = vpack.c.b16 %v2142, %v2132
  %v3293 = vpack.c.b16 %v2143, %v2133
  %v3294 = vpack.c.b16 %v2144, %v2134
  %v3295 = vpack.c.b16 %v2145, %v2135
  %v3296 = vpack.c.b16 %v2146, %v2136
  %v3297 = vpack.c.b16 %v2147, %v2137
  %v3298 = vpack.c.b16 %v2148, %v2138
  %v3299 = vpack.c.b16 %v2149, %v2139
  %v3300 = vpack.c.b16 %v2160, %v2150
  %v3301 = vpack.c.b16 %v2161, %v2151
  %v3302 = vpack.c.b16 %v2162, %v2152
  %v3303 = vpack.c.b16 %v2163, %v2153
  %v3304 = vpack.c.b16 %v2164, %v2154
  %v3305 = vpack.c.b16 %v2165, %v2155
  %v3306 = vpack.c.b16 %v2166, %v2156
  %v3307 = vpack.c.b16 %v2167, %v2157
  %v3308 = vpack.c.b16 %v2168, %v2158
  %v3309 = vpack.c.b16 %v2169, %v2159
  %v3310 = vpack.c.b16 %v2180, %v2170
  %v3311 = vpack.c.b16 %v2181, %v2171
  %v3312 = vpack.c.b16 %v2182, %v2172
  %v3313 = vpack.c.b16 %v2183, %v2173
  %v3314 = vpack.c.b16 %v2184, %v2174
  %v3315 = vpack.c.b16 %v2185, %v2175
  %v3316 = vpack.c.b16 %v2186, %v2176
  %v3317 = vpack.c.b16 %v2187, %v2177
  %v3318 = vpack.c.b16 %v2188, %v2178
  %v3319 = vpack.c.b16 %v2189, %v2179
  %v3320 = vpack.c.b16 %v2200, %v2190
  %v3321 = vpack.c.b16 %v2201, %v2191
  %v3322 = vpack.c.b16 %v2202, %v2192
  %v3323 = vpack.c.b16 %v2203, %v2193
  %v3324 = vpack.c.b16 %v2204, %v2194
  %v3325 = vpack.c.b16 %v2205, %v2195
  %v3326 = vpack.c.b16 %v2206, %v2196
  %v3327 = vpack.c.b16 %v2207, %v2197
  %v3328 = vpack.c.b16 %v2208, %v2198
  %v3329 = vpack.c.b16 %v2209, %v2199
  %v3330 = vpack.c.b16 %v2220, %v2210
  %v3331 = vpack.c.b16 %v2221, %v2211
  %v3332 = vpack.c.b16 %v2222, %v2212
  %v3333 = vpack.c.b16 %v2223, %v2213
  %v3334 = vpack.c.b16 %v2224, %v2214
  %v3335 = vpack.c.b16 %v2225, %v2215
  %v3336 = vpack.c.b16 %v2226, %v2216
  %v3337 = vpack.c.b16 %v2227, %v2217
  %v3338 = vpack.c.b16 %v2228, %v2218
  %v3339 = vpack.c.b16 %v2229, %v2219
  %v3340 = vpack.c.b16 %v2240, %v2230
  %v3341 = vpack.c.b16 %v2241, %v2231
  %v3342 = vpack.c.b16 %v2242, %v2232
  %v3343 = vpack.c.b16 %v2243, %v2233
  %v3344 = vpack.c.b16 %v2244, %v2234
  %v3345 = vpack.c.b16 %v2245, %v2235
  %v3346 = vpack.c.b16 %v2246, %v2236
  %v3347 = vpack.c.b16 %v2247, %v2237
  %v3348 = vpack.c.b16 %v2248, %v2238
  %v3349 = vpack.c.b16 %v2249, %v2239
  %v3350 = vpack.c.b16 %v2260, %v2250
  %v3351 = vpack.c.b16 %v2261, %v2251
  %v3352 = vpack.c.b16 %v2262, %v2252
  %v3353 = vpack.c.b16 %v2263, %v2253
  %v3354 = vpack.c.b16 %v2264, %v2254
  %v3355 = vpack.c.b16 %v2265, %v2255
  %v3356 = vpack.c.b16 %v2266, %v2256
  %v3357 = vpack.c.b16 %v2267, %v2257
  %v3358 = vpack.c.b16 %v2268, %v2258
  %v3359 = vpack.c.b16 %v2269, %v2259
  %v3360 = vpack.c.b16 %v2280, %v2270
  %v3361 = vpack.c.b16 %v2281, %v2271
  %v3362 = vpack.c.b16 %v2282, %v2272
  %v3363 = vpack.c.b16 %v2283, %v2273
  %v3364 = vpack.c.b16 %v2284, %v2274
  %v3365 = vpack.c.b16 %v2285, %v2275
  %v3366 = vpack.c.b16 %v2286, %v2276
  %v3367 = vpack.c.b16 %v2287, %v2277
  %v3368 = vpack.c.b16 %v2288, %v2278
  %v3369 = vpack.c.b16 %v2289, %v2279
  %v3370 = vpack.c.b16 %v2300, %v2290
  %v3371 = vpack.c.b16 %v2301, %v2291
  %v3372 = vpack.c.b16 %v2302, %v2292
  %v3373 = vpack.c.b16 %v2303, %v2293
  %v3374 = vpack.c.b16 %v2304, %v2294
  %v3375 = vpack.c.b16 %v2305, %v2295
  %v3376 = vpack.c.b16 %v2306, %v2296
  %v3377 = vpack.c.b16 %v2307, %v2297
  %v3378 = vpack.c.b16 %v2308, %v2298
  %v3379 = vpack.c.b16 %v2309, %v2299
  %v3380 = vpack.c.b16 %v2320, %v2310
  %v3381 = vpack.c.b16 %v2321, %v2311
  %v3382 = vpack.c.b16 %v2322, %v2312
  %v3383 = vpack.c.b16 %v2323, %v2313
  %v3384 = vpack.c.b16 %v2324, %v2314
  %v3385 = vpack.c.b16 %v2325, %v2315
  %v3386 = vpack.c.b16 %v2326, %v2316
  %v3387 = vpack.c.b16 %v2327, %v2317
  %v3388 = vpack.c.b16 %v2328, %v2318
  %v3389 = vpack.c.b16 %v2329, %v2319
  %v3390 = vpack.c.b16 %v2340, %v2330
  %v3391 = vpack.c.b16 %v2341, %v2331
  %v3392 = vpack.c.b16 %v2342, %v2332
  %v3393 = vpack.c.b16 %v2343, %v2333
  %v3394 = vpack.c.b16 %v2344, %v2334
  %v3395 = vpack.c.b16 %v2345, %v2335
  %v3396 = vpack.c.b16 %v2346, %v2336
  %v3397 = vpack.c.b16 %v2347, %v2337
  %v3398 = vpack.c.b16 %v2348, %v2338
  %v3399 = vpack.c.b16 %v2349, %v2339
  %v3400 = vpack.c.b16 %v2360, %v2350
  %v3401 = vpack.c.b16 %v2361, %v2351
  %v3402 = vpack.c.b16 %v2362, %v2352
  %v3403 = vpack.c.b16 %v2363, %v2353
  %v3404 = vpack.c.b16 %v2364, %v2354
  %v3405 = vpack.c.b16 %v2365, %v2355
  %v3406 = vpack.c.b16 %v2366, %v2356
  %v3407 = vpack.c.b16 %v2367, %v2357
  %v3408 = vpack.c.b16 %v2368, %v2358
  %v3409 = vpack.c.b16 %v2369, %v2359
  %v3410 = vpack.c.b16 %v2380, %v2370
  %v3411 = vpack.c.b16 %v2381, %v2371
  %v3412 = vpack.c.b16 %v2382, %v2372
  %v3413 = vpack.c.b16 %v2383, %v2373
  %v3414 = vpack.c.b16 %v2384, %v2374
  %v3415 = vpack.c.b16 %v2385, %v2375
  %v3416 = vpack.c.b16 %v2386, %v2376
  %v3417 = vpack.c.b16 %v2387, %v2377
  %v3418 = vpack.c.b16 %v2388, %v2378
  %v3419 = vpack.c.b16 %v2389, %v2379
  %v3420 = vpack.c.b16 %v2400, %v2390
  %v3421 = vpack.c.b16 %v2401, %v2391
  %v3422 = vpack.c.b16 %v2402, %v2392
  %v3423 = vpack.c.b16 %v2403, %v2393
  %v3424 = vpack.c.b16 %v2404, %v2394
  %v3425 = vpack.c.b16 %v2405, %v2395
  %v3426 = vpack.c.b16 %v2406, %v2396
  %v3427 = vpack.c.b16 %v2407, %v2397
  %v3428 = vpack.c.b16 %v2408, %v2398
  %v3429 = vpack.c.b16 %v2409, %v2399
  %v3430 = vpack.c.b16 %v2420, %v2410
  %v3431 = vpack.c.b16 %v2421, %v2411
  %v3432 = vpack.c.b16 %v2422, %v2412
  %v3433 = vpack.c.b16 %v2423, %v2413
  %v3434 = vpack.c.b16 %v2424, %v2414
  %v3435 = vpack.c.b16 %v2425, %v2415
  %v3436 = vpack.c.b16 %v2426, %v2416
  %v3437 = vpack.c.b16 %v2427, %v2417
  %v3438 = vpack.c.b16 %v2428, %v2418
  %v3439 = vpack.c.b16 %v2429, %v2419
  %v3440 = vpack.c.b16 %v2440, %v2430
  %v3441 = vpack.c.b16 %v2441, %v2431
  %v3442 = vpack.c.b16 %v2442, %v2432
  %v3443 = vpack.c.b16 %v2443, %v2433
  %v3444 = vpack.c.b16 %v2444, %v2434
  %v3445 = vpack.c.b16 %v2445, %v2435
  %v3446 = vpack.c.b16 %v2446, %v2436
  %v3447 = vpack.c.b16 %v2447, %v2437
  %v3448 = vpack.c.b16 %v2448, %v2438
  %v3449 = vpack.c.b16 %v2449, %v2439
  %v3450 = vpack.c.b16 %v2460, %v2450
  %v3451 = vpack.c.b16 %v2461, %v2451
  %v3452 = vpack.c.b16 %v2462, %v2452
  %v3453 = vpack.c.b16 %v2463, %v2453
  %v3454 = vpack.c.b16 %v2464, %v2454
  %v3455 = vpack.c.b16 %v2465, %v2455
  %v3456 = vpack.c.b16 %v2466, %v2456
  %v3457 = vpack.c.b16 %v2467, %v2457
  %v3458 = vpack.c.b16 %v2468, %v2458
  %v3459 = vpack.c.b16 %v2469, %v2459
  %v3460 = vpack.c.b16 %v2480, %v2470
  %v3461 = vpack.c.b16 %v2481, %v2471
  %v3462 = vpack.c.b16 %v2482, %v2472
  %v3463 = vpack.c.b16 %v2483, %v2473
  %v3464 = vpack.c.b16 %v2484, %v2474
  %v3465 = vpack.c.b16 %v2485, %v2475
  %v3466 = vpack.c.b16 %v2486, %v2476
  %v3467 = vpack.c.b16 %v2487, %v2477
  %v3468 = vpack.c.b16 %v2488, %v2478
  %v3469 = vpack.c.b16 %v2489, %v2479
  %v3470 = vpack.c.b16 %v2500, %v2490
  %v3471 = vpack.c.b16 %v2501, %v2491
  %v3472 = vpack.c.b16 %v2502, %v2492
  %v3473 = vpack.c.b16 %v2503, %v2493
  %v3474 = vpack.c.b16 %v2504, %v2494
  %v3475 = vpack.c.b16 %v2505, %v2495
  %v3476 = vpack.c.b16 %v2506, %v2496
  %v3477 = vpack.c.b16 %v2507, %v2497
  %v3478 = vpack.c.b16 %v2508, %v2498
  %v3479 = vpack.c.b16 %v2509, %v2499
  %v3480 = vpack.c.b16 %v2520, %v2510
  %v3481 = vpack.c.b16 %v2521, %v2511
  %v3482 = vpack.c.b16 %v2522, %v2512
  %v3483 = vpack.c.b16 %v2523, %v2513
  %v3484 = vpack.c.b16 %v2524, %v2514
  %v3485 = vpack.c.b16 %v2525, %v2515
  %v3486 = vpack.c.b16 %v2526, %v2516
  %v3487 = vpack.c.b16 %v2527, %v2517
  %v3488 = vpack.c.b16 %v2528, %v2518
  %v3489 = vpack.c.b16 %v2529, %v2519
  %v3490 = vpack.c.b16 %v2540, %v2530
  %v3491 = vpack.c.b16 %v2541, %v2531
  %v3492 = vpack.c.b16 %v2542, %v2532
  %v3493 = vpack.c.b16 %v2543, %v2533
  %v3494 = vpack.c.b16 %v2544, %v2534
  %v3495 = vpack.c.b16 %v2545, %v2535
  %v3496 = vpack.c.b16 %v2546, %v2536
  %v3497 = vpack.c.b16 %v2547, %v2537
  %v3498 = vpack.c.b16 %v2548, %v2538
  %v3499 = vpack.c.b16 %v2549, %v2539
  %v3500 = vpack.c.b16 %v2560, %v2550
  %v3501 = vpack.c.b16 %v2561, %v2551
  %v3502 = vpack.c.b16 %v2562, %v2552
  %v3503 = vpack.c.b16 %v2563, %v2553
  %v3504 = vpack.c.b16 %v2564, %v2554
  %v3505 = vpack.c.b16 %v2565, %v2555
  %v3506 = vpack.c.b16 %v2566, %v2556
  %v3507 = vpack.c.b16 %v2567, %v2557
  %v3508 = vpack.c.b16 %v2568, %v2558
  %v3509 = vpack.c.b16 %v2569, %v2559
  %v3510 = vpack.c.b16 %v2580, %v2570
  %v3511 = vpack.c.b16 %v2581, %v2571
  %v3512 = vpack.c.b16 %v2582, %v2572
  %v3513 = vpack.c.b16 %v2583, %v2573
  %v3514 = vpack.c.b16 %v2584, %v2574
  %v3515 = vpack.c.b16 %v2585, %v2575
  %v3516 = vpack.c.b16 %v2586, %v2576
  %v3517 = vpack.c.b16 %v2587, %v2577
  %v3518 = vpack.c.b16 %v2588, %v2578
  %v3519 = vpack.c.b16 %v2589, %v2579
  %v3520 = vpack.c.b16 %v2600, %v2590
  %v3521 = vpack.c.b16 %v2601, %v2591
  %v3522 = vpack.c.b16 %v2602, %v2592
  %v3523 = vpack.c.b16 %v2603, %v2593
  %v3524 = vpack.c.b16 %v2604, %v2594
  %v3525 = vpack.c.b16 %v2605, %v2595
  %v3526 = vpack.c.b16 %v2606, %v2596
  %v3527 = vpack.c.b16 %v2607, %v2597
  %v3528 = vpack.c.b16 %v2608, %v2598
  %v3529 = vpack.c.b16 %v2609, %v2599
  %v3530 = vpack.c.b16 %v2620, %v2610
  %v3531 = vpack.c.b16 %v2621, %v2611
  %v3532 = vpack.c.b16 %v2622, %v2612
  %v3533 = vpack.c.b16 %v2623, %v2613
  %v3534 = vpack.c.b16 %v2624, %v2614
  %v3535 = vpack.c.b16 %v2625, %v2615
  %v3536 = vpack.c.b16 %v2626, %v2616
  %v3537 = vpack.c.b16 %v2627, %v2617
  %v3538 = vpack.c.b16 %v2628, %v2618
  %v3539 = vpack.c.b16 %v2629, %v2619
  %v3540 = vpack.c.b16 %v2640, %v2630
  %v3541 = vpack.c.b16 %v2641, %v2631
  %v3542 = vpack.c.b16 %v2642, %v2632
  %v3543 = vpack.c.b16 %v2643, %v2633
  %v3544 = vpack.c.b16 %v2644, %v2634
  %v3545 = vpack.c.b16 %v2645, %v2635
  %v3546 = vpack.c.b16 %v2646, %v2636
  %v3547 = vpack.c.b16 %v2647, %v2637
  %v3548 = vpack.c.b16 %v2648, %v2638
  %v3549 = vpack.c.b16 %v2649, %v2639
  %v3550 = vpack.c.b16 %v2660, %v2650
  %v3551 = vpack.c.b16 %v2661, %v2651
  %v3552 = vpack.c.b16 %v2662, %v2652
  %v3553 = vpack.c.b16 %v2663, %v2653
  %v3554 = vpack.c.b16 %v2664, %v2654
  %v3555 = vpack.c.b16 %v2665, %v2655
  %v3556 = vpack.c.b16 %v2666, %v2656
  %v3557 = vpack.c.b16 %v2667, %v2657
  %v3558 = vpack.c.b16 %v2668, %v2658
  %v3559 = vpack.c.b16 %v2669, %v2659
  %v3560 = vpack.c.b16 %v2680, %v2670
  %v3561 = vpack.c.b16 %v2681, %v2671
  %v3562 = vpack.c.b16 %v2682, %v2672
  %v3563 = vpack.c.b16 %v2683, %v2673
  %v3564 = vpack.c.b16 %v2684, %v2674
  %v3565 = vpack.c.b16 %v2685, %v2675
  %v3566 = vpack.c.b16 %v2686, %v2676
  %v3567 = vpack.c.b16 %v2687, %v2677
  %v3568 = vpack.c.b16 %v2688, %v2678
  %v3569 = vpack.c.b16 %v2689, %v2679
  %v3570 = vpack.c.b16 %v2700, %v2690
  %v3571 = vpack.c.b16 %v2701, %v2691
  %v3572 = vpack.c.b16 %v2702, %v2692
  %v3573 = vpack.c.b16 %v2703, %v2693
  %v3574 = vpack.c.b16 %v2704, %v2694
  %v3575 = vpack.c.b16 %v2705, %v2695
  %v3576 = vpack.c.b16 %v2706, %v2696
  %v3577 = vpack.c.b16 %v2707, %v2697
  %v3578 = vpack.c.b16 %v2708, %v2698
  %v3579 = vpack.c.b16 %v2709, %v2699
  %v3580 = vpack.c.b16 %v2720, %v2710
  %v3581 = vpack.c.b16 %v2721, %v2711
  %v3582 = vpack.c.b16 %v2722, %v2712
  %v3583 = vpack.c.b16 %v2723, %v2713
  %v3584 = vpack.c.b16 %v2724, %v2714
  %v3585 = vpack.c.b16 %v2725, %v2715
  %v3586 = vpack.c.b16 %v2726, %v2716
  %v3587 = vpack.c.b16 %v2727, %v2717
  %v3588 = vpack.c.b16 %v2728, %v2718
  %v3589 = vpack.c.b16 %v2729, %v2719
  %v3590 = vpack.c.b16 %v2740, %v2730
  %v3591 = vpack.c.b16 %v2741, %v2731
  %v3592 = vpack.c.b16 %v2742, %v2732
  %v3593 = vpack.c.b16 %v2743, %v2733
  %v3594 = vpack.c.b16 %v2744, %v2734
  %v3595 = vpack.c.b16 %v2745, %v2735
  %v3596 = vpack.c.b16 %v2746, %v2736
  %v3597 = vpack.c.b16 %v2747, %v2737
  %v3598 = vpack.c.b16 %v2748, %v2738
  %v3599 = vpack.c.b16 %v2749, %v2739
  %v3600 = vpack.c.b16 %v2760, %v2750
  %v3601 = vpack.c.b16 %v2761, %v2751
  %v3602 = vpack.c.b16 %v2762, %v2752
  %v3603 = vpack.c.b16 %v2763, %v2753
  %v3604 = vpack.c.b16 %v2764, %v2754
  %v3605 = vpack.c.b16 %v2765, %v2755
  %v3606 = vpack.c.b16 %v2766, %v2756
  %v3607 = vpack.c.b16 %v2767, %v2757
  %v3608 = vpack.c.b16 %v2768, %v2758
  %v3609 = vpack.c.b16 %v2769, %v2759
  %v3610 = vpack.c.b16 %v2780, %v2770
  %v3611 = vpack.c.b16 %v2781, %v2771
  %v3612 = vpack.c.b16 %v2782, %v2772
  %v3613 = vpack.c.b16 %v2783, %v2773
  %v3614 = vpack.c.b16 %v2784, %v2774
  %v3615 = vpack.c.b16 %v2785, %v2775
  %v3616 = vpack.c.b16 %v2786, %v2776
  %v3617 = vpack.c.b16 %v2787, %v2777
  %v3618 = vpack.c.b16 %v2788, %v2778
  %v3619 = vpack.c.b16 %v2789, %v2779
  %v3620 = vpack.c.b16 %v2800, %v2790
  %v3621 = vpack.c.b16 %v2801, %v2791
  %v3622 = vpack.c.b16 %v2802, %v2792
  %v3623 = vpack.c.b16 %v2803, %v2793
  %v3624 = vpack.c.b16 %v2804, %v2794
  %v3625 = vpack.c.b16 %v2805, %v2795
  %v3626 = vpack.c.b16 %v2806, %v2796
  %v3627 = vpack.c.b16 %v2807, %v2797
  %v3628 = vpack.c.b16 %v2808, %v2798
  %v3629 = vpack.c.b16 %v2809, %v2799
  %v3630 = vpack.c.b16 %v2820, %v2810
  %v3631 = vpack.c.b16 %v2821, %v2811
  %v3632 = vpack.c.b16 %v2822, %v2812
  %v3633 = vpack.c.b16 %v2823, %v2813
  %v3634 = vpack.c.b16 %v2824, %v2814
  %v3635 = vpack.c.b16 %v2825, %v2815
  %v3636 = vpack.c.b16 %v2826, %v2816
  %v3637 = vpack.c.b16 %v2827, %v2817
  %v3638 = vpack.c.b16 %v2828, %v2818
  %v3639 = vpack.c.b16 %v2829, %v2819
  %v3640 = vpack.c.b16 %v2840, %v2830
  %v3641 = vpack.c.b16 %v2841, %v2831
  %v3642 = vpack.c.b16 %v2842, %v2832
  %v3643 = vpack.c.b16 %v2843, %v2833
  %v3644 = vpack.c.b16 %v2844, %v2834
  %v3645 = vpack.c.b16 %v2845, %v2835
  %v3646 = vpack.c.b16 %v2846, %v2836
  %v3647 = vpack.c.b16 %v2847, %v2837
  %v3648 = vpack.c.b16 %v2848, %v2838
  %v3649 = vpack.c.b16 %v2849, %v2839
  %v3650 = vpack.c.b16 %v2860, %v2850
  %v3651 = vpack.c.b16 %v2861, %v2851
  %v3652 = vpack.c.b16 %v2862, %v2852
  %v3653 = vpack.c.b16 %v2863, %v2853
  %v3654 = vpack.c.b16 %v2864, %v2854
  %v3655 = vpack.c.b16 %v2865, %v2855
  %v3656 = vpack.c.b16 %v2866, %v2856
  %v3657 = vpack.c.b16 %v2867, %v2857
  %v3658 = vpack.c.b16 %v2868, %v2858
  %v3659 = vpack.c.b16 %v2869, %v2859
  %v3660 = vpack.c.b16 %v2880, %v2870
  %v3661 = vpack.c.b16 %v2881, %v2871
  %v3662 = vpack.c.b16 %v2882, %v2872
  %v3663 = vpack.c.b16 %v2883, %v2873
  %v3664 = vpack.c.b16 %v2884, %v2874
  %v3665 = vpack.c.b16 %v2885, %v2875
  %v3666 = vpack.c.b16 %v2886, %v2876
  %v3667 = vpack.c.b16 %v2887, %v2877
  %v3668 = vpack.c.b16 %v2888, %v2878
  %v3669 = vpack.c.b16 %v2889, %v2879
  %v3670 = vpack.c.b16 %v2900, %v2890
  %v3671 = vpack.c.b16 %v2901, %v2891
  %v3672 = vpack.c.b16 %v2902, %v2892
  %v3673 = vpack.c.b16 %v2903, %v2893
  %v3674 = vpack.c.b16 %v2904, %v2894
  %v3675 = vpack.c.b16 %v2905, %v2895
  %v3676 = vpack.c.b16 %v2906, %v2896
  %v3677 = vpack.c.b16 %v2907, %v2897
  %v3678 = vpack.c.b16 %v2908, %v2898
  %v3679 = vpack.c.b16 %v2909, %v2899
  %v3680 = vpack.c.b16 %v2920, %v2910
  %v3681 = vpack.c.b16 %v2921, %v2911
  %v3682 = vpack.c.b16 %v2922, %v2912
  %v3683 = vpack.c.b16 %v2923, %v2913
  %v3684 = vpack.c.b16 %v2924, %v2914
  %v3685 = vpack.c.b16 %v2925, %v2915
  %v3686 = vpack.c.b16 %v2926, %v2916
  %v3687 = vpack.c.b16 %v2927, %v2917
  %v3688 = vpack.c.b16 %v2928, %v2918
  %v3689 = vpack.c.b16 %v2929, %v2919
  %v3690 = vpack.c.b16 %v2940, %v2930
  %v3691 = vpack.c.b16 %v2941, %v2931
  %v3692 = vpack.c.b16 %v2942, %v2932
  %v3693 = vpack.c.b16 %v2943, %v2933
  %v3694 = vpack.c.b16 %v2944, %v2934
  %v3695 = vpack.c.b16 %v2945, %v2935
  %v3696 = vpack.c.b16 %v2946, %v2936
  %v3697 = vpack.c.b16 %v2947, %v2937
  %v3698 = vpack.c.b16 %v2948, %v2938
  %v3699 = vpack.c.b16 %v2949, %v2939
  %v3700 = vpack.c.b16 %v2960, %v2950
  %v3701 = vpack.c.b16 %v2961, %v2951
  %v3702 = vpack.c.b16 %v2962, %v2952
  %v3703 = vpack.c.b16 %v2963, %v2953
  %v3704 = vpack.c.b16 %v2964, %v2954
  %v3705 = vpack.c.b16 %v2965, %v2955
  %v3706 = vpack.c.b16 %v2966, %v2956
  %v3707 = vpack.c.b16 %v2967, %v2957
  %v3708 = vpack.c.b16 %v2968, %v2958
  %v3709 = vpack.c.b16 %v2969, %v2959
  %v3710 = vpack.c.b16 %v2980, %v2970
  %v3711 = vpack.c.b16 %v2981, %v2971
  %v3712 = vpack.c.b16 %v2982, %v2972
  %v3713 = vpack.c.b16 %v2983, %v2973
  %v3714 = vpack.c.b16 %v2984, %v2974
  %v3715 = vpack.c.b16 %v2985, %v2975
  %v3716 = vpack.c.b16 %v2986, %v2976
  %v3717 = vpack.c.b16 %v2987, %v2977
  %v3718 = vpack.c.b16 %v2988, %v2978
  %v3719 = vpack.c.b16 %v2989, %v2979
  %v3720 = vpack.c.b16 %v3000, %v2990
  %v3721 = vpack.c.b16 %v3001, %v2991
  %v3722 = vpack.c.b16 %v3002, %v2992
  %v3723 = vpack.c.b16 %v3003, %v2993
  %v3724 = vpack.c.b16 %v3004, %v2994
  %v3725 = vpack.c.b16 %v3005, %v2995
  %v3726 = vpack.c.b16 %v3006, %v2996
  %v3727 = vpack.c.b16 %v3007, %v2997
  %v3728 = vpack.c.b16 %v3008, %v2998
  %v3729 = vpack.c.b16 %v3009, %v2999
  %4450 = vmatprep.subr.bf16.mxu0 %v3011
  %4451 = vmatpush1.bf16.msra.mxu0 %v3010
  %4452 = vmatprep.subr.bf16.mxu0 %v3021
  %4453 = vmatpush1.bf16.msra.mxu0 %v3020
  %4454 = vmatprep.subr.bf16.mxu0 %v3031
  %4455 = vmatpush1.bf16.msra.mxu0 %v3030
  %4456 = vmatprep.subr.bf16.mxu0 %v3041
  %4457 = vmatpush1.bf16.msra.mxu0 %v3040
  %4458 = vmatprep.subr.bf16.mxu0 %v3051
  %4459 = vmatpush1.bf16.msra.mxu0 %v3050
  %4460 = vmatprep.subr.bf16.mxu0 %v3061
  %4461 = vmatpush1.bf16.msra.mxu0 %v3060
  %4462 = vmatprep.subr.bf16.mxu0 %v3071
  %4463 = vmatpush1.bf16.msra.mxu0 %v3070
  %4464 = vmatprep.subr.bf16.mxu0 %v3081
  %4465 = vmatpush1.bf16.msra.mxu0 %v3080
  %4466 = vmatprep.subr.bf16.mxu0 %v3091
  %4467 = vmatpush1.bf16.msra.mxu0 %v3090
  %4468 = vmatprep.subr.bf16.mxu0 %v3101
  %4469 = vmatpush1.bf16.msra.mxu0 %v3100
  %4470 = vmatprep.subr.bf16.mxu0 %v3111
  %4471 = vmatpush1.bf16.msra.mxu0 %v3110
  %4472 = vmatprep.subr.bf16.mxu0 %v3121
  %4473 = vmatpush1.bf16.msra.mxu0 %v3120
  %4474 = vmatprep.subr.bf16.mxu0 %v3131
  %4475 = vmatpush1.bf16.msra.mxu0 %v3130
  %4476 = vmatprep.subr.bf16.mxu0 %v3141
  %4477 = vmatpush1.bf16.msra.mxu0 %v3140
  %4478 = vmatprep.subr.bf16.mxu0 %v3151
  %4479 = vmatpush1.bf16.msra.mxu0 %v3150
  %4480 = vmatprep.subr.bf16.mxu0 %v3161
  %4481 = vmatpush1.bf16.msra.mxu0 %v3160
  %4482 = vmatprep.mubr.bf16.mxu0 %v833
  %4483 = vmatmul.mubr.bf16.gmra.mrb[0].mxu0 %v832
  %v4484 = vpop.f32.mrb[0].mxu0
  %v4485 = vadd.f32 %v771, %v4484
  %v4486 = vpop.f32.mrb[0].mxu0
  %v4487 = vadd.f32 %v775, %v4486
  %v4488 = vpop.f32.mrb[0].mxu0
  %v4489 = vpop.f32.mrb[0].mxu0
  %4490 = vdwg.mxu0
  %4491 = vmatprep.subr.bf16.mxu0 %v3171
  %4492 = vmatpush1.bf16.msra.mxu0 %v3170
  %4493 = vmatprep.subr.bf16.mxu0 %v3181
  %4494 = vmatpush1.bf16.msra.mxu0 %v3180
  %4495 = vmatprep.subr.bf16.mxu0 %v3191
  %4496 = vmatpush1.bf16.msra.mxu0 %v3190
  %4497 = vmatprep.subr.bf16.mxu0 %v3201
  %4498 = vmatpush1.bf16.msra.mxu0 %v3200
  %4499 = vmatprep.subr.bf16.mxu0 %v3211
  %4500 = vmatpush1.bf16.msra.mxu0 %v3210
  %4501 = vmatprep.subr.bf16.mxu0 %v3221
  %4502 = vmatpush1.bf16.msra.mxu0 %v3220
  %4503 = vmatprep.subr.bf16.mxu0 %v3231
  %4504 = vmatpush1.bf16.msra.mxu0 %v3230
  %4505 = vmatprep.subr.bf16.mxu0 %v3241
  %4506 = vmatpush1.bf16.msra.mxu0 %v3240
  %4507 = vmatprep.subr.bf16.mxu0 %v3251
  %4508 = vmatpush1.bf16.msra.mxu0 %v3250
  %4509 = vmatprep.subr.bf16.mxu0 %v3261
  %4510 = vmatpush1.bf16.msra.mxu0 %v3260
  %4511 = vmatprep.subr.bf16.mxu0 %v3271
  %4512 = vmatpush1.bf16.msra.mxu0 %v3270
  %4513 = vmatprep.subr.bf16.mxu0 %v3281
  %4514 = vmatpush1.bf16.msra.mxu0 %v3280
  %4515 = vmatprep.subr.bf16.mxu0 %v3291
  %4516 = vmatpush1.bf16.msra.mxu0 %v3290
  %4517 = vmatprep.subr.bf16.mxu0 %v3301
  %4518 = vmatpush1.bf16.msra.mxu0 %v3300
  %4519 = vmatprep.subr.bf16.mxu0 %v3311
  %4520 = vmatpush1.bf16.msra.mxu0 %v3310
  %4521 = vmatprep.subr.bf16.mxu0 %v3321
  %4522 = vmatpush1.bf16.msra.mxu0 %v3320
  %4523 = vmatprep.mubr.bf16.mxu0 %v835
  %4524 = vmatmul.mubr.bf16.gmra.mrb[0].mxu0 %v834
  %v4525 = vpop.f32.mrb[0].mxu0
  %v4526 = vadd.f32 %v4485, %v4525
  %v4527 = vpop.f32.mrb[0].mxu0
  %v4528 = vadd.f32 %v4487, %v4527
  %v4529 = vpop.f32.mrb[0].mxu0
  %v4530 = vpop.f32.mrb[0].mxu0
  %4531 = vdwg.mxu0
  %4532 = vmatprep.subr.bf16.mxu0 %v3331
  %4533 = vmatpush1.bf16.msra.mxu0 %v3330
  %4534 = vmatprep.subr.bf16.mxu0 %v3341
  %4535 = vmatpush1.bf16.msra.mxu0 %v3340
  %4536 = vmatprep.subr.bf16.mxu0 %v3351
  %4537 = vmatpush1.bf16.msra.mxu0 %v3350
  %4538 = vmatprep.subr.bf16.mxu0 %v3361
  %4539 = vmatpush1.bf16.msra.mxu0 %v3360
  %4540 = vmatprep.subr.bf16.mxu0 %v3371
  %4541 = vmatpush1.bf16.msra.mxu0 %v3370
  %4542 = vmatprep.subr.bf16.mxu0 %v3381
  %4543 = vmatpush1.bf16.msra.mxu0 %v3380
  %4544 = vmatprep.subr.bf16.mxu0 %v3391
  %4545 = vmatpush1.bf16.msra.mxu0 %v3390
  %4546 = vmatprep.subr.bf16.mxu0 %v3401
  %4547 = vmatpush1.bf16.msra.mxu0 %v3400
  %4548 = vmatprep.subr.bf16.mxu0 %v3411
  %4549 = vmatpush1.bf16.msra.mxu0 %v3410
  %4550 = vmatprep.subr.bf16.mxu0 %v3421
  %4551 = vmatpush1.bf16.msra.mxu0 %v3420
  %4552 = vmatprep.subr.bf16.mxu0 %v3431
  %4553 = vmatpush1.bf16.msra.mxu0 %v3430
  %4554 = vmatprep.subr.bf16.mxu0 %v3441
  %4555 = vmatpush1.bf16.msra.mxu0 %v3440
  %4556 = vmatprep.subr.bf16.mxu0 %v3451
  %4557 = vmatpush1.bf16.msra.mxu0 %v3450
  %4558 = vmatprep.subr.bf16.mxu0 %v3461
  %4559 = vmatpush1.bf16.msra.mxu0 %v3460
  %4560 = vmatprep.subr.bf16.mxu0 %v3471
  %4561 = vmatpush1.bf16.msra.mxu0 %v3470
  %4562 = vmatprep.subr.bf16.mxu0 %v3481
  %4563 = vmatpush1.bf16.msra.mxu0 %v3480
  %4564 = vmatprep.mubr.bf16.mxu0 %v837
  %4565 = vmatmul.mubr.bf16.gmra.mrb[0].mxu0 %v836
  %v4566 = vpop.f32.mrb[0].mxu0
  %v4567 = vadd.f32 %v4526, %v4566
  %v4568 = vpop.f32.mrb[0].mxu0
  %v4569 = vadd.f32 %v4528, %v4568
  %v4570 = vpop.f32.mrb[0].mxu0
  %v4571 = vpop.f32.mrb[0].mxu0
  %4572 = vdwg.mxu0
  %4573 = vmatprep.subr.bf16.mxu0 %v3491
  %4574 = vmatpush1.bf16.msra.mxu0 %v3490
  %4575 = vmatprep.subr.bf16.mxu0 %v3501
  %4576 = vmatpush1.bf16.msra.mxu0 %v3500
  %4577 = vmatprep.subr.bf16.mxu0 %v3511
  %4578 = vmatpush1.bf16.msra.mxu0 %v3510
  %4579 = vmatprep.subr.bf16.mxu0 %v3521
  %4580 = vmatpush1.bf16.msra.mxu0 %v3520
  %4581 = vmatprep.subr.bf16.mxu0 %v3531
  %4582 = vmatpush1.bf16.msra.mxu0 %v3530
  %4583 = vmatprep.subr.bf16.mxu0 %v3541
  %4584 = vmatpush1.bf16.msra.mxu0 %v3540
  %4585 = vmatprep.subr.bf16.mxu0 %v3551
  %4586 = vmatpush1.bf16.msra.mxu0 %v3550
  %4587 = vmatprep.subr.bf16.mxu0 %v3561
  %4588 = vmatpush1.bf16.msra.mxu0 %v3560
  %4589 = vmatprep.subr.bf16.mxu0 %v3571
  %4590 = vmatpush1.bf16.msra.mxu0 %v3570
  %4591 = vmatprep.subr.bf16.mxu0 %v3581
  %4592 = vmatpush1.bf16.msra.mxu0 %v3580
  %4593 = vmatprep.subr.bf16.mxu0 %v3591
  %4594 = vmatpush1.bf16.msra.mxu0 %v3590
  %4595 = vmatprep.subr.bf16.mxu0 %v3601
  %4596 = vmatpush1.bf16.msra.mxu0 %v3600
  %4597 = vmatprep.subr.bf16.mxu0 %v3611
  %4598 = vmatpush1.bf16.msra.mxu0 %v3610
  %4599 = vmatprep.subr.bf16.mxu0 %v3621
  %4600 = vmatpush1.bf16.msra.mxu0 %v3620
  %4601 = vmatprep.subr.bf16.mxu0 %v3631
  %4602 = vmatpush1.bf16.msra.mxu0 %v3630
  %4603 = vmatprep.subr.bf16.mxu0 %v3641
  %4604 = vmatpush1.bf16.msra.mxu0 %v3640
  %4605 = vmatprep.mubr.bf16.mxu0 %v839
  %4606 = vmatmul.mubr.bf16.gmra.mrb[0].mxu0 %v838
  %v4607 = vpop.f32.mrb[0].mxu0
  %v4608 = vadd.f32 %v4567, %v4607
  %v4609 = vpop.f32.mrb[0].mxu0
  %v4610 = vadd.f32 %v4569, %v4609
  %v4611 = vpop.f32.mrb[0].mxu0
  %v4612 = vpop.f32.mrb[0].mxu0
  %4613 = vdwg.mxu0
  %4614 = vmatprep.subr.bf16.mxu0 %v3651
  %4615 = vmatpush1.bf16.msra.mxu0 %v3650
  %4616 = vmatprep.subr.bf16.mxu0 %v3661
  %4617 = vmatpush1.bf16.msra.mxu0 %v3660
  %4618 = vmatprep.subr.bf16.mxu0 %v3671
  %4619 = vmatpush1.bf16.msra.mxu0 %v3670
  %4620 = vmatprep.subr.bf16.mxu0 %v3681
  %4621 = vmatpush1.bf16.msra.mxu0 %v3680
  %4622 = vmatprep.subr.bf16.mxu0 %v3691
  %4623 = vmatpush1.bf16.msra.mxu0 %v3690
  %4624 = vmatprep.subr.bf16.mxu0 %v3701
  %4625 = vmatpush1.bf16.msra.mxu0 %v3700
  %4626 = vmatprep.subr.bf16.mxu0 %v3711
  %4627 = vmatpush1.bf16.msra.mxu0 %v3710
  %4628 = vmatprep.subr.bf16.mxu0 %v3721
  %4629 = vmatpush1.bf16.msra.mxu0 %v3720
  %4630 = vmatprep.subr.bf16.mxu0 0
  %4631 = vmatpush1.bf16.msra.mxu0 0
  %4632 = vmatprep.subr.bf16.mxu0 0
  %4633 = vmatpush1.bf16.msra.mxu0 0
  %4634 = vmatprep.subr.bf16.mxu0 0
  %4635 = vmatpush1.bf16.msra.mxu0 0
  %4636 = vmatprep.subr.bf16.mxu0 0
  %4637 = vmatpush1.bf16.msra.mxu0 0
  %4638 = vmatprep.subr.bf16.mxu0 0
  %4639 = vmatpush1.bf16.msra.mxu0 0
  %4640 = vmatprep.subr.bf16.mxu0 0
  %4641 = vmatpush1.bf16.msra.mxu0 0
  %4642 = vmatprep.subr.bf16.mxu0 0
  %4643 = vmatpush1.bf16.msra.mxu0 0
  %4644 = vmatprep.subr.bf16.mxu0 0
  %4645 = vmatpush1.bf16.msra.mxu0 0
  %4646 = vmatprep.mubr.bf16.mxu0 0
  %4647 = vmatmul.mubr.bf16.gmra.mrb[0].mxu0 %v840
  %v4648 = vpop.f32.mrb[0].mxu0
  %v4649 = vadd.f32 %v4608, %v4648
  %v4650 = vpop.f32.mrb[0].mxu0
  %v4651 = vadd.f32 %v4610, %v4650
  %v4652 = vpop.f32.mrb[0].mxu0
  %v4653 = vpop.f32.mrb[0].mxu0
  %4654 = vdwg.mxu0
  %4655 = vmatprep.subr.bf16.mxu0 %v3013
  %4656 = vmatpush1.bf16.msra.mxu0 %v3012
  %4657 = vmatprep.subr.bf16.mxu0 %v3023
  %4658 = vmatpush1.bf16.msra.mxu0 %v3022
  %4659 = vmatprep.subr.bf16.mxu0 %v3033
  %4660 = vmatpush1.bf16.msra.mxu0 %v3032
  %4661 = vmatprep.subr.bf16.mxu0 %v3043
  %4662 = vmatpush1.bf16.msra.mxu0 %v3042
  %4663 = vmatprep.subr.bf16.mxu0 %v3053
  %4664 = vmatpush1.bf16.msra.mxu0 %v3052
  %4665 = vmatprep.subr.bf16.mxu0 %v3063
  %4666 = vmatpush1.bf16.msra.mxu0 %v3062
  %4667 = vmatprep.subr.bf16.mxu0 %v3073
  %4668 = vmatpush1.bf16.msra.mxu0 %v3072
  %4669 = vmatprep.subr.bf16.mxu0 %v3083
  %4670 = vmatpush1.bf16.msra.mxu0 %v3082
  %4671 = vmatprep.subr.bf16.mxu0 %v3093
  %4672 = vmatpush1.bf16.msra.mxu0 %v3092
  %4673 = vmatprep.subr.bf16.mxu0 %v3103
  %4674 = vmatpush1.bf16.msra.mxu0 %v3102
  %4675 = vmatprep.subr.bf16.mxu0 %v3113
  %4676 = vmatpush1.bf16.msra.mxu0 %v3112
  %4677 = vmatprep.subr.bf16.mxu0 %v3123
  %4678 = vmatpush1.bf16.msra.mxu0 %v3122
  %4679 = vmatprep.subr.bf16.mxu0 %v3133
  %4680 = vmatpush1.bf16.msra.mxu0 %v3132
  %4681 = vmatprep.subr.bf16.mxu0 %v3143
  %4682 = vmatpush1.bf16.msra.mxu0 %v3142
  %4683 = vmatprep.subr.bf16.mxu0 %v3153
  %4684 = vmatpush1.bf16.msra.mxu0 %v3152
  %4685 = vmatprep.subr.bf16.mxu0 %v3163
  %4686 = vmatpush1.bf16.msra.mxu0 %v3162
  %4687 = vmatprep.mubr.bf16.mxu0 %v833
  %4688 = vmatmul.mubr.bf16.gmra.mrb[0].mxu0 %v832
  %v4689 = vpop.f32.mrb[0].mxu0
  %v4690 = vadd.f32 %v779, %v4689
  %v4691 = vpop.f32.mrb[0].mxu0
  %v4692 = vadd.f32 %v783, %v4691
  %v4693 = vpop.f32.mrb[0].mxu0
  %v4694 = vpop.f32.mrb[0].mxu0
  %4695 = vdwg.mxu0
  %4696 = vmatprep.subr.bf16.mxu0 %v3173
  %4697 = vmatpush1.bf16.msra.mxu0 %v3172
  %4698 = vmatprep.subr.bf16.mxu0 %v3183
  %4699 = vmatpush1.bf16.msra.mxu0 %v3182
  %4700 = vmatprep.subr.bf16.mxu0 %v3193
  %4701 = vmatpush1.bf16.msra.mxu0 %v3192
  %4702 = vmatprep.subr.bf16.mxu0 %v3203
  %4703 = vmatpush1.bf16.msra.mxu0 %v3202
  %4704 = vmatprep.subr.bf16.mxu0 %v3213
  %4705 = vmatpush1.bf16.msra.mxu0 %v3212
  %4706 = vmatprep.subr.bf16.mxu0 %v3223
  %4707 = vmatpush1.bf16.msra.mxu0 %v3222
  %4708 = vmatprep.subr.bf16.mxu0 %v3233
  %4709 = vmatpush1.bf16.msra.mxu0 %v3232
  %4710 = vmatprep.subr.bf16.mxu0 %v3243
  %4711 = vmatpush1.bf16.msra.mxu0 %v3242
  %4712 = vmatprep.subr.bf16.mxu0 %v3253
  %4713 = vmatpush1.bf16.msra.mxu0 %v3252
  %4714 = vmatprep.subr.bf16.mxu0 %v3263
  %4715 = vmatpush1.bf16.msra.mxu0 %v3262
  %4716 = vmatprep.subr.bf16.mxu0 %v3273
  %4717 = vmatpush1.bf16.msra.mxu0 %v3272
  %4718 = vmatprep.subr.bf16.mxu0 %v3283
  %4719 = vmatpush1.bf16.msra.mxu0 %v3282
  %4720 = vmatprep.subr.bf16.mxu0 %v3293
  %4721 = vmatpush1.bf16.msra.mxu0 %v3292
  %4722 = vmatprep.subr.bf16.mxu0 %v3303
  %4723 = vmatpush1.bf16.msra.mxu0 %v3302
  %4724 = vmatprep.subr.bf16.mxu0 %v3313
  %4725 = vmatpush1.bf16.msra.mxu0 %v3312
  %4726 = vmatprep.subr.bf16.mxu0 %v3323
  %4727 = vmatpush1.bf16.msra.mxu0 %v3322
  %4728 = vmatprep.mubr.bf16.mxu0 %v835
  %4729 = vmatmul.mubr.bf16.gmra.mrb[0].mxu0 %v834
  %v4730 = vpop.f32.mrb[0].mxu0
  %v4731 = vadd.f32 %v4690, %v4730
  %v4732 = vpop.f32.mrb[0].mxu0
  %v4733 = vadd.f32 %v4692, %v4732
  %v4734 = vpop.f32.mrb[0].mxu0
  %v4735 = vpop.f32.mrb[0].mxu0
  %4736 = vdwg.mxu0
  %4737 = vmatprep.subr.bf16.mxu0 %v3333
  %4738 = vmatpush1.bf16.msra.mxu0 %v3332
  %4739 = vmatprep.subr.bf16.mxu0 %v3343
  %4740 = vmatpush1.bf16.msra.mxu0 %v3342
  %4741 = vmatprep.subr.bf16.mxu0 %v3353
  %4742 = vmatpush1.bf16.msra.mxu0 %v3352
  %4743 = vmatprep.subr.bf16.mxu0 %v3363
  %4744 = vmatpush1.bf16.msra.mxu0 %v3362
  %4745 = vmatprep.subr.bf16.mxu0 %v3373
  %4746 = vmatpush1.bf16.msra.mxu0 %v3372
  %4747 = vmatprep.subr.bf16.mxu0 %v3383
  %4748 = vmatpush1.bf16.msra.mxu0 %v3382
  %4749 = vmatprep.subr.bf16.mxu0 %v3393
  %4750 = vmatpush1.bf16.msra.mxu0 %v3392
  %4751 = vmatprep.subr.bf16.mxu0 %v3403
  %4752 = vmatpush1.bf16.msra.mxu0 %v3402
  %4753 = vmatprep.subr.bf16.mxu0 %v3413
  %4754 = vmatpush1.bf16.msra.mxu0 %v3412
  %4755 = vmatprep.subr.bf16.mxu0 %v3423
  %4756 = vmatpush1.bf16.msra.mxu0 %v3422
  %4757 = vmatprep.subr.bf16.mxu0 %v3433
  %4758 = vmatpush1.bf16.msra.mxu0 %v3432
  %4759 = vmatprep.subr.bf16.mxu0 %v3443
  %4760 = vmatpush1.bf16.msra.mxu0 %v3442
  %4761 = vmatprep.subr.bf16.mxu0 %v3453
  %4762 = vmatpush1.bf16.msra.mxu0 %v3452
  %4763 = vmatprep.subr.bf16.mxu0 %v3463
  %4764 = vmatpush1.bf16.msra.mxu0 %v3462
  %4765 = vmatprep.subr.bf16.mxu0 %v3473
  %4766 = vmatpush1.bf16.msra.mxu0 %v3472
  %4767 = vmatprep.subr.bf16.mxu0 %v3483
  %4768 = vmatpush1.bf16.msra.mxu0 %v3482
  %4769 = vmatprep.mubr.bf16.mxu0 %v837
  %4770 = vmatmul.mubr.bf16.gmra.mrb[0].mxu0 %v836
  %v4771 = vpop.f32.mrb[0].mxu0
  %v4772 = vadd.f32 %v4731, %v4771
  %v4773 = vpop.f32.mrb[0].mxu0
  %v4774 = vadd.f32 %v4733, %v4773
  %v4775 = vpop.f32.mrb[0].mxu0
  %v4776 = vpop.f32.mrb[0].mxu0
  %4777 = vdwg.mxu0
  %4778 = vmatprep.subr.bf16.mxu0 %v3493
  %4779 = vmatpush1.bf16.msra.mxu0 %v3492
  %4780 = vmatprep.subr.bf16.mxu0 %v3503
  %4781 = vmatpush1.bf16.msra.mxu0 %v3502
  %4782 = vmatprep.subr.bf16.mxu0 %v3513
  %4783 = vmatpush1.bf16.msra.mxu0 %v3512
  %4784 = vmatprep.subr.bf16.mxu0 %v3523
  %4785 = vmatpush1.bf16.msra.mxu0 %v3522
  %4786 = vmatprep.subr.bf16.mxu0 %v3533
  %4787 = vmatpush1.bf16.msra.mxu0 %v3532
  %4788 = vmatprep.subr.bf16.mxu0 %v3543
  %4789 = vmatpush1.bf16.msra.mxu0 %v3542
  %4790 = vmatprep.subr.bf16.mxu0 %v3553
  %4791 = vmatpush1.bf16.msra.mxu0 %v3552
  %4792 = vmatprep.subr.bf16.mxu0 %v3563
  %4793 = vmatpush1.bf16.msra.mxu0 %v3562
  %4794 = vmatprep.subr.bf16.mxu0 %v3573
  %4795 = vmatpush1.bf16.msra.mxu0 %v3572
  %4796 = vmatprep.subr.bf16.mxu0 %v3583
  %4797 = vmatpush1.bf16.msra.mxu0 %v3582
  %4798 = vmatprep.subr.bf16.mxu0 %v3593
  %4799 = vmatpush1.bf16.msra.mxu0 %v3592
  %4800 = vmatprep.subr.bf16.mxu0 %v3603
  %4801 = vmatpush1.bf16.msra.mxu0 %v3602
  %4802 = vmatprep.subr.bf16.mxu0 %v3613
  %4803 = vmatpush1.bf16.msra.mxu0 %v3612
  %4804 = vmatprep.subr.bf16.mxu0 %v3623
  %4805 = vmatpush1.bf16.msra.mxu0 %v3622
  %4806 = vmatprep.subr.bf16.mxu0 %v3633
  %4807 = vmatpush1.bf16.msra.mxu0 %v3632
  %4808 = vmatprep.subr.bf16.mxu0 %v3643
  %4809 = vmatpush1.bf16.msra.mxu0 %v3642
  %4810 = vmatprep.mubr.bf16.mxu0 %v839
  %4811 = vmatmul.mubr.bf16.gmra.mrb[0].mxu0 %v838
  %v4812 = vpop.f32.mrb[0].mxu0
  %v4813 = vadd.f32 %v4772, %v4812
  %v4814 = vpop.f32.mrb[0].mxu0
  %v4815 = vadd.f32 %v4774, %v4814
  %v4816 = vpop.f32.mrb[0].mxu0
  %v4817 = vpop.f32.mrb[0].mxu0
  %4818 = vdwg.mxu0
  %4819 = vmatprep.subr.bf16.mxu0 %v3653
  %4820 = vmatpush1.bf16.msra.mxu0 %v3652
  %4821 = vmatprep.subr.bf16.mxu0 %v3663
  %4822 = vmatpush1.bf16.msra.mxu0 %v3662
  %4823 = vmatprep.subr.bf16.mxu0 %v3673
  %4824 = vmatpush1.bf16.msra.mxu0 %v3672
  %4825 = vmatprep.subr.bf16.mxu0 %v3683
  %4826 = vmatpush1.bf16.msra.mxu0 %v3682
  %4827 = vmatprep.subr.bf16.mxu0 %v3693
  %4828 = vmatpush1.bf16.msra.mxu0 %v3692
  %4829 = vmatprep.subr.bf16.mxu0 %v3703
  %4830 = vmatpush1.bf16.msra.mxu0 %v3702
  %4831 = vmatprep.subr.bf16.mxu0 %v3713
  %4832 = vmatpush1.bf16.msra.mxu0 %v3712
  %4833 = vmatprep.subr.bf16.mxu0 %v3723
  %4834 = vmatpush1.bf16.msra.mxu0 %v3722
  %4835 = vmatprep.subr.bf16.mxu0 0
  %4836 = vmatpush1.bf16.msra.mxu0 0
  %4837 = vmatprep.subr.bf16.mxu0 0
  %4838 = vmatpush1.bf16.msra.mxu0 0
  %4839 = vmatprep.subr.bf16.mxu0 0
  %4840 = vmatpush1.bf16.msra.mxu0 0
  %4841 = vmatprep.subr.bf16.mxu0 0
  %4842 = vmatpush1.bf16.msra.mxu0 0
  %4843 = vmatprep.subr.bf16.mxu0 0
  %4844 = vmatpush1.bf16.msra.mxu0 0
  %4845 = vmatprep.subr.bf16.mxu0 0
  %4846 = vmatpush1.bf16.msra.mxu0 0
  %4847 = vmatprep.subr.bf16.mxu0 0
  %4848 = vmatpush1.bf16.msra.mxu0 0
  %4849 = vmatprep.subr.bf16.mxu0 0
  %4850 = vmatpush1.bf16.msra.mxu0 0
  %4851 = vmatprep.mubr.bf16.mxu0 0
  %4852 = vmatmul.mubr.bf16.gmra.mrb[0].mxu0 %v840
  %v4853 = vpop.f32.mrb[0].mxu0
  %v4854 = vadd.f32 %v4813, %v4853
  %v4855 = vpop.f32.mrb[0].mxu0
  %v4856 = vadd.f32 %v4815, %v4855
  %v4857 = vpop.f32.mrb[0].mxu0
  %v4858 = vpop.f32.mrb[0].mxu0
  %4859 = vdwg.mxu0
  %4860 = vmatprep.subr.bf16.mxu0 %v3015
  %4861 = vmatpush1.bf16.msra.mxu0 %v3014
  %4862 = vmatprep.subr.bf16.mxu0 %v3025
  %4863 = vmatpush1.bf16.msra.mxu0 %v3024
  %4864 = vmatprep.subr.bf16.mxu0 %v3035
  %4865 = vmatpush1.bf16.msra.mxu0 %v3034
  %4866 = vmatprep.subr.bf16.mxu0 %v3045
  %4867 = vmatpush1.bf16.msra.mxu0 %v3044
  %4868 = vmatprep.subr.bf16.mxu0 %v3055
  %4869 = vmatpush1.bf16.msra.mxu0 %v3054
  %4870 = vmatprep.subr.bf16.mxu0 %v3065
  %4871 = vmatpush1.bf16.msra.mxu0 %v3064
  %4872 = vmatprep.subr.bf16.mxu0 %v3075
  %4873 = vmatpush1.bf16.msra.mxu0 %v3074
  %4874 = vmatprep.subr.bf16.mxu0 %v3085
  %4875 = vmatpush1.bf16.msra.mxu0 %v3084
  %4876 = vmatprep.subr.bf16.mxu0 %v3095
  %4877 = vmatpush1.bf16.msra.mxu0 %v3094
  %4878 = vmatprep.subr.bf16.mxu0 %v3105
  %4879 = vmatpush1.bf16.msra.mxu0 %v3104
  %4880 = vmatprep.subr.bf16.mxu0 %v3115
  %4881 = vmatpush1.bf16.msra.mxu0 %v3114
  %4882 = vmatprep.subr.bf16.mxu0 %v3125
  %4883 = vmatpush1.bf16.msra.mxu0 %v3124
  %4884 = vmatprep.subr.bf16.mxu0 %v3135
  %4885 = vmatpush1.bf16.msra.mxu0 %v3134
  %4886 = vmatprep.subr.bf16.mxu0 %v3145
  %4887 = vmatpush1.bf16.msra.mxu0 %v3144
  %4888 = vmatprep.subr.bf16.mxu0 %v3155
  %4889 = vmatpush1.bf16.msra.mxu0 %v3154
  %4890 = vmatprep.subr.bf16.mxu0 %v3165
  %4891 = vmatpush1.bf16.msra.mxu0 %v3164
  %4892 = vmatprep.mubr.bf16.mxu0 %v833
  %4893 = vmatmul.mubr.bf16.gmra.mrb[0].mxu0 %v832
  %v4894 = vpop.f32.mrb[0].mxu0
  %v4895 = vadd.f32 %v787, %v4894
  %v4896 = vpop.f32.mrb[0].mxu0
  %v4897 = vadd.f32 %v791, %v4896
  %v4898 = vpop.f32.mrb[0].mxu0
  %v4899 = vpop.f32.mrb[0].mxu0
  %4900 = vdwg.mxu0
  %4901 = vmatprep.subr.bf16.mxu0 %v3175
  %4902 = vmatpush1.bf16.msra.mxu0 %v3174
  %4903 = vmatprep.subr.bf16.mxu0 %v3185
  %4904 = vmatpush1.bf16.msra.mxu0 %v3184
  %4905 = vmatprep.subr.bf16.mxu0 %v3195
  %4906 = vmatpush1.bf16.msra.mxu0 %v3194
  %4907 = vmatprep.subr.bf16.mxu0 %v3205
  %4908 = vmatpush1.bf16.msra.mxu0 %v3204
  %4909 = vmatprep.subr.bf16.mxu0 %v3215
  %4910 = vmatpush1.bf16.msra.mxu0 %v3214
  %4911 = vmatprep.subr.bf16.mxu0 %v3225
  %4912 = vmatpush1.bf16.msra.mxu0 %v3224
  %4913 = vmatprep.subr.bf16.mxu0 %v3235
  %4914 = vmatpush1.bf16.msra.mxu0 %v3234
  %4915 = vmatprep.subr.bf16.mxu0 %v3245
  %4916 = vmatpush1.bf16.msra.mxu0 %v3244
  %4917 = vmatprep.subr.bf16.mxu0 %v3255
  %4918 = vmatpush1.bf16.msra.mxu0 %v3254
  %4919 = vmatprep.subr.bf16.mxu0 %v3265
  %4920 = vmatpush1.bf16.msra.mxu0 %v3264
  %4921 = vmatprep.subr.bf16.mxu0 %v3275
  %4922 = vmatpush1.bf16.msra.mxu0 %v3274
  %4923 = vmatprep.subr.bf16.mxu0 %v3285
  %4924 = vmatpush1.bf16.msra.mxu0 %v3284
  %4925 = vmatprep.subr.bf16.mxu0 %v3295
  %4926 = vmatpush1.bf16.msra.mxu0 %v3294
  %4927 = vmatprep.subr.bf16.mxu0 %v3305
  %4928 = vmatpush1.bf16.msra.mxu0 %v3304
  %4929 = vmatprep.subr.bf16.mxu0 %v3315
  %4930 = vmatpush1.bf16.msra.mxu0 %v3314
  %4931 = vmatprep.subr.bf16.mxu0 %v3325
  %4932 = vmatpush1.bf16.msra.mxu0 %v3324
  %4933 = vmatprep.mubr.bf16.mxu0 %v835
  %4934 = vmatmul.mubr.bf16.gmra.mrb[0].mxu0 %v834
  %v4935 = vpop.f32.mrb[0].mxu0
  %v4936 = vadd.f32 %v4895, %v4935
  %v4937 = vpop.f32.mrb[0].mxu0
  %v4938 = vadd.f32 %v4897, %v4937
  %v4939 = vpop.f32.mrb[0].mxu0
  %v4940 = vpop.f32.mrb[0].mxu0
  %4941 = vdwg.mxu0
  %4942 = vmatprep.subr.bf16.mxu0 %v3335
  %4943 = vmatpush1.bf16.msra.mxu0 %v3334
  %4944 = vmatprep.subr.bf16.mxu0 %v3345
  %4945 = vmatpush1.bf16.msra.mxu0 %v3344
  %4946 = vmatprep.subr.bf16.mxu0 %v3355
  %4947 = vmatpush1.bf16.msra.mxu0 %v3354
  %4948 = vmatprep.subr.bf16.mxu0 %v3365
  %4949 = vmatpush1.bf16.msra.mxu0 %v3364
  %4950 = vmatprep.subr.bf16.mxu0 %v3375
  %4951 = vmatpush1.bf16.msra.mxu0 %v3374
  %4952 = vmatprep.subr.bf16.mxu0 %v3385
  %4953 = vmatpush1.bf16.msra.mxu0 %v3384
  %4954 = vmatprep.subr.bf16.mxu0 %v3395
  %4955 = vmatpush1.bf16.msra.mxu0 %v3394
  %4956 = vmatprep.subr.bf16.mxu0 %v3405
  %4957 = vmatpush1.bf16.msra.mxu0 %v3404
  %4958 = vmatprep.subr.bf16.mxu0 %v3415
  %4959 = vmatpush1.bf16.msra.mxu0 %v3414
  %4960 = vmatprep.subr.bf16.mxu0 %v3425
  %4961 = vmatpush1.bf16.msra.mxu0 %v3424
  %4962 = vmatprep.subr.bf16.mxu0 %v3435
  %4963 = vmatpush1.bf16.msra.mxu0 %v3434
  %4964 = vmatprep.subr.bf16.mxu0 %v3445
  %4965 = vmatpush1.bf16.msra.mxu0 %v3444
  %4966 = vmatprep.subr.bf16.mxu0 %v3455
  %4967 = vmatpush1.bf16.msra.mxu0 %v3454
  %4968 = vmatprep.subr.bf16.mxu0 %v3465
  %4969 = vmatpush1.bf16.msra.mxu0 %v3464
  %4970 = vmatprep.subr.bf16.mxu0 %v3475
  %4971 = vmatpush1.bf16.msra.mxu0 %v3474
  %4972 = vmatprep.subr.bf16.mxu0 %v3485
  %4973 = vmatpush1.bf16.msra.mxu0 %v3484
  %4974 = vmatprep.mubr.bf16.mxu0 %v837
  %4975 = vmatmul.mubr.bf16.gmra.mrb[0].mxu0 %v836
  %v4976 = vpop.f32.mrb[0].mxu0
  %v4977 = vadd.f32 %v4936, %v4976
  %v4978 = vpop.f32.mrb[0].mxu0
  %v4979 = vadd.f32 %v4938, %v4978
  %v4980 = vpop.f32.mrb[0].mxu0
  %v4981 = vpop.f32.mrb[0].mxu0
  %4982 = vdwg.mxu0
  %4983 = vmatprep.subr.bf16.mxu0 %v3495
  %4984 = vmatpush1.bf16.msra.mxu0 %v3494
  %4985 = vmatprep.subr.bf16.mxu0 %v3505
  %4986 = vmatpush1.bf16.msra.mxu0 %v3504
  %4987 = vmatprep.subr.bf16.mxu0 %v3515
  %4988 = vmatpush1.bf16.msra.mxu0 %v3514
  %4989 = vmatprep.subr.bf16.mxu0 %v3525
  %4990 = vmatpush1.bf16.msra.mxu0 %v3524
  %4991 = vmatprep.subr.bf16.mxu0 %v3535
  %4992 = vmatpush1.bf16.msra.mxu0 %v3534
  %4993 = vmatprep.subr.bf16.mxu0 %v3545
  %4994 = vmatpush1.bf16.msra.mxu0 %v3544
  %4995 = vmatprep.subr.bf16.mxu0 %v3555
  %4996 = vmatpush1.bf16.msra.mxu0 %v3554
  %4997 = vmatprep.subr.bf16.mxu0 %v3565
  %4998 = vmatpush1.bf16.msra.mxu0 %v3564
  %4999 = vmatprep.subr.bf16.mxu0 %v3575
  %5000 = vmatpush1.bf16.msra.mxu0 %v3574
  %5001 = vmatprep.subr.bf16.mxu0 %v3585
  %5002 = vmatpush1.bf16.msra.mxu0 %v3584
  %5003 = vmatprep.subr.bf16.mxu0 %v3595
  %5004 = vmatpush1.bf16.msra.mxu0 %v3594
  %5005 = vmatprep.subr.bf16.mxu0 %v3605
  %5006 = vmatpush1.bf16.msra.mxu0 %v3604
  %5007 = vmatprep.subr.bf16.mxu0 %v3615
  %5008 = vmatpush1.bf16.msra.mxu0 %v3614
  %5009 = vmatprep.subr.bf16.mxu0 %v3625
  %5010 = vmatpush1.bf16.msra.mxu0 %v3624
  %5011 = vmatprep.subr.bf16.mxu0 %v3635
  %5012 = vmatpush1.bf16.msra.mxu0 %v3634
  %5013 = vmatprep.subr.bf16.mxu0 %v3645
  %5014 = vmatpush1.bf16.msra.mxu0 %v3644
  %5015 = vmatprep.mubr.bf16.mxu0 %v839
  %5016 = vmatmul.mubr.bf16.gmra.mrb[0].mxu0 %v838
  %v5017 = vpop.f32.mrb[0].mxu0
  %v5018 = vadd.f32 %v4977, %v5017
  %v5019 = vpop.f32.mrb[0].mxu0
  %v5020 = vadd.f32 %v4979, %v5019
  %v5021 = vpop.f32.mrb[0].mxu0
  %v5022 = vpop.f32.mrb[0].mxu0
  %5023 = vdwg.mxu0
  %5024 = vmatprep.subr.bf16.mxu0 %v3655
  %5025 = vmatpush1.bf16.msra.mxu0 %v3654
  %5026 = vmatprep.subr.bf16.mxu0 %v3665
  %5027 = vmatpush1.bf16.msra.mxu0 %v3664
  %5028 = vmatprep.subr.bf16.mxu0 %v3675
  %5029 = vmatpush1.bf16.msra.mxu0 %v3674
  %5030 = vmatprep.subr.bf16.mxu0 %v3685
  %5031 = vmatpush1.bf16.msra.mxu0 %v3684
  %5032 = vmatprep.subr.bf16.mxu0 %v3695
  %5033 = vmatpush1.bf16.msra.mxu0 %v3694
  %5034 = vmatprep.subr.bf16.mxu0 %v3705
  %5035 = vmatpush1.bf16.msra.mxu0 %v3704
  %5036 = vmatprep.subr.bf16.mxu0 %v3715
  %5037 = vmatpush1.bf16.msra.mxu0 %v3714
  %5038 = vmatprep.subr.bf16.mxu0 %v3725
  %5039 = vmatpush1.bf16.msra.mxu0 %v3724
  %5040 = vmatprep.subr.bf16.mxu0 0
  %5041 = vmatpush1.bf16.msra.mxu0 0
  %5042 = vmatprep.subr.bf16.mxu0 0
  %5043 = vmatpush1.bf16.msra.mxu0 0
  %5044 = vmatprep.subr.bf16.mxu0 0
  %5045 = vmatpush1.bf16.msra.mxu0 0
  %5046 = vmatprep.subr.bf16.mxu0 0
  %5047 = vmatpush1.bf16.msra.mxu0 0
  %5048 = vmatprep.subr.bf16.mxu0 0
  %5049 = vmatpush1.bf16.msra.mxu0 0
  %5050 = vmatprep.subr.bf16.mxu0 0
  %5051 = vmatpush1.bf16.msra.mxu0 0
  %5052 = vmatprep.subr.bf16.mxu0 0
  %5053 = vmatpush1.bf16.msra.mxu0 0
  %5054 = vmatprep.subr.bf16.mxu0 0
  %5055 = vmatpush1.bf16.msra.mxu0 0
  %5056 = vmatprep.mubr.bf16.mxu0 0
  %5057 = vmatmul.mubr.bf16.gmra.mrb[0].mxu0 %v840
  %v5058 = vpop.f32.mrb[0].mxu0
  %v5059 = vadd.f32 %v5018, %v5058
  %v5060 = vpop.f32.mrb[0].mxu0
  %v5061 = vadd.f32 %v5020, %v5060
  %v5062 = vpop.f32.mrb[0].mxu0
  %v5063 = vpop.f32.mrb[0].mxu0
  %5064 = vdwg.mxu0
  %5065 = vmatprep.subr.bf16.mxu0 %v3017
  %5066 = vmatpush1.bf16.msra.mxu0 %v3016
  %5067 = vmatprep.subr.bf16.mxu0 %v3027
  %5068 = vmatpush1.bf16.msra.mxu0 %v3026
  %5069 = vmatprep.subr.bf16.mxu0 %v3037
  %5070 = vmatpush1.bf16.msra.mxu0 %v3036
  %5071 = vmatprep.subr.bf16.mxu0 %v3047
  %5072 = vmatpush1.bf16.msra.mxu0 %v3046
  %5073 = vmatprep.subr.bf16.mxu0 %v3057
  %5074 = vmatpush1.bf16.msra.mxu0 %v3056
  %5075 = vmatprep.subr.bf16.mxu0 %v3067
  %5076 = vmatpush1.bf16.msra.mxu0 %v3066
  %5077 = vmatprep.subr.bf16.mxu0 %v3077
  %5078 = vmatpush1.bf16.msra.mxu0 %v3076
  %5079 = vmatprep.subr.bf16.mxu0 %v3087
  %5080 = vmatpush1.bf16.msra.mxu0 %v3086
  %5081 = vmatprep.subr.bf16.mxu0 %v3097
  %5082 = vmatpush1.bf16.msra.mxu0 %v3096
  %5083 = vmatprep.subr.bf16.mxu0 %v3107
  %5084 = vmatpush1.bf16.msra.mxu0 %v3106
  %5085 = vmatprep.subr.bf16.mxu0 %v3117
  %5086 = vmatpush1.bf16.msra.mxu0 %v3116
  %5087 = vmatprep.subr.bf16.mxu0 %v3127
  %5088 = vmatpush1.bf16.msra.mxu0 %v3126
  %5089 = vmatprep.subr.bf16.mxu0 %v3137
  %5090 = vmatpush1.bf16.msra.mxu0 %v3136
  %5091 = vmatprep.subr.bf16.mxu0 %v3147
  %5092 = vmatpush1.bf16.msra.mxu0 %v3146
  %5093 = vmatprep.subr.bf16.mxu0 %v3157
  %5094 = vmatpush1.bf16.msra.mxu0 %v3156
  %5095 = vmatprep.subr.bf16.mxu0 %v3167
  %5096 = vmatpush1.bf16.msra.mxu0 %v3166
  %5097 = vmatprep.mubr.bf16.mxu0 %v833
  %5098 = vmatmul.mubr.bf16.gmra.mrb[0].mxu0 %v832
  %v5099 = vpop.f32.mrb[0].mxu0
  %v5100 = vadd.f32 %v795, %v5099
  %v5101 = vpop.f32.mrb[0].mxu0
  %v5102 = vadd.f32 %v799, %v5101
  %v5103 = vpop.f32.mrb[0].mxu0
  %v5104 = vpop.f32.mrb[0].mxu0
  %5105 = vdwg.mxu0
  %5106 = vmatprep.subr.bf16.mxu0 %v3177
  %5107 = vmatpush1.bf16.msra.mxu0 %v3176
  %5108 = vmatprep.subr.bf16.mxu0 %v3187
  %5109 = vmatpush1.bf16.msra.mxu0 %v3186
  %5110 = vmatprep.subr.bf16.mxu0 %v3197
  %5111 = vmatpush1.bf16.msra.mxu0 %v3196
  %5112 = vmatprep.subr.bf16.mxu0 %v3207
  %5113 = vmatpush1.bf16.msra.mxu0 %v3206
  %5114 = vmatprep.subr.bf16.mxu0 %v3217
  %5115 = vmatpush1.bf16.msra.mxu0 %v3216
  %5116 = vmatprep.subr.bf16.mxu0 %v3227
  %5117 = vmatpush1.bf16.msra.mxu0 %v3226
  %5118 = vmatprep.subr.bf16.mxu0 %v3237
  %5119 = vmatpush1.bf16.msra.mxu0 %v3236
  %5120 = vmatprep.subr.bf16.mxu0 %v3247
  %5121 = vmatpush1.bf16.msra.mxu0 %v3246
  %5122 = vmatprep.subr.bf16.mxu0 %v3257
  %5123 = vmatpush1.bf16.msra.mxu0 %v3256
  %5124 = vmatprep.subr.bf16.mxu0 %v3267
  %5125 = vmatpush1.bf16.msra.mxu0 %v3266
  %5126 = vmatprep.subr.bf16.mxu0 %v3277
  %5127 = vmatpush1.bf16.msra.mxu0 %v3276
  %5128 = vmatprep.subr.bf16.mxu0 %v3287
  %5129 = vmatpush1.bf16.msra.mxu0 %v3286
  %5130 = vmatprep.subr.bf16.mxu0 %v3297
  %5131 = vmatpush1.bf16.msra.mxu0 %v3296
  %5132 = vmatprep.subr.bf16.mxu0 %v3307
  %5133 = vmatpush1.bf16.msra.mxu0 %v3306
  %5134 = vmatprep.subr.bf16.mxu0 %v3317
  %5135 = vmatpush1.bf16.msra.mxu0 %v3316
  %5136 = vmatprep.subr.bf16.mxu0 %v3327
  %5137 = vmatpush1.bf16.msra.mxu0 %v3326
  %5138 = vmatprep.mubr.bf16.mxu0 %v835
  %5139 = vmatmul.mubr.bf16.gmra.mrb[0].mxu0 %v834
  %v5140 = vpop.f32.mrb[0].mxu0
  %v5141 = vadd.f32 %v5100, %v5140
  %v5142 = vpop.f32.mrb[0].mxu0
  %v5143 = vadd.f32 %v5102, %v5142
  %v5144 = vpop.f32.mrb[0].mxu0
  %v5145 = vpop.f32.mrb[0].mxu0
  %5146 = vdwg.mxu0
  %5147 = vmatprep.subr.bf16.mxu0 %v3337
  %5148 = vmatpush1.bf16.msra.mxu0 %v3336
  %5149 = vmatprep.subr.bf16.mxu0 %v3347
  %5150 = vmatpush1.bf16.msra.mxu0 %v3346
  %5151 = vmatprep.subr.bf16.mxu0 %v3357
  %5152 = vmatpush1.bf16.msra.mxu0 %v3356
  %5153 = vmatprep.subr.bf16.mxu0 %v3367
  %5154 = vmatpush1.bf16.msra.mxu0 %v3366
  %5155 = vmatprep.subr.bf16.mxu0 %v3377
  %5156 = vmatpush1.bf16.msra.mxu0 %v3376
  %5157 = vmatprep.subr.bf16.mxu0 %v3387
  %5158 = vmatpush1.bf16.msra.mxu0 %v3386
  %5159 = vmatprep.subr.bf16.mxu0 %v3397
  %5160 = vmatpush1.bf16.msra.mxu0 %v3396
  %5161 = vmatprep.subr.bf16.mxu0 %v3407
  %5162 = vmatpush1.bf16.msra.mxu0 %v3406
  %5163 = vmatprep.subr.bf16.mxu0 %v3417
  %5164 = vmatpush1.bf16.msra.mxu0 %v3416
  %5165 = vmatprep.subr.bf16.mxu0 %v3427
  %5166 = vmatpush1.bf16.msra.mxu0 %v3426
  %5167 = vmatprep.subr.bf16.mxu0 %v3437
  %5168 = vmatpush1.bf16.msra.mxu0 %v3436
  %5169 = vmatprep.subr.bf16.mxu0 %v3447
  %5170 = vmatpush1.bf16.msra.mxu0 %v3446
  %5171 = vmatprep.subr.bf16.mxu0 %v3457
  %5172 = vmatpush1.bf16.msra.mxu0 %v3456
  %5173 = vmatprep.subr.bf16.mxu0 %v3467
  %5174 = vmatpush1.bf16.msra.mxu0 %v3466
  %5175 = vmatprep.subr.bf16.mxu0 %v3477
  %5176 = vmatpush1.bf16.msra.mxu0 %v3476
  %5177 = vmatprep.subr.bf16.mxu0 %v3487
  %5178 = vmatpush1.bf16.msra.mxu0 %v3486
  %5179 = vmatprep.mubr.bf16.mxu0 %v837
  %5180 = vmatmul.mubr.bf16.gmra.mrb[0].mxu0 %v836
  %v5181 = vpop.f32.mrb[0].mxu0
  %v5182 = vadd.f32 %v5141, %v5181
  %v5183 = vpop.f32.mrb[0].mxu0
  %v5184 = vadd.f32 %v5143, %v5183
  %v5185 = vpop.f32.mrb[0].mxu0
  %v5186 = vpop.f32.mrb[0].mxu0
  %5187 = vdwg.mxu0
  %5188 = vmatprep.subr.bf16.mxu0 %v3497
  %5189 = vmatpush1.bf16.msra.mxu0 %v3496
  %5190 = vmatprep.subr.bf16.mxu0 %v3507
  %5191 = vmatpush1.bf16.msra.mxu0 %v3506
  %5192 = vmatprep.subr.bf16.mxu0 %v3517
  %5193 = vmatpush1.bf16.msra.mxu0 %v3516
  %5194 = vmatprep.subr.bf16.mxu0 %v3527
  %5195 = vmatpush1.bf16.msra.mxu0 %v3526
  %5196 = vmatprep.subr.bf16.mxu0 %v3537
  %5197 = vmatpush1.bf16.msra.mxu0 %v3536
  %5198 = vmatprep.subr.bf16.mxu0 %v3547
  %5199 = vmatpush1.bf16.msra.mxu0 %v3546
  %5200 = vmatprep.subr.bf16.mxu0 %v3557
  %5201 = vmatpush1.bf16.msra.mxu0 %v3556
  %5202 = vmatprep.subr.bf16.mxu0 %v3567
  %5203 = vmatpush1.bf16.msra.mxu0 %v3566
  %5204 = vmatprep.subr.bf16.mxu0 %v3577
  %5205 = vmatpush1.bf16.msra.mxu0 %v3576
  %5206 = vmatprep.subr.bf16.mxu0 %v3587
  %5207 = vmatpush1.bf16.msra.mxu0 %v3586
  %5208 = vmatprep.subr.bf16.mxu0 %v3597
  %5209 = vmatpush1.bf16.msra.mxu0 %v3596
  %5210 = vmatprep.subr.bf16.mxu0 %v3607
  %5211 = vmatpush1.bf16.msra.mxu0 %v3606
  %5212 = vmatprep.subr.bf16.mxu0 %v3617
  %5213 = vmatpush1.bf16.msra.mxu0 %v3616
  %5214 = vmatprep.subr.bf16.mxu0 %v3627
  %5215 = vmatpush1.bf16.msra.mxu0 %v3626
  %5216 = vmatprep.subr.bf16.mxu0 %v3637
  %5217 = vmatpush1.bf16.msra.mxu0 %v3636
  %5218 = vmatprep.subr.bf16.mxu0 %v3647
  %5219 = vmatpush1.bf16.msra.mxu0 %v3646
  %5220 = vmatprep.mubr.bf16.mxu0 %v839
  %5221 = vmatmul.mubr.bf16.gmra.mrb[0].mxu0 %v838
  %v5222 = vpop.f32.mrb[0].mxu0
  %v5223 = vadd.f32 %v5182, %v5222
  %v5224 = vpop.f32.mrb[0].mxu0
  %v5225 = vadd.f32 %v5184, %v5224
  %v5226 = vpop.f32.mrb[0].mxu0
  %v5227 = vpop.f32.mrb[0].mxu0
  %5228 = vdwg.mxu0
  %5229 = vmatprep.subr.bf16.mxu0 %v3657
  %5230 = vmatpush1.bf16.msra.mxu0 %v3656
  %5231 = vmatprep.subr.bf16.mxu0 %v3667
  %5232 = vmatpush1.bf16.msra.mxu0 %v3666
  %5233 = vmatprep.subr.bf16.mxu0 %v3677
  %5234 = vmatpush1.bf16.msra.mxu0 %v3676
  %5235 = vmatprep.subr.bf16.mxu0 %v3687
  %5236 = vmatpush1.bf16.msra.mxu0 %v3686
  %5237 = vmatprep.subr.bf16.mxu0 %v3697
  %5238 = vmatpush1.bf16.msra.mxu0 %v3696
  %5239 = vmatprep.subr.bf16.mxu0 %v3707
  %5240 = vmatpush1.bf16.msra.mxu0 %v3706
  %5241 = vmatprep.subr.bf16.mxu0 %v3717
  %5242 = vmatpush1.bf16.msra.mxu0 %v3716
  %5243 = vmatprep.subr.bf16.mxu0 %v3727
  %5244 = vmatpush1.bf16.msra.mxu0 %v3726
  %5245 = vmatprep.subr.bf16.mxu0 0
  %5246 = vmatpush1.bf16.msra.mxu0 0
  %5247 = vmatprep.subr.bf16.mxu0 0
  %5248 = vmatpush1.bf16.msra.mxu0 0
  %5249 = vmatprep.subr.bf16.mxu0 0
  %5250 = vmatpush1.bf16.msra.mxu0 0
  %5251 = vmatprep.subr.bf16.mxu0 0
  %5252 = vmatpush1.bf16.msra.mxu0 0
  %5253 = vmatprep.subr.bf16.mxu0 0
  %5254 = vmatpush1.bf16.msra.mxu0 0
  %5255 = vmatprep.subr.bf16.mxu0 0
  %5256 = vmatpush1.bf16.msra.mxu0 0
  %5257 = vmatprep.subr.bf16.mxu0 0
  %5258 = vmatpush1.bf16.msra.mxu0 0
  %5259 = vmatprep.subr.bf16.mxu0 0
  %5260 = vmatpush1.bf16.msra.mxu0 0
  %5261 = vmatprep.mubr.bf16.mxu0 0
  %5262 = vmatmul.mubr.bf16.gmra.mrb[0].mxu0 %v840
  %v5263 = vpop.f32.mrb[0].mxu0
  %v5264 = vadd.f32 %v5223, %v5263
  %v5265 = vpop.f32.mrb[0].mxu0
  %v5266 = vadd.f32 %v5225, %v5265
  %v5267 = vpop.f32.mrb[0].mxu0
  %v5268 = vpop.f32.mrb[0].mxu0
  %5269 = vdwg.mxu0
  %5270 = vmatprep.subr.bf16.mxu0 %v3019
  %5271 = vmatpush1.bf16.msra.mxu0 %v3018
  %5272 = vmatprep.subr.bf16.mxu0 %v3029
  %5273 = vmatpush1.bf16.msra.mxu0 %v3028
  %5274 = vmatprep.subr.bf16.mxu0 %v3039
  %5275 = vmatpush1.bf16.msra.mxu0 %v3038
  %5276 = vmatprep.subr.bf16.mxu0 %v3049
  %5277 = vmatpush1.bf16.msra.mxu0 %v3048
  %5278 = vmatprep.subr.bf16.mxu0 %v3059
  %5279 = vmatpush1.bf16.msra.mxu0 %v3058
  %5280 = vmatprep.subr.bf16.mxu0 %v3069
  %5281 = vmatpush1.bf16.msra.mxu0 %v3068
  %5282 = vmatprep.subr.bf16.mxu0 %v3079
  %5283 = vmatpush1.bf16.msra.mxu0 %v3078
  %5284 = vmatprep.subr.bf16.mxu0 %v3089
  %5285 = vmatpush1.bf16.msra.mxu0 %v3088
  %5286 = vmatprep.subr.bf16.mxu0 %v3099
  %5287 = vmatpush1.bf16.msra.mxu0 %v3098
  %5288 = vmatprep.subr.bf16.mxu0 %v3109
  %5289 = vmatpush1.bf16.msra.mxu0 %v3108
  %5290 = vmatprep.subr.bf16.mxu0 %v3119
  %5291 = vmatpush1.bf16.msra.mxu0 %v3118
  %5292 = vmatprep.subr.bf16.mxu0 %v3129
  %5293 = vmatpush1.bf16.msra.mxu0 %v3128
  %5294 = vmatprep.subr.bf16.mxu0 %v3139
  %5295 = vmatpush1.bf16.msra.mxu0 %v3138
  %5296 = vmatprep.subr.bf16.mxu0 %v3149
  %5297 = vmatpush1.bf16.msra.mxu0 %v3148
  %5298 = vmatprep.subr.bf16.mxu0 %v3159
  %5299 = vmatpush1.bf16.msra.mxu0 %v3158
  %5300 = vmatprep.subr.bf16.mxu0 %v3169
  %5301 = vmatpush1.bf16.msra.mxu0 %v3168
  %5302 = vmatprep.mubr.bf16.mxu0 %v833
  %5303 = vmatmul.mubr.bf16.gmra.mrb[0].mxu0 %v832
  %v5304 = vpop.f32.mrb[0].mxu0
  %v5305 = vadd.f32 %v803, %v5304
  %v5306 = vpop.f32.mrb[0].mxu0
  %v5307 = vadd.f32 %v807, %v5306
  %v5308 = vpop.f32.mrb[0].mxu0
  %v5309 = vpop.f32.mrb[0].mxu0
  %5310 = vdwg.mxu0
  %5311 = vmatprep.subr.bf16.mxu0 %v3179
  %5312 = vmatpush1.bf16.msra.mxu0 %v3178
  %5313 = vmatprep.subr.bf16.mxu0 %v3189
  %5314 = vmatpush1.bf16.msra.mxu0 %v3188
  %5315 = vmatprep.subr.bf16.mxu0 %v3199
  %5316 = vmatpush1.bf16.msra.mxu0 %v3198
  %5317 = vmatprep.subr.bf16.mxu0 %v3209
  %5318 = vmatpush1.bf16.msra.mxu0 %v3208
  %5319 = vmatprep.subr.bf16.mxu0 %v3219
  %5320 = vmatpush1.bf16.msra.mxu0 %v3218
  %5321 = vmatprep.subr.bf16.mxu0 %v3229
  %5322 = vmatpush1.bf16.msra.mxu0 %v3228
  %5323 = vmatprep.subr.bf16.mxu0 %v3239
  %5324 = vmatpush1.bf16.msra.mxu0 %v3238
  %5325 = vmatprep.subr.bf16.mxu0 %v3249
  %5326 = vmatpush1.bf16.msra.mxu0 %v3248
  %5327 = vmatprep.subr.bf16.mxu0 %v3259
  %5328 = vmatpush1.bf16.msra.mxu0 %v3258
  %5329 = vmatprep.subr.bf16.mxu0 %v3269
  %5330 = vmatpush1.bf16.msra.mxu0 %v3268
  %5331 = vmatprep.subr.bf16.mxu0 %v3279
  %5332 = vmatpush1.bf16.msra.mxu0 %v3278
  %5333 = vmatprep.subr.bf16.mxu0 %v3289
  %5334 = vmatpush1.bf16.msra.mxu0 %v3288
  %5335 = vmatprep.subr.bf16.mxu0 %v3299
  %5336 = vmatpush1.bf16.msra.mxu0 %v3298
  %5337 = vmatprep.subr.bf16.mxu0 %v3309
  %5338 = vmatpush1.bf16.msra.mxu0 %v3308
  %5339 = vmatprep.subr.bf16.mxu0 %v3319
  %5340 = vmatpush1.bf16.msra.mxu0 %v3318
  %5341 = vmatprep.subr.bf16.mxu0 %v3329
  %5342 = vmatpush1.bf16.msra.mxu0 %v3328
  %5343 = vmatprep.mubr.bf16.mxu0 %v835
  %5344 = vmatmul.mubr.bf16.gmra.mrb[0].mxu0 %v834
  %v5345 = vpop.f32.mrb[0].mxu0
  %v5346 = vadd.f32 %v5305, %v5345
  %v5347 = vpop.f32.mrb[0].mxu0
  %v5348 = vadd.f32 %v5307, %v5347
  %v5349 = vpop.f32.mrb[0].mxu0
  %v5350 = vpop.f32.mrb[0].mxu0
  %5351 = vdwg.mxu0
  %5352 = vmatprep.subr.bf16.mxu0 %v3339
  %5353 = vmatpush1.bf16.msra.mxu0 %v3338
  %5354 = vmatprep.subr.bf16.mxu0 %v3349
  %5355 = vmatpush1.bf16.msra.mxu0 %v3348
  %5356 = vmatprep.subr.bf16.mxu0 %v3359
  %5357 = vmatpush1.bf16.msra.mxu0 %v3358
  %5358 = vmatprep.subr.bf16.mxu0 %v3369
  %5359 = vmatpush1.bf16.msra.mxu0 %v3368
  %5360 = vmatprep.subr.bf16.mxu0 %v3379
  %5361 = vmatpush1.bf16.msra.mxu0 %v3378
  %5362 = vmatprep.subr.bf16.mxu0 %v3389
  %5363 = vmatpush1.bf16.msra.mxu0 %v3388
  %5364 = vmatprep.subr.bf16.mxu0 %v3399
  %5365 = vmatpush1.bf16.msra.mxu0 %v3398
  %5366 = vmatprep.subr.bf16.mxu0 %v3409
  %5367 = vmatpush1.bf16.msra.mxu0 %v3408
  %5368 = vmatprep.subr.bf16.mxu0 %v3419
  %5369 = vmatpush1.bf16.msra.mxu0 %v3418
  %5370 = vmatprep.subr.bf16.mxu0 %v3429
  %5371 = vmatpush1.bf16.msra.mxu0 %v3428
  %5372 = vmatprep.subr.bf16.mxu0 %v3439
  %5373 = vmatpush1.bf16.msra.mxu0 %v3438
  %5374 = vmatprep.subr.bf16.mxu0 %v3449
  %5375 = vmatpush1.bf16.msra.mxu0 %v3448
  %5376 = vmatprep.subr.bf16.mxu0 %v3459
  %5377 = vmatpush1.bf16.msra.mxu0 %v3458
  %5378 = vmatprep.subr.bf16.mxu0 %v3469
  %5379 = vmatpush1.bf16.msra.mxu0 %v3468
  %5380 = vmatprep.subr.bf16.mxu0 %v3479
  %5381 = vmatpush1.bf16.msra.mxu0 %v3478
  %5382 = vmatprep.subr.bf16.mxu0 %v3489
  %5383 = vmatpush1.bf16.msra.mxu0 %v3488
  %5384 = vmatprep.mubr.bf16.mxu0 %v837
  %5385 = vmatmul.mubr.bf16.gmra.mrb[0].mxu0 %v836
  %v5386 = vpop.f32.mrb[0].mxu0
  %v5387 = vadd.f32 %v5346, %v5386
  %v5388 = vpop.f32.mrb[0].mxu0
  %v5389 = vadd.f32 %v5348, %v5388
  %v5390 = vpop.f32.mrb[0].mxu0
  %v5391 = vpop.f32.mrb[0].mxu0
  %5392 = vdwg.mxu0
  %5393 = vmatprep.subr.bf16.mxu0 %v3499
  %5394 = vmatpush1.bf16.msra.mxu0 %v3498
  %5395 = vmatprep.subr.bf16.mxu0 %v3509
  %5396 = vmatpush1.bf16.msra.mxu0 %v3508
  %5397 = vmatprep.subr.bf16.mxu0 %v3519
  %5398 = vmatpush1.bf16.msra.mxu0 %v3518
  %5399 = vmatprep.subr.bf16.mxu0 %v3529
  %5400 = vmatpush1.bf16.msra.mxu0 %v3528
  %5401 = vmatprep.subr.bf16.mxu0 %v3539
  %5402 = vmatpush1.bf16.msra.mxu0 %v3538
  %5403 = vmatprep.subr.bf16.mxu0 %v3549
  %5404 = vmatpush1.bf16.msra.mxu0 %v3548
  %5405 = vmatprep.subr.bf16.mxu0 %v3559
  %5406 = vmatpush1.bf16.msra.mxu0 %v3558
  %5407 = vmatprep.subr.bf16.mxu0 %v3569
  %5408 = vmatpush1.bf16.msra.mxu0 %v3568
  %5409 = vmatprep.subr.bf16.mxu0 %v3579
  %5410 = vmatpush1.bf16.msra.mxu0 %v3578
  %5411 = vmatprep.subr.bf16.mxu0 %v3589
  %5412 = vmatpush1.bf16.msra.mxu0 %v3588
  %5413 = vmatprep.subr.bf16.mxu0 %v3599
  %5414 = vmatpush1.bf16.msra.mxu0 %v3598
  %5415 = vmatprep.subr.bf16.mxu0 %v3609
  %5416 = vmatpush1.bf16.msra.mxu0 %v3608
  %5417 = vmatprep.subr.bf16.mxu0 %v3619
  %5418 = vmatpush1.bf16.msra.mxu0 %v3618
  %5419 = vmatprep.subr.bf16.mxu0 %v3629
  %5420 = vmatpush1.bf16.msra.mxu0 %v3628
  %5421 = vmatprep.subr.bf16.mxu0 %v3639
  %5422 = vmatpush1.bf16.msra.mxu0 %v3638
  %5423 = vmatprep.subr.bf16.mxu0 %v3649
  %5424 = vmatpush1.bf16.msra.mxu0 %v3648
  %5425 = vmatprep.mubr.bf16.mxu0 %v839
  %5426 = vmatmul.mubr.bf16.gmra.mrb[0].mxu0 %v838
  %v5427 = vpop.f32.mrb[0].mxu0
  %v5428 = vadd.f32 %v5387, %v5427
  %v5429 = vpop.f32.mrb[0].mxu0
  %v5430 = vadd.f32 %v5389, %v5429
  %v5431 = vpop.f32.mrb[0].mxu0
  %v5432 = vpop.f32.mrb[0].mxu0
  %5433 = vdwg.mxu0
  %5434 = vmatprep.subr.bf16.mxu0 %v3659
  %5435 = vmatpush1.bf16.msra.mxu0 %v3658
  %5436 = vmatprep.subr.bf16.mxu0 %v3669
  %5437 = vmatpush1.bf16.msra.mxu0 %v3668
  %5438 = vmatprep.subr.bf16.mxu0 %v3679
  %5439 = vmatpush1.bf16.msra.mxu0 %v3678
  %5440 = vmatprep.subr.bf16.mxu0 %v3689
  %5441 = vmatpush1.bf16.msra.mxu0 %v3688
  %5442 = vmatprep.subr.bf16.mxu0 %v3699
  %5443 = vmatpush1.bf16.msra.mxu0 %v3698
  %5444 = vmatprep.subr.bf16.mxu0 %v3709
  %5445 = vmatpush1.bf16.msra.mxu0 %v3708
  %5446 = vmatprep.subr.bf16.mxu0 %v3719
  %5447 = vmatpush1.bf16.msra.mxu0 %v3718
  %5448 = vmatprep.subr.bf16.mxu0 %v3729
  %5449 = vmatpush1.bf16.msra.mxu0 %v3728
  %5450 = vmatprep.subr.bf16.mxu0 0
  %5451 = vmatpush1.bf16.msra.mxu0 0
  %5452 = vmatprep.subr.bf16.mxu0 0
  %5453 = vmatpush1.bf16.msra.mxu0 0
  %5454 = vmatprep.subr.bf16.mxu0 0
  %5455 = vmatpush1.bf16.msra.mxu0 0
  %5456 = vmatprep.subr.bf16.mxu0 0
  %5457 = vmatpush1.bf16.msra.mxu0 0
  %5458 = vmatprep.subr.bf16.mxu0 0
  %5459 = vmatpush1.bf16.msra.mxu0 0
  %5460 = vmatprep.subr.bf16.mxu0 0
  %5461 = vmatpush1.bf16.msra.mxu0 0
  %5462 = vmatprep.subr.bf16.mxu0 0
  %5463 = vmatpush1.bf16.msra.mxu0 0
  %5464 = vmatprep.subr.bf16.mxu0 0
  %5465 = vmatpush1.bf16.msra.mxu0 0
  %5466 = vmatprep.mubr.bf16.mxu0 0
  %5467 = vmatmul.mubr.bf16.gmra.mrb[0].mxu0 %v840
  %v5468 = vpop.f32.mrb[0].mxu0
  %v5469 = vadd.f32 %v5428, %v5468
  %v5470 = vpop.f32.mrb[0].mxu0
  %v5471 = vadd.f32 %v5430, %v5470
  %v5472 = vpop.f32.mrb[0].mxu0
  %v5473 = vpop.f32.mrb[0].mxu0
  %5474 = vdwg.mxu0
  %v5475 = vmax.f32 %v4649, 0.0
  %v5476 = vmax.f32 %v4651, 0.0
  %v5477 = vmax.f32 %v4854, 0.0
  %v5478 = vmax.f32 %v4856, 0.0
  %v5479 = vmax.f32 %v5059, 0.0
  %v5480 = vmax.f32 %v5061, 0.0
  %v5481 = vmax.f32 %v5264, 0.0
  %v5482 = vmax.f32 %v5266, 0.0
  %v5483 = vmax.f32 %v5469, 0.0
  %v5484 = vmax.f32 %v5471, 0.0
  %v5485 = vpack.c.bf16 %v5475, %v5475
  %v5486 = vpack.c.bf16 %v5476, %v5476
  %v5487 = vpack.c.bf16 %v5477, %v5477
  %v5488 = vpack.c.bf16 %v5478, %v5478
  %v5489 = vpack.c.bf16 %v5479, %v5479
  %v5490 = vpack.c.bf16 %v5480, %v5480
  %v5491 = vpack.c.bf16 %v5481, %v5481
  %v5492 = vpack.c.bf16 %v5482, %v5482
  %v5493 = vpack.c.bf16 %v5483, %v5483
  %v5494 = vpack.c.bf16 %v5484, %v5484
  %v5495 = vld [vmem:[%s3] sm:$0xf]
  %v5496 = vld [vmem:[%s3 + $0x4] sm:$0xf]
  %v5497 = vld [vmem:[%s3 + $0x8] sm:$0xf]
  %v5498 = vld [vmem:[%s3 + $0xc] sm:$0xf]
  %v5499 = vld [vmem:[%s3 + $0x10] sm:$0xf]
  %v5500 = vld [vmem:[%s3 + $0x14] sm:$0xf]
  %v5501 = vld [vmem:[%s3 + $0x18] sm:$0xf]
  %v5502 = vld [vmem:[%s3 + $0x1c] sm:$0xf]
  %v5503 = vld [vmem:[%s3 + $0x20] sm:$0xf]
  %v5504 = vld [vmem:[%s3 + $0x24] sm:$0xf]
  %v5505 = vld [vmem:[%s3 + $0x28] sm:$0xf]
  %v5506 = vld [vmem:[%s3 + $0x2c] sm:$0xf]
  %v5507 = vld [vmem:[%s3 + $0x30] sm:$0xf]
  %v5508 = vld [vmem:[%s3 + $0x34] sm:$0xf]
  %v5509 = vld [vmem:[%s3 + $0x38] sm:$0xf]
  %v5510 = vld [vmem:[%s3 + $0x3c] sm:$0xf]
  %v5511 = vld [vmem:[%s3 + $0x40] sm:$0xf]
  %v5512 = vld [vmem:[%s3 + $0x44] sm:$0xf]
  %v5513 = vld [vmem:[%s3 + $0x48] sm:$0xf]
  %v5514 = vld [vmem:[%s3 + $0x4c] sm:$0xf]
  %v5515 = vld [vmem:[%s3 + $0x50] sm:$0xf]
  %v5516 = vld [vmem:[%s3 + $0x54] sm:$0xf]
  %v5517 = vld [vmem:[%s3 + $0x58] sm:$0xf]
  %v5518 = vld [vmem:[%s3 + $0x5c] sm:$0xf]
  %v5519 = vld [vmem:[%s3 + $0x60] sm:$0xf]
  %v5520 = vld [vmem:[%s3 + $0x64] sm:$0xf]
  %v5521 = vld [vmem:[%s3 + $0x68] sm:$0xf]
  %v5522 = vld [vmem:[%s3 + $0x6c] sm:$0xf]
  %v5523 = vld [vmem:[%s3 + $0x70] sm:$0xf]
  %v5524 = vld [vmem:[%s3 + $0x74] sm:$0xf]
  %v5525 = vld [vmem:[%s3 + $0x78] sm:$0xf]
  %v5526 = vld [vmem:[%s3 + $0x7c] sm:$0xf]
  %v5527 = vld [vmem:[%s3 + $0x80] sm:$0xf]
  %v5528 = vld [vmem:[%s3 + $0x84] sm:$0xf]
  %v5529 = vld [vmem:[%s3 + $0x88] sm:$0xf]
  %v5530 = vld [vmem:[%s3 + $0x8c] sm:$0xf]
  %v5531 = vld [vmem:[%s3 + $0x90] sm:$0xf]
  %v5532 = vld [vmem:[%s3 + $0x94] sm:$0xf]
  %v5533 = vld [vmem:[%s3 + $0x98] sm:$0xf]
  %v5534 = vld [vmem:[%s3 + $0x9c] sm:$0xf]
  %v5535 = vld [vmem:[%s3 + $0xa0] sm:$0xf]
  %v5536 = vld [vmem:[%s3 + $0xa4] sm:$0xf]
  %v5537 = vld [vmem:[%s3 + $0xa8] sm:$0xf]
  %v5538 = vld [vmem:[%s3 + $0xac] sm:$0xf]
  %v5539 = vld [vmem:[%s3 + $0xb0] sm:$0xf]
  %v5540 = vld [vmem:[%s3 + $0xb4] sm:$0xf]
  %v5541 = vld [vmem:[%s3 + $0xb8] sm:$0xf]
  %v5542 = vld [vmem:[%s3 + $0xbc] sm:$0xf]
  %v5543 = vld [vmem:[%s3 + $0xc0] sm:$0xf]
  %v5544 = vld [vmem:[%s3 + $0xc4] sm:$0xf]
  %v5545 = vld [vmem:[%s3 + $0xc8] sm:$0xf]
  %v5546 = vld [vmem:[%s3 + $0xcc] sm:$0xf]
  %v5547 = vld [vmem:[%s3 + $0xd0] sm:$0xf]
  %v5548 = vld [vmem:[%s3 + $0xd4] sm:$0xf]
  %v5549 = vld [vmem:[%s3 + $0xd8] sm:$0xf]
  %v5550 = vld [vmem:[%s3 + $0xdc] sm:$0xf]
  %v5551 = vld [vmem:[%s3 + $0xe0] sm:$0xf]
  %v5552 = vld [vmem:[%s3 + $0xe4] sm:$0xf]
  %v5553 = vld [vmem:[%s3 + $0xe8] sm:$0xf]
  %v5554 = vld [vmem:[%s3 + $0xec] sm:$0xf]
  %v5555 = vld [vmem:[%s3 + $0xf0] sm:$0xf]
  %v5556 = vld [vmem:[%s3 + $0xf4] sm:$0xf]
  %v5557 = vld [vmem:[%s3 + $0xf8] sm:$0xf]
  %v5558 = vld [vmem:[%s3 + $0xfc] sm:$0xf]
  %v5559 = vld [vmem:[%s3 + $0x100] sm:$0xf]
  %v5560 = vld [vmem:[%s3 + $0x104] sm:$0xf]
  %v5561 = vld [vmem:[%s3 + $0x108] sm:$0xf]
  %v5562 = vld [vmem:[%s3 + $0x10c] sm:$0xf]
  %v5563 = vld [vmem:[%s3 + $0x110] sm:$0xf]
  %v5564 = vld [vmem:[%s3 + $0x114] sm:$0xf]
  %v5565 = vld [vmem:[%s3 + $0x118] sm:$0xf]
  %v5566 = vld [vmem:[%s3 + $0x11c] sm:$0xf]
  %v5567 = vld [vmem:[%s3 + $0x120] sm:$0xf]
  %v5568 = vld [vmem:[%s3 + $0x124] sm:$0xf]
  %v5569 = vld [vmem:[%s3 + $0x128] sm:$0xf]
  %v5570 = vld [vmem:[%s3 + $0x12c] sm:$0xf]
  %v5571 = vld [vmem:[%s3 + $0x130] sm:$0xf]
  %v5572 = vld [vmem:[%s3 + $0x134] sm:$0xf]
  %v5573 = vld [vmem:[%s3 + $0x138] sm:$0xf]
  %v5574 = vld [vmem:[%s3 + $0x13c] sm:$0xf]
  %v5575 = vld [vmem:[%s3 + $0x140] sm:$0xf]
  %v5576 = vld [vmem:[%s3 + $0x144] sm:$0xf]
  %v5577 = vld [vmem:[%s3 + $0x148] sm:$0xf]
  %v5578 = vld [vmem:[%s3 + $0x14c] sm:$0xf]
  %v5579 = vld [vmem:[%s3 + $0x150] sm:$0xf]
  %v5580 = vld [vmem:[%s3 + $0x154] sm:$0xf]
  %v5581 = vld [vmem:[%s3 + $0x158] sm:$0xf]
  %v5582 = vld [vmem:[%s3 + $0x15c] sm:$0xf]
  %v5583 = vld [vmem:[%s3 + $0x160] sm:$0xf]
  %v5584 = vld [vmem:[%s3 + $0x164] sm:$0xf]
  %v5585 = vld [vmem:[%s3 + $0x168] sm:$0xf]
  %v5586 = vld [vmem:[%s3 + $0x16c] sm:$0xf]
  %v5587 = vld [vmem:[%s3 + $0x170] sm:$0xf]
  %v5588 = vld [vmem:[%s3 + $0x174] sm:$0xf]
  %v5589 = vld [vmem:[%s3 + $0x178] sm:$0xf]
  %v5590 = vld [vmem:[%s3 + $0x17c] sm:$0xf]
  %v5591 = vld [vmem:[%s3 + $0x180] sm:$0xf]
  %v5592 = vld [vmem:[%s3 + $0x184] sm:$0xf]
  %v5593 = vld [vmem:[%s3 + $0x188] sm:$0xf]
  %v5594 = vld [vmem:[%s3 + $0x18c] sm:$0xf]
  %v5595 = vld [vmem:[%s3 + $0x190] sm:$0xf]
  %v5596 = vld [vmem:[%s3 + $0x194] sm:$0xf]
  %v5597 = vld [vmem:[%s3 + $0x198] sm:$0xf]
  %v5598 = vld [vmem:[%s3 + $0x19c] sm:$0xf]
  %v5599 = vld [vmem:[%s3 + $0x1a0] sm:$0xf]
  %v5600 = vld [vmem:[%s3 + $0x1a4] sm:$0xf]
  %v5601 = vld [vmem:[%s3 + $0x1a8] sm:$0xf]
  %v5602 = vld [vmem:[%s3 + $0x1ac] sm:$0xf]
  %v5603 = vld [vmem:[%s3 + $0x1b0] sm:$0xf]
  %v5604 = vld [vmem:[%s3 + $0x1b4] sm:$0xf]
  %v5605 = vld [vmem:[%s3 + $0x1b8] sm:$0xf]
  %v5606 = vld [vmem:[%s3 + $0x1bc] sm:$0xf]
  %v5607 = vld [vmem:[%s3 + $0x1c0] sm:$0xf]
  %v5608 = vld [vmem:[%s3 + $0x1c4] sm:$0xf]
  %v5609 = vld [vmem:[%s3 + $0x1c8] sm:$0xf]
  %v5610 = vld [vmem:[%s3 + $0x1cc] sm:$0xf]
  %v5611 = vld [vmem:[%s3 + $0x1d0] sm:$0xf]
  %v5612 = vld [vmem:[%s3 + $0x1d4] sm:$0xf]
  %v5613 = vld [vmem:[%s3 + $0x1d8] sm:$0xf]
  %v5614 = vld [vmem:[%s3 + $0x1dc] sm:$0xf]
  %v5615 = vld [vmem:[%s3 + $0x1e0] sm:$0xf]
  %v5616 = vld [vmem:[%s3 + $0x1e4] sm:$0xf]
  %v5617 = vld [vmem:[%s3 + $0x1e8] sm:$0xf]
  %v5618 = vld [vmem:[%s3 + $0x1ec] sm:$0xf]
  %v5619 = vld [vmem:[%s3 + $0x1f0] sm:$0xf]
  %v5620 = vld [vmem:[%s3 + $0x1f4] sm:$0xf]
  %v5621 = vld [vmem:[%s3 + $0x1f8] sm:$0xf]
  %v5622 = vld [vmem:[%s3 + $0x1fc] sm:$0xf]
  %v5623 = vld [vmem:[%s3 + $0x200] sm:$0xf]
  %v5624 = vld [vmem:[%s3 + $0x204] sm:$0xf]
  %v5625 = vld [vmem:[%s3 + $0x208] sm:$0xf]
  %v5626 = vld [vmem:[%s3 + $0x20c] sm:$0xf]
  %v5627 = vld [vmem:[%s3 + $0x210] sm:$0xf]
  %v5628 = vld [vmem:[%s3 + $0x214] sm:$0xf]
  %v5629 = vld [vmem:[%s3 + $0x218] sm:$0xf]
  %v5630 = vld [vmem:[%s3 + $0x21c] sm:$0xf]
  %v5631 = vld [vmem:[%s3 + $0x220] sm:$0xf]
  %v5632 = vld [vmem:[%s3 + $0x224] sm:$0xf]
  %v5633 = vld [vmem:[%s3 + $0x228] sm:$0xf]
  %v5634 = vld [vmem:[%s3 + $0x22c] sm:$0xf]
  %v5635 = vld [vmem:[%s3 + $0x230] sm:$0xf]
  %v5636 = vld [vmem:[%s3 + $0x234] sm:$0xf]
  %v5637 = vld [vmem:[%s3 + $0x238] sm:$0xf]
  %v5638 = vld [vmem:[%s3 + $0x23c] sm:$0xf]
  %v5639 = vld [vmem:[%s3 + $0x240] sm:$0xf]
  %v5640 = vld [vmem:[%s3 + $0x244] sm:$0xf]
  %v5641 = vld [vmem:[%s3 + $0x248] sm:$0xf]
  %v5642 = vld [vmem:[%s3 + $0x24c] sm:$0xf]
  %v5643 = vld [vmem:[%s3 + $0x250] sm:$0xf]
  %v5644 = vld [vmem:[%s3 + $0x254] sm:$0xf]
  %v5645 = vld [vmem:[%s3 + $0x258] sm:$0xf]
  %v5646 = vld [vmem:[%s3 + $0x25c] sm:$0xf]
  %v5647 = vld [vmem:[%s3 + $0x260] sm:$0xf]
  %v5648 = vld [vmem:[%s3 + $0x264] sm:$0xf]
  %v5649 = vld [vmem:[%s3 + $0x268] sm:$0xf]
  %v5650 = vld [vmem:[%s3 + $0x26c] sm:$0xf]
  %v5651 = vld [vmem:[%s3 + $0x270] sm:$0xf]
  %v5652 = vld [vmem:[%s3 + $0x274] sm:$0xf]
  %v5653 = vld [vmem:[%s3 + $0x278] sm:$0xf]
  %v5654 = vld [vmem:[%s3 + $0x27c] sm:$0xf]
  %v5655 = vld [vmem:[%s4] sm:$0x1]
  %v5657 = vlaneseq
  %v5658 = vshrl.u32 %v5657, 7
  %v5659 = vsub.s32 0, %v5658
  %v5660 = vrot.slane %v5655, %v5659
  %v5822 = vunpack.c.l.b16 %v5495
  %v5823 = vunpack.c.l.b16 %v5496
  %v5824 = vunpack.c.l.b16 %v5497
  %v5825 = vunpack.c.l.b16 %v5498
  %v5826 = vunpack.c.l.b16 %v5499
  %v5827 = vunpack.c.l.b16 %v5500
  %v5828 = vunpack.c.l.b16 %v5501
  %v5829 = vunpack.c.l.b16 %v5502
  %v5830 = vunpack.c.l.b16 %v5503
  %v5831 = vunpack.c.l.b16 %v5504
  %v5832 = vunpack.c.l.b16 %v5505
  %v5833 = vunpack.c.l.b16 %v5506
  %v5834 = vunpack.c.l.b16 %v5507
  %v5835 = vunpack.c.l.b16 %v5508
  %v5836 = vunpack.c.l.b16 %v5509
  %v5837 = vunpack.c.l.b16 %v5510
  %v5838 = vunpack.c.l.b16 %v5511
  %v5839 = vunpack.c.l.b16 %v5512
  %v5840 = vunpack.c.l.b16 %v5513
  %v5841 = vunpack.c.l.b16 %v5514
  %v5842 = vunpack.c.l.b16 %v5515
  %v5843 = vunpack.c.l.b16 %v5516
  %v5844 = vunpack.c.l.b16 %v5517
  %v5845 = vunpack.c.l.b16 %v5518
  %v5846 = vunpack.c.l.b16 %v5519
  %v5847 = vunpack.c.l.b16 %v5520
  %v5848 = vunpack.c.l.b16 %v5521
  %v5849 = vunpack.c.l.b16 %v5522
  %v5850 = vunpack.c.l.b16 %v5523
  %v5851 = vunpack.c.l.b16 %v5524
  %v5852 = vunpack.c.l.b16 %v5525
  %v5853 = vunpack.c.l.b16 %v5526
  %v5854 = vunpack.c.l.b16 %v5527
  %v5855 = vunpack.c.l.b16 %v5528
  %v5856 = vunpack.c.l.b16 %v5529
  %v5857 = vunpack.c.l.b16 %v5530
  %v5858 = vunpack.c.l.b16 %v5531
  %v5859 = vunpack.c.l.b16 %v5532
  %v5860 = vunpack.c.l.b16 %v5533
  %v5861 = vunpack.c.l.b16 %v5534
  %v5862 = vunpack.c.l.b16 %v5535
  %v5863 = vunpack.c.l.b16 %v5536
  %v5864 = vunpack.c.l.b16 %v5537
  %v5865 = vunpack.c.l.b16 %v5538
  %v5866 = vunpack.c.l.b16 %v5539
  %v5867 = vunpack.c.l.b16 %v5540
  %v5868 = vunpack.c.l.b16 %v5541
  %v5869 = vunpack.c.l.b16 %v5542
  %v5870 = vunpack.c.l.b16 %v5543
  %v5871 = vunpack.c.l.b16 %v5544
  %v5872 = vunpack.c.l.b16 %v5545
  %v5873 = vunpack.c.l.b16 %v5546
  %v5874 = vunpack.c.l.b16 %v5547
  %v5875 = vunpack.c.l.b16 %v5548
  %v5876 = vunpack.c.l.b16 %v5549
  %v5877 = vunpack.c.l.b16 %v5550
  %v5878 = vunpack.c.l.b16 %v5551
  %v5879 = vunpack.c.l.b16 %v5552
  %v5880 = vunpack.c.l.b16 %v5553
  %v5881 = vunpack.c.l.b16 %v5554
  %v5882 = vunpack.c.l.b16 %v5555
  %v5883 = vunpack.c.l.b16 %v5556
  %v5884 = vunpack.c.l.b16 %v5557
  %v5885 = vunpack.c.l.b16 %v5558
  %v5886 = vunpack.c.l.b16 %v5559
  %v5887 = vunpack.c.l.b16 %v5560
  %v5888 = vunpack.c.l.b16 %v5561
  %v5889 = vunpack.c.l.b16 %v5562
  %v5890 = vunpack.c.l.b16 %v5563
  %v5891 = vunpack.c.l.b16 %v5564
  %v5892 = vunpack.c.l.b16 %v5565
  %v5893 = vunpack.c.l.b16 %v5566
  %v5894 = vunpack.c.l.b16 %v5567
  %v5895 = vunpack.c.l.b16 %v5568
  %v5896 = vunpack.c.l.b16 %v5569
  %v5897 = vunpack.c.l.b16 %v5570
  %v5898 = vunpack.c.l.b16 %v5571
  %v5899 = vunpack.c.l.b16 %v5572
  %v5900 = vunpack.c.l.b16 %v5573
  %v5901 = vunpack.c.l.b16 %v5574
  %v5902 = vunpack.c.l.b16 %v5575
  %v5903 = vunpack.c.l.b16 %v5576
  %v5904 = vunpack.c.l.b16 %v5577
  %v5905 = vunpack.c.l.b16 %v5578
  %v5906 = vunpack.c.l.b16 %v5579
  %v5907 = vunpack.c.l.b16 %v5580
  %v5908 = vunpack.c.l.b16 %v5581
  %v5909 = vunpack.c.l.b16 %v5582
  %v5910 = vunpack.c.l.b16 %v5583
  %v5911 = vunpack.c.l.b16 %v5584
  %v5912 = vunpack.c.l.b16 %v5585
  %v5913 = vunpack.c.l.b16 %v5586
  %v5914 = vunpack.c.l.b16 %v5587
  %v5915 = vunpack.c.l.b16 %v5588
  %v5916 = vunpack.c.l.b16 %v5589
  %v5917 = vunpack.c.l.b16 %v5590
  %v5918 = vunpack.c.l.b16 %v5591
  %v5919 = vunpack.c.l.b16 %v5592
  %v5920 = vunpack.c.l.b16 %v5593
  %v5921 = vunpack.c.l.b16 %v5594
  %v5922 = vunpack.c.l.b16 %v5595
  %v5923 = vunpack.c.l.b16 %v5596
  %v5924 = vunpack.c.l.b16 %v5597
  %v5925 = vunpack.c.l.b16 %v5598
  %v5926 = vunpack.c.l.b16 %v5599
  %v5927 = vunpack.c.l.b16 %v5600
  %v5928 = vunpack.c.l.b16 %v5601
  %v5929 = vunpack.c.l.b16 %v5602
  %v5930 = vunpack.c.l.b16 %v5603
  %v5931 = vunpack.c.l.b16 %v5604
  %v5932 = vunpack.c.l.b16 %v5605
  %v5933 = vunpack.c.l.b16 %v5606
  %v5934 = vunpack.c.l.b16 %v5607
  %v5935 = vunpack.c.l.b16 %v5608
  %v5936 = vunpack.c.l.b16 %v5609
  %v5937 = vunpack.c.l.b16 %v5610
  %v5938 = vunpack.c.l.b16 %v5611
  %v5939 = vunpack.c.l.b16 %v5612
  %v5940 = vunpack.c.l.b16 %v5613
  %v5941 = vunpack.c.l.b16 %v5614
  %v5942 = vunpack.c.l.b16 %v5615
  %v5943 = vunpack.c.l.b16 %v5616
  %v5944 = vunpack.c.l.b16 %v5617
  %v5945 = vunpack.c.l.b16 %v5618
  %v5946 = vunpack.c.l.b16 %v5619
  %v5947 = vunpack.c.l.b16 %v5620
  %v5948 = vunpack.c.l.b16 %v5621
  %v5949 = vunpack.c.l.b16 %v5622
  %v5950 = vunpack.c.l.b16 %v5623
  %v5951 = vunpack.c.l.b16 %v5624
  %v5952 = vunpack.c.l.b16 %v5625
  %v5953 = vunpack.c.l.b16 %v5626
  %v5954 = vunpack.c.l.b16 %v5627
  %v5955 = vunpack.c.l.b16 %v5628
  %v5956 = vunpack.c.l.b16 %v5629
  %v5957 = vunpack.c.l.b16 %v5630
  %v5958 = vunpack.c.l.b16 %v5631
  %v5959 = vunpack.c.l.b16 %v5632
  %v5960 = vunpack.c.l.b16 %v5633
  %v5961 = vunpack.c.l.b16 %v5634
  %v5962 = vunpack.c.l.b16 %v5635
  %v5963 = vunpack.c.l.b16 %v5636
  %v5964 = vunpack.c.l.b16 %v5637
  %v5965 = vunpack.c.l.b16 %v5638
  %v5966 = vunpack.c.l.b16 %v5639
  %v5967 = vunpack.c.l.b16 %v5640
  %v5968 = vunpack.c.l.b16 %v5641
  %v5969 = vunpack.c.l.b16 %v5642
  %v5970 = vunpack.c.l.b16 %v5643
  %v5971 = vunpack.c.l.b16 %v5644
  %v5972 = vunpack.c.l.b16 %v5645
  %v5973 = vunpack.c.l.b16 %v5646
  %v5974 = vunpack.c.l.b16 %v5647
  %v5975 = vunpack.c.l.b16 %v5648
  %v5976 = vunpack.c.l.b16 %v5649
  %v5977 = vunpack.c.l.b16 %v5650
  %v5978 = vunpack.c.l.b16 %v5651
  %v5979 = vunpack.c.l.b16 %v5652
  %v5980 = vunpack.c.l.b16 %v5653
  %v5981 = vunpack.c.l.b16 %v5654
  %v5982 = vpack.c.b16 %v5823, %v5822
  %v5983 = vpack.c.b16 %v5825, %v5824
  %v5984 = vpack.c.b16 %v5827, %v5826
  %v5985 = vpack.c.b16 %v5829, %v5828
  %v5986 = vpack.c.b16 %v5831, %v5830
  %v5987 = vpack.c.b16 %v5833, %v5832
  %v5988 = vpack.c.b16 %v5835, %v5834
  %v5989 = vpack.c.b16 %v5837, %v5836
  %v5990 = vpack.c.b16 %v5839, %v5838
  %v5991 = vpack.c.b16 %v5841, %v5840
  %v5992 = vpack.c.b16 %v5843, %v5842
  %v5993 = vpack.c.b16 %v5845, %v5844
  %v5994 = vpack.c.b16 %v5847, %v5846
  %v5995 = vpack.c.b16 %v5849, %v5848
  %v5996 = vpack.c.b16 %v5851, %v5850
  %v5997 = vpack.c.b16 %v5853, %v5852
  %v5998 = vpack.c.b16 %v5855, %v5854
  %v5999 = vpack.c.b16 %v5857, %v5856
  %v6000 = vpack.c.b16 %v5859, %v5858
  %v6001 = vpack.c.b16 %v5861, %v5860
  %v6002 = vpack.c.b16 %v5863, %v5862
  %v6003 = vpack.c.b16 %v5865, %v5864
  %v6004 = vpack.c.b16 %v5867, %v5866
  %v6005 = vpack.c.b16 %v5869, %v5868
  %v6006 = vpack.c.b16 %v5871, %v5870
  %v6007 = vpack.c.b16 %v5873, %v5872
  %v6008 = vpack.c.b16 %v5875, %v5874
  %v6009 = vpack.c.b16 %v5877, %v5876
  %v6010 = vpack.c.b16 %v5879, %v5878
  %v6011 = vpack.c.b16 %v5881, %v5880
  %v6012 = vpack.c.b16 %v5883, %v5882
  %v6013 = vpack.c.b16 %v5885, %v5884
  %v6014 = vpack.c.b16 %v5887, %v5886
  %v6015 = vpack.c.b16 %v5889, %v5888
  %v6016 = vpack.c.b16 %v5891, %v5890
  %v6017 = vpack.c.b16 %v5893, %v5892
  %v6018 = vpack.c.b16 %v5895, %v5894
  %v6019 = vpack.c.b16 %v5897, %v5896
  %v6020 = vpack.c.b16 %v5899, %v5898
  %v6021 = vpack.c.b16 %v5901, %v5900
  %v6022 = vpack.c.b16 %v5903, %v5902
  %v6023 = vpack.c.b16 %v5905, %v5904
  %v6024 = vpack.c.b16 %v5907, %v5906
  %v6025 = vpack.c.b16 %v5909, %v5908
  %v6026 = vpack.c.b16 %v5911, %v5910
  %v6027 = vpack.c.b16 %v5913, %v5912
  %v6028 = vpack.c.b16 %v5915, %v5914
  %v6029 = vpack.c.b16 %v5917, %v5916
  %v6030 = vpack.c.b16 %v5919, %v5918
  %v6031 = vpack.c.b16 %v5921, %v5920
  %v6032 = vpack.c.b16 %v5923, %v5922
  %v6033 = vpack.c.b16 %v5925, %v5924
  %v6034 = vpack.c.b16 %v5927, %v5926
  %v6035 = vpack.c.b16 %v5929, %v5928
  %v6036 = vpack.c.b16 %v5931, %v5930
  %v6037 = vpack.c.b16 %v5933, %v5932
  %v6038 = vpack.c.b16 %v5935, %v5934
  %v6039 = vpack.c.b16 %v5937, %v5936
  %v6040 = vpack.c.b16 %v5939, %v5938
  %v6041 = vpack.c.b16 %v5941, %v5940
  %v6042 = vpack.c.b16 %v5943, %v5942
  %v6043 = vpack.c.b16 %v5945, %v5944
  %v6044 = vpack.c.b16 %v5947, %v5946
  %v6045 = vpack.c.b16 %v5949, %v5948
  %v6046 = vpack.c.b16 %v5951, %v5950
  %v6047 = vpack.c.b16 %v5953, %v5952
  %v6048 = vpack.c.b16 %v5955, %v5954
  %v6049 = vpack.c.b16 %v5957, %v5956
  %v6050 = vpack.c.b16 %v5959, %v5958
  %v6051 = vpack.c.b16 %v5961, %v5960
  %v6052 = vpack.c.b16 %v5963, %v5962
  %v6053 = vpack.c.b16 %v5965, %v5964
  %v6054 = vpack.c.b16 %v5967, %v5966
  %v6055 = vpack.c.b16 %v5969, %v5968
  %v6056 = vpack.c.b16 %v5971, %v5970
  %v6057 = vpack.c.b16 %v5973, %v5972
  %v6058 = vpack.c.b16 %v5975, %v5974
  %v6059 = vpack.c.b16 %v5977, %v5976
  %v6060 = vpack.c.b16 %v5979, %v5978
  %v6061 = vpack.c.b16 %v5981, %v5980
  %6142 = vmatprep.subr.bf16.mxu0 0
  %6143 = vmatpush1.bf16.msra.mxu0 %v5982
  %6144 = vmatprep.subr.bf16.mxu0 0
  %6145 = vmatpush1.bf16.msra.mxu0 %v5983
  %6146 = vmatprep.subr.bf16.mxu0 0
  %6147 = vmatpush1.bf16.msra.mxu0 %v5984
  %6148 = vmatprep.subr.bf16.mxu0 0
  %6149 = vmatpush1.bf16.msra.mxu0 %v5985
  %6150 = vmatprep.subr.bf16.mxu0 0
  %6151 = vmatpush1.bf16.msra.mxu0 %v5986
  %6152 = vmatprep.subr.bf16.mxu0 0
  %6153 = vmatpush1.bf16.msra.mxu0 %v5987
  %6154 = vmatprep.subr.bf16.mxu0 0
  %6155 = vmatpush1.bf16.msra.mxu0 %v5988
  %6156 = vmatprep.subr.bf16.mxu0 0
  %6157 = vmatpush1.bf16.msra.mxu0 %v5989
  %6158 = vmatprep.subr.bf16.mxu0 0
  %6159 = vmatpush1.bf16.msra.mxu0 %v5990
  %6160 = vmatprep.subr.bf16.mxu0 0
  %6161 = vmatpush1.bf16.msra.mxu0 %v5991
  %6162 = vmatprep.subr.bf16.mxu0 0
  %6163 = vmatpush1.bf16.msra.mxu0 %v5992
  %6164 = vmatprep.subr.bf16.mxu0 0
  %6165 = vmatpush1.bf16.msra.mxu0 %v5993
  %6166 = vmatprep.subr.bf16.mxu0 0
  %6167 = vmatpush1.bf16.msra.mxu0 %v5994
  %6168 = vmatprep.subr.bf16.mxu0 0
  %6169 = vmatpush1.bf16.msra.mxu0 %v5995
  %6170 = vmatprep.subr.bf16.mxu0 0
  %6171 = vmatpush1.bf16.msra.mxu0 %v5996
  %6172 = vmatprep.subr.bf16.mxu0 0
  %6173 = vmatpush1.bf16.msra.mxu0 %v5997
  %6174 = vmatprep.mubr.bf16.mxu0 %v5486
  %6175 = vmatmul.mubr.bf16.gmra.mrb[0].mxu0 %v5485
  %v6176 = vpop.f32.mrb[0].mxu0
  %v6177 = vadd.f32 %v5660, %v6176
  %v6178 = vpop.f32.mrb[0].mxu0
  %v6179 = vpop.f32.mrb[0].mxu0
  %v6180 = vpop.f32.mrb[0].mxu0
  %6181 = vdwg.mxu0
  %6182 = vmatprep.subr.bf16.mxu0 0
  %6183 = vmatpush1.bf16.msra.mxu0 %v5998
  %6184 = vmatprep.subr.bf16.mxu0 0
  %6185 = vmatpush1.bf16.msra.mxu0 %v5999
  %6186 = vmatprep.subr.bf16.mxu0 0
  %6187 = vmatpush1.bf16.msra.mxu0 %v6000
  %6188 = vmatprep.subr.bf16.mxu0 0
  %6189 = vmatpush1.bf16.msra.mxu0 %v6001
  %6190 = vmatprep.subr.bf16.mxu0 0
  %6191 = vmatpush1.bf16.msra.mxu0 %v6002
  %6192 = vmatprep.subr.bf16.mxu0 0
  %6193 = vmatpush1.bf16.msra.mxu0 %v6003
  %6194 = vmatprep.subr.bf16.mxu0 0
  %6195 = vmatpush1.bf16.msra.mxu0 %v6004
  %6196 = vmatprep.subr.bf16.mxu0 0
  %6197 = vmatpush1.bf16.msra.mxu0 %v6005
  %6198 = vmatprep.subr.bf16.mxu0 0
  %6199 = vmatpush1.bf16.msra.mxu0 %v6006
  %6200 = vmatprep.subr.bf16.mxu0 0
  %6201 = vmatpush1.bf16.msra.mxu0 %v6007
  %6202 = vmatprep.subr.bf16.mxu0 0
  %6203 = vmatpush1.bf16.msra.mxu0 %v6008
  %6204 = vmatprep.subr.bf16.mxu0 0
  %6205 = vmatpush1.bf16.msra.mxu0 %v6009
  %6206 = vmatprep.subr.bf16.mxu0 0
  %6207 = vmatpush1.bf16.msra.mxu0 %v6010
  %6208 = vmatprep.subr.bf16.mxu0 0
  %6209 = vmatpush1.bf16.msra.mxu0 %v6011
  %6210 = vmatprep.subr.bf16.mxu0 0
  %6211 = vmatpush1.bf16.msra.mxu0 %v6012
  %6212 = vmatprep.subr.bf16.mxu0 0
  %6213 = vmatpush1.bf16.msra.mxu0 %v6013
  %6214 = vmatprep.mubr.bf16.mxu0 %v5488
  %6215 = vmatmul.mubr.bf16.gmra.mrb[0].mxu0 %v5487
  %v6216 = vpop.f32.mrb[0].mxu0
  %v6217 = vadd.f32 %v6177, %v6216
  %v6218 = vpop.f32.mrb[0].mxu0
  %v6219 = vpop.f32.mrb[0].mxu0
  %v6220 = vpop.f32.mrb[0].mxu0
  %6221 = vdwg.mxu0
  %6222 = vmatprep.subr.bf16.mxu0 0
  %6223 = vmatpush1.bf16.msra.mxu0 %v6014
  %6224 = vmatprep.subr.bf16.mxu0 0
  %6225 = vmatpush1.bf16.msra.mxu0 %v6015
  %6226 = vmatprep.subr.bf16.mxu0 0
  %6227 = vmatpush1.bf16.msra.mxu0 %v6016
  %6228 = vmatprep.subr.bf16.mxu0 0
  %6229 = vmatpush1.bf16.msra.mxu0 %v6017
  %6230 = vmatprep.subr.bf16.mxu0 0
  %6231 = vmatpush1.bf16.msra.mxu0 %v6018
  %6232 = vmatprep.subr.bf16.mxu0 0
  %6233 = vmatpush1.bf16.msra.mxu0 %v6019
  %6234 = vmatprep.subr.bf16.mxu0 0
  %6235 = vmatpush1.bf16.msra.mxu0 %v6020
  %6236 = vmatprep.subr.bf16.mxu0 0
  %6237 = vmatpush1.bf16.msra.mxu0 %v6021
  %6238 = vmatprep.subr.bf16.mxu0 0
  %6239 = vmatpush1.bf16.msra.mxu0 %v6022
  %6240 = vmatprep.subr.bf16.mxu0 0
  %6241 = vmatpush1.bf16.msra.mxu0 %v6023
  %6242 = vmatprep.subr.bf16.mxu0 0
  %6243 = vmatpush1.bf16.msra.mxu0 %v6024
  %6244 = vmatprep.subr.bf16.mxu0 0
  %6245 = vmatpush1.bf16.msra.mxu0 %v6025
  %6246 = vmatprep.subr.bf16.mxu0 0
  %6247 = vmatpush1.bf16.msra.mxu0 %v6026
  %6248 = vmatprep.subr.bf16.mxu0 0
  %6249 = vmatpush1.bf16.msra.mxu0 %v6027
  %6250 = vmatprep.subr.bf16.mxu0 0
  %6251 = vmatpush1.bf16.msra.mxu0 %v6028
  %6252 = vmatprep.subr.bf16.mxu0 0
  %6253 = vmatpush1.bf16.msra.mxu0 %v6029
  %6254 = vmatprep.mubr.bf16.mxu0 %v5490
  %6255 = vmatmul.mubr.bf16.gmra.mrb[0].mxu0 %v5489
  %v6256 = vpop.f32.mrb[0].mxu0
  %v6257 = vadd.f32 %v6217, %v6256
  %v6258 = vpop.f32.mrb[0].mxu0
  %v6259 = vpop.f32.mrb[0].mxu0
  %v6260 = vpop.f32.mrb[0].mxu0
  %6261 = vdwg.mxu0
  %6262 = vmatprep.subr.bf16.mxu0 0
  %6263 = vmatpush1.bf16.msra.mxu0 %v6030
  %6264 = vmatprep.subr.bf16.mxu0 0
  %6265 = vmatpush1.bf16.msra.mxu0 %v6031
  %6266 = vmatprep.subr.bf16.mxu0 0
  %6267 = vmatpush1.bf16.msra.mxu0 %v6032
  %6268 = vmatprep.subr.bf16.mxu0 0
  %6269 = vmatpush1.bf16.msra.mxu0 %v6033
  %6270 = vmatprep.subr.bf16.mxu0 0
  %6271 = vmatpush1.bf16.msra.mxu0 %v6034
  %6272 = vmatprep.subr.bf16.mxu0 0
  %6273 = vmatpush1.bf16.msra.mxu0 %v6035
  %6274 = vmatprep.subr.bf16.mxu0 0
  %6275 = vmatpush1.bf16.msra.mxu0 %v6036
  %6276 = vmatprep.subr.bf16.mxu0 0
  %6277 = vmatpush1.bf16.msra.mxu0 %v6037
  %6278 = vmatprep.subr.bf16.mxu0 0
  %6279 = vmatpush1.bf16.msra.mxu0 %v6038
  %6280 = vmatprep.subr.bf16.mxu0 0
  %6281 = vmatpush1.bf16.msra.mxu0 %v6039
  %6282 = vmatprep.subr.bf16.mxu0 0
  %6283 = vmatpush1.bf16.msra.mxu0 %v6040
  %6284 = vmatprep.subr.bf16.mxu0 0
  %6285 = vmatpush1.bf16.msra.mxu0 %v6041
  %6286 = vmatprep.subr.bf16.mxu0 0
  %6287 = vmatpush1.bf16.msra.mxu0 %v6042
  %6288 = vmatprep.subr.bf16.mxu0 0
  %6289 = vmatpush1.bf16.msra.mxu0 %v6043
  %6290 = vmatprep.subr.bf16.mxu0 0
  %6291 = vmatpush1.bf16.msra.mxu0 %v6044
  %6292 = vmatprep.subr.bf16.mxu0 0
  %6293 = vmatpush1.bf16.msra.mxu0 %v6045
  %6294 = vmatprep.mubr.bf16.mxu0 %v5492
  %6295 = vmatmul.mubr.bf16.gmra.mrb[0].mxu0 %v5491
  %v6296 = vpop.f32.mrb[0].mxu0
  %v6297 = vadd.f32 %v6257, %v6296
  %v6298 = vpop.f32.mrb[0].mxu0
  %v6299 = vpop.f32.mrb[0].mxu0
  %v6300 = vpop.f32.mrb[0].mxu0
  %6301 = vdwg.mxu0
  %6302 = vmatprep.subr.bf16.mxu0 0
  %6303 = vmatpush1.bf16.msra.mxu0 %v6046
  %6304 = vmatprep.subr.bf16.mxu0 0
  %6305 = vmatpush1.bf16.msra.mxu0 %v6047
  %6306 = vmatprep.subr.bf16.mxu0 0
  %6307 = vmatpush1.bf16.msra.mxu0 %v6048
  %6308 = vmatprep.subr.bf16.mxu0 0
  %6309 = vmatpush1.bf16.msra.mxu0 %v6049
  %6310 = vmatprep.subr.bf16.mxu0 0
  %6311 = vmatpush1.bf16.msra.mxu0 %v6050
  %6312 = vmatprep.subr.bf16.mxu0 0
  %6313 = vmatpush1.bf16.msra.mxu0 %v6051
  %6314 = vmatprep.subr.bf16.mxu0 0
  %6315 = vmatpush1.bf16.msra.mxu0 %v6052
  %6316 = vmatprep.subr.bf16.mxu0 0
  %6317 = vmatpush1.bf16.msra.mxu0 %v6053
  %6318 = vmatprep.subr.bf16.mxu0 0
  %6319 = vmatpush1.bf16.msra.mxu0 %v6054
  %6320 = vmatprep.subr.bf16.mxu0 0
  %6321 = vmatpush1.bf16.msra.mxu0 %v6055
  %6322 = vmatprep.subr.bf16.mxu0 0
  %6323 = vmatpush1.bf16.msra.mxu0 %v6056
  %6324 = vmatprep.subr.bf16.mxu0 0
  %6325 = vmatpush1.bf16.msra.mxu0 %v6057
  %6326 = vmatprep.subr.bf16.mxu0 0
  %6327 = vmatpush1.bf16.msra.mxu0 %v6058
  %6328 = vmatprep.subr.bf16.mxu0 0
  %6329 = vmatpush1.bf16.msra.mxu0 %v6059
  %6330 = vmatprep.subr.bf16.mxu0 0
  %6331 = vmatpush1.bf16.msra.mxu0 %v6060
  %6332 = vmatprep.subr.bf16.mxu0 0
  %6333 = vmatpush1.bf16.msra.mxu0 %v6061
  %6334 = vmatprep.mubr.bf16.mxu0 %v5494
  %6335 = vmatmul.mubr.bf16.gmra.mrb[0].mxu0 %v5493
  %v6336 = vpop.f32.mrb[0].mxu0
  %v6337 = vadd.f32 %v6297, %v6336
  %v6338 = vpop.f32.mrb[0].mxu0
  %v6339 = vpop.f32.mrb[0].mxu0
  %v6340 = vpop.f32.mrb[0].mxu0
  %6341 = vdwg.mxu0
  %v6342 = vmax.f32 %v6337, 0.0
  %v6343 = vpack.c.bf16 %v6342, %v6342
  %v6344 = vld [vmem:[%s5] sm:$0xf]
  %v6345 = vld [vmem:[%s5 + $0x4] sm:$0xf]
  %v6346 = vld [vmem:[%s5 + $0x8] sm:$0xf]
  %v6347 = vld [vmem:[%s5 + $0xc] sm:$0xf]
  %v6348 = vld [vmem:[%s5 + $0x10] sm:$0xf]
  %v6349 = vld [vmem:[%s5 + $0x14] sm:$0xf]
  %v6350 = vld [vmem:[%s5 + $0x18] sm:$0xf]
  %v6351 = vld [vmem:[%s5 + $0x1c] sm:$0xf]
  %v6352 = vld [vmem:[%s5 + $0x20] sm:$0xf]
  %v6353 = vld [vmem:[%s5 + $0x24] sm:$0xf]
  %v6354 = vld [vmem:[%s5 + $0x28] sm:$0xf]
  %v6355 = vld [vmem:[%s5 + $0x2c] sm:$0xf]
  %v6356 = vld [vmem:[%s5 + $0x30] sm:$0xf]
  %v6357 = vld [vmem:[%s5 + $0x34] sm:$0xf]
  %v6358 = vld [vmem:[%s5 + $0x38] sm:$0xf]
  %v6359 = vld [vmem:[%s5 + $0x3c] sm:$0xf]
  %v6360 = vld [vmem:[%s6] sm:$0x1]
  %v6362 = vlaneseq
  %v6363 = vshrl.u32 %v6362, 7
  %v6364 = vsub.s32 0, %v6363
  %v6365 = vrot.slane %v6360, %v6364
  %v6383 = vunpack.c.l.b16 %v6344
  %v6384 = vunpack.c.l.b16 %v6345
  %v6385 = vunpack.c.l.b16 %v6346
  %v6386 = vunpack.c.l.b16 %v6347
  %v6387 = vunpack.c.l.b16 %v6348
  %v6388 = vunpack.c.l.b16 %v6349
  %v6389 = vunpack.c.l.b16 %v6350
  %v6390 = vunpack.c.l.b16 %v6351
  %v6391 = vunpack.c.l.b16 %v6352
  %v6392 = vunpack.c.l.b16 %v6353
  %v6393 = vunpack.c.l.b16 %v6354
  %v6394 = vunpack.c.l.b16 %v6355
  %v6395 = vunpack.c.l.b16 %v6356
  %v6396 = vunpack.c.l.b16 %v6357
  %v6397 = vunpack.c.l.b16 %v6358
  %v6398 = vunpack.c.l.b16 %v6359
  %v6399 = vpack.c.b16 %v6384, %v6383
  %v6400 = vpack.c.b16 %v6386, %v6385
  %v6401 = vpack.c.b16 %v6388, %v6387
  %v6402 = vpack.c.b16 %v6390, %v6389
  %v6403 = vpack.c.b16 %v6392, %v6391
  %v6404 = vpack.c.b16 %v6394, %v6393
  %v6405 = vpack.c.b16 %v6396, %v6395
  %v6406 = vpack.c.b16 %v6398, %v6397
  %6415 = vmatprep.subr.bf16.mxu0 0
  %6416 = vmatpush1.bf16.msra.mxu0 %v6399
  %6417 = vmatprep.subr.bf16.mxu0 0
  %6418 = vmatpush1.bf16.msra.mxu0 %v6400
  %6419 = vmatprep.subr.bf16.mxu0 0
  %6420 = vmatpush1.bf16.msra.mxu0 %v6401
  %6421 = vmatprep.subr.bf16.mxu0 0
  %6422 = vmatpush1.bf16.msra.mxu0 %v6402
  %6423 = vmatprep.subr.bf16.mxu0 0
  %6424 = vmatpush1.bf16.msra.mxu0 %v6403
  %6425 = vmatprep.subr.bf16.mxu0 0
  %6426 = vmatpush1.bf16.msra.mxu0 %v6404
  %6427 = vmatprep.subr.bf16.mxu0 0
  %6428 = vmatpush1.bf16.msra.mxu0 %v6405
  %6429 = vmatprep.subr.bf16.mxu0 0
  %6430 = vmatpush1.bf16.msra.mxu0 %v6406
  %6431 = vmatprep.subr.bf16.mxu0 0
  %6432 = vmatpush1.bf16.msra.mxu0 0
  %6433 = vmatprep.subr.bf16.mxu0 0
  %6434 = vmatpush1.bf16.msra.mxu0 0
  %6435 = vmatprep.subr.bf16.mxu0 0
  %6436 = vmatpush1.bf16.msra.mxu0 0
  %6437 = vmatprep.subr.bf16.mxu0 0
  %6438 = vmatpush1.bf16.msra.mxu0 0
  %6439 = vmatprep.subr.bf16.mxu0 0
  %6440 = vmatpush1.bf16.msra.mxu0 0
  %6441 = vmatprep.subr.bf16.mxu0 0
  %6442 = vmatpush1.bf16.msra.mxu0 0
  %6443 = vmatprep.subr.bf16.mxu0 0
  %6444 = vmatpush1.bf16.msra.mxu0 0
  %6445 = vmatprep.subr.bf16.mxu0 0
  %6446 = vmatpush1.bf16.msra.mxu0 0
  %6447 = vmatprep.mubr.bf16.mxu0 0
  %6448 = vmatmul.mubr.bf16.gmra.mrb[0].mxu0 %v6343
  %v6449 = vpop.f32.mrb[0].mxu0
  %v6450 = vadd.f32 %v6365, %v6449
  %v6451 = vpop.f32.mrb[0].mxu0
  %v6452 = vpop.f32.mrb[0].mxu0
  %v6453 = vpop.f32.mrb[0].mxu0
  %6454 = vdwg.mxu0
  %v6455 = vmax.f32 %v6450, 0.0
  %v6456 = vpack.c.bf16 %v6455, %v6455
  %v6457 = vld [vmem:[%s7] sm:$0xf]
  %v6458 = vld [vmem:[%s7 + $0x4] sm:$0xf]
  %v6459 = vld [vmem:[%s7 + $0x8] sm:$0xf]
  %v6460 = vld [vmem:[%s7 + $0xc] sm:$0xf]
  %v6461 = vld [vmem:[%s7 + $0x10] sm:$0xf]
  %v6462 = vld [vmem:[%s7 + $0x14] sm:$0xf]
  %v6463 = vld [vmem:[%s7 + $0x18] sm:$0xf]
  %v6464 = vld [vmem:[%s7 + $0x1c] sm:$0xf]
  %v6465 = vld [vmem:[%s7 + $0x20] sm:$0xf]
  %v6466 = vld [vmem:[%s7 + $0x24] sm:$0xf]
  %v6467 = vld [vmem:[%s7 + $0x28] sm:$0xf]
  %v6468 = vld [vmem:[%s7 + $0x2c] sm:$0xf]
  %v6469 = vld [vmem:[%s7 + $0x30] sm:$0xf]
  %v6470 = vld [vmem:[%s7 + $0x34] sm:$0xf]
  %v6471 = vld [vmem:[%s7 + $0x38] sm:$0xf]
  %v6472 = vld [vmem:[%s7 + $0x3c] sm:$0xf]
  %v6473 = vld [vmem:[%s8] sm:$0x1]
  %v6475 = vlaneseq
  %v6476 = vshrl.u32 %v6475, 7
  %v6477 = vsub.s32 0, %v6476
  %v6478 = vrot.slane %v6473, %v6477
  %v6496 = vunpack.c.l.b16 %v6457
  %v6497 = vunpack.c.l.b16 %v6458
  %v6498 = vunpack.c.l.b16 %v6459
  %v6499 = vunpack.c.l.b16 %v6460
  %v6500 = vunpack.c.l.b16 %v6461
  %v6501 = vunpack.c.l.b16 %v6462
  %v6502 = vunpack.c.l.b16 %v6463
  %v6503 = vunpack.c.l.b16 %v6464
  %v6504 = vunpack.c.l.b16 %v6465
  %v6505 = vunpack.c.l.b16 %v6466
  %v6506 = vunpack.c.l.b16 %v6467
  %v6507 = vunpack.c.l.b16 %v6468
  %v6508 = vunpack.c.l.b16 %v6469
  %v6509 = vunpack.c.l.b16 %v6470
  %v6510 = vunpack.c.l.b16 %v6471
  %v6511 = vunpack.c.l.b16 %v6472
  %v6512 = vpack.c.b16 %v6497, %v6496
  %v6513 = vpack.c.b16 %v6499, %v6498
  %v6514 = vpack.c.b16 %v6501, %v6500
  %v6515 = vpack.c.b16 %v6503, %v6502
  %v6516 = vpack.c.b16 %v6505, %v6504
  %v6517 = vpack.c.b16 %v6507, %v6506
  %v6518 = vpack.c.b16 %v6509, %v6508
  %v6519 = vpack.c.b16 %v6511, %v6510
  %6528 = vmatprep.subr.bf16.mxu0 0
  %6529 = vmatpush1.bf16.msra.mxu0 %v6512
  %6530 = vmatprep.subr.bf16.mxu0 0
  %6531 = vmatpush1.bf16.msra.mxu0 %v6513
  %6532 = vmatprep.subr.bf16.mxu0 0
  %6533 = vmatpush1.bf16.msra.mxu0 %v6514
  %6534 = vmatprep.subr.bf16.mxu0 0
  %6535 = vmatpush1.bf16.msra.mxu0 %v6515
  %6536 = vmatprep.subr.bf16.mxu0 0
  %6537 = vmatpush1.bf16.msra.mxu0 %v6516
  %6538 = vmatprep.subr.bf16.mxu0 0
  %6539 = vmatpush1.bf16.msra.mxu0 %v6517
  %6540 = vmatprep.subr.bf16.mxu0 0
  %6541 = vmatpush1.bf16.msra.mxu0 %v6518
  %6542 = vmatprep.subr.bf16.mxu0 0
  %6543 = vmatpush1.bf16.msra.mxu0 %v6519
  %6544 = vmatprep.subr.bf16.mxu0 0
  %6545 = vmatpush1.bf16.msra.mxu0 0
  %6546 = vmatprep.subr.bf16.mxu0 0
  %6547 = vmatpush1.bf16.msra.mxu0 0
  %6548 = vmatprep.subr.bf16.mxu0 0
  %6549 = vmatpush1.bf16.msra.mxu0 0
  %6550 = vmatprep.subr.bf16.mxu0 0
  %6551 = vmatpush1.bf16.msra.mxu0 0
  %6552 = vmatprep.subr.bf16.mxu0 0
  %6553 = vmatpush1.bf16.msra.mxu0 0
  %6554 = vmatprep.subr.bf16.mxu0 0
  %6555 = vmatpush1.bf16.msra.mxu0 0
  %6556 = vmatprep.subr.bf16.mxu0 0
  %6557 = vmatpush1.bf16.msra.mxu0 0
  %6558 = vmatprep.subr.bf16.mxu0 0
  %6559 = vmatpush1.bf16.msra.mxu0 0
  %6560 = vmatprep.mubr.bf16.mxu0 0
  %6561 = vmatmul.mubr.bf16.gmra.mrb[0].mxu0 %v6456
  %v6562 = vpop.f32.mrb[0].mxu0
  %v6563 = vadd.f32 %v6478, %v6562
  %v6564 = vpop.f32.mrb[0].mxu0
  %v6565 = vpop.f32.mrb[0].mxu0
  %v6566 = vpop.f32.mrb[0].mxu0
  %6567 = vdwg.mxu0
  %v6568 = vmax.f32 %v6563, 0.0
  %v6569 = vpack.c.bf16 %v6568, %v6568
  %v6570 = vld [vmem:[%s9] sm:$0xf]
  %v6571 = vld [vmem:[%s9 + $0x4] sm:$0xf]
  %v6572 = vld [vmem:[%s9 + $0x8] sm:$0xf]
  %v6573 = vld [vmem:[%s9 + $0xc] sm:$0xf]
  %v6574 = vld [vmem:[%s9 + $0x10] sm:$0xf]
  %v6575 = vld [vmem:[%s9 + $0x14] sm:$0xf]
  %v6576 = vld [vmem:[%s9 + $0x18] sm:$0xf]
  %v6577 = vld [vmem:[%s9 + $0x1c] sm:$0xf]
  %v6578 = vld [vmem:[%s9 + $0x20] sm:$0xf]
  %v6579 = vld [vmem:[%s9 + $0x24] sm:$0xf]
  %v6580 = vld [vmem:[%s9 + $0x28] sm:$0xf]
  %v6581 = vld [vmem:[%s9 + $0x2c] sm:$0xf]
  %v6582 = vld [vmem:[%s9 + $0x30] sm:$0xf]
  %v6583 = vld [vmem:[%s9 + $0x34] sm:$0xf]
  %v6584 = vld [vmem:[%s9 + $0x38] sm:$0xf]
  %v6585 = vld [vmem:[%s9 + $0x3c] sm:$0xf]
  %v6586 = vld [vmem:[%s10] sm:$0x1]
  %v6588 = vlaneseq
  %v6589 = vshrl.u32 %v6588, 7
  %v6590 = vsub.s32 0, %v6589
  %v6591 = vrot.slane %v6586, %v6590
  %v6609 = vunpack.c.l.b16 %v6570
  %v6610 = vunpack.c.l.b16 %v6571
  %v6611 = vunpack.c.l.b16 %v6572
  %v6612 = vunpack.c.l.b16 %v6573
  %v6613 = vunpack.c.l.b16 %v6574
  %v6614 = vunpack.c.l.b16 %v6575
  %v6615 = vunpack.c.l.b16 %v6576
  %v6616 = vunpack.c.l.b16 %v6577
  %v6617 = vunpack.c.l.b16 %v6578
  %v6618 = vunpack.c.l.b16 %v6579
  %v6619 = vunpack.c.l.b16 %v6580
  %v6620 = vunpack.c.l.b16 %v6581
  %v6621 = vunpack.c.l.b16 %v6582
  %v6622 = vunpack.c.l.b16 %v6583
  %v6623 = vunpack.c.l.b16 %v6584
  %v6624 = vunpack.c.l.b16 %v6585
  %v6625 = vpack.c.b16 %v6610, %v6609
  %v6626 = vpack.c.b16 %v6612, %v6611
  %v6627 = vpack.c.b16 %v6614, %v6613
  %v6628 = vpack.c.b16 %v6616, %v6615
  %v6629 = vpack.c.b16 %v6618, %v6617
  %v6630 = vpack.c.b16 %v6620, %v6619
  %v6631 = vpack.c.b16 %v6622, %v6621
  %v6632 = vpack.c.b16 %v6624, %v6623
  %6641 = vmatprep.subr.bf16.mxu0 0
  %6642 = vmatpush1.bf16.msra.mxu0 %v6625
  %6643 = vmatprep.subr.bf16.mxu0 0
  %6644 = vmatpush1.bf16.msra.mxu0 %v6626
  %6645 = vmatprep.subr.bf16.mxu0 0
  %6646 = vmatpush1.bf16.msra.mxu0 %v6627
  %6647 = vmatprep.subr.bf16.mxu0 0
  %6648 = vmatpush1.bf16.msra.mxu0 %v6628
  %6649 = vmatprep.subr.bf16.mxu0 0
  %6650 = vmatpush1.bf16.msra.mxu0 %v6629
  %6651 = vmatprep.subr.bf16.mxu0 0
  %6652 = vmatpush1.bf16.msra.mxu0 %v6630
  %6653 = vmatprep.subr.bf16.mxu0 0
  %6654 = vmatpush1.bf16.msra.mxu0 %v6631
  %6655 = vmatprep.subr.bf16.mxu0 0
  %6656 = vmatpush1.bf16.msra.mxu0 %v6632
  %6657 = vmatprep.subr.bf16.mxu0 0
  %6658 = vmatpush1.bf16.msra.mxu0 0
  %6659 = vmatprep.subr.bf16.mxu0 0
  %6660 = vmatpush1.bf16.msra.mxu0 0
  %6661 = vmatprep.subr.bf16.mxu0 0
  %6662 = vmatpush1.bf16.msra.mxu0 0
  %6663 = vmatprep.subr.bf16.mxu0 0
  %6664 = vmatpush1.bf16.msra.mxu0 0
  %6665 = vmatprep.subr.bf16.mxu0 0
  %6666 = vmatpush1.bf16.msra.mxu0 0
  %6667 = vmatprep.subr.bf16.mxu0 0
  %6668 = vmatpush1.bf16.msra.mxu0 0
  %6669 = vmatprep.subr.bf16.mxu0 0
  %6670 = vmatpush1.bf16.msra.mxu0 0
  %6671 = vmatprep.subr.bf16.mxu0 0
  %6672 = vmatpush1.bf16.msra.mxu0 0
  %6673 = vmatprep.mubr.bf16.mxu0 0
  %6674 = vmatmul.mubr.bf16.gmra.mrb[0].mxu0 %v6569
  %v6675 = vpop.f32.mrb[0].mxu0
  %v6676 = vadd.f32 %v6591, %v6675
  %v6677 = vpop.f32.mrb[0].mxu0
  %v6678 = vpop.f32.mrb[0].mxu0
  %v6679 = vpop.f32.mrb[0].mxu0
  %6680 = vdwg.mxu0
  %6681 = vst [vmem:[%s11] sm:$0xff] %v6676
  // Predicated region
  $region46: #{nvidia_forward.11} parent=0 // pred_check
    _
  $region47: #{nvidia_forward.11} parent=0 // pred_check_branch
    %6683 = sbr.rel (0) target = $region49
  $region48: #{nvidia_forward.11} parent=0 // pred_region
    _
  $region49: #{nvidia_forward.11} parent=0 // pred_fallthru
    _
  // Predicated region
  $region50: #{nvidia_forward.11} parent=0 // pred_check
    _
  $region51: #{nvidia_forward.11} parent=0 // pred_check_branch
    %6685 = sbr.rel (0) target = $region53
  $region52: #{nvidia_forward.11} parent=0 // pred_region
    _
  $region53: #{nvidia_forward.11} parent=0 // pred_fallthru
    _

</llo_original>
